<compile_context>
chip_gen: v7x
topology: tpu7x:2x2x1
jax: 0.10.0
libtpu: 0.0.40
codegen_flags: <defaults>
</compile_context>

<pallas_src>
import functools

import jax
import jax.numpy as jnp
from jax.experimental import pallas as pl
from jax.experimental.pallas import tpu as pltpu


def _round_up(n, m):
    return -(-n // m) * m


def _pad_to(a, shape, dtype):
    """Zero-pad `a` (at the end of each axis) to `shape`, cast to `dtype`."""
    a = a.astype(dtype)
    if tuple(a.shape) == tuple(shape):
        return a
    out = jnp.zeros(shape, dtype)
    return out.at[tuple(slice(0, s) for s in a.shape)].set(a)


def _lstm_chunk_kernel(x_ref, h0_ref, c0_ref, wih_ref, whh_ref, b_ref,
                       lens_ref, out_ref, gx_scr, h_scr, c_scr, *, unroll):
    """One grid step == one chunk of Tc timesteps.

    x_ref:    (Tc, Bp, Ip)   raw inputs for this chunk (bf16 by default)
    h0_ref:   (Bp, Hp) f32   initial hidden state (lane/sublane padded)
    c0_ref:   (Bp, Hp) f32   initial cell state
    wih_ref:  (Ip, 4*Hp)     input-projection weights  (resident)
    whh_ref:  (Hp, 4*Hp)     recurrent weights         (resident)
    b_ref:    (1, 4*Hp) f32  combined bias b_ih + b_hh (gate-lane padded)
    lens_ref: (Bp, 1) int32  sequence lengths (output masking)
    out_ref:  (Tc, Bp, Hp)   output hidden states for this chunk
    gx_scr:   (Tc, Bp, 4*Hp) f32  per-chunk input projection (scratch)
    h_scr/c_scr: (Bp, Hp) f32     recurrent state carried across chunks
    """
    cidx = pl.program_id(0)
    Tc, Bp, Ip = x_ref.shape
    Hp = h_scr.shape[1]

    # Initialize the recurrent state from h0/c0 on the first chunk only.
    @pl.when(cidx == 0)
    def _():
        h_scr[...] = h0_ref[...]
        c_scr[...] = c0_ref[...]

    # --- Fused, hoisted input projection: ONE big MXU GEMM per chunk, off the
    # serial path.  bf16 inputs, f32 accumulation.  (Bp is a multiple of 8, Ip
    # a multiple of 128, so the merge-reshape is tile-aligned.)
    x_flat = x_ref[...].reshape(Tc * Bp, Ip)
    gx = jnp.dot(x_flat, wih_ref[...], preferred_element_type=jnp.float32)
    gx_scr[...] = gx.reshape(Tc, Bp, 4 * Hp) + b_ref[...]

    # Loop invariants hoisted out of the (unrolled) serial loop.
    lens = lens_ref[...]                      # (Bp, 1) int32
    base = cidx * Tc

    def _sig(z):
        # sigmoid(z) == 0.5 * tanh(0.5 * z) + 0.5  -> one EUP push, not two.
        return 0.5 * jnp.tanh(0.5 * z) + 0.5

    def step(tt, carry):
        h, c = carry
        # Recurrent projection on the MXU (f32 accumulate) + precomputed gx.
        gates = gx_scr[tt] + jnp.dot(h.astype(whh_ref.dtype), whh_ref[...],
                                     preferred_element_type=jnp.float32)

        # Lane-aligned gate extraction (each gate is a 128-multiple block).
        i = _sig(gates[:, 0 * Hp:1 * Hp])
        f = _sig(gates[:, 1 * Hp:2 * Hp])
        g = jnp.tanh(gates[:, 2 * Hp:3 * Hp])
        o = _sig(gates[:, 3 * Hp:4 * Hp])

        c_new = f * c + i * g
        h_new = o * jnp.tanh(c_new)

        # pad_packed_sequence: zero outputs for timesteps beyond each length.
        mask = lens > (base + tt)                          # (Bp, 1) bool
        out_ref[tt] = jnp.where(mask, h_new, 0.0).astype(out_ref.dtype)
        return h_new, c_new

    h_fin, c_fin = jax.lax.fori_loop(0, Tc, step, (h_scr[...], c_scr[...]),
                                     unroll=unroll)

    # Persist state for the next chunk.
    h_scr[...] = h_fin
    c_scr[...] = c_fin


def lstm_layer_forward(x, h0, c0, w_ih, w_hh, b_ih, b_hh, lens, *,
                       time_chunk=32, param_dtype=jnp.bfloat16):
    """x: [T, B, I] f32, h0/c0: [1, B, H] f32, lens: [B] int32 -> [T, B, H].

    param_dtype=jnp.float32 is an accuracy fallback (slower: f32 MXU passes,
    2x HBM for x/weights) for very long sequences where bf16 drift matters.
    """
    T, B, I = x.shape
    H = h0.shape[-1]
    out_dtype = x.dtype
    f32 = jnp.float32

    # Padding: each gate gets a 128-lane block, batch a sublane multiple, the
    # contraction dim a lane multiple.  Padded weight rows/cols, bias lanes and
    # x lanes are zero, so padded gate lanes of h/c stay exactly zero.
    Hp = _round_up(H, 128)
    Ip = _round_up(I, 128)
    Bp = _round_up(B, 8)
    Tc = max(1, min(time_chunk, T))
    Tp = _round_up(T, Tc)
    n_chunks = Tp // Tc
    unroll = True if Tc <= 16 else 4   # guard vreg pressure for big chunks

    # --- Inputs (padded; bf16 halves the dominant HBM read). ---
    x_p = _pad_to(x, (Tp, Bp, Ip), param_dtype)
    h0p = _pad_to(h0[0], (Bp, Hp), f32)
    c0p = _pad_to(c0[0], (Bp, Hp), f32)
    lens2d = _pad_to(lens.reshape(B, 1), (Bp, 1), jnp.int32)

    # --- Weights / bias, gate-lane padded, resident in VMEM. ---
    wih_p = _pad_to(w_ih.T.reshape(I, 4, H), (Ip, 4, Hp),
                    param_dtype).reshape(Ip, 4 * Hp)
    whh_p = _pad_to(w_hh.T.reshape(H, 4, H), (Hp, 4, Hp),
                    param_dtype).reshape(Hp, 4 * Hp)
    b_p = _pad_to((b_ih + b_hh).reshape(1, 4, H), (1, 4, Hp),
                  f32).reshape(1, 4 * Hp)

    def resident_spec(shape, single_buffer):
        # Constant index_map -> double-buffering only wastes VMEM.
        kwargs = {}
        if single_buffer:
            kwargs["pipeline_mode"] = pl.Buffered(1)
        return pl.BlockSpec(shape, lambda c: (0,) * len(shape), **kwargs)

    def build_call(single_buffer):
        grid_spec = pltpu.PrefetchScalarGridSpec(
            num_scalar_prefetch=0,
            grid=(n_chunks,),
            in_specs=[
                pl.BlockSpec((Tc, Bp, Ip), lambda c: (c, 0, 0)),   # x chunk
                resident_spec((Bp, Hp), single_buffer),            # h0
                resident_spec((Bp, Hp), single_buffer),            # c0
                resident_spec((Ip, 4 * Hp), single_buffer),        # W_ih^T
                resident_spec((Hp, 4 * Hp), single_buffer),        # W_hh^T
                resident_spec((1, 4 * Hp), single_buffer),         # bias
                resident_spec((Bp, 1), single_buffer),             # lengths
            ],
            out_specs=pl.BlockSpec((Tc, Bp, Hp), lambda c: (c, 0, 0)),
            scratch_shapes=[
                pltpu.VMEM((Tc, Bp, 4 * Hp), jnp.float32),  # gx (this chunk)
                pltpu.VMEM((Bp, Hp), jnp.float32),          # h state (carried)
                pltpu.VMEM((Bp, Hp), jnp.float32),          # c state (carried)
            ],
        )
        return pl.pallas_call(
            functools.partial(_lstm_chunk_kernel, unroll=unroll),
            out_shape=jax.ShapeDtypeStruct((Tp, Bp, Hp), out_dtype),
            grid_spec=grid_spec,
            compiler_params=pltpu.CompilerParams(
                # Time is a serial recurrence.
                # TODO(synk): on v7x (2 TCs/chip) add a leading batch grid axis
                # marked "parallel" with per-core h/c scratch to use both cores.
                dimension_semantics=("arbitrary",),
                # 48 MiB: above the 16/32 MiB scoped defaults (v5e/v6e) while
                # still fitting v7x's 64 MiB physical VMEM.
                vmem_limit_bytes=48 * 1024 * 1024,
            ),
        )

    args = (x_p, h0p, c0p, wih_p, whh_p, b_p, lens2d)
    try:
        out_p = build_call(single_buffer=True)(*args)
    except Exception:
        # Pallas build without BlockSpec.pipeline_mode / Buffered(1) support:
        # fall back to default double-buffered residents (correctness identical).
        out_p = build_call(single_buffer=False)(*args)

    # Strip time, batch and lane padding.
    return out_p[:T, :B, :H]


def lstm_ref(x, h0, c0, w_ih, w_hh, b_ih, b_hh, lens):
    """Pure-JAX f32 reference (PyTorch LSTM equations, gate order i,f,g,o)."""
    T, B, _ = x.shape
    H = h0.shape[-1]
    w_ih_t, w_hh_t = w_ih.T, w_hh.T
    b = b_ih + b_hh

    def step(carry, x_t):
        h, c = carry
        gates = x_t @ w_ih_t + h @ w_hh_t + b
        i = jax.nn.sigmoid(gates[:, :H])
        f = jax.nn.sigmoid(gates[:, H:2 * H])
        g = jnp.tanh(gates[:, 2 * H:3 * H])
        o = jax.nn.sigmoid(gates[:, 3 * H:])
        c = f * c + i * g
        h = o * jnp.tanh(c)
        return (h, c), h

    _, hs = jax.lax.scan(step, (h0[0], c0[0]), x)
    mask = (jnp.arange(T)[:, None, None] < lens[None, :, None]).astype(x.dtype)
    return hs * mask


if __name__ == "__main__":
    # Small shapes consistent with the module.
    T, B, I, H = 8, 4, 16, 32

    key = jax.random.PRNGKey(0)
    ks = jax.random.split(key, 8)

    # Deterministic PyTorch-style init: U(-1/sqrt(H), 1/sqrt(H)).
    bound = 1.0 / jnp.sqrt(jnp.float32(H))
    w_ih = jax.random.uniform(ks[0], (4 * H, I), jnp.float32, -bound, bound)
    w_hh = jax.random.uniform(ks[1], (4 * H, H), jnp.float32, -bound, bound)
    b_ih = jax.random.uniform(ks[2], (4 * H,), jnp.float32, -bound, bound)
    b_hh = jax.random.uniform(ks[3], (4 * H,), jnp.float32, -bound, bound)

    x = jax.random.normal(ks[4], (T, B, I), jnp.float32)      # padded sequence
    h0 = jax.random.normal(ks[5], (1, B, H), jnp.float32)     # initial states
    c0 = jax.random.normal(ks[6], (1, B, H), jnp.float32)
    lens = jnp.array([8, 6, 5, 3], dtype=jnp.int32)           # PackedSequence
                                                              # lengths (sorted)

    dec_out = lstm_layer_forward(x, h0, c0, w_ih, w_hh, b_ih, b_hh, lens)
    dec_out = jax.block_until_ready(dec_out)

    ref = lstm_ref(x, h0, c0, w_ih, w_hh, b_ih, b_hh, lens)
    assert dec_out.shape == (T, B, H)
    # bf16 x / W_ih / W_hh (f32 MXU accumulation) introduce a few e-3 deviation
    # vs the full-f32 reference over T=8; 2e-2 is a comfortable bound.
    assert jnp.max(jnp.abs(dec_out - ref)) < 2e-2, "mismatch vs JAX reference"

    print("KERNEL_OK")
</pallas_src>

<mosaic_0001>
module attributes {stable_mosaic.version = 11 : i64} {
  func.func @_lstm_chunk_kernel(%arg0: i32, %arg1: memref<8x8x128xbf16, #tpu.memory_space<vmem>>, %arg2: memref<8x128xf32, #tpu.memory_space<vmem>>, %arg3: memref<8x128xf32, #tpu.memory_space<vmem>>, %arg4: memref<128x512xbf16, #tpu.memory_space<vmem>>, %arg5: memref<128x512xbf16, #tpu.memory_space<vmem>>, %arg6: memref<1x512xf32, #tpu.memory_space<vmem>>, %arg7: memref<8x1xi32, #tpu.memory_space<vmem>>, %arg8: memref<8x8x128xf32, #tpu.memory_space<vmem>>, %arg9: memref<8x8x512xf32, #tpu.memory_space<vmem>>, %arg10: memref<8x128xf32, #tpu.memory_space<vmem>>, %arg11: memref<8x128xf32, #tpu.memory_space<vmem>>) attributes {dimension_semantics = [#tpu.dimension_semantics<arbitrary>], iteration_bounds = array<i64: 1>, scalar_prefetch = 0 : i64, scratch_operands = 3 : i64, tpu.core_type = #tpu.core_type<tc>, window_params = [{transform_indices = @transform_0, window_bounds = array<i64: 8, 8, 128>}, {pipeline_mode = #tpu.pipeline_mode<synchronous>, transform_indices = @transform_1, window_bounds = array<i64: 8, 128>}, {pipeline_mode = #tpu.pipeline_mode<synchronous>, transform_indices = @transform_2, window_bounds = array<i64: 8, 128>}, {pipeline_mode = #tpu.pipeline_mode<synchronous>, transform_indices = @transform_3, window_bounds = array<i64: 128, 512>}, {pipeline_mode = #tpu.pipeline_mode<synchronous>, transform_indices = @transform_4, window_bounds = array<i64: 128, 512>}, {pipeline_mode = #tpu.pipeline_mode<synchronous>, transform_indices = @transform_5, window_bounds = array<i64: 1, 512>}, {pipeline_mode = #tpu.pipeline_mode<synchronous>, transform_indices = @transform_6, window_bounds = array<i64: 8, 1>}, {transform_indices = @transform_7, window_bounds = array<i64: 8, 8, 128>}]} {
    %c0_i32 = arith.constant 0 : i32
    %0 = arith.cmpi eq, %arg0, %c0_i32 : i32
    %1 = arith.extui %0 : i1 to i32
    %c0_i32_0 = arith.constant 0 : i32
    %2 = arith.cmpi ne, %1, %c0_i32_0 : i32
    scf.if %2 {
      %c0_158 = arith.constant 0 : index
      %c0_159 = arith.constant 0 : index
      %411 = vector.load %arg2[%c0_158, %c0_159] : memref<8x128xf32, #tpu.memory_space<vmem>>, vector<8x128xf32>
      %c0_160 = arith.constant 0 : index
      %c0_161 = arith.constant 0 : index
      %412 = vector.load %arg10[%c0_160, %c0_161] : memref<8x128xf32, #tpu.memory_space<vmem>>, vector<8x128xf32>
      tpu.vector_store %arg10[%c0_160, %c0_161], %411 {strides = array<i32>} : memref<8x128xf32, #tpu.memory_space<vmem>>, vector<8x128xf32>,
      %c0_162 = arith.constant 0 : index
      %c0_163 = arith.constant 0 : index
      %413 = vector.load %arg3[%c0_162, %c0_163] : memref<8x128xf32, #tpu.memory_space<vmem>>, vector<8x128xf32>
      %c0_164 = arith.constant 0 : index
      %c0_165 = arith.constant 0 : index
      %414 = vector.load %arg11[%c0_164, %c0_165] : memref<8x128xf32, #tpu.memory_space<vmem>>, vector<8x128xf32>
      tpu.vector_store %arg11[%c0_164, %c0_165], %413 {strides = array<i32>} : memref<8x128xf32, #tpu.memory_space<vmem>>, vector<8x128xf32>,
    } else {
    }
    %c0 = arith.constant 0 : index
    %c0_1 = arith.constant 0 : index
    %c0_2 = arith.constant 0 : index
    %3 = vector.load %arg1[%c0, %c0_1, %c0_2] : memref<8x8x128xbf16, #tpu.memory_space<vmem>>, vector<8x8x128xbf16>
    %4 = vector.shape_cast %3 : vector<8x8x128xbf16> to vector<64x128xbf16>
    %c0_3 = arith.constant 0 : index
    %c0_4 = arith.constant 0 : index
    %5 = vector.load %arg4[%c0_3, %c0_4] : memref<128x512xbf16, #tpu.memory_space<vmem>>, vector<128x512xbf16>
    %cst = arith.constant dense<0.000000e+00> : vector<64x512xf32>
    %6 = tpu.matmul %4, %5, %cst {dimension_numbers = #tpu.dot_dimension_numbers<[1], [0], [0], [1], [0, 0, 1, 1], [], []>} : vector<64x128xbf16>, vector<128x512xbf16>, vector<64x512xf32> -> vector<64x512xf32>
    %7 = vector.shape_cast %6 : vector<64x512xf32> to vector<8x8x512xf32>
    %c0_5 = arith.constant 0 : index
    %c0_6 = arith.constant 0 : index
    %8 = vector.load %arg6[%c0_5, %c0_6] : memref<1x512xf32, #tpu.memory_space<vmem>>, vector<1x512xf32>
    %9 = vector.shape_cast %8 : vector<1x512xf32> to vector<1x1x512xf32>
    %10 = vector.broadcast %9 : vector<1x1x512xf32> to vector<8x8x512xf32>
    %11 = arith.addf %7, %10 : vector<8x8x512xf32>
    %c0_7 = arith.constant 0 : index
    %c0_8 = arith.constant 0 : index
    %c0_9 = arith.constant 0 : index
    %12 = vector.load %arg9[%c0_7, %c0_8, %c0_9] : memref<8x8x512xf32, #tpu.memory_space<vmem>>, vector<8x8x512xf32>
    tpu.vector_store %arg9[%c0_7, %c0_8, %c0_9], %11 {strides = array<i32>} : memref<8x8x512xf32, #tpu.memory_space<vmem>>, vector<8x8x512xf32>,
    %c0_10 = arith.constant 0 : index
    %c0_11 = arith.constant 0 : index
    %13 = vector.load %arg7[%c0_10, %c0_11] : memref<8x1xi32, #tpu.memory_space<vmem>>, vector<8x1xi32>
    %c8_i32 = arith.constant 8 : i32
    %14 = arith.muli %arg0, %c8_i32 : i32
    %c0_12 = arith.constant 0 : index
    %c0_13 = arith.constant 0 : index
    %15 = vector.load %arg10[%c0_12, %c0_13] : memref<8x128xf32, #tpu.memory_space<vmem>>, vector<8x128xf32>
    %c0_14 = arith.constant 0 : index
    %c0_15 = arith.constant 0 : index
    %16 = vector.load %arg11[%c0_14, %c0_15] : memref<8x128xf32, #tpu.memory_space<vmem>>, vector<8x128xf32>
    %c0_i32_16 = arith.constant 0 : i32
    %17 = arith.index_cast %c0_i32_16 : i32 to index
    %c0_17 = arith.constant 0 : index
    %c0_18 = arith.constant 0 : index
    %18 = vector.load %arg9[%17, %c0_17, %c0_18] : memref<8x8x512xf32, #tpu.memory_space<vmem>>, vector<1x8x512xf32>
    %19 = vector.shape_cast %18 : vector<1x8x512xf32> to vector<8x512xf32>
    %20 = arith.truncf %15 : vector<8x128xf32> to vector<8x128xbf16>
    %c0_19 = arith.constant 0 : index
    %c0_20 = arith.constant 0 : index
    %21 = vector.load %arg5[%c0_19, %c0_20] : memref<128x512xbf16, #tpu.memory_space<vmem>>, vector<128x512xbf16>
    %cst_21 = arith.constant dense<0.000000e+00> : vector<8x512xf32>
    %22 = tpu.matmul %20, %21, %cst_21 {dimension_numbers = #tpu.dot_dimension_numbers<[1], [0], [0], [1], [0, 0, 1, 1], [], []>} : vector<8x128xbf16>, vector<128x512xbf16>, vector<8x512xf32> -> vector<8x512xf32>
    %23 = arith.addf %19, %22 : vector<8x512xf32>
    %24 = vector.extract_strided_slice %23 {offsets = [0, 0], sizes = [8, 128], strides = [1, 1]} : vector<8x512xf32> to vector<8x128xf32>
    %cst_22 = arith.constant 5.000000e-01 : f32
    %25 = vector.broadcast %cst_22 : f32 to vector<8x128xf32>
    %26 = arith.mulf %25, %24 : vector<8x128xf32>
    %27 = math.tanh %26 : vector<8x128xf32>
    %cst_23 = arith.constant 5.000000e-01 : f32
    %28 = vector.broadcast %cst_23 : f32 to vector<8x128xf32>
    %29 = arith.mulf %28, %27 : vector<8x128xf32>
    %cst_24 = arith.constant 5.000000e-01 : f32
    %30 = vector.broadcast %cst_24 : f32 to vector<8x128xf32>
    %31 = arith.addf %29, %30 : vector<8x128xf32>
    %32 = vector.extract_strided_slice %23 {offsets = [0, 128], sizes = [8, 128], strides = [1, 1]} : vector<8x512xf32> to vector<8x128xf32>
    %cst_25 = arith.constant 5.000000e-01 : f32
    %33 = vector.broadcast %cst_25 : f32 to vector<8x128xf32>
    %34 = arith.mulf %33, %32 : vector<8x128xf32>
    %35 = math.tanh %34 : vector<8x128xf32>
    %cst_26 = arith.constant 5.000000e-01 : f32
    %36 = vector.broadcast %cst_26 : f32 to vector<8x128xf32>
    %37 = arith.mulf %36, %35 : vector<8x128xf32>
    %cst_27 = arith.constant 5.000000e-01 : f32
    %38 = vector.broadcast %cst_27 : f32 to vector<8x128xf32>
    %39 = arith.addf %37, %38 : vector<8x128xf32>
    %40 = vector.extract_strided_slice %23 {offsets = [0, 256], sizes = [8, 128], strides = [1, 1]} : vector<8x512xf32> to vector<8x128xf32>
    %41 = math.tanh %40 : vector<8x128xf32>
    %42 = vector.extract_strided_slice %23 {offsets = [0, 384], sizes = [8, 128], strides = [1, 1]} : vector<8x512xf32> to vector<8x128xf32>
    %cst_28 = arith.constant 5.000000e-01 : f32
    %43 = vector.broadcast %cst_28 : f32 to vector<8x128xf32>
    %44 = arith.mulf %43, %42 : vector<8x128xf32>
    %45 = math.tanh %44 : vector<8x128xf32>
    %cst_29 = arith.constant 5.000000e-01 : f32
    %46 = vector.broadcast %cst_29 : f32 to vector<8x128xf32>
    %47 = arith.mulf %46, %45 : vector<8x128xf32>
    %cst_30 = arith.constant 5.000000e-01 : f32
    %48 = vector.broadcast %cst_30 : f32 to vector<8x128xf32>
    %49 = arith.addf %47, %48 : vector<8x128xf32>
    %50 = arith.mulf %39, %16 : vector<8x128xf32>
    %51 = arith.mulf %31, %41 : vector<8x128xf32>
    %52 = arith.addf %50, %51 : vector<8x128xf32>
    %53 = math.tanh %52 : vector<8x128xf32>
    %54 = arith.mulf %49, %53 : vector<8x128xf32>
    %55 = arith.addi %14, %c0_i32_16 : i32
    %56 = vector.broadcast %55 : i32 to vector<8x1xi32>
    %57 = arith.cmpi sgt, %13, %56 : vector<8x1xi32>
    %cst_31 = arith.constant 0.000000e+00 : f32
    %58 = vector.shape_cast %57 : vector<8x1xi1> to vector<8x1xi1>
    %59 = vector.broadcast %58 : vector<8x1xi1> to vector<8x128xi1>
    %60 = vector.broadcast %cst_31 : f32 to vector<8x128xf32>
    %61 = arith.select %59, %54, %60 : vector<8x128xi1>, vector<8x128xf32>
    %62 = arith.index_cast %c0_i32_16 : i32 to index
    %c0_32 = arith.constant 0 : index
    %c0_33 = arith.constant 0 : index
    %63 = vector.load %arg8[%62, %c0_32, %c0_33] : memref<8x8x128xf32, #tpu.memory_space<vmem>>, vector<1x8x128xf32>
    %64 = vector.shape_cast %63 : vector<1x8x128xf32> to vector<8x128xf32>
    %65 = vector.shape_cast %61 : vector<8x128xf32> to vector<1x8x128xf32>
    tpu.vector_store %arg8[%62, %c0_32, %c0_33], %65 {strides = array<i32>} : memref<8x8x128xf32, #tpu.memory_space<vmem>>, vector<1x8x128xf32>,
    %c1_i32 = arith.constant 1 : i32
    %66 = arith.index_cast %c1_i32 : i32 to index
    %c0_34 = arith.constant 0 : index
    %c0_35 = arith.constant 0 : index
    %67 = vector.load %arg9[%66, %c0_34, %c0_35] : memref<8x8x512xf32, #tpu.memory_space<vmem>>, vector<1x8x512xf32>
    %68 = vector.shape_cast %67 : vector<1x8x512xf32> to vector<8x512xf32>
    %69 = arith.truncf %54 : vector<8x128xf32> to vector<8x128xbf16>
    %c0_36 = arith.constant 0 : index
    %c0_37 = arith.constant 0 : index
    %70 = vector.load %arg5[%c0_36, %c0_37] : memref<128x512xbf16, #tpu.memory_space<vmem>>, vector<128x512xbf16>
    %cst_38 = arith.constant dense<0.000000e+00> : vector<8x512xf32>
    %71 = tpu.matmul %69, %70, %cst_38 {dimension_numbers = #tpu.dot_dimension_numbers<[1], [0], [0], [1], [0, 0, 1, 1], [], []>} : vector<8x128xbf16>, vector<128x512xbf16>, vector<8x512xf32> -> vector<8x512xf32>
    %72 = arith.addf %68, %71 : vector<8x512xf32>
    %73 = vector.extract_strided_slice %72 {offsets = [0, 0], sizes = [8, 128], strides = [1, 1]} : vector<8x512xf32> to vector<8x128xf32>
    %cst_39 = arith.constant 5.000000e-01 : f32
    %74 = vector.broadcast %cst_39 : f32 to vector<8x128xf32>
    %75 = arith.mulf %74, %73 : vector<8x128xf32>
    %76 = math.tanh %75 : vector<8x128xf32>
    %cst_40 = arith.constant 5.000000e-01 : f32
    %77 = vector.broadcast %cst_40 : f32 to vector<8x128xf32>
    %78 = arith.mulf %77, %76 : vector<8x128xf32>
    %cst_41 = arith.constant 5.000000e-01 : f32
    %79 = vector.broadcast %cst_41 : f32 to vector<8x128xf32>
    %80 = arith.addf %78, %79 : vector<8x128xf32>
    %81 = vector.extract_strided_slice %72 {offsets = [0, 128], sizes = [8, 128], strides = [1, 1]} : vector<8x512xf32> to vector<8x128xf32>
    %cst_42 = arith.constant 5.000000e-01 : f32
    %82 = vector.broadcast %cst_42 : f32 to vector<8x128xf32>
    %83 = arith.mulf %82, %81 : vector<8x128xf32>
    %84 = math.tanh %83 : vector<8x128xf32>
    %cst_43 = arith.constant 5.000000e-01 : f32
    %85 = vector.broadcast %cst_43 : f32 to vector<8x128xf32>
    %86 = arith.mulf %85, %84 : vector<8x128xf32>
    %cst_44 = arith.constant 5.000000e-01 : f32
    %87 = vector.broadcast %cst_44 : f32 to vector<8x128xf32>
    %88 = arith.addf %86, %87 : vector<8x128xf32>
    %89 = vector.extract_strided_slice %72 {offsets = [0, 256], sizes = [8, 128], strides = [1, 1]} : vector<8x512xf32> to vector<8x128xf32>
    %90 = math.tanh %89 : vector<8x128xf32>
    %91 = vector.extract_strided_slice %72 {offsets = [0, 384], sizes = [8, 128], strides = [1, 1]} : vector<8x512xf32> to vector<8x128xf32>
    %cst_45 = arith.constant 5.000000e-01 : f32
    %92 = vector.broadcast %cst_45 : f32 to vector<8x128xf32>
    %93 = arith.mulf %92, %91 : vector<8x128xf32>
    %94 = math.tanh %93 : vector<8x128xf32>
    %cst_46 = arith.constant 5.000000e-01 : f32
    %95 = vector.broadcast %cst_46 : f32 to vector<8x128xf32>
    %96 = arith.mulf %95, %94 : vector<8x128xf32>
    %cst_47 = arith.constant 5.000000e-01 : f32
    %97 = vector.broadcast %cst_47 : f32 to vector<8x128xf32>
    %98 = arith.addf %96, %97 : vector<8x128xf32>
    %99 = arith.mulf %88, %52 : vector<8x128xf32>
    %100 = arith.mulf %80, %90 : vector<8x128xf32>
    %101 = arith.addf %99, %100 : vector<8x128xf32>
    %102 = math.tanh %101 : vector<8x128xf32>
    %103 = arith.mulf %98, %102 : vector<8x128xf32>
    %104 = arith.addi %14, %c1_i32 : i32
    %105 = vector.broadcast %104 : i32 to vector<8x1xi32>
    %106 = arith.cmpi sgt, %13, %105 : vector<8x1xi32>
    %cst_48 = arith.constant 0.000000e+00 : f32
    %107 = vector.shape_cast %106 : vector<8x1xi1> to vector<8x1xi1>
    %108 = vector.broadcast %107 : vector<8x1xi1> to vector<8x128xi1>
    %109 = vector.broadcast %cst_48 : f32 to vector<8x128xf32>
    %110 = arith.select %108, %103, %109 : vector<8x128xi1>, vector<8x128xf32>
    %111 = arith.index_cast %c1_i32 : i32 to index
    %c0_49 = arith.constant 0 : index
    %c0_50 = arith.constant 0 : index
    %112 = vector.load %arg8[%111, %c0_49, %c0_50] : memref<8x8x128xf32, #tpu.memory_space<vmem>>, vector<1x8x128xf32>
    %113 = vector.shape_cast %112 : vector<1x8x128xf32> to vector<8x128xf32>
    %114 = vector.shape_cast %110 : vector<8x128xf32> to vector<1x8x128xf32>
    tpu.vector_store %arg8[%111, %c0_49, %c0_50], %114 {strides = array<i32>} : memref<8x8x128xf32, #tpu.memory_space<vmem>>, vector<1x8x128xf32>,
    %c2_i32 = arith.constant 2 : i32
    %115 = arith.index_cast %c2_i32 : i32 to index
    %c0_51 = arith.constant 0 : index
    %c0_52 = arith.constant 0 : index
    %116 = vector.load %arg9[%115, %c0_51, %c0_52] : memref<8x8x512xf32, #tpu.memory_space<vmem>>, vector<1x8x512xf32>
    %117 = vector.shape_cast %116 : vector<1x8x512xf32> to vector<8x512xf32>
    %118 = arith.truncf %103 : vector<8x128xf32> to vector<8x128xbf16>
    %c0_53 = arith.constant 0 : index
    %c0_54 = arith.constant 0 : index
    %119 = vector.load %arg5[%c0_53, %c0_54] : memref<128x512xbf16, #tpu.memory_space<vmem>>, vector<128x512xbf16>
    %cst_55 = arith.constant dense<0.000000e+00> : vector<8x512xf32>
    %120 = tpu.matmul %118, %119, %cst_55 {dimension_numbers = #tpu.dot_dimension_numbers<[1], [0], [0], [1], [0, 0, 1, 1], [], []>} : vector<8x128xbf16>, vector<128x512xbf16>, vector<8x512xf32> -> vector<8x512xf32>
    %121 = arith.addf %117, %120 : vector<8x512xf32>
    %122 = vector.extract_strided_slice %121 {offsets = [0, 0], sizes = [8, 128], strides = [1, 1]} : vector<8x512xf32> to vector<8x128xf32>
    %cst_56 = arith.constant 5.000000e-01 : f32
    %123 = vector.broadcast %cst_56 : f32 to vector<8x128xf32>
    %124 = arith.mulf %123, %122 : vector<8x128xf32>
    %125 = math.tanh %124 : vector<8x128xf32>
    %cst_57 = arith.constant 5.000000e-01 : f32
    %126 = vector.broadcast %cst_57 : f32 to vector<8x128xf32>
    %127 = arith.mulf %126, %125 : vector<8x128xf32>
    %cst_58 = arith.constant 5.000000e-01 : f32
    %128 = vector.broadcast %cst_58 : f32 to vector<8x128xf32>
    %129 = arith.addf %127, %128 : vector<8x128xf32>
    %130 = vector.extract_strided_slice %121 {offsets = [0, 128], sizes = [8, 128], strides = [1, 1]} : vector<8x512xf32> to vector<8x128xf32>
    %cst_59 = arith.constant 5.000000e-01 : f32
    %131 = vector.broadcast %cst_59 : f32 to vector<8x128xf32>
    %132 = arith.mulf %131, %130 : vector<8x128xf32>
    %133 = math.tanh %132 : vector<8x128xf32>
    %cst_60 = arith.constant 5.000000e-01 : f32
    %134 = vector.broadcast %cst_60 : f32 to vector<8x128xf32>
    %135 = arith.mulf %134, %133 : vector<8x128xf32>
    %cst_61 = arith.constant 5.000000e-01 : f32
    %136 = vector.broadcast %cst_61 : f32 to vector<8x128xf32>
    %137 = arith.addf %135, %136 : vector<8x128xf32>
    %138 = vector.extract_strided_slice %121 {offsets = [0, 256], sizes = [8, 128], strides = [1, 1]} : vector<8x512xf32> to vector<8x128xf32>
    %139 = math.tanh %138 : vector<8x128xf32>
    %140 = vector.extract_strided_slice %121 {offsets = [0, 384], sizes = [8, 128], strides = [1, 1]} : vector<8x512xf32> to vector<8x128xf32>
    %cst_62 = arith.constant 5.000000e-01 : f32
    %141 = vector.broadcast %cst_62 : f32 to vector<8x128xf32>
    %142 = arith.mulf %141, %140 : vector<8x128xf32>
    %143 = math.tanh %142 : vector<8x128xf32>
    %cst_63 = arith.constant 5.000000e-01 : f32
    %144 = vector.broadcast %cst_63 : f32 to vector<8x128xf32>
    %145 = arith.mulf %144, %143 : vector<8x128xf32>
    %cst_64 = arith.constant 5.000000e-01 : f32
    %146 = vector.broadcast %cst_64 : f32 to vector<8x128xf32>
    %147 = arith.addf %145, %146 : vector<8x128xf32>
    %148 = arith.mulf %137, %101 : vector<8x128xf32>
    %149 = arith.mulf %129, %139 : vector<8x128xf32>
    %150 = arith.addf %148, %149 : vector<8x128xf32>
    %151 = math.tanh %150 : vector<8x128xf32>
    %152 = arith.mulf %147, %151 : vector<8x128xf32>
    %153 = arith.addi %14, %c2_i32 : i32
    %154 = vector.broadcast %153 : i32 to vector<8x1xi32>
    %155 = arith.cmpi sgt, %13, %154 : vector<8x1xi32>
    %cst_65 = arith.constant 0.000000e+00 : f32
    %156 = vector.shape_cast %155 : vector<8x1xi1> to vector<8x1xi1>
    %157 = vector.broadcast %156 : vector<8x1xi1> to vector<8x128xi1>
    %158 = vector.broadcast %cst_65 : f32 to vector<8x128xf32>
    %159 = arith.select %157, %152, %158 : vector<8x128xi1>, vector<8x128xf32>
    %160 = arith.index_cast %c2_i32 : i32 to index
    %c0_66 = arith.constant 0 : index
    %c0_67 = arith.constant 0 : index
    %161 = vector.load %arg8[%160, %c0_66, %c0_67] : memref<8x8x128xf32, #tpu.memory_space<vmem>>, vector<1x8x128xf32>
    %162 = vector.shape_cast %161 : vector<1x8x128xf32> to vector<8x128xf32>
    %163 = vector.shape_cast %159 : vector<8x128xf32> to vector<1x8x128xf32>
    tpu.vector_store %arg8[%160, %c0_66, %c0_67], %163 {strides = array<i32>} : memref<8x8x128xf32, #tpu.memory_space<vmem>>, vector<1x8x128xf32>,
    %c3_i32 = arith.constant 3 : i32
    %164 = arith.index_cast %c3_i32 : i32 to index
    %c0_68 = arith.constant 0 : index
    %c0_69 = arith.constant 0 : index
    %165 = vector.load %arg9[%164, %c0_68, %c0_69] : memref<8x8x512xf32, #tpu.memory_space<vmem>>, vector<1x8x512xf32>
    %166 = vector.shape_cast %165 : vector<1x8x512xf32> to vector<8x512xf32>
    %167 = arith.truncf %152 : vector<8x128xf32> to vector<8x128xbf16>
    %c0_70 = arith.constant 0 : index
    %c0_71 = arith.constant 0 : index
    %168 = vector.load %arg5[%c0_70, %c0_71] : memref<128x512xbf16, #tpu.memory_space<vmem>>, vector<128x512xbf16>
    %cst_72 = arith.constant dense<0.000000e+00> : vector<8x512xf32>
    %169 = tpu.matmul %167, %168, %cst_72 {dimension_numbers = #tpu.dot_dimension_numbers<[1], [0], [0], [1], [0, 0, 1, 1], [], []>} : vector<8x128xbf16>, vector<128x512xbf16>, vector<8x512xf32> -> vector<8x512xf32>
    %170 = arith.addf %166, %169 : vector<8x512xf32>
    %171 = vector.extract_strided_slice %170 {offsets = [0, 0], sizes = [8, 128], strides = [1, 1]} : vector<8x512xf32> to vector<8x128xf32>
    %cst_73 = arith.constant 5.000000e-01 : f32
    %172 = vector.broadcast %cst_73 : f32 to vector<8x128xf32>
    %173 = arith.mulf %172, %171 : vector<8x128xf32>
    %174 = math.tanh %173 : vector<8x128xf32>
    %cst_74 = arith.constant 5.000000e-01 : f32
    %175 = vector.broadcast %cst_74 : f32 to vector<8x128xf32>
    %176 = arith.mulf %175, %174 : vector<8x128xf32>
    %cst_75 = arith.constant 5.000000e-01 : f32
    %177 = vector.broadcast %cst_75 : f32 to vector<8x128xf32>
    %178 = arith.addf %176, %177 : vector<8x128xf32>
    %179 = vector.extract_strided_slice %170 {offsets = [0, 128], sizes = [8, 128], strides = [1, 1]} : vector<8x512xf32> to vector<8x128xf32>
    %cst_76 = arith.constant 5.000000e-01 : f32
    %180 = vector.broadcast %cst_76 : f32 to vector<8x128xf32>
    %181 = arith.mulf %180, %179 : vector<8x128xf32>
    %182 = math.tanh %181 : vector<8x128xf32>
    %cst_77 = arith.constant 5.000000e-01 : f32
    %183 = vector.broadcast %cst_77 : f32 to vector<8x128xf32>
    %184 = arith.mulf %183, %182 : vector<8x128xf32>
    %cst_78 = arith.constant 5.000000e-01 : f32
    %185 = vector.broadcast %cst_78 : f32 to vector<8x128xf32>
    %186 = arith.addf %184, %185 : vector<8x128xf32>
    %187 = vector.extract_strided_slice %170 {offsets = [0, 256], sizes = [8, 128], strides = [1, 1]} : vector<8x512xf32> to vector<8x128xf32>
    %188 = math.tanh %187 : vector<8x128xf32>
    %189 = vector.extract_strided_slice %170 {offsets = [0, 384], sizes = [8, 128], strides = [1, 1]} : vector<8x512xf32> to vector<8x128xf32>
    %cst_79 = arith.constant 5.000000e-01 : f32
    %190 = vector.broadcast %cst_79 : f32 to vector<8x128xf32>
    %191 = arith.mulf %190, %189 : vector<8x128xf32>
    %192 = math.tanh %191 : vector<8x128xf32>
    %cst_80 = arith.constant 5.000000e-01 : f32
    %193 = vector.broadcast %cst_80 : f32 to vector<8x128xf32>
    %194 = arith.mulf %193, %192 : vector<8x128xf32>
    %cst_81 = arith.constant 5.000000e-01 : f32
    %195 = vector.broadcast %cst_81 : f32 to vector<8x128xf32>
    %196 = arith.addf %194, %195 : vector<8x128xf32>
    %197 = arith.mulf %186, %150 : vector<8x128xf32>
    %198 = arith.mulf %178, %188 : vector<8x128xf32>
    %199 = arith.addf %197, %198 : vector<8x128xf32>
    %200 = math.tanh %199 : vector<8x128xf32>
    %201 = arith.mulf %196, %200 : vector<8x128xf32>
    %202 = arith.addi %14, %c3_i32 : i32
    %203 = vector.broadcast %202 : i32 to vector<8x1xi32>
    %204 = arith.cmpi sgt, %13, %203 : vector<8x1xi32>
    %cst_82 = arith.constant 0.000000e+00 : f32
    %205 = vector.shape_cast %204 : vector<8x1xi1> to vector<8x1xi1>
    %206 = vector.broadcast %205 : vector<8x1xi1> to vector<8x128xi1>
    %207 = vector.broadcast %cst_82 : f32 to vector<8x128xf32>
    %208 = arith.select %206, %201, %207 : vector<8x128xi1>, vector<8x128xf32>
    %209 = arith.index_cast %c3_i32 : i32 to index
    %c0_83 = arith.constant 0 : index
    %c0_84 = arith.constant 0 : index
    %210 = vector.load %arg8[%209, %c0_83, %c0_84] : memref<8x8x128xf32, #tpu.memory_space<vmem>>, vector<1x8x128xf32>
    %211 = vector.shape_cast %210 : vector<1x8x128xf32> to vector<8x128xf32>
    %212 = vector.shape_cast %208 : vector<8x128xf32> to vector<1x8x128xf32>
    tpu.vector_store %arg8[%209, %c0_83, %c0_84], %212 {strides = array<i32>} : memref<8x8x128xf32, #tpu.memory_space<vmem>>, vector<1x8x128xf32>,
    %c4_i32 = arith.constant 4 : i32
    %213 = arith.index_cast %c4_i32 : i32 to index
    %c0_85 = arith.constant 0 : index
    %c0_86 = arith.constant 0 : index
    %214 = vector.load %arg9[%213, %c0_85, %c0_86] : memref<8x8x512xf32, #tpu.memory_space<vmem>>, vector<1x8x512xf32>
    %215 = vector.shape_cast %214 : vector<1x8x512xf32> to vector<8x512xf32>
    %216 = arith.truncf %201 : vector<8x128xf32> to vector<8x128xbf16>
    %c0_87 = arith.constant 0 : index
    %c0_88 = arith.constant 0 : index
    %217 = vector.load %arg5[%c0_87, %c0_88] : memref<128x512xbf16, #tpu.memory_space<vmem>>, vector<128x512xbf16>
    %cst_89 = arith.constant dense<0.000000e+00> : vector<8x512xf32>
    %218 = tpu.matmul %216, %217, %cst_89 {dimension_numbers = #tpu.dot_dimension_numbers<[1], [0], [0], [1], [0, 0, 1, 1], [], []>} : vector<8x128xbf16>, vector<128x512xbf16>, vector<8x512xf32> -> vector<8x512xf32>
    %219 = arith.addf %215, %218 : vector<8x512xf32>
    %220 = vector.extract_strided_slice %219 {offsets = [0, 0], sizes = [8, 128], strides = [1, 1]} : vector<8x512xf32> to vector<8x128xf32>
    %cst_90 = arith.constant 5.000000e-01 : f32
    %221 = vector.broadcast %cst_90 : f32 to vector<8x128xf32>
    %222 = arith.mulf %221, %220 : vector<8x128xf32>
    %223 = math.tanh %222 : vector<8x128xf32>
    %cst_91 = arith.constant 5.000000e-01 : f32
    %224 = vector.broadcast %cst_91 : f32 to vector<8x128xf32>
    %225 = arith.mulf %224, %223 : vector<8x128xf32>
    %cst_92 = arith.constant 5.000000e-01 : f32
    %226 = vector.broadcast %cst_92 : f32 to vector<8x128xf32>
    %227 = arith.addf %225, %226 : vector<8x128xf32>
    %228 = vector.extract_strided_slice %219 {offsets = [0, 128], sizes = [8, 128], strides = [1, 1]} : vector<8x512xf32> to vector<8x128xf32>
    %cst_93 = arith.constant 5.000000e-01 : f32
    %229 = vector.broadcast %cst_93 : f32 to vector<8x128xf32>
    %230 = arith.mulf %229, %228 : vector<8x128xf32>
    %231 = math.tanh %230 : vector<8x128xf32>
    %cst_94 = arith.constant 5.000000e-01 : f32
    %232 = vector.broadcast %cst_94 : f32 to vector<8x128xf32>
    %233 = arith.mulf %232, %231 : vector<8x128xf32>
    %cst_95 = arith.constant 5.000000e-01 : f32
    %234 = vector.broadcast %cst_95 : f32 to vector<8x128xf32>
    %235 = arith.addf %233, %234 : vector<8x128xf32>
    %236 = vector.extract_strided_slice %219 {offsets = [0, 256], sizes = [8, 128], strides = [1, 1]} : vector<8x512xf32> to vector<8x128xf32>
    %237 = math.tanh %236 : vector<8x128xf32>
    %238 = vector.extract_strided_slice %219 {offsets = [0, 384], sizes = [8, 128], strides = [1, 1]} : vector<8x512xf32> to vector<8x128xf32>
    %cst_96 = arith.constant 5.000000e-01 : f32
    %239 = vector.broadcast %cst_96 : f32 to vector<8x128xf32>
    %240 = arith.mulf %239, %238 : vector<8x128xf32>
    %241 = math.tanh %240 : vector<8x128xf32>
    %cst_97 = arith.constant 5.000000e-01 : f32
    %242 = vector.broadcast %cst_97 : f32 to vector<8x128xf32>
    %243 = arith.mulf %242, %241 : vector<8x128xf32>
    %cst_98 = arith.constant 5.000000e-01 : f32
    %244 = vector.broadcast %cst_98 : f32 to vector<8x128xf32>
    %245 = arith.addf %243, %244 : vector<8x128xf32>
    %246 = arith.mulf %235, %199 : vector<8x128xf32>
    %247 = arith.mulf %227, %237 : vector<8x128xf32>
    %248 = arith.addf %246, %247 : vector<8x128xf32>
    %249 = math.tanh %248 : vector<8x128xf32>
    %250 = arith.mulf %245, %249 : vector<8x128xf32>
    %251 = arith.addi %14, %c4_i32 : i32
    %252 = vector.broadcast %251 : i32 to vector<8x1xi32>
    %253 = arith.cmpi sgt, %13, %252 : vector<8x1xi32>
    %cst_99 = arith.constant 0.000000e+00 : f32
    %254 = vector.shape_cast %253 : vector<8x1xi1> to vector<8x1xi1>
    %255 = vector.broadcast %254 : vector<8x1xi1> to vector<8x128xi1>
    %256 = vector.broadcast %cst_99 : f32 to vector<8x128xf32>
    %257 = arith.select %255, %250, %256 : vector<8x128xi1>, vector<8x128xf32>
    %258 = arith.index_cast %c4_i32 : i32 to index
    %c0_100 = arith.constant 0 : index
    %c0_101 = arith.constant 0 : index
    %259 = vector.load %arg8[%258, %c0_100, %c0_101] : memref<8x8x128xf32, #tpu.memory_space<vmem>>, vector<1x8x128xf32>
    %260 = vector.shape_cast %259 : vector<1x8x128xf32> to vector<8x128xf32>
    %261 = vector.shape_cast %257 : vector<8x128xf32> to vector<1x8x128xf32>
    tpu.vector_store %arg8[%258, %c0_100, %c0_101], %261 {strides = array<i32>} : memref<8x8x128xf32, #tpu.memory_space<vmem>>, vector<1x8x128xf32>,
    %c5_i32 = arith.constant 5 : i32
    %262 = arith.index_cast %c5_i32 : i32 to index
    %c0_102 = arith.constant 0 : index
    %c0_103 = arith.constant 0 : index
    %263 = vector.load %arg9[%262, %c0_102, %c0_103] : memref<8x8x512xf32, #tpu.memory_space<vmem>>, vector<1x8x512xf32>
    %264 = vector.shape_cast %263 : vector<1x8x512xf32> to vector<8x512xf32>
    %265 = arith.truncf %250 : vector<8x128xf32> to vector<8x128xbf16>
    %c0_104 = arith.constant 0 : index
    %c0_105 = arith.constant 0 : index
    %266 = vector.load %arg5[%c0_104, %c0_105] : memref<128x512xbf16, #tpu.memory_space<vmem>>, vector<128x512xbf16>
    %cst_106 = arith.constant dense<0.000000e+00> : vector<8x512xf32>
    %267 = tpu.matmul %265, %266, %cst_106 {dimension_numbers = #tpu.dot_dimension_numbers<[1], [0], [0], [1], [0, 0, 1, 1], [], []>} : vector<8x128xbf16>, vector<128x512xbf16>, vector<8x512xf32> -> vector<8x512xf32>
    %268 = arith.addf %264, %267 : vector<8x512xf32>
    %269 = vector.extract_strided_slice %268 {offsets = [0, 0], sizes = [8, 128], strides = [1, 1]} : vector<8x512xf32> to vector<8x128xf32>
    %cst_107 = arith.constant 5.000000e-01 : f32
    %270 = vector.broadcast %cst_107 : f32 to vector<8x128xf32>
    %271 = arith.mulf %270, %269 : vector<8x128xf32>
    %272 = math.tanh %271 : vector<8x128xf32>
    %cst_108 = arith.constant 5.000000e-01 : f32
    %273 = vector.broadcast %cst_108 : f32 to vector<8x128xf32>
    %274 = arith.mulf %273, %272 : vector<8x128xf32>
    %cst_109 = arith.constant 5.000000e-01 : f32
    %275 = vector.broadcast %cst_109 : f32 to vector<8x128xf32>
    %276 = arith.addf %274, %275 : vector<8x128xf32>
    %277 = vector.extract_strided_slice %268 {offsets = [0, 128], sizes = [8, 128], strides = [1, 1]} : vector<8x512xf32> to vector<8x128xf32>
    %cst_110 = arith.constant 5.000000e-01 : f32
    %278 = vector.broadcast %cst_110 : f32 to vector<8x128xf32>
    %279 = arith.mulf %278, %277 : vector<8x128xf32>
    %280 = math.tanh %279 : vector<8x128xf32>
    %cst_111 = arith.constant 5.000000e-01 : f32
    %281 = vector.broadcast %cst_111 : f32 to vector<8x128xf32>
    %282 = arith.mulf %281, %280 : vector<8x128xf32>
    %cst_112 = arith.constant 5.000000e-01 : f32
    %283 = vector.broadcast %cst_112 : f32 to vector<8x128xf32>
    %284 = arith.addf %282, %283 : vector<8x128xf32>
    %285 = vector.extract_strided_slice %268 {offsets = [0, 256], sizes = [8, 128], strides = [1, 1]} : vector<8x512xf32> to vector<8x128xf32>
    %286 = math.tanh %285 : vector<8x128xf32>
    %287 = vector.extract_strided_slice %268 {offsets = [0, 384], sizes = [8, 128], strides = [1, 1]} : vector<8x512xf32> to vector<8x128xf32>
    %cst_113 = arith.constant 5.000000e-01 : f32
    %288 = vector.broadcast %cst_113 : f32 to vector<8x128xf32>
    %289 = arith.mulf %288, %287 : vector<8x128xf32>
    %290 = math.tanh %289 : vector<8x128xf32>
    %cst_114 = arith.constant 5.000000e-01 : f32
    %291 = vector.broadcast %cst_114 : f32 to vector<8x128xf32>
    %292 = arith.mulf %291, %290 : vector<8x128xf32>
    %cst_115 = arith.constant 5.000000e-01 : f32
    %293 = vector.broadcast %cst_115 : f32 to vector<8x128xf32>
    %294 = arith.addf %292, %293 : vector<8x128xf32>
    %295 = arith.mulf %284, %248 : vector<8x128xf32>
    %296 = arith.mulf %276, %286 : vector<8x128xf32>
    %297 = arith.addf %295, %296 : vector<8x128xf32>
    %298 = math.tanh %297 : vector<8x128xf32>
    %299 = arith.mulf %294, %298 : vector<8x128xf32>
    %300 = arith.addi %14, %c5_i32 : i32
    %301 = vector.broadcast %300 : i32 to vector<8x1xi32>
    %302 = arith.cmpi sgt, %13, %301 : vector<8x1xi32>
    %cst_116 = arith.constant 0.000000e+00 : f32
    %303 = vector.shape_cast %302 : vector<8x1xi1> to vector<8x1xi1>
    %304 = vector.broadcast %303 : vector<8x1xi1> to vector<8x128xi1>
    %305 = vector.broadcast %cst_116 : f32 to vector<8x128xf32>
    %306 = arith.select %304, %299, %305 : vector<8x128xi1>, vector<8x128xf32>
    %307 = arith.index_cast %c5_i32 : i32 to index
    %c0_117 = arith.constant 0 : index
    %c0_118 = arith.constant 0 : index
    %308 = vector.load %arg8[%307, %c0_117, %c0_118] : memref<8x8x128xf32, #tpu.memory_space<vmem>>, vector<1x8x128xf32>
    %309 = vector.shape_cast %308 : vector<1x8x128xf32> to vector<8x128xf32>
    %310 = vector.shape_cast %306 : vector<8x128xf32> to vector<1x8x128xf32>
    tpu.vector_store %arg8[%307, %c0_117, %c0_118], %310 {strides = array<i32>} : memref<8x8x128xf32, #tpu.memory_space<vmem>>, vector<1x8x128xf32>,
    %c6_i32 = arith.constant 6 : i32
    %311 = arith.index_cast %c6_i32 : i32 to index
    %c0_119 = arith.constant 0 : index
    %c0_120 = arith.constant 0 : index
    %312 = vector.load %arg9[%311, %c0_119, %c0_120] : memref<8x8x512xf32, #tpu.memory_space<vmem>>, vector<1x8x512xf32>
    %313 = vector.shape_cast %312 : vector<1x8x512xf32> to vector<8x512xf32>
    %314 = arith.truncf %299 : vector<8x128xf32> to vector<8x128xbf16>
    %c0_121 = arith.constant 0 : index
    %c0_122 = arith.constant 0 : index
    %315 = vector.load %arg5[%c0_121, %c0_122] : memref<128x512xbf16, #tpu.memory_space<vmem>>, vector<128x512xbf16>
    %cst_123 = arith.constant dense<0.000000e+00> : vector<8x512xf32>
    %316 = tpu.matmul %314, %315, %cst_123 {dimension_numbers = #tpu.dot_dimension_numbers<[1], [0], [0], [1], [0, 0, 1, 1], [], []>} : vector<8x128xbf16>, vector<128x512xbf16>, vector<8x512xf32> -> vector<8x512xf32>
    %317 = arith.addf %313, %316 : vector<8x512xf32>
    %318 = vector.extract_strided_slice %317 {offsets = [0, 0], sizes = [8, 128], strides = [1, 1]} : vector<8x512xf32> to vector<8x128xf32>
    %cst_124 = arith.constant 5.000000e-01 : f32
    %319 = vector.broadcast %cst_124 : f32 to vector<8x128xf32>
    %320 = arith.mulf %319, %318 : vector<8x128xf32>
    %321 = math.tanh %320 : vector<8x128xf32>
    %cst_125 = arith.constant 5.000000e-01 : f32
    %322 = vector.broadcast %cst_125 : f32 to vector<8x128xf32>
    %323 = arith.mulf %322, %321 : vector<8x128xf32>
    %cst_126 = arith.constant 5.000000e-01 : f32
    %324 = vector.broadcast %cst_126 : f32 to vector<8x128xf32>
    %325 = arith.addf %323, %324 : vector<8x128xf32>
    %326 = vector.extract_strided_slice %317 {offsets = [0, 128], sizes = [8, 128], strides = [1, 1]} : vector<8x512xf32> to vector<8x128xf32>
    %cst_127 = arith.constant 5.000000e-01 : f32
    %327 = vector.broadcast %cst_127 : f32 to vector<8x128xf32>
    %328 = arith.mulf %327, %326 : vector<8x128xf32>
    %329 = math.tanh %328 : vector<8x128xf32>
    %cst_128 = arith.constant 5.000000e-01 : f32
    %330 = vector.broadcast %cst_128 : f32 to vector<8x128xf32>
    %331 = arith.mulf %330, %329 : vector<8x128xf32>
    %cst_129 = arith.constant 5.000000e-01 : f32
    %332 = vector.broadcast %cst_129 : f32 to vector<8x128xf32>
    %333 = arith.addf %331, %332 : vector<8x128xf32>
    %334 = vector.extract_strided_slice %317 {offsets = [0, 256], sizes = [8, 128], strides = [1, 1]} : vector<8x512xf32> to vector<8x128xf32>
    %335 = math.tanh %334 : vector<8x128xf32>
    %336 = vector.extract_strided_slice %317 {offsets = [0, 384], sizes = [8, 128], strides = [1, 1]} : vector<8x512xf32> to vector<8x128xf32>
    %cst_130 = arith.constant 5.000000e-01 : f32
    %337 = vector.broadcast %cst_130 : f32 to vector<8x128xf32>
    %338 = arith.mulf %337, %336 : vector<8x128xf32>
    %339 = math.tanh %338 : vector<8x128xf32>
    %cst_131 = arith.constant 5.000000e-01 : f32
    %340 = vector.broadcast %cst_131 : f32 to vector<8x128xf32>
    %341 = arith.mulf %340, %339 : vector<8x128xf32>
    %cst_132 = arith.constant 5.000000e-01 : f32
    %342 = vector.broadcast %cst_132 : f32 to vector<8x128xf32>
    %343 = arith.addf %341, %342 : vector<8x128xf32>
    %344 = arith.mulf %333, %297 : vector<8x128xf32>
    %345 = arith.mulf %325, %335 : vector<8x128xf32>
    %346 = arith.addf %344, %345 : vector<8x128xf32>
    %347 = math.tanh %346 : vector<8x128xf32>
    %348 = arith.mulf %343, %347 : vector<8x128xf32>
    %349 = arith.addi %14, %c6_i32 : i32
    %350 = vector.broadcast %349 : i32 to vector<8x1xi32>
    %351 = arith.cmpi sgt, %13, %350 : vector<8x1xi32>
    %cst_133 = arith.constant 0.000000e+00 : f32
    %352 = vector.shape_cast %351 : vector<8x1xi1> to vector<8x1xi1>
    %353 = vector.broadcast %352 : vector<8x1xi1> to vector<8x128xi1>
    %354 = vector.broadcast %cst_133 : f32 to vector<8x128xf32>
    %355 = arith.select %353, %348, %354 : vector<8x128xi1>, vector<8x128xf32>
    %356 = arith.index_cast %c6_i32 : i32 to index
    %c0_134 = arith.constant 0 : index
    %c0_135 = arith.constant 0 : index
    %357 = vector.load %arg8[%356, %c0_134, %c0_135] : memref<8x8x128xf32, #tpu.memory_space<vmem>>, vector<1x8x128xf32>
    %358 = vector.shape_cast %357 : vector<1x8x128xf32> to vector<8x128xf32>
    %359 = vector.shape_cast %355 : vector<8x128xf32> to vector<1x8x128xf32>
    tpu.vector_store %arg8[%356, %c0_134, %c0_135], %359 {strides = array<i32>} : memref<8x8x128xf32, #tpu.memory_space<vmem>>, vector<1x8x128xf32>,
    %c7_i32 = arith.constant 7 : i32
    %360 = arith.index_cast %c7_i32 : i32 to index
    %c0_136 = arith.constant 0 : index
    %c0_137 = arith.constant 0 : index
    %361 = vector.load %arg9[%360, %c0_136, %c0_137] : memref<8x8x512xf32, #tpu.memory_space<vmem>>, vector<1x8x512xf32>
    %362 = vector.shape_cast %361 : vector<1x8x512xf32> to vector<8x512xf32>
    %363 = arith.truncf %348 : vector<8x128xf32> to vector<8x128xbf16>
    %c0_138 = arith.constant 0 : index
    %c0_139 = arith.constant 0 : index
    %364 = vector.load %arg5[%c0_138, %c0_139] : memref<128x512xbf16, #tpu.memory_space<vmem>>, vector<128x512xbf16>
    %cst_140 = arith.constant dense<0.000000e+00> : vector<8x512xf32>
    %365 = tpu.matmul %363, %364, %cst_140 {dimension_numbers = #tpu.dot_dimension_numbers<[1], [0], [0], [1], [0, 0, 1, 1], [], []>} : vector<8x128xbf16>, vector<128x512xbf16>, vector<8x512xf32> -> vector<8x512xf32>
    %366 = arith.addf %362, %365 : vector<8x512xf32>
    %367 = vector.extract_strided_slice %366 {offsets = [0, 0], sizes = [8, 128], strides = [1, 1]} : vector<8x512xf32> to vector<8x128xf32>
    %cst_141 = arith.constant 5.000000e-01 : f32
    %368 = vector.broadcast %cst_141 : f32 to vector<8x128xf32>
    %369 = arith.mulf %368, %367 : vector<8x128xf32>
    %370 = math.tanh %369 : vector<8x128xf32>
    %cst_142 = arith.constant 5.000000e-01 : f32
    %371 = vector.broadcast %cst_142 : f32 to vector<8x128xf32>
    %372 = arith.mulf %371, %370 : vector<8x128xf32>
    %cst_143 = arith.constant 5.000000e-01 : f32
    %373 = vector.broadcast %cst_143 : f32 to vector<8x128xf32>
    %374 = arith.addf %372, %373 : vector<8x128xf32>
    %375 = vector.extract_strided_slice %366 {offsets = [0, 128], sizes = [8, 128], strides = [1, 1]} : vector<8x512xf32> to vector<8x128xf32>
    %cst_144 = arith.constant 5.000000e-01 : f32
    %376 = vector.broadcast %cst_144 : f32 to vector<8x128xf32>
    %377 = arith.mulf %376, %375 : vector<8x128xf32>
    %378 = math.tanh %377 : vector<8x128xf32>
    %cst_145 = arith.constant 5.000000e-01 : f32
    %379 = vector.broadcast %cst_145 : f32 to vector<8x128xf32>
    %380 = arith.mulf %379, %378 : vector<8x128xf32>
    %cst_146 = arith.constant 5.000000e-01 : f32
    %381 = vector.broadcast %cst_146 : f32 to vector<8x128xf32>
    %382 = arith.addf %380, %381 : vector<8x128xf32>
    %383 = vector.extract_strided_slice %366 {offsets = [0, 256], sizes = [8, 128], strides = [1, 1]} : vector<8x512xf32> to vector<8x128xf32>
    %384 = math.tanh %383 : vector<8x128xf32>
    %385 = vector.extract_strided_slice %366 {offsets = [0, 384], sizes = [8, 128], strides = [1, 1]} : vector<8x512xf32> to vector<8x128xf32>
    %cst_147 = arith.constant 5.000000e-01 : f32
    %386 = vector.broadcast %cst_147 : f32 to vector<8x128xf32>
    %387 = arith.mulf %386, %385 : vector<8x128xf32>
    %388 = math.tanh %387 : vector<8x128xf32>
    %cst_148 = arith.constant 5.000000e-01 : f32
    %389 = vector.broadcast %cst_148 : f32 to vector<8x128xf32>
    %390 = arith.mulf %389, %388 : vector<8x128xf32>
    %cst_149 = arith.constant 5.000000e-01 : f32
    %391 = vector.broadcast %cst_149 : f32 to vector<8x128xf32>
    %392 = arith.addf %390, %391 : vector<8x128xf32>
    %393 = arith.mulf %382, %346 : vector<8x128xf32>
    %394 = arith.mulf %374, %384 : vector<8x128xf32>
    %395 = arith.addf %393, %394 : vector<8x128xf32>
    %396 = math.tanh %395 : vector<8x128xf32>
    %397 = arith.mulf %392, %396 : vector<8x128xf32>
    %398 = arith.addi %14, %c7_i32 : i32
    %399 = vector.broadcast %398 : i32 to vector<8x1xi32>
    %400 = arith.cmpi sgt, %13, %399 : vector<8x1xi32>
    %cst_150 = arith.constant 0.000000e+00 : f32
    %401 = vector.shape_cast %400 : vector<8x1xi1> to vector<8x1xi1>
    %402 = vector.broadcast %401 : vector<8x1xi1> to vector<8x128xi1>
    %403 = vector.broadcast %cst_150 : f32 to vector<8x128xf32>
    %404 = arith.select %402, %397, %403 : vector<8x128xi1>, vector<8x128xf32>
    %405 = arith.index_cast %c7_i32 : i32 to index
    %c0_151 = arith.constant 0 : index
    %c0_152 = arith.constant 0 : index
    %406 = vector.load %arg8[%405, %c0_151, %c0_152] : memref<8x8x128xf32, #tpu.memory_space<vmem>>, vector<1x8x128xf32>
    %407 = vector.shape_cast %406 : vector<1x8x128xf32> to vector<8x128xf32>
    %408 = vector.shape_cast %404 : vector<8x128xf32> to vector<1x8x128xf32>
    tpu.vector_store %arg8[%405, %c0_151, %c0_152], %408 {strides = array<i32>} : memref<8x8x128xf32, #tpu.memory_space<vmem>>, vector<1x8x128xf32>,
    %c8_i32_153 = arith.constant 8 : i32
    %c0_154 = arith.constant 0 : index
    %c0_155 = arith.constant 0 : index
    %409 = vector.load %arg10[%c0_154, %c0_155] : memref<8x128xf32, #tpu.memory_space<vmem>>, vector<8x128xf32>
    tpu.vector_store %arg10[%c0_154, %c0_155], %397 {strides = array<i32>} : memref<8x128xf32, #tpu.memory_space<vmem>>, vector<8x128xf32>,
    %c0_156 = arith.constant 0 : index
    %c0_157 = arith.constant 0 : index
    %410 = vector.load %arg11[%c0_156, %c0_157] : memref<8x128xf32, #tpu.memory_space<vmem>>, vector<8x128xf32>
    tpu.vector_store %arg11[%c0_156, %c0_157], %395 {strides = array<i32>} : memref<8x128xf32, #tpu.memory_space<vmem>>, vector<8x128xf32>,
    return
  }
  func.func @transform_0(%arg0: i32) -> (i32, i32, i32) {
    %c0_i32 = arith.constant 0 : i32
    %c0_i32_0 = arith.constant 0 : i32
    %c0_i32_1 = arith.constant 0 : i32
    return %arg0, %c0_i32, %c0_i32_0 : i32, i32, i32
  }
  func.func @transform_1(%arg0: i32) -> (i32, i32) {
    %c0_i32 = arith.constant 0 : i32
    %c0_i32_0 = arith.constant 0 : i32
    %c0_i32_1 = arith.constant 0 : i32
    return %c0_i32, %c0_i32_0 : i32, i32
  }
  func.func @transform_2(%arg0: i32) -> (i32, i32) {
    %c0_i32 = arith.constant 0 : i32
    %c0_i32_0 = arith.constant 0 : i32
    %c0_i32_1 = arith.constant 0 : i32
    return %c0_i32, %c0_i32_0 : i32, i32
  }
  func.func @transform_3(%arg0: i32) -> (i32, i32) {
    %c0_i32 = arith.constant 0 : i32
    %c0_i32_0 = arith.constant 0 : i32
    %c0_i32_1 = arith.constant 0 : i32
    return %c0_i32, %c0_i32_0 : i32, i32
  }
  func.func @transform_4(%arg0: i32) -> (i32, i32) {
    %c0_i32 = arith.constant 0 : i32
    %c0_i32_0 = arith.constant 0 : i32
    %c0_i32_1 = arith.constant 0 : i32
    return %c0_i32, %c0_i32_0 : i32, i32
  }
  func.func @transform_5(%arg0: i32) -> (i32, i32) {
    %c0_i32 = arith.constant 0 : i32
    %c0_i32_0 = arith.constant 0 : i32
    %c0_i32_1 = arith.constant 0 : i32
    return %c0_i32, %c0_i32_0 : i32, i32
  }
  func.func @transform_6(%arg0: i32) -> (i32, i32) {
    %c0_i32 = arith.constant 0 : i32
    %c0_i32_0 = arith.constant 0 : i32
    %c0_i32_1 = arith.constant 0 : i32
    return %c0_i32, %c0_i32_0 : i32, i32
  }
  func.func @transform_7(%arg0: i32) -> (i32, i32, i32) {
    %c0_i32 = arith.constant 0 : i32
    %c0_i32_0 = arith.constant 0 : i32
    %c0_i32_1 = arith.constant 0 : i32
    return %arg0, %c0_i32, %c0_i32_0 : i32, i32, i32
  }
}

module attributes {stable_mosaic.version = 11 : i64} {
  func.func @_lstm_chunk_kernel(%arg0: i32, %arg1: memref<8x8x128xbf16, #tpu.memory_space<vmem>>, %arg2: memref<8x128xf32, #tpu.memory_space<vmem>>, %arg3: memref<8x128xf32, #tpu.memory_space<vmem>>, %arg4: memref<128x512xbf16, #tpu.memory_space<vmem>>, %arg5: memref<128x512xbf16, #tpu.memory_space<vmem>>, %arg6: memref<1x512xf32, #tpu.memory_space<vmem>>, %arg7: memref<8x1xi32, #tpu.memory_space<vmem>>, %arg8: memref<8x8x128xf32, #tpu.memory_space<vmem>>, %arg9: memref<8x8x512xf32, #tpu.memory_space<vmem>>, %arg10: memref<8x128xf32, #tpu.memory_space<vmem>>, %arg11: memref<8x128xf32, #tpu.memory_space<vmem>>) attributes {dimension_semantics = [#tpu.dimension_semantics<arbitrary>], iteration_bounds = array<i64: 1>, scalar_prefetch = 0 : i64, scratch_operands = 3 : i64, tpu.core_type = #tpu.core_type<tc>, window_params = [{transform_indices = @transform_0, window_bounds = array<i64: 8, 8, 128>}, {pipeline_mode = #tpu.pipeline_mode<synchronous>, transform_indices = @transform_1, window_bounds = array<i64: 8, 128>}, {pipeline_mode = #tpu.pipeline_mode<synchronous>, transform_indices = @transform_2, window_bounds = array<i64: 8, 128>}, {pipeline_mode = #tpu.pipeline_mode<synchronous>, transform_indices = @transform_3, window_bounds = array<i64: 128, 512>}, {pipeline_mode = #tpu.pipeline_mode<synchronous>, transform_indices = @transform_4, window_bounds = array<i64: 128, 512>}, {pipeline_mode = #tpu.pipeline_mode<synchronous>, transform_indices = @transform_5, window_bounds = array<i64: 1, 512>}, {pipeline_mode = #tpu.pipeline_mode<synchronous>, transform_indices = @transform_6, window_bounds = array<i64: 8, 1>}, {transform_indices = @transform_7, window_bounds = array<i64: 8, 8, 128>}]} {
    %c0_i32 = arith.constant 0 : i32
    %0 = arith.cmpi eq, %arg0, %c0_i32 : i32
    %1 = arith.extui %0 : i1 to i32
    %c0_i32_0 = arith.constant 0 : i32
    %2 = arith.cmpi ne, %1, %c0_i32_0 : i32
    scf.if %2 {
      %c0_158 = arith.constant 0 : index
      %c0_159 = arith.constant 0 : index
      %411 = vector.load %arg2[%c0_158, %c0_159] : memref<8x128xf32, #tpu.memory_space<vmem>>, vector<8x128xf32>
      %c0_160 = arith.constant 0 : index
      %c0_161 = arith.constant 0 : index
      %412 = vector.load %arg10[%c0_160, %c0_161] : memref<8x128xf32, #tpu.memory_space<vmem>>, vector<8x128xf32>
      tpu.vector_store %arg10[%c0_160, %c0_161], %411 {strides = array<i32>} : memref<8x128xf32, #tpu.memory_space<vmem>>, vector<8x128xf32>,
      %c0_162 = arith.constant 0 : index
      %c0_163 = arith.constant 0 : index
      %413 = vector.load %arg3[%c0_162, %c0_163] : memref<8x128xf32, #tpu.memory_space<vmem>>, vector<8x128xf32>
      %c0_164 = arith.constant 0 : index
      %c0_165 = arith.constant 0 : index
      %414 = vector.load %arg11[%c0_164, %c0_165] : memref<8x128xf32, #tpu.memory_space<vmem>>, vector<8x128xf32>
      tpu.vector_store %arg11[%c0_164, %c0_165], %413 {strides = array<i32>} : memref<8x128xf32, #tpu.memory_space<vmem>>, vector<8x128xf32>,
    } else {
    }
    %c0 = arith.constant 0 : index
    %c0_1 = arith.constant 0 : index
    %c0_2 = arith.constant 0 : index
    %3 = vector.load %arg1[%c0, %c0_1, %c0_2] : memref<8x8x128xbf16, #tpu.memory_space<vmem>>, vector<8x8x128xbf16>
    %4 = vector.shape_cast %3 : vector<8x8x128xbf16> to vector<64x128xbf16>
    %c0_3 = arith.constant 0 : index
    %c0_4 = arith.constant 0 : index
    %5 = vector.load %arg4[%c0_3, %c0_4] : memref<128x512xbf16, #tpu.memory_space<vmem>>, vector<128x512xbf16>
    %cst = arith.constant dense<0.000000e+00> : vector<64x512xf32>
    %6 = tpu.matmul %4, %5, %cst {dimension_numbers = #tpu.dot_dimension_numbers<[1], [0], [0], [1], [0, 0, 1, 1], [], []>} : vector<64x128xbf16>, vector<128x512xbf16>, vector<64x512xf32> -> vector<64x512xf32>
    %7 = vector.shape_cast %6 : vector<64x512xf32> to vector<8x8x512xf32>
    %c0_5 = arith.constant 0 : index
    %c0_6 = arith.constant 0 : index
    %8 = vector.load %arg6[%c0_5, %c0_6] : memref<1x512xf32, #tpu.memory_space<vmem>>, vector<1x512xf32>
    %9 = vector.shape_cast %8 : vector<1x512xf32> to vector<1x1x512xf32>
    %10 = vector.broadcast %9 : vector<1x1x512xf32> to vector<8x8x512xf32>
    %11 = arith.addf %7, %10 : vector<8x8x512xf32>
    %c0_7 = arith.constant 0 : index
    %c0_8 = arith.constant 0 : index
    %c0_9 = arith.constant 0 : index
    %12 = vector.load %arg9[%c0_7, %c0_8, %c0_9] : memref<8x8x512xf32, #tpu.memory_space<vmem>>, vector<8x8x512xf32>
    tpu.vector_store %arg9[%c0_7, %c0_8, %c0_9], %11 {strides = array<i32>} : memref<8x8x512xf32, #tpu.memory_space<vmem>>, vector<8x8x512xf32>,
    %c0_10 = arith.constant 0 : index
    %c0_11 = arith.constant 0 : index
    %13 = vector.load %arg7[%c0_10, %c0_11] : memref<8x1xi32, #tpu.memory_space<vmem>>, vector<8x1xi32>
    %c8_i32 = arith.constant 8 : i32
    %14 = arith.muli %arg0, %c8_i32 : i32
    %c0_12 = arith.constant 0 : index
    %c0_13 = arith.constant 0 : index
    %15 = vector.load %arg10[%c0_12, %c0_13] : memref<8x128xf32, #tpu.memory_space<vmem>>, vector<8x128xf32>
    %c0_14 = arith.constant 0 : index
    %c0_15 = arith.constant 0 : index
    %16 = vector.load %arg11[%c0_14, %c0_15] : memref<8x128xf32, #tpu.memory_space<vmem>>, vector<8x128xf32>
    %c0_i32_16 = arith.constant 0 : i32
    %17 = arith.index_cast %c0_i32_16 : i32 to index
    %c0_17 = arith.constant 0 : index
    %c0_18 = arith.constant 0 : index
    %18 = vector.load %arg9[%17, %c0_17, %c0_18] : memref<8x8x512xf32, #tpu.memory_space<vmem>>, vector<1x8x512xf32>
    %19 = vector.shape_cast %18 : vector<1x8x512xf32> to vector<8x512xf32>
    %20 = arith.truncf %15 : vector<8x128xf32> to vector<8x128xbf16>
    %c0_19 = arith.constant 0 : index
    %c0_20 = arith.constant 0 : index
    %21 = vector.load %arg5[%c0_19, %c0_20] : memref<128x512xbf16, #tpu.memory_space<vmem>>, vector<128x512xbf16>
    %cst_21 = arith.constant dense<0.000000e+00> : vector<8x512xf32>
    %22 = tpu.matmul %20, %21, %cst_21 {dimension_numbers = #tpu.dot_dimension_numbers<[1], [0], [0], [1], [0, 0, 1, 1], [], []>} : vector<8x128xbf16>, vector<128x512xbf16>, vector<8x512xf32> -> vector<8x512xf32>
    %23 = arith.addf %19, %22 : vector<8x512xf32>
    %24 = vector.extract_strided_slice %23 {offsets = [0, 0], sizes = [8, 128], strides = [1, 1]} : vector<8x512xf32> to vector<8x128xf32>
    %cst_22 = arith.constant 5.000000e-01 : f32
    %25 = vector.broadcast %cst_22 : f32 to vector<8x128xf32>
    %26 = arith.mulf %25, %24 : vector<8x128xf32>
    %27 = math.tanh %26 : vector<8x128xf32>
    %cst_23 = arith.constant 5.000000e-01 : f32
    %28 = vector.broadcast %cst_23 : f32 to vector<8x128xf32>
    %29 = arith.mulf %28, %27 : vector<8x128xf32>
    %cst_24 = arith.constant 5.000000e-01 : f32
    %30 = vector.broadcast %cst_24 : f32 to vector<8x128xf32>
    %31 = arith.addf %29, %30 : vector<8x128xf32>
    %32 = vector.extract_strided_slice %23 {offsets = [0, 128], sizes = [8, 128], strides = [1, 1]} : vector<8x512xf32> to vector<8x128xf32>
    %cst_25 = arith.constant 5.000000e-01 : f32
    %33 = vector.broadcast %cst_25 : f32 to vector<8x128xf32>
    %34 = arith.mulf %33, %32 : vector<8x128xf32>
    %35 = math.tanh %34 : vector<8x128xf32>
    %cst_26 = arith.constant 5.000000e-01 : f32
    %36 = vector.broadcast %cst_26 : f32 to vector<8x128xf32>
    %37 = arith.mulf %36, %35 : vector<8x128xf32>
    %cst_27 = arith.constant 5.000000e-01 : f32
    %38 = vector.broadcast %cst_27 : f32 to vector<8x128xf32>
    %39 = arith.addf %37, %38 : vector<8x128xf32>
    %40 = vector.extract_strided_slice %23 {offsets = [0, 256], sizes = [8, 128], strides = [1, 1]} : vector<8x512xf32> to vector<8x128xf32>
    %41 = math.tanh %40 : vector<8x128xf32>
    %42 = vector.extract_strided_slice %23 {offsets = [0, 384], sizes = [8, 128], strides = [1, 1]} : vector<8x512xf32> to vector<8x128xf32>
    %cst_28 = arith.constant 5.000000e-01 : f32
    %43 = vector.broadcast %cst_28 : f32 to vector<8x128xf32>
    %44 = arith.mulf %43, %42 : vector<8x128xf32>
    %45 = math.tanh %44 : vector<8x128xf32>
    %cst_29 = arith.constant 5.000000e-01 : f32
    %46 = vector.broadcast %cst_29 : f32 to vector<8x128xf32>
    %47 = arith.mulf %46, %45 : vector<8x128xf32>
    %cst_30 = arith.constant 5.000000e-01 : f32
    %48 = vector.broadcast %cst_30 : f32 to vector<8x128xf32>
    %49 = arith.addf %47, %48 : vector<8x128xf32>
    %50 = arith.mulf %39, %16 : vector<8x128xf32>
    %51 = arith.mulf %31, %41 : vector<8x128xf32>
    %52 = arith.addf %50, %51 : vector<8x128xf32>
    %53 = math.tanh %52 : vector<8x128xf32>
    %54 = arith.mulf %49, %53 : vector<8x128xf32>
    %55 = arith.addi %14, %c0_i32_16 : i32
    %56 = vector.broadcast %55 : i32 to vector<8x1xi32>
    %57 = arith.cmpi sgt, %13, %56 : vector<8x1xi32>
    %cst_31 = arith.constant 0.000000e+00 : f32
    %58 = vector.shape_cast %57 : vector<8x1xi1> to vector<8x1xi1>
    %59 = vector.broadcast %58 : vector<8x1xi1> to vector<8x128xi1>
    %60 = vector.broadcast %cst_31 : f32 to vector<8x128xf32>
    %61 = arith.select %59, %54, %60 : vector<8x128xi1>, vector<8x128xf32>
    %62 = arith.index_cast %c0_i32_16 : i32 to index
    %c0_32 = arith.constant 0 : index
    %c0_33 = arith.constant 0 : index
    %63 = vector.load %arg8[%62, %c0_32, %c0_33] : memref<8x8x128xf32, #tpu.memory_space<vmem>>, vector<1x8x128xf32>
    %64 = vector.shape_cast %63 : vector<1x8x128xf32> to vector<8x128xf32>
    %65 = vector.shape_cast %61 : vector<8x128xf32> to vector<1x8x128xf32>
    tpu.vector_store %arg8[%62, %c0_32, %c0_33], %65 {strides = array<i32>} : memref<8x8x128xf32, #tpu.memory_space<vmem>>, vector<1x8x128xf32>,
    %c1_i32 = arith.constant 1 : i32
    %66 = arith.index_cast %c1_i32 : i32 to index
    %c0_34 = arith.constant 0 : index
    %c0_35 = arith.constant 0 : index
    %67 = vector.load %arg9[%66, %c0_34, %c0_35] : memref<8x8x512xf32, #tpu.memory_space<vmem>>, vector<1x8x512xf32>
    %68 = vector.shape_cast %67 : vector<1x8x512xf32> to vector<8x512xf32>
    %69 = arith.truncf %54 : vector<8x128xf32> to vector<8x128xbf16>
    %c0_36 = arith.constant 0 : index
    %c0_37 = arith.constant 0 : index
    %70 = vector.load %arg5[%c0_36, %c0_37] : memref<128x512xbf16, #tpu.memory_space<vmem>>, vector<128x512xbf16>
    %cst_38 = arith.constant dense<0.000000e+00> : vector<8x512xf32>
    %71 = tpu.matmul %69, %70, %cst_38 {dimension_numbers = #tpu.dot_dimension_numbers<[1], [0], [0], [1], [0, 0, 1, 1], [], []>} : vector<8x128xbf16>, vector<128x512xbf16>, vector<8x512xf32> -> vector<8x512xf32>
    %72 = arith.addf %68, %71 : vector<8x512xf32>
    %73 = vector.extract_strided_slice %72 {offsets = [0, 0], sizes = [8, 128], strides = [1, 1]} : vector<8x512xf32> to vector<8x128xf32>
    %cst_39 = arith.constant 5.000000e-01 : f32
    %74 = vector.broadcast %cst_39 : f32 to vector<8x128xf32>
    %75 = arith.mulf %74, %73 : vector<8x128xf32>
    %76 = math.tanh %75 : vector<8x128xf32>
    %cst_40 = arith.constant 5.000000e-01 : f32
    %77 = vector.broadcast %cst_40 : f32 to vector<8x128xf32>
    %78 = arith.mulf %77, %76 : vector<8x128xf32>
    %cst_41 = arith.constant 5.000000e-01 : f32
    %79 = vector.broadcast %cst_41 : f32 to vector<8x128xf32>
    %80 = arith.addf %78, %79 : vector<8x128xf32>
    %81 = vector.extract_strided_slice %72 {offsets = [0, 128], sizes = [8, 128], strides = [1, 1]} : vector<8x512xf32> to vector<8x128xf32>
    %cst_42 = arith.constant 5.000000e-01 : f32
    %82 = vector.broadcast %cst_42 : f32 to vector<8x128xf32>
    %83 = arith.mulf %82, %81 : vector<8x128xf32>
    %84 = math.tanh %83 : vector<8x128xf32>
    %cst_43 = arith.constant 5.000000e-01 : f32
    %85 = vector.broadcast %cst_43 : f32 to vector<8x128xf32>
    %86 = arith.mulf %85, %84 : vector<8x128xf32>
    %cst_44 = arith.constant 5.000000e-01 : f32
    %87 = vector.broadcast %cst_44 : f32 to vector<8x128xf32>
    %88 = arith.addf %86, %87 : vector<8x128xf32>
    %89 = vector.extract_strided_slice %72 {offsets = [0, 256], sizes = [8, 128], strides = [1, 1]} : vector<8x512xf32> to vector<8x128xf32>
    %90 = math.tanh %89 : vector<8x128xf32>
    %91 = vector.extract_strided_slice %72 {offsets = [0, 384], sizes = [8, 128], strides = [1, 1]} : vector<8x512xf32> to vector<8x128xf32>
    %cst_45 = arith.constant 5.000000e-01 : f32
    %92 = vector.broadcast %cst_45 : f32 to vector<8x128xf32>
    %93 = arith.mulf %92, %91 : vector<8x128xf32>
    %94 = math.tanh %93 : vector<8x128xf32>
    %cst_46 = arith.constant 5.000000e-01 : f32
    %95 = vector.broadcast %cst_46 : f32 to vector<8x128xf32>
    %96 = arith.mulf %95, %94 : vector<8x128xf32>
    %cst_47 = arith.constant 5.000000e-01 : f32
    %97 = vector.broadcast %cst_47 : f32 to vector<8x128xf32>
    %98 = arith.addf %96, %97 : vector<8x128xf32>
    %99 = arith.mulf %88, %52 : vector<8x128xf32>
    %100 = arith.mulf %80, %90 : vector<8x128xf32>
    %101 = arith.addf %99, %100 : vector<8x128xf32>
    %102 = math.tanh %101 : vector<8x128xf32>
    %103 = arith.mulf %98, %102 : vector<8x128xf32>
    %104 = arith.addi %14, %c1_i32 : i32
    %105 = vector.broadcast %104 : i32 to vector<8x1xi32>
    %106 = arith.cmpi sgt, %13, %105 : vector<8x1xi32>
    %cst_48 = arith.constant 0.000000e+00 : f32
    %107 = vector.shape_cast %106 : vector<8x1xi1> to vector<8x1xi1>
    %108 = vector.broadcast %107 : vector<8x1xi1> to vector<8x128xi1>
    %109 = vector.broadcast %cst_48 : f32 to vector<8x128xf32>
    %110 = arith.select %108, %103, %109 : vector<8x128xi1>, vector<8x128xf32>
    %111 = arith.index_cast %c1_i32 : i32 to index
    %c0_49 = arith.constant 0 : index
    %c0_50 = arith.constant 0 : index
    %112 = vector.load %arg8[%111, %c0_49, %c0_50] : memref<8x8x128xf32, #tpu.memory_space<vmem>>, vector<1x8x128xf32>
    %113 = vector.shape_cast %112 : vector<1x8x128xf32> to vector<8x128xf32>
    %114 = vector.shape_cast %110 : vector<8x128xf32> to vector<1x8x128xf32>
    tpu.vector_store %arg8[%111, %c0_49, %c0_50], %114 {strides = array<i32>} : memref<8x8x128xf32, #tpu.memory_space<vmem>>, vector<1x8x128xf32>,
    %c2_i32 = arith.constant 2 : i32
    %115 = arith.index_cast %c2_i32 : i32 to index
    %c0_51 = arith.constant 0 : index
    %c0_52 = arith.constant 0 : index
    %116 = vector.load %arg9[%115, %c0_51, %c0_52] : memref<8x8x512xf32, #tpu.memory_space<vmem>>, vector<1x8x512xf32>
    %117 = vector.shape_cast %116 : vector<1x8x512xf32> to vector<8x512xf32>
    %118 = arith.truncf %103 : vector<8x128xf32> to vector<8x128xbf16>
    %c0_53 = arith.constant 0 : index
    %c0_54 = arith.constant 0 : index
    %119 = vector.load %arg5[%c0_53, %c0_54] : memref<128x512xbf16, #tpu.memory_space<vmem>>, vector<128x512xbf16>
    %cst_55 = arith.constant dense<0.000000e+00> : vector<8x512xf32>
    %120 = tpu.matmul %118, %119, %cst_55 {dimension_numbers = #tpu.dot_dimension_numbers<[1], [0], [0], [1], [0, 0, 1, 1], [], []>} : vector<8x128xbf16>, vector<128x512xbf16>, vector<8x512xf32> -> vector<8x512xf32>
    %121 = arith.addf %117, %120 : vector<8x512xf32>
    %122 = vector.extract_strided_slice %121 {offsets = [0, 0], sizes = [8, 128], strides = [1, 1]} : vector<8x512xf32> to vector<8x128xf32>
    %cst_56 = arith.constant 5.000000e-01 : f32
    %123 = vector.broadcast %cst_56 : f32 to vector<8x128xf32>
    %124 = arith.mulf %123, %122 : vector<8x128xf32>
    %125 = math.tanh %124 : vector<8x128xf32>
    %cst_57 = arith.constant 5.000000e-01 : f32
    %126 = vector.broadcast %cst_57 : f32 to vector<8x128xf32>
    %127 = arith.mulf %126, %125 : vector<8x128xf32>
    %cst_58 = arith.constant 5.000000e-01 : f32
    %128 = vector.broadcast %cst_58 : f32 to vector<8x128xf32>
    %129 = arith.addf %127, %128 : vector<8x128xf32>
    %130 = vector.extract_strided_slice %121 {offsets = [0, 128], sizes = [8, 128], strides = [1, 1]} : vector<8x512xf32> to vector<8x128xf32>
    %cst_59 = arith.constant 5.000000e-01 : f32
    %131 = vector.broadcast %cst_59 : f32 to vector<8x128xf32>
    %132 = arith.mulf %131, %130 : vector<8x128xf32>
    %133 = math.tanh %132 : vector<8x128xf32>
    %cst_60 = arith.constant 5.000000e-01 : f32
    %134 = vector.broadcast %cst_60 : f32 to vector<8x128xf32>
    %135 = arith.mulf %134, %133 : vector<8x128xf32>
    %cst_61 = arith.constant 5.000000e-01 : f32
    %136 = vector.broadcast %cst_61 : f32 to vector<8x128xf32>
    %137 = arith.addf %135, %136 : vector<8x128xf32>
    %138 = vector.extract_strided_slice %121 {offsets = [0, 256], sizes = [8, 128], strides = [1, 1]} : vector<8x512xf32> to vector<8x128xf32>
    %139 = math.tanh %138 : vector<8x128xf32>
    %140 = vector.extract_strided_slice %121 {offsets = [0, 384], sizes = [8, 128], strides = [1, 1]} : vector<8x512xf32> to vector<8x128xf32>
    %cst_62 = arith.constant 5.000000e-01 : f32
    %141 = vector.broadcast %cst_62 : f32 to vector<8x128xf32>
    %142 = arith.mulf %141, %140 : vector<8x128xf32>
    %143 = math.tanh %142 : vector<8x128xf32>
    %cst_63 = arith.constant 5.000000e-01 : f32
    %144 = vector.broadcast %cst_63 : f32 to vector<8x128xf32>
    %145 = arith.mulf %144, %143 : vector<8x128xf32>
    %cst_64 = arith.constant 5.000000e-01 : f32
    %146 = vector.broadcast %cst_64 : f32 to vector<8x128xf32>
    %147 = arith.addf %145, %146 : vector<8x128xf32>
    %148 = arith.mulf %137, %101 : vector<8x128xf32>
    %149 = arith.mulf %129, %139 : vector<8x128xf32>
    %150 = arith.addf %148, %149 : vector<8x128xf32>
    %151 = math.tanh %150 : vector<8x128xf32>
    %152 = arith.mulf %147, %151 : vector<8x128xf32>
    %153 = arith.addi %14, %c2_i32 : i32
    %154 = vector.broadcast %153 : i32 to vector<8x1xi32>
    %155 = arith.cmpi sgt, %13, %154 : vector<8x1xi32>
    %cst_65 = arith.constant 0.000000e+00 : f32
    %156 = vector.shape_cast %155 : vector<8x1xi1> to vector<8x1xi1>
    %157 = vector.broadcast %156 : vector<8x1xi1> to vector<8x128xi1>
    %158 = vector.broadcast %cst_65 : f32 to vector<8x128xf32>
    %159 = arith.select %157, %152, %158 : vector<8x128xi1>, vector<8x128xf32>
    %160 = arith.index_cast %c2_i32 : i32 to index
    %c0_66 = arith.constant 0 : index
    %c0_67 = arith.constant 0 : index
    %161 = vector.load %arg8[%160, %c0_66, %c0_67] : memref<8x8x128xf32, #tpu.memory_space<vmem>>, vector<1x8x128xf32>
    %162 = vector.shape_cast %161 : vector<1x8x128xf32> to vector<8x128xf32>
    %163 = vector.shape_cast %159 : vector<8x128xf32> to vector<1x8x128xf32>
    tpu.vector_store %arg8[%160, %c0_66, %c0_67], %163 {strides = array<i32>} : memref<8x8x128xf32, #tpu.memory_space<vmem>>, vector<1x8x128xf32>,
    %c3_i32 = arith.constant 3 : i32
    %164 = arith.index_cast %c3_i32 : i32 to index
    %c0_68 = arith.constant 0 : index
    %c0_69 = arith.constant 0 : index
    %165 = vector.load %arg9[%164, %c0_68, %c0_69] : memref<8x8x512xf32, #tpu.memory_space<vmem>>, vector<1x8x512xf32>
    %166 = vector.shape_cast %165 : vector<1x8x512xf32> to vector<8x512xf32>
    %167 = arith.truncf %152 : vector<8x128xf32> to vector<8x128xbf16>
    %c0_70 = arith.constant 0 : index
    %c0_71 = arith.constant 0 : index
    %168 = vector.load %arg5[%c0_70, %c0_71] : memref<128x512xbf16, #tpu.memory_space<vmem>>, vector<128x512xbf16>
    %cst_72 = arith.constant dense<0.000000e+00> : vector<8x512xf32>
    %169 = tpu.matmul %167, %168, %cst_72 {dimension_numbers = #tpu.dot_dimension_numbers<[1], [0], [0], [1], [0, 0, 1, 1], [], []>} : vector<8x128xbf16>, vector<128x512xbf16>, vector<8x512xf32> -> vector<8x512xf32>
    %170 = arith.addf %166, %169 : vector<8x512xf32>
    %171 = vector.extract_strided_slice %170 {offsets = [0, 0], sizes = [8, 128], strides = [1, 1]} : vector<8x512xf32> to vector<8x128xf32>
    %cst_73 = arith.constant 5.000000e-01 : f32
    %172 = vector.broadcast %cst_73 : f32 to vector<8x128xf32>
    %173 = arith.mulf %172, %171 : vector<8x128xf32>
    %174 = math.tanh %173 : vector<8x128xf32>
    %cst_74 = arith.constant 5.000000e-01 : f32
    %175 = vector.broadcast %cst_74 : f32 to vector<8x128xf32>
    %176 = arith.mulf %175, %174 : vector<8x128xf32>
    %cst_75 = arith.constant 5.000000e-01 : f32
    %177 = vector.broadcast %cst_75 : f32 to vector<8x128xf32>
    %178 = arith.addf %176, %177 : vector<8x128xf32>
    %179 = vector.extract_strided_slice %170 {offsets = [0, 128], sizes = [8, 128], strides = [1, 1]} : vector<8x512xf32> to vector<8x128xf32>
    %cst_76 = arith.constant 5.000000e-01 : f32
    %180 = vector.broadcast %cst_76 : f32 to vector<8x128xf32>
    %181 = arith.mulf %180, %179 : vector<8x128xf32>
    %182 = math.tanh %181 : vector<8x128xf32>
    %cst_77 = arith.constant 5.000000e-01 : f32
    %183 = vector.broadcast %cst_77 : f32 to vector<8x128xf32>
    %184 = arith.mulf %183, %182 : vector<8x128xf32>
    %cst_78 = arith.constant 5.000000e-01 : f32
    %185 = vector.broadcast %cst_78 : f32 to vector<8x128xf32>
    %186 = arith.addf %184, %185 : vector<8x128xf32>
    %187 = vector.extract_strided_slice %170 {offsets = [0, 256], sizes = [8, 128], strides = [1, 1]} : vector<8x512xf32> to vector<8x128xf32>
    %188 = math.tanh %187 : vector<8x128xf32>
    %189 = vector.extract_strided_slice %170 {offsets = [0, 384], sizes = [8, 128], strides = [1, 1]} : vector<8x512xf32> to vector<8x128xf32>
    %cst_79 = arith.constant 5.000000e-01 : f32
    %190 = vector.broadcast %cst_79 : f32 to vector<8x128xf32>
    %191 = arith.mulf %190, %189 : vector<8x128xf32>
    %192 = math.tanh %191 : vector<8x128xf32>
    %cst_80 = arith.constant 5.000000e-01 : f32
    %193 = vector.broadcast %cst_80 : f32 to vector<8x128xf32>
    %194 = arith.mulf %193, %192 : vector<8x128xf32>
    %cst_81 = arith.constant 5.000000e-01 : f32
    %195 = vector.broadcast %cst_81 : f32 to vector<8x128xf32>
    %196 = arith.addf %194, %195 : vector<8x128xf32>
    %197 = arith.mulf %186, %150 : vector<8x128xf32>
    %198 = arith.mulf %178, %188 : vector<8x128xf32>
    %199 = arith.addf %197, %198 : vector<8x128xf32>
    %200 = math.tanh %199 : vector<8x128xf32>
    %201 = arith.mulf %196, %200 : vector<8x128xf32>
    %202 = arith.addi %14, %c3_i32 : i32
    %203 = vector.broadcast %202 : i32 to vector<8x1xi32>
    %204 = arith.cmpi sgt, %13, %203 : vector<8x1xi32>
    %cst_82 = arith.constant 0.000000e+00 : f32
    %205 = vector.shape_cast %204 : vector<8x1xi1> to vector<8x1xi1>
    %206 = vector.broadcast %205 : vector<8x1xi1> to vector<8x128xi1>
    %207 = vector.broadcast %cst_82 : f32 to vector<8x128xf32>
    %208 = arith.select %206, %201, %207 : vector<8x128xi1>, vector<8x128xf32>
    %209 = arith.index_cast %c3_i32 : i32 to index
    %c0_83 = arith.constant 0 : index
    %c0_84 = arith.constant 0 : index
    %210 = vector.load %arg8[%209, %c0_83, %c0_84] : memref<8x8x128xf32, #tpu.memory_space<vmem>>, vector<1x8x128xf32>
    %211 = vector.shape_cast %210 : vector<1x8x128xf32> to vector<8x128xf32>
    %212 = vector.shape_cast %208 : vector<8x128xf32> to vector<1x8x128xf32>
    tpu.vector_store %arg8[%209, %c0_83, %c0_84], %212 {strides = array<i32>} : memref<8x8x128xf32, #tpu.memory_space<vmem>>, vector<1x8x128xf32>,
    %c4_i32 = arith.constant 4 : i32
    %213 = arith.index_cast %c4_i32 : i32 to index
    %c0_85 = arith.constant 0 : index
    %c0_86 = arith.constant 0 : index
    %214 = vector.load %arg9[%213, %c0_85, %c0_86] : memref<8x8x512xf32, #tpu.memory_space<vmem>>, vector<1x8x512xf32>
    %215 = vector.shape_cast %214 : vector<1x8x512xf32> to vector<8x512xf32>
    %216 = arith.truncf %201 : vector<8x128xf32> to vector<8x128xbf16>
    %c0_87 = arith.constant 0 : index
    %c0_88 = arith.constant 0 : index
    %217 = vector.load %arg5[%c0_87, %c0_88] : memref<128x512xbf16, #tpu.memory_space<vmem>>, vector<128x512xbf16>
    %cst_89 = arith.constant dense<0.000000e+00> : vector<8x512xf32>
    %218 = tpu.matmul %216, %217, %cst_89 {dimension_numbers = #tpu.dot_dimension_numbers<[1], [0], [0], [1], [0, 0, 1, 1], [], []>} : vector<8x128xbf16>, vector<128x512xbf16>, vector<8x512xf32> -> vector<8x512xf32>
    %219 = arith.addf %215, %218 : vector<8x512xf32>
    %220 = vector.extract_strided_slice %219 {offsets = [0, 0], sizes = [8, 128], strides = [1, 1]} : vector<8x512xf32> to vector<8x128xf32>
    %cst_90 = arith.constant 5.000000e-01 : f32
    %221 = vector.broadcast %cst_90 : f32 to vector<8x128xf32>
    %222 = arith.mulf %221, %220 : vector<8x128xf32>
    %223 = math.tanh %222 : vector<8x128xf32>
    %cst_91 = arith.constant 5.000000e-01 : f32
    %224 = vector.broadcast %cst_91 : f32 to vector<8x128xf32>
    %225 = arith.mulf %224, %223 : vector<8x128xf32>
    %cst_92 = arith.constant 5.000000e-01 : f32
    %226 = vector.broadcast %cst_92 : f32 to vector<8x128xf32>
    %227 = arith.addf %225, %226 : vector<8x128xf32>
    %228 = vector.extract_strided_slice %219 {offsets = [0, 128], sizes = [8, 128], strides = [1, 1]} : vector<8x512xf32> to vector<8x128xf32>
    %cst_93 = arith.constant 5.000000e-01 : f32
    %229 = vector.broadcast %cst_93 : f32 to vector<8x128xf32>
    %230 = arith.mulf %229, %228 : vector<8x128xf32>
    %231 = math.tanh %230 : vector<8x128xf32>
    %cst_94 = arith.constant 5.000000e-01 : f32
    %232 = vector.broadcast %cst_94 : f32 to vector<8x128xf32>
    %233 = arith.mulf %232, %231 : vector<8x128xf32>
    %cst_95 = arith.constant 5.000000e-01 : f32
    %234 = vector.broadcast %cst_95 : f32 to vector<8x128xf32>
    %235 = arith.addf %233, %234 : vector<8x128xf32>
    %236 = vector.extract_strided_slice %219 {offsets = [0, 256], sizes = [8, 128], strides = [1, 1]} : vector<8x512xf32> to vector<8x128xf32>
    %237 = math.tanh %236 : vector<8x128xf32>
    %238 = vector.extract_strided_slice %219 {offsets = [0, 384], sizes = [8, 128], strides = [1, 1]} : vector<8x512xf32> to vector<8x128xf32>
    %cst_96 = arith.constant 5.000000e-01 : f32
    %239 = vector.broadcast %cst_96 : f32 to vector<8x128xf32>
    %240 = arith.mulf %239, %238 : vector<8x128xf32>
    %241 = math.tanh %240 : vector<8x128xf32>
    %cst_97 = arith.constant 5.000000e-01 : f32
    %242 = vector.broadcast %cst_97 : f32 to vector<8x128xf32>
    %243 = arith.mulf %242, %241 : vector<8x128xf32>
    %cst_98 = arith.constant 5.000000e-01 : f32
    %244 = vector.broadcast %cst_98 : f32 to vector<8x128xf32>
    %245 = arith.addf %243, %244 : vector<8x128xf32>
    %246 = arith.mulf %235, %199 : vector<8x128xf32>
    %247 = arith.mulf %227, %237 : vector<8x128xf32>
    %248 = arith.addf %246, %247 : vector<8x128xf32>
    %249 = math.tanh %248 : vector<8x128xf32>
    %250 = arith.mulf %245, %249 : vector<8x128xf32>
    %251 = arith.addi %14, %c4_i32 : i32
    %252 = vector.broadcast %251 : i32 to vector<8x1xi32>
    %253 = arith.cmpi sgt, %13, %252 : vector<8x1xi32>
    %cst_99 = arith.constant 0.000000e+00 : f32
    %254 = vector.shape_cast %253 : vector<8x1xi1> to vector<8x1xi1>
    %255 = vector.broadcast %254 : vector<8x1xi1> to vector<8x128xi1>
    %256 = vector.broadcast %cst_99 : f32 to vector<8x128xf32>
    %257 = arith.select %255, %250, %256 : vector<8x128xi1>, vector<8x128xf32>
    %258 = arith.index_cast %c4_i32 : i32 to index
    %c0_100 = arith.constant 0 : index
    %c0_101 = arith.constant 0 : index
    %259 = vector.load %arg8[%258, %c0_100, %c0_101] : memref<8x8x128xf32, #tpu.memory_space<vmem>>, vector<1x8x128xf32>
    %260 = vector.shape_cast %259 : vector<1x8x128xf32> to vector<8x128xf32>
    %261 = vector.shape_cast %257 : vector<8x128xf32> to vector<1x8x128xf32>
    tpu.vector_store %arg8[%258, %c0_100, %c0_101], %261 {strides = array<i32>} : memref<8x8x128xf32, #tpu.memory_space<vmem>>, vector<1x8x128xf32>,
    %c5_i32 = arith.constant 5 : i32
    %262 = arith.index_cast %c5_i32 : i32 to index
    %c0_102 = arith.constant 0 : index
    %c0_103 = arith.constant 0 : index
    %263 = vector.load %arg9[%262, %c0_102, %c0_103] : memref<8x8x512xf32, #tpu.memory_space<vmem>>, vector<1x8x512xf32>
    %264 = vector.shape_cast %263 : vector<1x8x512xf32> to vector<8x512xf32>
    %265 = arith.truncf %250 : vector<8x128xf32> to vector<8x128xbf16>
    %c0_104 = arith.constant 0 : index
    %c0_105 = arith.constant 0 : index
    %266 = vector.load %arg5[%c0_104, %c0_105] : memref<128x512xbf16, #tpu.memory_space<vmem>>, vector<128x512xbf16>
    %cst_106 = arith.constant dense<0.000000e+00> : vector<8x512xf32>
    %267 = tpu.matmul %265, %266, %cst_106 {dimension_numbers = #tpu.dot_dimension_numbers<[1], [0], [0], [1], [0, 0, 1, 1], [], []>} : vector<8x128xbf16>, vector<128x512xbf16>, vector<8x512xf32> -> vector<8x512xf32>
    %268 = arith.addf %264, %267 : vector<8x512xf32>
    %269 = vector.extract_strided_slice %268 {offsets = [0, 0], sizes = [8, 128], strides = [1, 1]} : vector<8x512xf32> to vector<8x128xf32>
    %cst_107 = arith.constant 5.000000e-01 : f32
    %270 = vector.broadcast %cst_107 : f32 to vector<8x128xf32>
    %271 = arith.mulf %270, %269 : vector<8x128xf32>
    %272 = math.tanh %271 : vector<8x128xf32>
    %cst_108 = arith.constant 5.000000e-01 : f32
    %273 = vector.broadcast %cst_108 : f32 to vector<8x128xf32>
    %274 = arith.mulf %273, %272 : vector<8x128xf32>
    %cst_109 = arith.constant 5.000000e-01 : f32
    %275 = vector.broadcast %cst_109 : f32 to vector<8x128xf32>
    %276 = arith.addf %274, %275 : vector<8x128xf32>
    %277 = vector.extract_strided_slice %268 {offsets = [0, 128], sizes = [8, 128], strides = [1, 1]} : vector<8x512xf32> to vector<8x128xf32>
    %cst_110 = arith.constant 5.000000e-01 : f32
    %278 = vector.broadcast %cst_110 : f32 to vector<8x128xf32>
    %279 = arith.mulf %278, %277 : vector<8x128xf32>
    %280 = math.tanh %279 : vector<8x128xf32>
    %cst_111 = arith.constant 5.000000e-01 : f32
    %281 = vector.broadcast %cst_111 : f32 to vector<8x128xf32>
    %282 = arith.mulf %281, %280 : vector<8x128xf32>
    %cst_112 = arith.constant 5.000000e-01 : f32
    %283 = vector.broadcast %cst_112 : f32 to vector<8x128xf32>
    %284 = arith.addf %282, %283 : vector<8x128xf32>
    %285 = vector.extract_strided_slice %268 {offsets = [0, 256], sizes = [8, 128], strides = [1, 1]} : vector<8x512xf32> to vector<8x128xf32>
    %286 = math.tanh %285 : vector<8x128xf32>
    %287 = vector.extract_strided_slice %268 {offsets = [0, 384], sizes = [8, 128], strides = [1, 1]} : vector<8x512xf32> to vector<8x128xf32>
    %cst_113 = arith.constant 5.000000e-01 : f32
    %288 = vector.broadcast %cst_113 : f32 to vector<8x128xf32>
    %289 = arith.mulf %288, %287 : vector<8x128xf32>
    %290 = math.tanh %289 : vector<8x128xf32>
    %cst_114 = arith.constant 5.000000e-01 : f32
    %291 = vector.broadcast %cst_114 : f32 to vector<8x128xf32>
    %292 = arith.mulf %291, %290 : vector<8x128xf32>
    %cst_115 = arith.constant 5.000000e-01 : f32
    %293 = vector.broadcast %cst_115 : f32 to vector<8x128xf32>
    %294 = arith.addf %292, %293 : vector<8x128xf32>
    %295 = arith.mulf %284, %248 : vector<8x128xf32>
    %296 = arith.mulf %276, %286 : vector<8x128xf32>
    %297 = arith.addf %295, %296 : vector<8x128xf32>
    %298 = math.tanh %297 : vector<8x128xf32>
    %299 = arith.mulf %294, %298 : vector<8x128xf32>
    %300 = arith.addi %14, %c5_i32 : i32
    %301 = vector.broadcast %300 : i32 to vector<8x1xi32>
    %302 = arith.cmpi sgt, %13, %301 : vector<8x1xi32>
    %cst_116 = arith.constant 0.000000e+00 : f32
    %303 = vector.shape_cast %302 : vector<8x1xi1> to vector<8x1xi1>
    %304 = vector.broadcast %303 : vector<8x1xi1> to vector<8x128xi1>
    %305 = vector.broadcast %cst_116 : f32 to vector<8x128xf32>
    %306 = arith.select %304, %299, %305 : vector<8x128xi1>, vector<8x128xf32>
    %307 = arith.index_cast %c5_i32 : i32 to index
    %c0_117 = arith.constant 0 : index
    %c0_118 = arith.constant 0 : index
    %308 = vector.load %arg8[%307, %c0_117, %c0_118] : memref<8x8x128xf32, #tpu.memory_space<vmem>>, vector<1x8x128xf32>
    %309 = vector.shape_cast %308 : vector<1x8x128xf32> to vector<8x128xf32>
    %310 = vector.shape_cast %306 : vector<8x128xf32> to vector<1x8x128xf32>
    tpu.vector_store %arg8[%307, %c0_117, %c0_118], %310 {strides = array<i32>} : memref<8x8x128xf32, #tpu.memory_space<vmem>>, vector<1x8x128xf32>,
    %c6_i32 = arith.constant 6 : i32
    %311 = arith.index_cast %c6_i32 : i32 to index
    %c0_119 = arith.constant 0 : index
    %c0_120 = arith.constant 0 : index
    %312 = vector.load %arg9[%311, %c0_119, %c0_120] : memref<8x8x512xf32, #tpu.memory_space<vmem>>, vector<1x8x512xf32>
    %313 = vector.shape_cast %312 : vector<1x8x512xf32> to vector<8x512xf32>
    %314 = arith.truncf %299 : vector<8x128xf32> to vector<8x128xbf16>
    %c0_121 = arith.constant 0 : index
    %c0_122 = arith.constant 0 : index
    %315 = vector.load %arg5[%c0_121, %c0_122] : memref<128x512xbf16, #tpu.memory_space<vmem>>, vector<128x512xbf16>
    %cst_123 = arith.constant dense<0.000000e+00> : vector<8x512xf32>
    %316 = tpu.matmul %314, %315, %cst_123 {dimension_numbers = #tpu.dot_dimension_numbers<[1], [0], [0], [1], [0, 0, 1, 1], [], []>} : vector<8x128xbf16>, vector<128x512xbf16>, vector<8x512xf32> -> vector<8x512xf32>
    %317 = arith.addf %313, %316 : vector<8x512xf32>
    %318 = vector.extract_strided_slice %317 {offsets = [0, 0], sizes = [8, 128], strides = [1, 1]} : vector<8x512xf32> to vector<8x128xf32>
    %cst_124 = arith.constant 5.000000e-01 : f32
    %319 = vector.broadcast %cst_124 : f32 to vector<8x128xf32>
    %320 = arith.mulf %319, %318 : vector<8x128xf32>
    %321 = math.tanh %320 : vector<8x128xf32>
    %cst_125 = arith.constant 5.000000e-01 : f32
    %322 = vector.broadcast %cst_125 : f32 to vector<8x128xf32>
    %323 = arith.mulf %322, %321 : vector<8x128xf32>
    %cst_126 = arith.constant 5.000000e-01 : f32
    %324 = vector.broadcast %cst_126 : f32 to vector<8x128xf32>
    %325 = arith.addf %323, %324 : vector<8x128xf32>
    %326 = vector.extract_strided_slice %317 {offsets = [0, 128], sizes = [8, 128], strides = [1, 1]} : vector<8x512xf32> to vector<8x128xf32>
    %cst_127 = arith.constant 5.000000e-01 : f32
    %327 = vector.broadcast %cst_127 : f32 to vector<8x128xf32>
    %328 = arith.mulf %327, %326 : vector<8x128xf32>
    %329 = math.tanh %328 : vector<8x128xf32>
    %cst_128 = arith.constant 5.000000e-01 : f32
    %330 = vector.broadcast %cst_128 : f32 to vector<8x128xf32>
    %331 = arith.mulf %330, %329 : vector<8x128xf32>
    %cst_129 = arith.constant 5.000000e-01 : f32
    %332 = vector.broadcast %cst_129 : f32 to vector<8x128xf32>
    %333 = arith.addf %331, %332 : vector<8x128xf32>
    %334 = vector.extract_strided_slice %317 {offsets = [0, 256], sizes = [8, 128], strides = [1, 1]} : vector<8x512xf32> to vector<8x128xf32>
    %335 = math.tanh %334 : vector<8x128xf32>
    %336 = vector.extract_strided_slice %317 {offsets = [0, 384], sizes = [8, 128], strides = [1, 1]} : vector<8x512xf32> to vector<8x128xf32>
    %cst_130 = arith.constant 5.000000e-01 : f32
    %337 = vector.broadcast %cst_130 : f32 to vector<8x128xf32>
    %338 = arith.mulf %337, %336 : vector<8x128xf32>
    %339 = math.tanh %338 : vector<8x128xf32>
    %cst_131 = arith.constant 5.000000e-01 : f32
    %340 = vector.broadcast %cst_131 : f32 to vector<8x128xf32>
    %341 = arith.mulf %340, %339 : vector<8x128xf32>
    %cst_132 = arith.constant 5.000000e-01 : f32
    %342 = vector.broadcast %cst_132 : f32 to vector<8x128xf32>
    %343 = arith.addf %341, %342 : vector<8x128xf32>
    %344 = arith.mulf %333, %297 : vector<8x128xf32>
    %345 = arith.mulf %325, %335 : vector<8x128xf32>
    %346 = arith.addf %344, %345 : vector<8x128xf32>
    %347 = math.tanh %346 : vector<8x128xf32>
    %348 = arith.mulf %343, %347 : vector<8x128xf32>
    %349 = arith.addi %14, %c6_i32 : i32
    %350 = vector.broadcast %349 : i32 to vector<8x1xi32>
    %351 = arith.cmpi sgt, %13, %350 : vector<8x1xi32>
    %cst_133 = arith.constant 0.000000e+00 : f32
    %352 = vector.shape_cast %351 : vector<8x1xi1> to vector<8x1xi1>
    %353 = vector.broadcast %352 : vector<8x1xi1> to vector<8x128xi1>
    %354 = vector.broadcast %cst_133 : f32 to vector<8x128xf32>
    %355 = arith.select %353, %348, %354 : vector<8x128xi1>, vector<8x128xf32>
    %356 = arith.index_cast %c6_i32 : i32 to index
    %c0_134 = arith.constant 0 : index
    %c0_135 = arith.constant 0 : index
    %357 = vector.load %arg8[%356, %c0_134, %c0_135] : memref<8x8x128xf32, #tpu.memory_space<vmem>>, vector<1x8x128xf32>
    %358 = vector.shape_cast %357 : vector<1x8x128xf32> to vector<8x128xf32>
    %359 = vector.shape_cast %355 : vector<8x128xf32> to vector<1x8x128xf32>
    tpu.vector_store %arg8[%356, %c0_134, %c0_135], %359 {strides = array<i32>} : memref<8x8x128xf32, #tpu.memory_space<vmem>>, vector<1x8x128xf32>,
    %c7_i32 = arith.constant 7 : i32
    %360 = arith.index_cast %c7_i32 : i32 to index
    %c0_136 = arith.constant 0 : index
    %c0_137 = arith.constant 0 : index
    %361 = vector.load %arg9[%360, %c0_136, %c0_137] : memref<8x8x512xf32, #tpu.memory_space<vmem>>, vector<1x8x512xf32>
    %362 = vector.shape_cast %361 : vector<1x8x512xf32> to vector<8x512xf32>
    %363 = arith.truncf %348 : vector<8x128xf32> to vector<8x128xbf16>
    %c0_138 = arith.constant 0 : index
    %c0_139 = arith.constant 0 : index
    %364 = vector.load %arg5[%c0_138, %c0_139] : memref<128x512xbf16, #tpu.memory_space<vmem>>, vector<128x512xbf16>
    %cst_140 = arith.constant dense<0.000000e+00> : vector<8x512xf32>
    %365 = tpu.matmul %363, %364, %cst_140 {dimension_numbers = #tpu.dot_dimension_numbers<[1], [0], [0], [1], [0, 0, 1, 1], [], []>} : vector<8x128xbf16>, vector<128x512xbf16>, vector<8x512xf32> -> vector<8x512xf32>
    %366 = arith.addf %362, %365 : vector<8x512xf32>
    %367 = vector.extract_strided_slice %366 {offsets = [0, 0], sizes = [8, 128], strides = [1, 1]} : vector<8x512xf32> to vector<8x128xf32>
    %cst_141 = arith.constant 5.000000e-01 : f32
    %368 = vector.broadcast %cst_141 : f32 to vector<8x128xf32>
    %369 = arith.mulf %368, %367 : vector<8x128xf32>
    %370 = math.tanh %369 : vector<8x128xf32>
    %cst_142 = arith.constant 5.000000e-01 : f32
    %371 = vector.broadcast %cst_142 : f32 to vector<8x128xf32>
    %372 = arith.mulf %371, %370 : vector<8x128xf32>
    %cst_143 = arith.constant 5.000000e-01 : f32
    %373 = vector.broadcast %cst_143 : f32 to vector<8x128xf32>
    %374 = arith.addf %372, %373 : vector<8x128xf32>
    %375 = vector.extract_strided_slice %366 {offsets = [0, 128], sizes = [8, 128], strides = [1, 1]} : vector<8x512xf32> to vector<8x128xf32>
    %cst_144 = arith.constant 5.000000e-01 : f32
    %376 = vector.broadcast %cst_144 : f32 to vector<8x128xf32>
    %377 = arith.mulf %376, %375 : vector<8x128xf32>
    %378 = math.tanh %377 : vector<8x128xf32>
    %cst_145 = arith.constant 5.000000e-01 : f32
    %379 = vector.broadcast %cst_145 : f32 to vector<8x128xf32>
    %380 = arith.mulf %379, %378 : vector<8x128xf32>
    %cst_146 = arith.constant 5.000000e-01 : f32
    %381 = vector.broadcast %cst_146 : f32 to vector<8x128xf32>
    %382 = arith.addf %380, %381 : vector<8x128xf32>
    %383 = vector.extract_strided_slice %366 {offsets = [0, 256], sizes = [8, 128], strides = [1, 1]} : vector<8x512xf32> to vector<8x128xf32>
    %384 = math.tanh %383 : vector<8x128xf32>
    %385 = vector.extract_strided_slice %366 {offsets = [0, 384], sizes = [8, 128], strides = [1, 1]} : vector<8x512xf32> to vector<8x128xf32>
    %cst_147 = arith.constant 5.000000e-01 : f32
    %386 = vector.broadcast %cst_147 : f32 to vector<8x128xf32>
    %387 = arith.mulf %386, %385 : vector<8x128xf32>
    %388 = math.tanh %387 : vector<8x128xf32>
    %cst_148 = arith.constant 5.000000e-01 : f32
    %389 = vector.broadcast %cst_148 : f32 to vector<8x128xf32>
    %390 = arith.mulf %389, %388 : vector<8x128xf32>
    %cst_149 = arith.constant 5.000000e-01 : f32
    %391 = vector.broadcast %cst_149 : f32 to vector<8x128xf32>
    %392 = arith.addf %390, %391 : vector<8x128xf32>
    %393 = arith.mulf %382, %346 : vector<8x128xf32>
    %394 = arith.mulf %374, %384 : vector<8x128xf32>
    %395 = arith.addf %393, %394 : vector<8x128xf32>
    %396 = math.tanh %395 : vector<8x128xf32>
    %397 = arith.mulf %392, %396 : vector<8x128xf32>
    %398 = arith.addi %14, %c7_i32 : i32
    %399 = vector.broadcast %398 : i32 to vector<8x1xi32>
    %400 = arith.cmpi sgt, %13, %399 : vector<8x1xi32>
    %cst_150 = arith.constant 0.000000e+00 : f32
    %401 = vector.shape_cast %400 : vector<8x1xi1> to vector<8x1xi1>
    %402 = vector.broadcast %401 : vector<8x1xi1> to vector<8x128xi1>
    %403 = vector.broadcast %cst_150 : f32 to vector<8x128xf32>
    %404 = arith.select %402, %397, %403 : vector<8x128xi1>, vector<8x128xf32>
    %405 = arith.index_cast %c7_i32 : i32 to index
    %c0_151 = arith.constant 0 : index
    %c0_152 = arith.constant 0 : index
    %406 = vector.load %arg8[%405, %c0_151, %c0_152] : memref<8x8x128xf32, #tpu.memory_space<vmem>>, vector<1x8x128xf32>
    %407 = vector.shape_cast %406 : vector<1x8x128xf32> to vector<8x128xf32>
    %408 = vector.shape_cast %404 : vector<8x128xf32> to vector<1x8x128xf32>
    tpu.vector_store %arg8[%405, %c0_151, %c0_152], %408 {strides = array<i32>} : memref<8x8x128xf32, #tpu.memory_space<vmem>>, vector<1x8x128xf32>,
    %c8_i32_153 = arith.constant 8 : i32
    %c0_154 = arith.constant 0 : index
    %c0_155 = arith.constant 0 : index
    %409 = vector.load %arg10[%c0_154, %c0_155] : memref<8x128xf32, #tpu.memory_space<vmem>>, vector<8x128xf32>
    tpu.vector_store %arg10[%c0_154, %c0_155], %397 {strides = array<i32>} : memref<8x128xf32, #tpu.memory_space<vmem>>, vector<8x128xf32>,
    %c0_156 = arith.constant 0 : index
    %c0_157 = arith.constant 0 : index
    %410 = vector.load %arg11[%c0_156, %c0_157] : memref<8x128xf32, #tpu.memory_space<vmem>>, vector<8x128xf32>
    tpu.vector_store %arg11[%c0_156, %c0_157], %395 {strides = array<i32>} : memref<8x128xf32, #tpu.memory_space<vmem>>, vector<8x128xf32>,
    return
  }
  func.func @transform_0(%arg0: i32) -> (i32, i32, i32) {
    %c0_i32 = arith.constant 0 : i32
    %c0_i32_0 = arith.constant 0 : i32
    %c0_i32_1 = arith.constant 0 : i32
    return %arg0, %c0_i32, %c0_i32_0 : i32, i32, i32
  }
  func.func @transform_1(%arg0: i32) -> (i32, i32) {
    %c0_i32 = arith.constant 0 : i32
    %c0_i32_0 = arith.constant 0 : i32
    %c0_i32_1 = arith.constant 0 : i32
    return %c0_i32, %c0_i32_0 : i32, i32
  }
  func.func @transform_2(%arg0: i32) -> (i32, i32) {
    %c0_i32 = arith.constant 0 : i32
    %c0_i32_0 = arith.constant 0 : i32
    %c0_i32_1 = arith.constant 0 : i32
    return %c0_i32, %c0_i32_0 : i32, i32
  }
  func.func @transform_3(%arg0: i32) -> (i32, i32) {
    %c0_i32 = arith.constant 0 : i32
    %c0_i32_0 = arith.constant 0 : i32
    %c0_i32_1 = arith.constant 0 : i32
    return %c0_i32, %c0_i32_0 : i32, i32
  }
  func.func @transform_4(%arg0: i32) -> (i32, i32) {
    %c0_i32 = arith.constant 0 : i32
    %c0_i32_0 = arith.constant 0 : i32
    %c0_i32_1 = arith.constant 0 : i32
    return %c0_i32, %c0_i32_0 : i32, i32
  }
  func.func @transform_5(%arg0: i32) -> (i32, i32) {
    %c0_i32 = arith.constant 0 : i32
    %c0_i32_0 = arith.constant 0 : i32
    %c0_i32_1 = arith.constant 0 : i32
    return %c0_i32, %c0_i32_0 : i32, i32
  }
  func.func @transform_6(%arg0: i32) -> (i32, i32) {
    %c0_i32 = arith.constant 0 : i32
    %c0_i32_0 = arith.constant 0 : i32
    %c0_i32_1 = arith.constant 0 : i32
    return %c0_i32, %c0_i32_0 : i32, i32
  }
  func.func @transform_7(%arg0: i32) -> (i32, i32, i32) {
    %c0_i32 = arith.constant 0 : i32
    %c0_i32_0 = arith.constant 0 : i32
    %c0_i32_1 = arith.constant 0 : i32
    return %arg0, %c0_i32, %c0_i32_0 : i32, i32, i32
  }
}

</mosaic_0001>

<llo_original>
// kernel: tpu_custom_call.1
$region0: #{tpu_custom_call.1}
  #allocation0 [shape = 'u32[]', space=smem, size = 0x4, offset = 0x4, fixed_abs, tag = 'smem constant byte address 0x4 - core index']
  #allocation1 [shape = 'u32[144,128]{1,0:T(1,128)}', space=vmem, size = 0x12000, scoped, tag = 'internal scratch']
  #allocation2 [shape = 'f32[8,8,512]{2,1,0:T(8,128)}', space=vmem, size = 0x20000, scoped, tag = 'scratch operand']
  #allocation3 [shape = 'f32[8,128]{1,0:T(8,128)}', space=vmem, size = 0x1000, scoped, tag = 'scratch operand']
  #allocation4 [shape = 'f32[8,128]{1,0:T(8,128)}', space=vmem, size = 0x1000, scoped, tag = 'scratch operand']
  %s0 = inlined_call_operand.hbm [shape: bf16[8,8,128], index: 0, kind: input, shape index: {}]
  %s1 = inlined_call_operand.vmem [shape: f32[8,128], index: 1, kind: input, shape index: {}]
  %s2 = inlined_call_operand.vmem [shape: f32[8,128], index: 2, kind: input, shape index: {}]
  %s3 = inlined_call_operand.hbm [shape: bf16[128,512], index: 3, kind: input, shape index: {}]
  %s4 = inlined_call_operand.hbm [shape: bf16[128,512], index: 4, kind: input, shape index: {}]
  %s5 = inlined_call_operand.vmem [shape: f32[1,512], index: 5, kind: input, shape index: {}]
  %s6 = inlined_call_operand.vmem [shape: s32[8,1], index: 6, kind: input, shape index: {}]
  %s7 = inlined_call_operand.hbm [shape: f32[8,8,128], index: 7, kind: output, shape index: {}]
  %s8 = sld [smem:[#allocation0]]
  $region54: #{tpu_custom_call.1} parent=0
    _
  %s10 = ssub.s32 1, %s8
  %s11 = scalar_select 0, %s10, %s8
  $region1: #{tpu_custom_call.1} parent=0
    #allocation5 [shape = 'u8[16384]{0}', space=vmem, size = 0x4000, scoped, tag = 'input window, operand 0, single buffered']
    #allocation6 [shape = 's32[1]{0}', space=sflag, size = 0x4, scoped, tag = 'scoped memory for tpu_custom_call.1']
    #allocation7 [shape = 's32[1]{0}', space=sflag, size = 0x4, scoped, tag = 'scoped memory for tpu_custom_call.1']
    #allocation8 [shape = 'u8[131072]{0}', space=vmem, size = 0x20000, scoped, tag = 'input window, operand 3, single buffered']
    #allocation9 [shape = 's32[1]{0}', space=sflag, size = 0x4, scoped, tag = 'scoped memory for tpu_custom_call.1']
    #allocation10 [shape = 'u8[131072]{0}', space=vmem, size = 0x20000, scoped, tag = 'input window, operand 4, single buffered']
    #allocation11 [shape = 'u8[32768]{0}', space=vmem, size = 0x8000, scoped, tag = 'output window, operand 0, single buffered']
    %12 = vsyncpa [#allocation6], 0
    %13 = vsyncpa [#allocation9], 0
    %14 = vsyncpa [#allocation7], 0
    // Predicated region
    $region2: #{tpu_custom_call.1} parent=1 // pred_check
      _
    $region3: #{tpu_custom_call.1} parent=1 // pred_check_branch
      %16 = sbr.rel (0) target = $region5
    $region4: #{tpu_custom_call.1} parent=1 // pred_region
      %s18 = ssub.s32 512, 512
      %19 = vsyncadd [#allocation6], %s18
      %s20 = sshll.u32 [#allocation5], 4
      %s21 = int_to_ptr.vmem [resolvable:$true] %s20
      %26 = dma.hbm_to_vmem [thread:$0]  %s0, 512, %s21, [#allocation6], 64, 64, 4
    $region5: #{tpu_custom_call.1} parent=1 // pred_fallthru
      _
    // Predicated region
    $region6: #{tpu_custom_call.1} parent=1 // pred_check
      _
    $region7: #{tpu_custom_call.1} parent=1 // pred_check_branch
      %28 = sbr.rel (0) target = $region9
    $region8: #{tpu_custom_call.1} parent=1 // pred_region
      _
    $region9: #{tpu_custom_call.1} parent=1 // pred_fallthru
      _
    // Predicated region
    $region10: #{tpu_custom_call.1} parent=1 // pred_check
      _
    $region11: #{tpu_custom_call.1} parent=1 // pred_check_branch
      %30 = sbr.rel (0) target = $region13
    $region12: #{tpu_custom_call.1} parent=1 // pred_region
      _
    $region13: #{tpu_custom_call.1} parent=1 // pred_fallthru
      _
    // Predicated region
    $region14: #{tpu_custom_call.1} parent=1 // pred_check
      _
    $region15: #{tpu_custom_call.1} parent=1 // pred_check_branch
      %32 = sbr.rel (0) target = $region17
    $region16: #{tpu_custom_call.1} parent=1 // pred_region
      %s34 = ssub.s32 4096, 4096
      %35 = vsyncadd [#allocation9], %s34
      %s36 = sshll.u32 [#allocation8], 4
      %s37 = int_to_ptr.vmem [resolvable:$true] %s36
      %42 = dma.hbm_to_vmem [thread:$0]  %s3, 4096, %s37, [#allocation9], 256, 256, 16
    $region17: #{tpu_custom_call.1} parent=1 // pred_fallthru
      _
    // Predicated region
    $region18: #{tpu_custom_call.1} parent=1 // pred_check
      _
    $region19: #{tpu_custom_call.1} parent=1 // pred_check_branch
      %44 = sbr.rel (0) target = $region21
    $region20: #{tpu_custom_call.1} parent=1 // pred_region
      %s46 = ssub.s32 4096, 4096
      %47 = vsyncadd [#allocation9], %s46
      %s48 = sshll.u32 [#allocation10], 4
      %s49 = int_to_ptr.vmem [resolvable:$true] %s48
      %54 = dma.hbm_to_vmem [thread:$0]  %s4, 4096, %s49, [#allocation9], 256, 256, 16
    $region21: #{tpu_custom_call.1} parent=1 // pred_fallthru
      _
    // Predicated region
    $region22: #{tpu_custom_call.1} parent=1 // pred_check
      _
    $region23: #{tpu_custom_call.1} parent=1 // pred_check_branch
      %56 = sbr.rel (0) target = $region25
    $region24: #{tpu_custom_call.1} parent=1 // pred_region
      _
    $region25: #{tpu_custom_call.1} parent=1 // pred_fallthru
      _
    // Predicated region
    $region26: #{tpu_custom_call.1} parent=1 // pred_check
      _
    $region27: #{tpu_custom_call.1} parent=1 // pred_check_branch
      %58 = sbr.rel (0) target = $region29
    $region28: #{tpu_custom_call.1} parent=1 // pred_region
      _
    $region29: #{tpu_custom_call.1} parent=1 // pred_fallthru
      _
    // Predicated region
    $region30: #{tpu_custom_call.1} parent=1 // pred_check
      _
    $region31: #{tpu_custom_call.1} parent=1 // pred_check_branch
      %60 = sbr.rel (0) target = $region33
    $region32: #{tpu_custom_call.1} parent=1 // pred_region
      %61 = dma.done [#allocation6], 512
    $region33: #{tpu_custom_call.1} parent=1 // pred_fallthru
      _
    // Predicated region
    $region34: #{tpu_custom_call.1} parent=1 // pred_check
      _
    $region35: #{tpu_custom_call.1} parent=1 // pred_check_branch
      %63 = sbr.rel (0) target = $region37
    $region36: #{tpu_custom_call.1} parent=1 // pred_region
      %64 = dma.done [#allocation9], 4096
    $region37: #{tpu_custom_call.1} parent=1 // pred_fallthru
      _
    // Predicated region
    $region38: #{tpu_custom_call.1} parent=1 // pred_check
      _
    $region39: #{tpu_custom_call.1} parent=1 // pred_check_branch
      %66 = sbr.rel (0) target = $region41
    $region40: #{tpu_custom_call.1} parent=1 // pred_region
      %67 = dma.done [#allocation9], 4096
    $region41: #{tpu_custom_call.1} parent=1 // pred_fallthru
      _
    %p69 = scmp.eq.s32.totalorder 0, 0
    // Predicated region
    $region42: #{tpu_custom_call.1} parent=1 // pred_check
      %p70 = pneg %p69
    $region43: #{tpu_custom_call.1} parent=1 // pred_check_branch
      %72 = sbr.rel (%p70) target = $region45
    $region44: #{tpu_custom_call.1} parent=1 // pred_region
      %v73 = vld [vmem:[%s1] sm:$0xff]
      %74 = vst [vmem:[#allocation3] sm:$0xff] %v73
      %v75 = vld [vmem:[%s2] sm:$0xff]
      %76 = vst [vmem:[#allocation4] sm:$0xff] %v75
    $region45: #{tpu_custom_call.1} parent=1 // pred_fallthru
      _
    %v77 = vld [vmem:[#allocation5] sm:$0xf]
    %v78 = vld [vmem:[#allocation5 + $0x4] sm:$0xf]
    %v79 = vld [vmem:[#allocation5 + $0x8] sm:$0xf]
    %v80 = vld [vmem:[#allocation5 + $0xc] sm:$0xf]
    %v81 = vld [vmem:[#allocation5 + $0x10] sm:$0xf]
    %v82 = vld [vmem:[#allocation5 + $0x14] sm:$0xf]
    %v83 = vld [vmem:[#allocation5 + $0x18] sm:$0xf]
    %v84 = vld [vmem:[#allocation5 + $0x1c] sm:$0xf]
    %v85 = vld [vmem:[#allocation8] sm:$0xff]
    %v86 = vld [vmem:[#allocation8 + $0x8] sm:$0xff]
    %v87 = vld [vmem:[#allocation8 + $0x10] sm:$0xff]
    %v88 = vld [vmem:[#allocation8 + $0x18] sm:$0xff]
    %v89 = vld [vmem:[#allocation8 + $0x20] sm:$0xff]
    %v90 = vld [vmem:[#allocation8 + $0x28] sm:$0xff]
    %v91 = vld [vmem:[#allocation8 + $0x30] sm:$0xff]
    %v92 = vld [vmem:[#allocation8 + $0x38] sm:$0xff]
    %v93 = vld [vmem:[#allocation8 + $0x40] sm:$0xff]
    %v94 = vld [vmem:[#allocation8 + $0x48] sm:$0xff]
    %v95 = vld [vmem:[#allocation8 + $0x50] sm:$0xff]
    %v96 = vld [vmem:[#allocation8 + $0x58] sm:$0xff]
    %v97 = vld [vmem:[#allocation8 + $0x60] sm:$0xff]
    %v98 = vld [vmem:[#allocation8 + $0x68] sm:$0xff]
    %v99 = vld [vmem:[#allocation8 + $0x70] sm:$0xff]
    %v100 = vld [vmem:[#allocation8 + $0x78] sm:$0xff]
    %v101 = vld [vmem:[#allocation8 + $0x80] sm:$0xff]
    %v102 = vld [vmem:[#allocation8 + $0x88] sm:$0xff]
    %v103 = vld [vmem:[#allocation8 + $0x90] sm:$0xff]
    %v104 = vld [vmem:[#allocation8 + $0x98] sm:$0xff]
    %v105 = vld [vmem:[#allocation8 + $0xa0] sm:$0xff]
    %v106 = vld [vmem:[#allocation8 + $0xa8] sm:$0xff]
    %v107 = vld [vmem:[#allocation8 + $0xb0] sm:$0xff]
    %v108 = vld [vmem:[#allocation8 + $0xb8] sm:$0xff]
    %v109 = vld [vmem:[#allocation8 + $0xc0] sm:$0xff]
    %v110 = vld [vmem:[#allocation8 + $0xc8] sm:$0xff]
    %v111 = vld [vmem:[#allocation8 + $0xd0] sm:$0xff]
    %v112 = vld [vmem:[#allocation8 + $0xd8] sm:$0xff]
    %v113 = vld [vmem:[#allocation8 + $0xe0] sm:$0xff]
    %v114 = vld [vmem:[#allocation8 + $0xe8] sm:$0xff]
    %v115 = vld [vmem:[#allocation8 + $0xf0] sm:$0xff]
    %v116 = vld [vmem:[#allocation8 + $0xf8] sm:$0xff]
    %v125 = vunpack.c.l.b16 %v77
    %v126 = vunpack.c.l.b16 %v78
    %v127 = vunpack.c.l.b16 %v79
    %v128 = vunpack.c.l.b16 %v80
    %v129 = vunpack.c.l.b16 %v81
    %v130 = vunpack.c.l.b16 %v82
    %v131 = vunpack.c.l.b16 %v83
    %v132 = vunpack.c.l.b16 %v84
    %v133 = vpack.c.b16 %v126, %v125
    %v134 = vpack.c.b16 %v128, %v127
    %v135 = vpack.c.b16 %v130, %v129
    %v136 = vpack.c.b16 %v132, %v131
    %v173 = vunpack.c.l.b16 %v85
    %v174 = vunpack.c.h.b16 %v85
    %v175 = vunpack.c.l.b16 %v86
    %v176 = vunpack.c.h.b16 %v86
    %v177 = vunpack.c.l.b16 %v87
    %v178 = vunpack.c.h.b16 %v87
    %v179 = vunpack.c.l.b16 %v88
    %v180 = vunpack.c.h.b16 %v88
    %v181 = vunpack.c.l.b16 %v89
    %v182 = vunpack.c.h.b16 %v89
    %v183 = vunpack.c.l.b16 %v90
    %v184 = vunpack.c.h.b16 %v90
    %v185 = vunpack.c.l.b16 %v91
    %v186 = vunpack.c.h.b16 %v91
    %v187 = vunpack.c.l.b16 %v92
    %v188 = vunpack.c.h.b16 %v92
    %v189 = vunpack.c.l.b16 %v93
    %v190 = vunpack.c.h.b16 %v93
    %v191 = vunpack.c.l.b16 %v94
    %v192 = vunpack.c.h.b16 %v94
    %v193 = vunpack.c.l.b16 %v95
    %v194 = vunpack.c.h.b16 %v95
    %v195 = vunpack.c.l.b16 %v96
    %v196 = vunpack.c.h.b16 %v96
    %v197 = vunpack.c.l.b16 %v97
    %v198 = vunpack.c.h.b16 %v97
    %v199 = vunpack.c.l.b16 %v98
    %v200 = vunpack.c.h.b16 %v98
    %v201 = vunpack.c.l.b16 %v99
    %v202 = vunpack.c.h.b16 %v99
    %v203 = vunpack.c.l.b16 %v100
    %v204 = vunpack.c.h.b16 %v100
    %v205 = vunpack.c.l.b16 %v101
    %v206 = vunpack.c.h.b16 %v101
    %v207 = vunpack.c.l.b16 %v102
    %v208 = vunpack.c.h.b16 %v102
    %v209 = vunpack.c.l.b16 %v103
    %v210 = vunpack.c.h.b16 %v103
    %v211 = vunpack.c.l.b16 %v104
    %v212 = vunpack.c.h.b16 %v104
    %v213 = vunpack.c.l.b16 %v105
    %v214 = vunpack.c.h.b16 %v105
    %v215 = vunpack.c.l.b16 %v106
    %v216 = vunpack.c.h.b16 %v106
    %v217 = vunpack.c.l.b16 %v107
    %v218 = vunpack.c.h.b16 %v107
    %v219 = vunpack.c.l.b16 %v108
    %v220 = vunpack.c.h.b16 %v108
    %v221 = vunpack.c.l.b16 %v109
    %v222 = vunpack.c.h.b16 %v109
    %v223 = vunpack.c.l.b16 %v110
    %v224 = vunpack.c.h.b16 %v110
    %v225 = vunpack.c.l.b16 %v111
    %v226 = vunpack.c.h.b16 %v111
    %v227 = vunpack.c.l.b16 %v112
    %v228 = vunpack.c.h.b16 %v112
    %v229 = vunpack.c.l.b16 %v113
    %v230 = vunpack.c.h.b16 %v113
    %v231 = vunpack.c.l.b16 %v114
    %v232 = vunpack.c.h.b16 %v114
    %v233 = vunpack.c.l.b16 %v115
    %v234 = vunpack.c.h.b16 %v115
    %v235 = vunpack.c.l.b16 %v116
    %v236 = vunpack.c.h.b16 %v116
    %v237 = vpack.c.b16 %v177, %v173
    %v238 = vpack.c.b16 %v178, %v174
    %v239 = vpack.c.b16 %v179, %v175
    %v240 = vpack.c.b16 %v180, %v176
    %v241 = vpack.c.b16 %v185, %v181
    %v242 = vpack.c.b16 %v186, %v182
    %v243 = vpack.c.b16 %v187, %v183
    %v244 = vpack.c.b16 %v188, %v184
    %v245 = vpack.c.b16 %v193, %v189
    %v246 = vpack.c.b16 %v194, %v190
    %v247 = vpack.c.b16 %v195, %v191
    %v248 = vpack.c.b16 %v196, %v192
    %v249 = vpack.c.b16 %v201, %v197
    %v250 = vpack.c.b16 %v202, %v198
    %v251 = vpack.c.b16 %v203, %v199
    %v252 = vpack.c.b16 %v204, %v200
    %v253 = vpack.c.b16 %v209, %v205
    %v254 = vpack.c.b16 %v210, %v206
    %v255 = vpack.c.b16 %v211, %v207
    %v256 = vpack.c.b16 %v212, %v208
    %v257 = vpack.c.b16 %v217, %v213
    %v258 = vpack.c.b16 %v218, %v214
    %v259 = vpack.c.b16 %v219, %v215
    %v260 = vpack.c.b16 %v220, %v216
    %v261 = vpack.c.b16 %v225, %v221
    %v262 = vpack.c.b16 %v226, %v222
    %v263 = vpack.c.b16 %v227, %v223
    %v264 = vpack.c.b16 %v228, %v224
    %v265 = vpack.c.b16 %v233, %v229
    %v266 = vpack.c.b16 %v234, %v230
    %v267 = vpack.c.b16 %v235, %v231
    %v268 = vpack.c.b16 %v236, %v232
    %301 = vmatprep.subr.bf16.mxu0 %v238
    %302 = vmatpush1.bf16.msra.mxu0 %v237
    %303 = vmatprep.subr.bf16.mxu0 %v242
    %304 = vmatpush1.bf16.msra.mxu0 %v241
    %305 = vmatprep.subr.bf16.mxu0 %v246
    %306 = vmatpush1.bf16.msra.mxu0 %v245
    %307 = vmatprep.subr.bf16.mxu0 %v250
    %308 = vmatpush1.bf16.msra.mxu0 %v249
    %309 = vmatprep.subr.bf16.mxu0 %v254
    %310 = vmatpush1.bf16.msra.mxu0 %v253
    %311 = vmatprep.subr.bf16.mxu0 %v258
    %312 = vmatpush1.bf16.msra.mxu0 %v257
    %313 = vmatprep.subr.bf16.mxu0 %v262
    %314 = vmatpush1.bf16.msra.mxu0 %v261
    %315 = vmatprep.subr.bf16.mxu0 %v266
    %316 = vmatpush1.bf16.msra.mxu0 %v265
    %317 = vmatprep.subr.bf16.mxu0 0
    %318 = vmatpush1.bf16.msra.mxu0 0
    %319 = vmatprep.subr.bf16.mxu0 0
    %320 = vmatpush1.bf16.msra.mxu0 0
    %321 = vmatprep.subr.bf16.mxu0 0
    %322 = vmatpush1.bf16.msra.mxu0 0
    %323 = vmatprep.subr.bf16.mxu0 0
    %324 = vmatpush1.bf16.msra.mxu0 0
    %325 = vmatprep.subr.bf16.mxu0 0
    %326 = vmatpush1.bf16.msra.mxu0 0
    %327 = vmatprep.subr.bf16.mxu0 0
    %328 = vmatpush1.bf16.msra.mxu0 0
    %329 = vmatprep.subr.bf16.mxu0 0
    %330 = vmatpush1.bf16.msra.mxu0 0
    %331 = vmatprep.subr.bf16.mxu0 0
    %332 = vmatpush1.bf16.msra.mxu0 0
    %333 = vmatprep.mubr.bf16.mxu0 0
    %334 = vmatmul.mubr.bf16.gmra.mrb[0].mxu0 %v133
    %v335 = vpop.f32.mrb[0].mxu0
    %v336 = vadd.f32 0.0, %v335
    %v337 = vpop.f32.mrb[0].mxu0
    %v338 = vadd.f32 0.0, %v337
    %v339 = vpop.f32.mrb[0].mxu0
    %v340 = vadd.f32 0.0, %v339
    %v341 = vpop.f32.mrb[0].mxu0
    %v342 = vadd.f32 0.0, %v341
    %343 = vmatprep.mubr.bf16.mxu0 0
    %344 = vmatmul.mubr.bf16.gmra.mrb[0].mxu0 %v134
    %v345 = vpop.f32.mrb[0].mxu0
    %v346 = vadd.f32 0.0, %v345
    %v347 = vpop.f32.mrb[0].mxu0
    %v348 = vadd.f32 0.0, %v347
    %v349 = vpop.f32.mrb[0].mxu0
    %v350 = vadd.f32 0.0, %v349
    %v351 = vpop.f32.mrb[0].mxu0
    %v352 = vadd.f32 0.0, %v351
    %353 = vmatprep.mubr.bf16.mxu0 0
    %354 = vmatmul.mubr.bf16.gmra.mrb[0].mxu0 %v135
    %v355 = vpop.f32.mrb[0].mxu0
    %v356 = vadd.f32 0.0, %v355
    %v357 = vpop.f32.mrb[0].mxu0
    %v358 = vadd.f32 0.0, %v357
    %v359 = vpop.f32.mrb[0].mxu0
    %v360 = vadd.f32 0.0, %v359
    %v361 = vpop.f32.mrb[0].mxu0
    %v362 = vadd.f32 0.0, %v361
    %363 = vmatprep.mubr.bf16.mxu0 0
    %364 = vmatmul.mubr.bf16.gmra.mrb[0].mxu0 %v136
    %v365 = vpop.f32.mrb[0].mxu0
    %v366 = vadd.f32 0.0, %v365
    %v367 = vpop.f32.mrb[0].mxu0
    %v368 = vadd.f32 0.0, %v367
    %v369 = vpop.f32.mrb[0].mxu0
    %v370 = vadd.f32 0.0, %v369
    %v371 = vpop.f32.mrb[0].mxu0
    %v372 = vadd.f32 0.0, %v371
    %373 = vdwg.mxu0
    %374 = vmatprep.subr.bf16.mxu0 %v240
    %375 = vmatpush1.bf16.msra.mxu0 %v239
    %376 = vmatprep.subr.bf16.mxu0 %v244
    %377 = vmatpush1.bf16.msra.mxu0 %v243
    %378 = vmatprep.subr.bf16.mxu0 %v248
    %379 = vmatpush1.bf16.msra.mxu0 %v247
    %380 = vmatprep.subr.bf16.mxu0 %v252
    %381 = vmatpush1.bf16.msra.mxu0 %v251
    %382 = vmatprep.subr.bf16.mxu0 %v256
    %383 = vmatpush1.bf16.msra.mxu0 %v255
    %384 = vmatprep.subr.bf16.mxu0 %v260
    %385 = vmatpush1.bf16.msra.mxu0 %v259
    %386 = vmatprep.subr.bf16.mxu0 %v264
    %387 = vmatpush1.bf16.msra.mxu0 %v263
    %388 = vmatprep.subr.bf16.mxu0 %v268
    %389 = vmatpush1.bf16.msra.mxu0 %v267
    %390 = vmatprep.subr.bf16.mxu0 0
    %391 = vmatpush1.bf16.msra.mxu0 0
    %392 = vmatprep.subr.bf16.mxu0 0
    %393 = vmatpush1.bf16.msra.mxu0 0
    %394 = vmatprep.subr.bf16.mxu0 0
    %395 = vmatpush1.bf16.msra.mxu0 0
    %396 = vmatprep.subr.bf16.mxu0 0
    %397 = vmatpush1.bf16.msra.mxu0 0
    %398 = vmatprep.subr.bf16.mxu0 0
    %399 = vmatpush1.bf16.msra.mxu0 0
    %400 = vmatprep.subr.bf16.mxu0 0
    %401 = vmatpush1.bf16.msra.mxu0 0
    %402 = vmatprep.subr.bf16.mxu0 0
    %403 = vmatpush1.bf16.msra.mxu0 0
    %404 = vmatprep.subr.bf16.mxu0 0
    %405 = vmatpush1.bf16.msra.mxu0 0
    %406 = vmatprep.mubr.bf16.mxu0 0
    %407 = vmatmul.mubr.bf16.gmra.mrb[0].mxu0 %v133
    %v408 = vpop.f32.mrb[0].mxu0
    %v409 = vadd.f32 0.0, %v408
    %v410 = vpop.f32.mrb[0].mxu0
    %v411 = vadd.f32 0.0, %v410
    %v412 = vpop.f32.mrb[0].mxu0
    %v413 = vadd.f32 0.0, %v412
    %v414 = vpop.f32.mrb[0].mxu0
    %v415 = vadd.f32 0.0, %v414
    %416 = vmatprep.mubr.bf16.mxu0 0
    %417 = vmatmul.mubr.bf16.gmra.mrb[0].mxu0 %v134
    %v418 = vpop.f32.mrb[0].mxu0
    %v419 = vadd.f32 0.0, %v418
    %v420 = vpop.f32.mrb[0].mxu0
    %v421 = vadd.f32 0.0, %v420
    %v422 = vpop.f32.mrb[0].mxu0
    %v423 = vadd.f32 0.0, %v422
    %v424 = vpop.f32.mrb[0].mxu0
    %v425 = vadd.f32 0.0, %v424
    %426 = vmatprep.mubr.bf16.mxu0 0
    %427 = vmatmul.mubr.bf16.gmra.mrb[0].mxu0 %v135
    %v428 = vpop.f32.mrb[0].mxu0
    %v429 = vadd.f32 0.0, %v428
    %v430 = vpop.f32.mrb[0].mxu0
    %v431 = vadd.f32 0.0, %v430
    %v432 = vpop.f32.mrb[0].mxu0
    %v433 = vadd.f32 0.0, %v432
    %v434 = vpop.f32.mrb[0].mxu0
    %v435 = vadd.f32 0.0, %v434
    %436 = vmatprep.mubr.bf16.mxu0 0
    %437 = vmatmul.mubr.bf16.gmra.mrb[0].mxu0 %v136
    %v438 = vpop.f32.mrb[0].mxu0
    %v439 = vadd.f32 0.0, %v438
    %v440 = vpop.f32.mrb[0].mxu0
    %v441 = vadd.f32 0.0, %v440
    %v442 = vpop.f32.mrb[0].mxu0
    %v443 = vadd.f32 0.0, %v442
    %v444 = vpop.f32.mrb[0].mxu0
    %v445 = vadd.f32 0.0, %v444
    %446 = vdwg.mxu0
    %v447 = vld [vmem:[%s5] sm:$0xf]
    %v449 = vlaneseq
    %v450 = vshrl.u32 %v449, 7
    %v451 = vsub.s32 0, %v450
    %v452 = vrot.slane %v447, %v451
    %v453 = vlaneseq
    %v454 = vshrl.u32 %v453, 7
    %v455 = vsub.s32 1, %v454
    %v456 = vrot.slane %v447, %v455
    %v457 = vlaneseq
    %v458 = vshrl.u32 %v457, 7
    %v459 = vsub.s32 2, %v458
    %v460 = vrot.slane %v447, %v459
    %v461 = vlaneseq
    %v462 = vshrl.u32 %v461, 7
    %v463 = vsub.s32 3, %v462
    %v464 = vrot.slane %v447, %v463
    %v469 = vadd.f32 %v336, %v452
    %v470 = vadd.f32 %v338, %v456
    %v471 = vadd.f32 %v409, %v460
    %v472 = vadd.f32 %v411, %v464
    %v473 = vadd.f32 %v340, %v452
    %v474 = vadd.f32 %v342, %v456
    %v475 = vadd.f32 %v413, %v460
    %v476 = vadd.f32 %v415, %v464
    %v477 = vadd.f32 %v346, %v452
    %v478 = vadd.f32 %v348, %v456
    %v479 = vadd.f32 %v419, %v460
    %v480 = vadd.f32 %v421, %v464
    %v481 = vadd.f32 %v350, %v452
    %v482 = vadd.f32 %v352, %v456
    %v483 = vadd.f32 %v423, %v460
    %v484 = vadd.f32 %v425, %v464
    %v485 = vadd.f32 %v356, %v452
    %v486 = vadd.f32 %v358, %v456
    %v487 = vadd.f32 %v429, %v460
    %v488 = vadd.f32 %v431, %v464
    %v489 = vadd.f32 %v360, %v452
    %v490 = vadd.f32 %v362, %v456
    %v491 = vadd.f32 %v433, %v460
    %v492 = vadd.f32 %v435, %v464
    %v493 = vadd.f32 %v366, %v452
    %v494 = vadd.f32 %v368, %v456
    %v495 = vadd.f32 %v439, %v460
    %v496 = vadd.f32 %v441, %v464
    %v497 = vadd.f32 %v370, %v452
    %v498 = vadd.f32 %v372, %v456
    %v499 = vadd.f32 %v443, %v460
    %v500 = vadd.f32 %v445, %v464
    %501 = vst [vmem:[#allocation2] sm:$0xff] %v469
    %502 = vst [vmem:[#allocation2 + $0x8] sm:$0xff] %v470
    %503 = vst [vmem:[#allocation2 + $0x10] sm:$0xff] %v471
    %504 = vst [vmem:[#allocation2 + $0x18] sm:$0xff] %v472
    %505 = vst [vmem:[#allocation2 + $0x20] sm:$0xff] %v473
    %506 = vst [vmem:[#allocation2 + $0x28] sm:$0xff] %v474
    %507 = vst [vmem:[#allocation2 + $0x30] sm:$0xff] %v475
    %508 = vst [vmem:[#allocation2 + $0x38] sm:$0xff] %v476
    %509 = vst [vmem:[#allocation2 + $0x40] sm:$0xff] %v477
    %510 = vst [vmem:[#allocation2 + $0x48] sm:$0xff] %v478
    %511 = vst [vmem:[#allocation2 + $0x50] sm:$0xff] %v479
    %512 = vst [vmem:[#allocation2 + $0x58] sm:$0xff] %v480
    %513 = vst [vmem:[#allocation2 + $0x60] sm:$0xff] %v481
    %514 = vst [vmem:[#allocation2 + $0x68] sm:$0xff] %v482
    %515 = vst [vmem:[#allocation2 + $0x70] sm:$0xff] %v483
    %516 = vst [vmem:[#allocation2 + $0x78] sm:$0xff] %v484
    %517 = vst [vmem:[#allocation2 + $0x80] sm:$0xff] %v485
    %518 = vst [vmem:[#allocation2 + $0x88] sm:$0xff] %v486
    %519 = vst [vmem:[#allocation2 + $0x90] sm:$0xff] %v487
    %520 = vst [vmem:[#allocation2 + $0x98] sm:$0xff] %v488
    %521 = vst [vmem:[#allocation2 + $0xa0] sm:$0xff] %v489
    %522 = vst [vmem:[#allocation2 + $0xa8] sm:$0xff] %v490
    %523 = vst [vmem:[#allocation2 + $0xb0] sm:$0xff] %v491
    %524 = vst [vmem:[#allocation2 + $0xb8] sm:$0xff] %v492
    %525 = vst [vmem:[#allocation2 + $0xc0] sm:$0xff] %v493
    %526 = vst [vmem:[#allocation2 + $0xc8] sm:$0xff] %v494
    %527 = vst [vmem:[#allocation2 + $0xd0] sm:$0xff] %v495
    %528 = vst [vmem:[#allocation2 + $0xd8] sm:$0xff] %v496
    %529 = vst [vmem:[#allocation2 + $0xe0] sm:$0xff] %v497
    %530 = vst [vmem:[#allocation2 + $0xe8] sm:$0xff] %v498
    %531 = vst [vmem:[#allocation2 + $0xf0] sm:$0xff] %v499
    %532 = vst [vmem:[#allocation2 + $0xf8] sm:$0xff] %v500
    %v533 = vld [vmem:[%s6] sm:$0xff]
    %s534 = smul.u32 0, 8
    %v535 = vld [vmem:[#allocation3] sm:$0xff]
    %v536 = vld [vmem:[#allocation4] sm:$0xff]
    %v537 = vld [vmem:[#allocation2] sm:$0xff]
    %v538 = vld [vmem:[#allocation2 + $0x8] sm:$0xff]
    %v539 = vld [vmem:[#allocation2 + $0x10] sm:$0xff]
    %v540 = vld [vmem:[#allocation2 + $0x18] sm:$0xff]
    %v541 = vpack.c.bf16 %v535, %v535
    %v542 = vld [vmem:[#allocation10] sm:$0xff]
    %v543 = vld [vmem:[#allocation10 + $0x8] sm:$0xff]
    %v544 = vld [vmem:[#allocation10 + $0x10] sm:$0xff]
    %v545 = vld [vmem:[#allocation10 + $0x18] sm:$0xff]
    %v546 = vld [vmem:[#allocation10 + $0x20] sm:$0xff]
    %v547 = vld [vmem:[#allocation10 + $0x28] sm:$0xff]
    %v548 = vld [vmem:[#allocation10 + $0x30] sm:$0xff]
    %v549 = vld [vmem:[#allocation10 + $0x38] sm:$0xff]
    %v550 = vld [vmem:[#allocation10 + $0x40] sm:$0xff]
    %v551 = vld [vmem:[#allocation10 + $0x48] sm:$0xff]
    %v552 = vld [vmem:[#allocation10 + $0x50] sm:$0xff]
    %v553 = vld [vmem:[#allocation10 + $0x58] sm:$0xff]
    %v554 = vld [vmem:[#allocation10 + $0x60] sm:$0xff]
    %v555 = vld [vmem:[#allocation10 + $0x68] sm:$0xff]
    %v556 = vld [vmem:[#allocation10 + $0x70] sm:$0xff]
    %v557 = vld [vmem:[#allocation10 + $0x78] sm:$0xff]
    %v558 = vld [vmem:[#allocation10 + $0x80] sm:$0xff]
    %v559 = vld [vmem:[#allocation10 + $0x88] sm:$0xff]
    %v560 = vld [vmem:[#allocation10 + $0x90] sm:$0xff]
    %v561 = vld [vmem:[#allocation10 + $0x98] sm:$0xff]
    %v562 = vld [vmem:[#allocation10 + $0xa0] sm:$0xff]
    %v563 = vld [vmem:[#allocation10 + $0xa8] sm:$0xff]
    %v564 = vld [vmem:[#allocation10 + $0xb0] sm:$0xff]
    %v565 = vld [vmem:[#allocation10 + $0xb8] sm:$0xff]
    %v566 = vld [vmem:[#allocation10 + $0xc0] sm:$0xff]
    %v567 = vld [vmem:[#allocation10 + $0xc8] sm:$0xff]
    %v568 = vld [vmem:[#allocation10 + $0xd0] sm:$0xff]
    %v569 = vld [vmem:[#allocation10 + $0xd8] sm:$0xff]
    %v570 = vld [vmem:[#allocation10 + $0xe0] sm:$0xff]
    %v571 = vld [vmem:[#allocation10 + $0xe8] sm:$0xff]
    %v572 = vld [vmem:[#allocation10 + $0xf0] sm:$0xff]
    %v573 = vld [vmem:[#allocation10 + $0xf8] sm:$0xff]
    %v606 = vunpack.c.l.b16 %v542
    %v607 = vunpack.c.h.b16 %v542
    %v608 = vunpack.c.l.b16 %v543
    %v609 = vunpack.c.h.b16 %v543
    %v610 = vunpack.c.l.b16 %v544
    %v611 = vunpack.c.h.b16 %v544
    %v612 = vunpack.c.l.b16 %v545
    %v613 = vunpack.c.h.b16 %v545
    %v614 = vunpack.c.l.b16 %v546
    %v615 = vunpack.c.h.b16 %v546
    %v616 = vunpack.c.l.b16 %v547
    %v617 = vunpack.c.h.b16 %v547
    %v618 = vunpack.c.l.b16 %v548
    %v619 = vunpack.c.h.b16 %v548
    %v620 = vunpack.c.l.b16 %v549
    %v621 = vunpack.c.h.b16 %v549
    %v622 = vunpack.c.l.b16 %v550
    %v623 = vunpack.c.h.b16 %v550
    %v624 = vunpack.c.l.b16 %v551
    %v625 = vunpack.c.h.b16 %v551
    %v626 = vunpack.c.l.b16 %v552
    %v627 = vunpack.c.h.b16 %v552
    %v628 = vunpack.c.l.b16 %v553
    %v629 = vunpack.c.h.b16 %v553
    %v630 = vunpack.c.l.b16 %v554
    %v631 = vunpack.c.h.b16 %v554
    %v632 = vunpack.c.l.b16 %v555
    %v633 = vunpack.c.h.b16 %v555
    %v634 = vunpack.c.l.b16 %v556
    %v635 = vunpack.c.h.b16 %v556
    %v636 = vunpack.c.l.b16 %v557
    %v637 = vunpack.c.h.b16 %v557
    %v638 = vunpack.c.l.b16 %v558
    %v639 = vunpack.c.h.b16 %v558
    %v640 = vunpack.c.l.b16 %v559
    %v641 = vunpack.c.h.b16 %v559
    %v642 = vunpack.c.l.b16 %v560
    %v643 = vunpack.c.h.b16 %v560
    %v644 = vunpack.c.l.b16 %v561
    %v645 = vunpack.c.h.b16 %v561
    %v646 = vunpack.c.l.b16 %v562
    %v647 = vunpack.c.h.b16 %v562
    %v648 = vunpack.c.l.b16 %v563
    %v649 = vunpack.c.h.b16 %v563
    %v650 = vunpack.c.l.b16 %v564
    %v651 = vunpack.c.h.b16 %v564
    %v652 = vunpack.c.l.b16 %v565
    %v653 = vunpack.c.h.b16 %v565
    %v654 = vunpack.c.l.b16 %v566
    %v655 = vunpack.c.h.b16 %v566
    %v656 = vunpack.c.l.b16 %v567
    %v657 = vunpack.c.h.b16 %v567
    %v658 = vunpack.c.l.b16 %v568
    %v659 = vunpack.c.h.b16 %v568
    %v660 = vunpack.c.l.b16 %v569
    %v661 = vunpack.c.h.b16 %v569
    %v662 = vunpack.c.l.b16 %v570
    %v663 = vunpack.c.h.b16 %v570
    %v664 = vunpack.c.l.b16 %v571
    %v665 = vunpack.c.h.b16 %v571
    %v666 = vunpack.c.l.b16 %v572
    %v667 = vunpack.c.h.b16 %v572
    %v668 = vunpack.c.l.b16 %v573
    %v669 = vunpack.c.h.b16 %v573
    %v670 = vpack.c.b16 %v610, %v606
    %v671 = vpack.c.b16 %v611, %v607
    %v672 = vpack.c.b16 %v612, %v608
    %v673 = vpack.c.b16 %v613, %v609
    %v674 = vpack.c.b16 %v618, %v614
    %v675 = vpack.c.b16 %v619, %v615
    %v676 = vpack.c.b16 %v620, %v616
    %v677 = vpack.c.b16 %v621, %v617
    %v678 = vpack.c.b16 %v626, %v622
    %v679 = vpack.c.b16 %v627, %v623
    %v680 = vpack.c.b16 %v628, %v624
    %v681 = vpack.c.b16 %v629, %v625
    %v682 = vpack.c.b16 %v634, %v630
    %v683 = vpack.c.b16 %v635, %v631
    %v684 = vpack.c.b16 %v636, %v632
    %v685 = vpack.c.b16 %v637, %v633
    %v686 = vpack.c.b16 %v642, %v638
    %v687 = vpack.c.b16 %v643, %v639
    %v688 = vpack.c.b16 %v644, %v640
    %v689 = vpack.c.b16 %v645, %v641
    %v690 = vpack.c.b16 %v650, %v646
    %v691 = vpack.c.b16 %v651, %v647
    %v692 = vpack.c.b16 %v652, %v648
    %v693 = vpack.c.b16 %v653, %v649
    %v694 = vpack.c.b16 %v658, %v654
    %v695 = vpack.c.b16 %v659, %v655
    %v696 = vpack.c.b16 %v660, %v656
    %v697 = vpack.c.b16 %v661, %v657
    %v698 = vpack.c.b16 %v666, %v662
    %v699 = vpack.c.b16 %v667, %v663
    %v700 = vpack.c.b16 %v668, %v664
    %v701 = vpack.c.b16 %v669, %v665
    %734 = vmatprep.subr.bf16.mxu0 %v671
    %735 = vmatpush1.bf16.msra.mxu0 %v670
    %736 = vmatprep.subr.bf16.mxu0 %v675
    %737 = vmatpush1.bf16.msra.mxu0 %v674
    %738 = vmatprep.subr.bf16.mxu0 %v679
    %739 = vmatpush1.bf16.msra.mxu0 %v678
    %740 = vmatprep.subr.bf16.mxu0 %v683
    %741 = vmatpush1.bf16.msra.mxu0 %v682
    %742 = vmatprep.subr.bf16.mxu0 %v687
    %743 = vmatpush1.bf16.msra.mxu0 %v686
    %744 = vmatprep.subr.bf16.mxu0 %v691
    %745 = vmatpush1.bf16.msra.mxu0 %v690
    %746 = vmatprep.subr.bf16.mxu0 %v695
    %747 = vmatpush1.bf16.msra.mxu0 %v694
    %748 = vmatprep.subr.bf16.mxu0 %v699
    %749 = vmatpush1.bf16.msra.mxu0 %v698
    %750 = vmatprep.subr.bf16.mxu0 0
    %751 = vmatpush1.bf16.msra.mxu0 0
    %752 = vmatprep.subr.bf16.mxu0 0
    %753 = vmatpush1.bf16.msra.mxu0 0
    %754 = vmatprep.subr.bf16.mxu0 0
    %755 = vmatpush1.bf16.msra.mxu0 0
    %756 = vmatprep.subr.bf16.mxu0 0
    %757 = vmatpush1.bf16.msra.mxu0 0
    %758 = vmatprep.subr.bf16.mxu0 0
    %759 = vmatpush1.bf16.msra.mxu0 0
    %760 = vmatprep.subr.bf16.mxu0 0
    %761 = vmatpush1.bf16.msra.mxu0 0
    %762 = vmatprep.subr.bf16.mxu0 0
    %763 = vmatpush1.bf16.msra.mxu0 0
    %764 = vmatprep.subr.bf16.mxu0 0
    %765 = vmatpush1.bf16.msra.mxu0 0
    %766 = vmatprep.mubr.bf16.mxu0 0
    %767 = vmatmul.mubr.bf16.gmra.mrb[0].mxu0 %v541
    %v768 = vpop.f32.mrb[0].mxu0
    %v769 = vadd.f32 0.0, %v768
    %v770 = vpop.f32.mrb[0].mxu0
    %v771 = vadd.f32 0.0, %v770
    %v772 = vpop.f32.mrb[0].mxu0
    %v773 = vpop.f32.mrb[0].mxu0
    %774 = vdwg.mxu0
    %775 = vmatprep.subr.bf16.mxu0 %v673
    %776 = vmatpush1.bf16.msra.mxu0 %v672
    %777 = vmatprep.subr.bf16.mxu0 %v677
    %778 = vmatpush1.bf16.msra.mxu0 %v676
    %779 = vmatprep.subr.bf16.mxu0 %v681
    %780 = vmatpush1.bf16.msra.mxu0 %v680
    %781 = vmatprep.subr.bf16.mxu0 %v685
    %782 = vmatpush1.bf16.msra.mxu0 %v684
    %783 = vmatprep.subr.bf16.mxu0 %v689
    %784 = vmatpush1.bf16.msra.mxu0 %v688
    %785 = vmatprep.subr.bf16.mxu0 %v693
    %786 = vmatpush1.bf16.msra.mxu0 %v692
    %787 = vmatprep.subr.bf16.mxu0 %v697
    %788 = vmatpush1.bf16.msra.mxu0 %v696
    %789 = vmatprep.subr.bf16.mxu0 %v701
    %790 = vmatpush1.bf16.msra.mxu0 %v700
    %791 = vmatprep.subr.bf16.mxu0 0
    %792 = vmatpush1.bf16.msra.mxu0 0
    %793 = vmatprep.subr.bf16.mxu0 0
    %794 = vmatpush1.bf16.msra.mxu0 0
    %795 = vmatprep.subr.bf16.mxu0 0
    %796 = vmatpush1.bf16.msra.mxu0 0
    %797 = vmatprep.subr.bf16.mxu0 0
    %798 = vmatpush1.bf16.msra.mxu0 0
    %799 = vmatprep.subr.bf16.mxu0 0
    %800 = vmatpush1.bf16.msra.mxu0 0
    %801 = vmatprep.subr.bf16.mxu0 0
    %802 = vmatpush1.bf16.msra.mxu0 0
    %803 = vmatprep.subr.bf16.mxu0 0
    %804 = vmatpush1.bf16.msra.mxu0 0
    %805 = vmatprep.subr.bf16.mxu0 0
    %806 = vmatpush1.bf16.msra.mxu0 0
    %807 = vmatprep.mubr.bf16.mxu0 0
    %808 = vmatmul.mubr.bf16.gmra.mrb[0].mxu0 %v541
    %v809 = vpop.f32.mrb[0].mxu0
    %v810 = vadd.f32 0.0, %v809
    %v811 = vpop.f32.mrb[0].mxu0
    %v812 = vadd.f32 0.0, %v811
    %v813 = vpop.f32.mrb[0].mxu0
    %v814 = vpop.f32.mrb[0].mxu0
    %815 = vdwg.mxu0
    %v816 = vadd.f32 %v537, %v769
    %v817 = vadd.f32 %v538, %v771
    %v818 = vadd.f32 %v539, %v810
    %v819 = vadd.f32 %v540, %v812
    %v820 = vmul.f32 %v816, 0.5
    %v821 = vtanh.pop %v820
    %v822 = vmul.f32 %v821, 0.5
    %v823 = vadd.f32 %v822, 0.5
    %v824 = vmul.f32 %v817, 0.5
    %v825 = vtanh.pop %v824
    %v826 = vmul.f32 %v825, 0.5
    %v827 = vadd.f32 %v826, 0.5
    %v828 = vtanh.pop %v818
    %v829 = vmul.f32 %v819, 0.5
    %v830 = vtanh.pop %v829
    %v831 = vmul.f32 %v830, 0.5
    %v832 = vadd.f32 %v831, 0.5
    %v833 = vmul.f32 %v827, %v536
    %v834 = vmul.f32 %v823, %v828
    %v835 = vadd.f32 %v833, %v834
    %v836 = vtanh.pop %v835
    %v837 = vmul.f32 %v832, %v836
    %v838 = vstv %s534
    %vm839 = vcmp.gt.s32.totalorder %v533, %v838
    %v840 = vsel %vm839, 1, 0
    %841 = vset.pattern.permute.xlu0 0
    %842 = vperm.xlu0 %841, %v840
    %v843 = vpop.permute.xlu0 %842
    %vm844 = vcmp.eq.s32.totalorder %v843, 1
    %v845 = vsel %vm844, %v837, 0.0
    %846 = vst [vmem:[#allocation11] sm:$0xff] %v845
    %s847 = scalar_lea.vmem [#allocation2], 32
    %v848 = vld [vmem:[%s847] sm:$0xff]
    %v849 = vld [vmem:[%s847 + $0x8] sm:$0xff]
    %v850 = vld [vmem:[%s847 + $0x10] sm:$0xff]
    %v851 = vld [vmem:[%s847 + $0x18] sm:$0xff]
    %v852 = vpack.c.bf16 %v837, %v837
    %v853 = vld [vmem:[#allocation10] sm:$0xff]
    %v854 = vld [vmem:[#allocation10 + $0x8] sm:$0xff]
    %v855 = vld [vmem:[#allocation10 + $0x10] sm:$0xff]
    %v856 = vld [vmem:[#allocation10 + $0x18] sm:$0xff]
    %v857 = vld [vmem:[#allocation10 + $0x20] sm:$0xff]
    %v858 = vld [vmem:[#allocation10 + $0x28] sm:$0xff]
    %v859 = vld [vmem:[#allocation10 + $0x30] sm:$0xff]
    %v860 = vld [vmem:[#allocation10 + $0x38] sm:$0xff]
    %v861 = vld [vmem:[#allocation10 + $0x40] sm:$0xff]
    %v862 = vld [vmem:[#allocation10 + $0x48] sm:$0xff]
    %v863 = vld [vmem:[#allocation10 + $0x50] sm:$0xff]
    %v864 = vld [vmem:[#allocation10 + $0x58] sm:$0xff]
    %v865 = vld [vmem:[#allocation10 + $0x60] sm:$0xff]
    %v866 = vld [vmem:[#allocation10 + $0x68] sm:$0xff]
    %v867 = vld [vmem:[#allocation10 + $0x70] sm:$0xff]
    %v868 = vld [vmem:[#allocation10 + $0x78] sm:$0xff]
    %v869 = vld [vmem:[#allocation10 + $0x80] sm:$0xff]
    %v870 = vld [vmem:[#allocation10 + $0x88] sm:$0xff]
    %v871 = vld [vmem:[#allocation10 + $0x90] sm:$0xff]
    %v872 = vld [vmem:[#allocation10 + $0x98] sm:$0xff]
    %v873 = vld [vmem:[#allocation10 + $0xa0] sm:$0xff]
    %v874 = vld [vmem:[#allocation10 + $0xa8] sm:$0xff]
    %v875 = vld [vmem:[#allocation10 + $0xb0] sm:$0xff]
    %v876 = vld [vmem:[#allocation10 + $0xb8] sm:$0xff]
    %v877 = vld [vmem:[#allocation10 + $0xc0] sm:$0xff]
    %v878 = vld [vmem:[#allocation10 + $0xc8] sm:$0xff]
    %v879 = vld [vmem:[#allocation10 + $0xd0] sm:$0xff]
    %v880 = vld [vmem:[#allocation10 + $0xd8] sm:$0xff]
    %v881 = vld [vmem:[#allocation10 + $0xe0] sm:$0xff]
    %v882 = vld [vmem:[#allocation10 + $0xe8] sm:$0xff]
    %v883 = vld [vmem:[#allocation10 + $0xf0] sm:$0xff]
    %v884 = vld [vmem:[#allocation10 + $0xf8] sm:$0xff]
    %v917 = vunpack.c.l.b16 %v853
    %v918 = vunpack.c.h.b16 %v853
    %v919 = vunpack.c.l.b16 %v854
    %v920 = vunpack.c.h.b16 %v854
    %v921 = vunpack.c.l.b16 %v855
    %v922 = vunpack.c.h.b16 %v855
    %v923 = vunpack.c.l.b16 %v856
    %v924 = vunpack.c.h.b16 %v856
    %v925 = vunpack.c.l.b16 %v857
    %v926 = vunpack.c.h.b16 %v857
    %v927 = vunpack.c.l.b16 %v858
    %v928 = vunpack.c.h.b16 %v858
    %v929 = vunpack.c.l.b16 %v859
    %v930 = vunpack.c.h.b16 %v859
    %v931 = vunpack.c.l.b16 %v860
    %v932 = vunpack.c.h.b16 %v860
    %v933 = vunpack.c.l.b16 %v861
    %v934 = vunpack.c.h.b16 %v861
    %v935 = vunpack.c.l.b16 %v862
    %v936 = vunpack.c.h.b16 %v862
    %v937 = vunpack.c.l.b16 %v863
    %v938 = vunpack.c.h.b16 %v863
    %v939 = vunpack.c.l.b16 %v864
    %v940 = vunpack.c.h.b16 %v864
    %v941 = vunpack.c.l.b16 %v865
    %v942 = vunpack.c.h.b16 %v865
    %v943 = vunpack.c.l.b16 %v866
    %v944 = vunpack.c.h.b16 %v866
    %v945 = vunpack.c.l.b16 %v867
    %v946 = vunpack.c.h.b16 %v867
    %v947 = vunpack.c.l.b16 %v868
    %v948 = vunpack.c.h.b16 %v868
    %v949 = vunpack.c.l.b16 %v869
    %v950 = vunpack.c.h.b16 %v869
    %v951 = vunpack.c.l.b16 %v870
    %v952 = vunpack.c.h.b16 %v870
    %v953 = vunpack.c.l.b16 %v871
    %v954 = vunpack.c.h.b16 %v871
    %v955 = vunpack.c.l.b16 %v872
    %v956 = vunpack.c.h.b16 %v872
    %v957 = vunpack.c.l.b16 %v873
    %v958 = vunpack.c.h.b16 %v873
    %v959 = vunpack.c.l.b16 %v874
    %v960 = vunpack.c.h.b16 %v874
    %v961 = vunpack.c.l.b16 %v875
    %v962 = vunpack.c.h.b16 %v875
    %v963 = vunpack.c.l.b16 %v876
    %v964 = vunpack.c.h.b16 %v876
    %v965 = vunpack.c.l.b16 %v877
    %v966 = vunpack.c.h.b16 %v877
    %v967 = vunpack.c.l.b16 %v878
    %v968 = vunpack.c.h.b16 %v878
    %v969 = vunpack.c.l.b16 %v879
    %v970 = vunpack.c.h.b16 %v879
    %v971 = vunpack.c.l.b16 %v880
    %v972 = vunpack.c.h.b16 %v880
    %v973 = vunpack.c.l.b16 %v881
    %v974 = vunpack.c.h.b16 %v881
    %v975 = vunpack.c.l.b16 %v882
    %v976 = vunpack.c.h.b16 %v882
    %v977 = vunpack.c.l.b16 %v883
    %v978 = vunpack.c.h.b16 %v883
    %v979 = vunpack.c.l.b16 %v884
    %v980 = vunpack.c.h.b16 %v884
    %v981 = vpack.c.b16 %v921, %v917
    %v982 = vpack.c.b16 %v922, %v918
    %v983 = vpack.c.b16 %v923, %v919
    %v984 = vpack.c.b16 %v924, %v920
    %v985 = vpack.c.b16 %v929, %v925
    %v986 = vpack.c.b16 %v930, %v926
    %v987 = vpack.c.b16 %v931, %v927
    %v988 = vpack.c.b16 %v932, %v928
    %v989 = vpack.c.b16 %v937, %v933
    %v990 = vpack.c.b16 %v938, %v934
    %v991 = vpack.c.b16 %v939, %v935
    %v992 = vpack.c.b16 %v940, %v936
    %v993 = vpack.c.b16 %v945, %v941
    %v994 = vpack.c.b16 %v946, %v942
    %v995 = vpack.c.b16 %v947, %v943
    %v996 = vpack.c.b16 %v948, %v944
    %v997 = vpack.c.b16 %v953, %v949
    %v998 = vpack.c.b16 %v954, %v950
    %v999 = vpack.c.b16 %v955, %v951
    %v1000 = vpack.c.b16 %v956, %v952
    %v1001 = vpack.c.b16 %v961, %v957
    %v1002 = vpack.c.b16 %v962, %v958
    %v1003 = vpack.c.b16 %v963, %v959
    %v1004 = vpack.c.b16 %v964, %v960
    %v1005 = vpack.c.b16 %v969, %v965
    %v1006 = vpack.c.b16 %v970, %v966
    %v1007 = vpack.c.b16 %v971, %v967
    %v1008 = vpack.c.b16 %v972, %v968
    %v1009 = vpack.c.b16 %v977, %v973
    %v1010 = vpack.c.b16 %v978, %v974
    %v1011 = vpack.c.b16 %v979, %v975
    %v1012 = vpack.c.b16 %v980, %v976
    %1045 = vmatprep.subr.bf16.mxu0 %v982
    %1046 = vmatpush1.bf16.msra.mxu0 %v981
    %1047 = vmatprep.subr.bf16.mxu0 %v986
    %1048 = vmatpush1.bf16.msra.mxu0 %v985
    %1049 = vmatprep.subr.bf16.mxu0 %v990
    %1050 = vmatpush1.bf16.msra.mxu0 %v989
    %1051 = vmatprep.subr.bf16.mxu0 %v994
    %1052 = vmatpush1.bf16.msra.mxu0 %v993
    %1053 = vmatprep.subr.bf16.mxu0 %v998
    %1054 = vmatpush1.bf16.msra.mxu0 %v997
    %1055 = vmatprep.subr.bf16.mxu0 %v1002
    %1056 = vmatpush1.bf16.msra.mxu0 %v1001
    %1057 = vmatprep.subr.bf16.mxu0 %v1006
    %1058 = vmatpush1.bf16.msra.mxu0 %v1005
    %1059 = vmatprep.subr.bf16.mxu0 %v1010
    %1060 = vmatpush1.bf16.msra.mxu0 %v1009
    %1061 = vmatprep.subr.bf16.mxu0 0
    %1062 = vmatpush1.bf16.msra.mxu0 0
    %1063 = vmatprep.subr.bf16.mxu0 0
    %1064 = vmatpush1.bf16.msra.mxu0 0
    %1065 = vmatprep.subr.bf16.mxu0 0
    %1066 = vmatpush1.bf16.msra.mxu0 0
    %1067 = vmatprep.subr.bf16.mxu0 0
    %1068 = vmatpush1.bf16.msra.mxu0 0
    %1069 = vmatprep.subr.bf16.mxu0 0
    %1070 = vmatpush1.bf16.msra.mxu0 0
    %1071 = vmatprep.subr.bf16.mxu0 0
    %1072 = vmatpush1.bf16.msra.mxu0 0
    %1073 = vmatprep.subr.bf16.mxu0 0
    %1074 = vmatpush1.bf16.msra.mxu0 0
    %1075 = vmatprep.subr.bf16.mxu0 0
    %1076 = vmatpush1.bf16.msra.mxu0 0
    %1077 = vmatprep.mubr.bf16.mxu0 0
    %1078 = vmatmul.mubr.bf16.gmra.mrb[0].mxu0 %v852
    %v1079 = vpop.f32.mrb[0].mxu0
    %v1080 = vadd.f32 0.0, %v1079
    %v1081 = vpop.f32.mrb[0].mxu0
    %v1082 = vadd.f32 0.0, %v1081
    %v1083 = vpop.f32.mrb[0].mxu0
    %v1084 = vpop.f32.mrb[0].mxu0
    %1085 = vdwg.mxu0
    %1086 = vmatprep.subr.bf16.mxu0 %v984
    %1087 = vmatpush1.bf16.msra.mxu0 %v983
    %1088 = vmatprep.subr.bf16.mxu0 %v988
    %1089 = vmatpush1.bf16.msra.mxu0 %v987
    %1090 = vmatprep.subr.bf16.mxu0 %v992
    %1091 = vmatpush1.bf16.msra.mxu0 %v991
    %1092 = vmatprep.subr.bf16.mxu0 %v996
    %1093 = vmatpush1.bf16.msra.mxu0 %v995
    %1094 = vmatprep.subr.bf16.mxu0 %v1000
    %1095 = vmatpush1.bf16.msra.mxu0 %v999
    %1096 = vmatprep.subr.bf16.mxu0 %v1004
    %1097 = vmatpush1.bf16.msra.mxu0 %v1003
    %1098 = vmatprep.subr.bf16.mxu0 %v1008
    %1099 = vmatpush1.bf16.msra.mxu0 %v1007
    %1100 = vmatprep.subr.bf16.mxu0 %v1012
    %1101 = vmatpush1.bf16.msra.mxu0 %v1011
    %1102 = vmatprep.subr.bf16.mxu0 0
    %1103 = vmatpush1.bf16.msra.mxu0 0
    %1104 = vmatprep.subr.bf16.mxu0 0
    %1105 = vmatpush1.bf16.msra.mxu0 0
    %1106 = vmatprep.subr.bf16.mxu0 0
    %1107 = vmatpush1.bf16.msra.mxu0 0
    %1108 = vmatprep.subr.bf16.mxu0 0
    %1109 = vmatpush1.bf16.msra.mxu0 0
    %1110 = vmatprep.subr.bf16.mxu0 0
    %1111 = vmatpush1.bf16.msra.mxu0 0
    %1112 = vmatprep.subr.bf16.mxu0 0
    %1113 = vmatpush1.bf16.msra.mxu0 0
    %1114 = vmatprep.subr.bf16.mxu0 0
    %1115 = vmatpush1.bf16.msra.mxu0 0
    %1116 = vmatprep.subr.bf16.mxu0 0
    %1117 = vmatpush1.bf16.msra.mxu0 0
    %1118 = vmatprep.mubr.bf16.mxu0 0
    %1119 = vmatmul.mubr.bf16.gmra.mrb[0].mxu0 %v852
    %v1120 = vpop.f32.mrb[0].mxu0
    %v1121 = vadd.f32 0.0, %v1120
    %v1122 = vpop.f32.mrb[0].mxu0
    %v1123 = vadd.f32 0.0, %v1122
    %v1124 = vpop.f32.mrb[0].mxu0
    %v1125 = vpop.f32.mrb[0].mxu0
    %1126 = vdwg.mxu0
    %v1127 = vadd.f32 %v848, %v1080
    %v1128 = vadd.f32 %v849, %v1082
    %v1129 = vadd.f32 %v850, %v1121
    %v1130 = vadd.f32 %v851, %v1123
    %v1131 = vmul.f32 %v1127, 0.5
    %v1132 = vtanh.pop %v1131
    %v1133 = vmul.f32 %v1132, 0.5
    %v1134 = vadd.f32 %v1133, 0.5
    %v1135 = vmul.f32 %v1128, 0.5
    %v1136 = vtanh.pop %v1135
    %v1137 = vmul.f32 %v1136, 0.5
    %v1138 = vadd.f32 %v1137, 0.5
    %v1139 = vtanh.pop %v1129
    %v1140 = vmul.f32 %v1130, 0.5
    %v1141 = vtanh.pop %v1140
    %v1142 = vmul.f32 %v1141, 0.5
    %v1143 = vadd.f32 %v1142, 0.5
    %v1144 = vmul.f32 %v1138, %v835
    %v1145 = vmul.f32 %v1134, %v1139
    %v1146 = vadd.f32 %v1144, %v1145
    %v1147 = vtanh.pop %v1146
    %v1148 = vmul.f32 %v1143, %v1147
    %s1149 = sadd.s32 %s534, 1
    %v1150 = vstv %s1149
    %vm1151 = vcmp.gt.s32.totalorder %v533, %v1150
    %v1152 = vsel %vm1151, 1, 0
    %1153 = vset.pattern.permute.xlu0 0
    %1154 = vperm.xlu0 %1153, %v1152
    %v1155 = vpop.permute.xlu0 %1154
    %vm1156 = vcmp.eq.s32.totalorder %v1155, 1
    %v1157 = vsel %vm1156, %v1148, 0.0
    %s1158 = scalar_lea.vmem [#allocation11], 8
    %1159 = vst [vmem:[%s1158] sm:$0xff] %v1157
    %s1160 = scalar_lea.vmem [#allocation2], 64
    %v1161 = vld [vmem:[%s1160] sm:$0xff]
    %v1162 = vld [vmem:[%s1160 + $0x8] sm:$0xff]
    %v1163 = vld [vmem:[%s1160 + $0x10] sm:$0xff]
    %v1164 = vld [vmem:[%s1160 + $0x18] sm:$0xff]
    %v1165 = vpack.c.bf16 %v1148, %v1148
    %v1166 = vld [vmem:[#allocation10] sm:$0xff]
    %v1167 = vld [vmem:[#allocation10 + $0x8] sm:$0xff]
    %v1168 = vld [vmem:[#allocation10 + $0x10] sm:$0xff]
    %v1169 = vld [vmem:[#allocation10 + $0x18] sm:$0xff]
    %v1170 = vld [vmem:[#allocation10 + $0x20] sm:$0xff]
    %v1171 = vld [vmem:[#allocation10 + $0x28] sm:$0xff]
    %v1172 = vld [vmem:[#allocation10 + $0x30] sm:$0xff]
    %v1173 = vld [vmem:[#allocation10 + $0x38] sm:$0xff]
    %v1174 = vld [vmem:[#allocation10 + $0x40] sm:$0xff]
    %v1175 = vld [vmem:[#allocation10 + $0x48] sm:$0xff]
    %v1176 = vld [vmem:[#allocation10 + $0x50] sm:$0xff]
    %v1177 = vld [vmem:[#allocation10 + $0x58] sm:$0xff]
    %v1178 = vld [vmem:[#allocation10 + $0x60] sm:$0xff]
    %v1179 = vld [vmem:[#allocation10 + $0x68] sm:$0xff]
    %v1180 = vld [vmem:[#allocation10 + $0x70] sm:$0xff]
    %v1181 = vld [vmem:[#allocation10 + $0x78] sm:$0xff]
    %v1182 = vld [vmem:[#allocation10 + $0x80] sm:$0xff]
    %v1183 = vld [vmem:[#allocation10 + $0x88] sm:$0xff]
    %v1184 = vld [vmem:[#allocation10 + $0x90] sm:$0xff]
    %v1185 = vld [vmem:[#allocation10 + $0x98] sm:$0xff]
    %v1186 = vld [vmem:[#allocation10 + $0xa0] sm:$0xff]
    %v1187 = vld [vmem:[#allocation10 + $0xa8] sm:$0xff]
    %v1188 = vld [vmem:[#allocation10 + $0xb0] sm:$0xff]
    %v1189 = vld [vmem:[#allocation10 + $0xb8] sm:$0xff]
    %v1190 = vld [vmem:[#allocation10 + $0xc0] sm:$0xff]
    %v1191 = vld [vmem:[#allocation10 + $0xc8] sm:$0xff]
    %v1192 = vld [vmem:[#allocation10 + $0xd0] sm:$0xff]
    %v1193 = vld [vmem:[#allocation10 + $0xd8] sm:$0xff]
    %v1194 = vld [vmem:[#allocation10 + $0xe0] sm:$0xff]
    %v1195 = vld [vmem:[#allocation10 + $0xe8] sm:$0xff]
    %v1196 = vld [vmem:[#allocation10 + $0xf0] sm:$0xff]
    %v1197 = vld [vmem:[#allocation10 + $0xf8] sm:$0xff]
    %v1230 = vunpack.c.l.b16 %v1166
    %v1231 = vunpack.c.h.b16 %v1166
    %v1232 = vunpack.c.l.b16 %v1167
    %v1233 = vunpack.c.h.b16 %v1167
    %v1234 = vunpack.c.l.b16 %v1168
    %v1235 = vunpack.c.h.b16 %v1168
    %v1236 = vunpack.c.l.b16 %v1169
    %v1237 = vunpack.c.h.b16 %v1169
    %v1238 = vunpack.c.l.b16 %v1170
    %v1239 = vunpack.c.h.b16 %v1170
    %v1240 = vunpack.c.l.b16 %v1171
    %v1241 = vunpack.c.h.b16 %v1171
    %v1242 = vunpack.c.l.b16 %v1172
    %v1243 = vunpack.c.h.b16 %v1172
    %v1244 = vunpack.c.l.b16 %v1173
    %v1245 = vunpack.c.h.b16 %v1173
    %v1246 = vunpack.c.l.b16 %v1174
    %v1247 = vunpack.c.h.b16 %v1174
    %v1248 = vunpack.c.l.b16 %v1175
    %v1249 = vunpack.c.h.b16 %v1175
    %v1250 = vunpack.c.l.b16 %v1176
    %v1251 = vunpack.c.h.b16 %v1176
    %v1252 = vunpack.c.l.b16 %v1177
    %v1253 = vunpack.c.h.b16 %v1177
    %v1254 = vunpack.c.l.b16 %v1178
    %v1255 = vunpack.c.h.b16 %v1178
    %v1256 = vunpack.c.l.b16 %v1179
    %v1257 = vunpack.c.h.b16 %v1179
    %v1258 = vunpack.c.l.b16 %v1180
    %v1259 = vunpack.c.h.b16 %v1180
    %v1260 = vunpack.c.l.b16 %v1181
    %v1261 = vunpack.c.h.b16 %v1181
    %v1262 = vunpack.c.l.b16 %v1182
    %v1263 = vunpack.c.h.b16 %v1182
    %v1264 = vunpack.c.l.b16 %v1183
    %v1265 = vunpack.c.h.b16 %v1183
    %v1266 = vunpack.c.l.b16 %v1184
    %v1267 = vunpack.c.h.b16 %v1184
    %v1268 = vunpack.c.l.b16 %v1185
    %v1269 = vunpack.c.h.b16 %v1185
    %v1270 = vunpack.c.l.b16 %v1186
    %v1271 = vunpack.c.h.b16 %v1186
    %v1272 = vunpack.c.l.b16 %v1187
    %v1273 = vunpack.c.h.b16 %v1187
    %v1274 = vunpack.c.l.b16 %v1188
    %v1275 = vunpack.c.h.b16 %v1188
    %v1276 = vunpack.c.l.b16 %v1189
    %v1277 = vunpack.c.h.b16 %v1189
    %v1278 = vunpack.c.l.b16 %v1190
    %v1279 = vunpack.c.h.b16 %v1190
    %v1280 = vunpack.c.l.b16 %v1191
    %v1281 = vunpack.c.h.b16 %v1191
    %v1282 = vunpack.c.l.b16 %v1192
    %v1283 = vunpack.c.h.b16 %v1192
    %v1284 = vunpack.c.l.b16 %v1193
    %v1285 = vunpack.c.h.b16 %v1193
    %v1286 = vunpack.c.l.b16 %v1194
    %v1287 = vunpack.c.h.b16 %v1194
    %v1288 = vunpack.c.l.b16 %v1195
    %v1289 = vunpack.c.h.b16 %v1195
    %v1290 = vunpack.c.l.b16 %v1196
    %v1291 = vunpack.c.h.b16 %v1196
    %v1292 = vunpack.c.l.b16 %v1197
    %v1293 = vunpack.c.h.b16 %v1197
    %v1294 = vpack.c.b16 %v1234, %v1230
    %v1295 = vpack.c.b16 %v1235, %v1231
    %v1296 = vpack.c.b16 %v1236, %v1232
    %v1297 = vpack.c.b16 %v1237, %v1233
    %v1298 = vpack.c.b16 %v1242, %v1238
    %v1299 = vpack.c.b16 %v1243, %v1239
    %v1300 = vpack.c.b16 %v1244, %v1240
    %v1301 = vpack.c.b16 %v1245, %v1241
    %v1302 = vpack.c.b16 %v1250, %v1246
    %v1303 = vpack.c.b16 %v1251, %v1247
    %v1304 = vpack.c.b16 %v1252, %v1248
    %v1305 = vpack.c.b16 %v1253, %v1249
    %v1306 = vpack.c.b16 %v1258, %v1254
    %v1307 = vpack.c.b16 %v1259, %v1255
    %v1308 = vpack.c.b16 %v1260, %v1256
    %v1309 = vpack.c.b16 %v1261, %v1257
    %v1310 = vpack.c.b16 %v1266, %v1262
    %v1311 = vpack.c.b16 %v1267, %v1263
    %v1312 = vpack.c.b16 %v1268, %v1264
    %v1313 = vpack.c.b16 %v1269, %v1265
    %v1314 = vpack.c.b16 %v1274, %v1270
    %v1315 = vpack.c.b16 %v1275, %v1271
    %v1316 = vpack.c.b16 %v1276, %v1272
    %v1317 = vpack.c.b16 %v1277, %v1273
    %v1318 = vpack.c.b16 %v1282, %v1278
    %v1319 = vpack.c.b16 %v1283, %v1279
    %v1320 = vpack.c.b16 %v1284, %v1280
    %v1321 = vpack.c.b16 %v1285, %v1281
    %v1322 = vpack.c.b16 %v1290, %v1286
    %v1323 = vpack.c.b16 %v1291, %v1287
    %v1324 = vpack.c.b16 %v1292, %v1288
    %v1325 = vpack.c.b16 %v1293, %v1289
    %1358 = vmatprep.subr.bf16.mxu0 %v1295
    %1359 = vmatpush1.bf16.msra.mxu0 %v1294
    %1360 = vmatprep.subr.bf16.mxu0 %v1299
    %1361 = vmatpush1.bf16.msra.mxu0 %v1298
    %1362 = vmatprep.subr.bf16.mxu0 %v1303
    %1363 = vmatpush1.bf16.msra.mxu0 %v1302
    %1364 = vmatprep.subr.bf16.mxu0 %v1307
    %1365 = vmatpush1.bf16.msra.mxu0 %v1306
    %1366 = vmatprep.subr.bf16.mxu0 %v1311
    %1367 = vmatpush1.bf16.msra.mxu0 %v1310
    %1368 = vmatprep.subr.bf16.mxu0 %v1315
    %1369 = vmatpush1.bf16.msra.mxu0 %v1314
    %1370 = vmatprep.subr.bf16.mxu0 %v1319
    %1371 = vmatpush1.bf16.msra.mxu0 %v1318
    %1372 = vmatprep.subr.bf16.mxu0 %v1323
    %1373 = vmatpush1.bf16.msra.mxu0 %v1322
    %1374 = vmatprep.subr.bf16.mxu0 0
    %1375 = vmatpush1.bf16.msra.mxu0 0
    %1376 = vmatprep.subr.bf16.mxu0 0
    %1377 = vmatpush1.bf16.msra.mxu0 0
    %1378 = vmatprep.subr.bf16.mxu0 0
    %1379 = vmatpush1.bf16.msra.mxu0 0
    %1380 = vmatprep.subr.bf16.mxu0 0
    %1381 = vmatpush1.bf16.msra.mxu0 0
    %1382 = vmatprep.subr.bf16.mxu0 0
    %1383 = vmatpush1.bf16.msra.mxu0 0
    %1384 = vmatprep.subr.bf16.mxu0 0
    %1385 = vmatpush1.bf16.msra.mxu0 0
    %1386 = vmatprep.subr.bf16.mxu0 0
    %1387 = vmatpush1.bf16.msra.mxu0 0
    %1388 = vmatprep.subr.bf16.mxu0 0
    %1389 = vmatpush1.bf16.msra.mxu0 0
    %1390 = vmatprep.mubr.bf16.mxu0 0
    %1391 = vmatmul.mubr.bf16.gmra.mrb[0].mxu0 %v1165
    %v1392 = vpop.f32.mrb[0].mxu0
    %v1393 = vadd.f32 0.0, %v1392
    %v1394 = vpop.f32.mrb[0].mxu0
    %v1395 = vadd.f32 0.0, %v1394
    %v1396 = vpop.f32.mrb[0].mxu0
    %v1397 = vpop.f32.mrb[0].mxu0
    %1398 = vdwg.mxu0
    %1399 = vmatprep.subr.bf16.mxu0 %v1297
    %1400 = vmatpush1.bf16.msra.mxu0 %v1296
    %1401 = vmatprep.subr.bf16.mxu0 %v1301
    %1402 = vmatpush1.bf16.msra.mxu0 %v1300
    %1403 = vmatprep.subr.bf16.mxu0 %v1305
    %1404 = vmatpush1.bf16.msra.mxu0 %v1304
    %1405 = vmatprep.subr.bf16.mxu0 %v1309
    %1406 = vmatpush1.bf16.msra.mxu0 %v1308
    %1407 = vmatprep.subr.bf16.mxu0 %v1313
    %1408 = vmatpush1.bf16.msra.mxu0 %v1312
    %1409 = vmatprep.subr.bf16.mxu0 %v1317
    %1410 = vmatpush1.bf16.msra.mxu0 %v1316
    %1411 = vmatprep.subr.bf16.mxu0 %v1321
    %1412 = vmatpush1.bf16.msra.mxu0 %v1320
    %1413 = vmatprep.subr.bf16.mxu0 %v1325
    %1414 = vmatpush1.bf16.msra.mxu0 %v1324
    %1415 = vmatprep.subr.bf16.mxu0 0
    %1416 = vmatpush1.bf16.msra.mxu0 0
    %1417 = vmatprep.subr.bf16.mxu0 0
    %1418 = vmatpush1.bf16.msra.mxu0 0
    %1419 = vmatprep.subr.bf16.mxu0 0
    %1420 = vmatpush1.bf16.msra.mxu0 0
    %1421 = vmatprep.subr.bf16.mxu0 0
    %1422 = vmatpush1.bf16.msra.mxu0 0
    %1423 = vmatprep.subr.bf16.mxu0 0
    %1424 = vmatpush1.bf16.msra.mxu0 0
    %1425 = vmatprep.subr.bf16.mxu0 0
    %1426 = vmatpush1.bf16.msra.mxu0 0
    %1427 = vmatprep.subr.bf16.mxu0 0
    %1428 = vmatpush1.bf16.msra.mxu0 0
    %1429 = vmatprep.subr.bf16.mxu0 0
    %1430 = vmatpush1.bf16.msra.mxu0 0
    %1431 = vmatprep.mubr.bf16.mxu0 0
    %1432 = vmatmul.mubr.bf16.gmra.mrb[0].mxu0 %v1165
    %v1433 = vpop.f32.mrb[0].mxu0
    %v1434 = vadd.f32 0.0, %v1433
    %v1435 = vpop.f32.mrb[0].mxu0
    %v1436 = vadd.f32 0.0, %v1435
    %v1437 = vpop.f32.mrb[0].mxu0
    %v1438 = vpop.f32.mrb[0].mxu0
    %1439 = vdwg.mxu0
    %v1440 = vadd.f32 %v1161, %v1393
    %v1441 = vadd.f32 %v1162, %v1395
    %v1442 = vadd.f32 %v1163, %v1434
    %v1443 = vadd.f32 %v1164, %v1436
    %v1444 = vmul.f32 %v1440, 0.5
    %v1445 = vtanh.pop %v1444
    %v1446 = vmul.f32 %v1445, 0.5
    %v1447 = vadd.f32 %v1446, 0.5
    %v1448 = vmul.f32 %v1441, 0.5
    %v1449 = vtanh.pop %v1448
    %v1450 = vmul.f32 %v1449, 0.5
    %v1451 = vadd.f32 %v1450, 0.5
    %v1452 = vtanh.pop %v1442
    %v1453 = vmul.f32 %v1443, 0.5
    %v1454 = vtanh.pop %v1453
    %v1455 = vmul.f32 %v1454, 0.5
    %v1456 = vadd.f32 %v1455, 0.5
    %v1457 = vmul.f32 %v1451, %v1146
    %v1458 = vmul.f32 %v1447, %v1452
    %v1459 = vadd.f32 %v1457, %v1458
    %v1460 = vtanh.pop %v1459
    %v1461 = vmul.f32 %v1456, %v1460
    %s1462 = sadd.s32 %s534, 2
    %v1463 = vstv %s1462
    %vm1464 = vcmp.gt.s32.totalorder %v533, %v1463
    %v1465 = vsel %vm1464, 1, 0
    %1466 = vset.pattern.permute.xlu0 0
    %1467 = vperm.xlu0 %1466, %v1465
    %v1468 = vpop.permute.xlu0 %1467
    %vm1469 = vcmp.eq.s32.totalorder %v1468, 1
    %v1470 = vsel %vm1469, %v1461, 0.0
    %s1471 = scalar_lea.vmem [#allocation11], 16
    %1472 = vst [vmem:[%s1471] sm:$0xff] %v1470
    %s1473 = scalar_lea.vmem [#allocation2], 96
    %v1474 = vld [vmem:[%s1473] sm:$0xff]
    %v1475 = vld [vmem:[%s1473 + $0x8] sm:$0xff]
    %v1476 = vld [vmem:[%s1473 + $0x10] sm:$0xff]
    %v1477 = vld [vmem:[%s1473 + $0x18] sm:$0xff]
    %v1478 = vpack.c.bf16 %v1461, %v1461
    %v1479 = vld [vmem:[#allocation10] sm:$0xff]
    %v1480 = vld [vmem:[#allocation10 + $0x8] sm:$0xff]
    %v1481 = vld [vmem:[#allocation10 + $0x10] sm:$0xff]
    %v1482 = vld [vmem:[#allocation10 + $0x18] sm:$0xff]
    %v1483 = vld [vmem:[#allocation10 + $0x20] sm:$0xff]
    %v1484 = vld [vmem:[#allocation10 + $0x28] sm:$0xff]
    %v1485 = vld [vmem:[#allocation10 + $0x30] sm:$0xff]
    %v1486 = vld [vmem:[#allocation10 + $0x38] sm:$0xff]
    %v1487 = vld [vmem:[#allocation10 + $0x40] sm:$0xff]
    %v1488 = vld [vmem:[#allocation10 + $0x48] sm:$0xff]
    %v1489 = vld [vmem:[#allocation10 + $0x50] sm:$0xff]
    %v1490 = vld [vmem:[#allocation10 + $0x58] sm:$0xff]
    %v1491 = vld [vmem:[#allocation10 + $0x60] sm:$0xff]
    %v1492 = vld [vmem:[#allocation10 + $0x68] sm:$0xff]
    %v1493 = vld [vmem:[#allocation10 + $0x70] sm:$0xff]
    %v1494 = vld [vmem:[#allocation10 + $0x78] sm:$0xff]
    %v1495 = vld [vmem:[#allocation10 + $0x80] sm:$0xff]
    %v1496 = vld [vmem:[#allocation10 + $0x88] sm:$0xff]
    %v1497 = vld [vmem:[#allocation10 + $0x90] sm:$0xff]
    %v1498 = vld [vmem:[#allocation10 + $0x98] sm:$0xff]
    %v1499 = vld [vmem:[#allocation10 + $0xa0] sm:$0xff]
    %v1500 = vld [vmem:[#allocation10 + $0xa8] sm:$0xff]
    %v1501 = vld [vmem:[#allocation10 + $0xb0] sm:$0xff]
    %v1502 = vld [vmem:[#allocation10 + $0xb8] sm:$0xff]
    %v1503 = vld [vmem:[#allocation10 + $0xc0] sm:$0xff]
    %v1504 = vld [vmem:[#allocation10 + $0xc8] sm:$0xff]
    %v1505 = vld [vmem:[#allocation10 + $0xd0] sm:$0xff]
    %v1506 = vld [vmem:[#allocation10 + $0xd8] sm:$0xff]
    %v1507 = vld [vmem:[#allocation10 + $0xe0] sm:$0xff]
    %v1508 = vld [vmem:[#allocation10 + $0xe8] sm:$0xff]
    %v1509 = vld [vmem:[#allocation10 + $0xf0] sm:$0xff]
    %v1510 = vld [vmem:[#allocation10 + $0xf8] sm:$0xff]
    %v1543 = vunpack.c.l.b16 %v1479
    %v1544 = vunpack.c.h.b16 %v1479
    %v1545 = vunpack.c.l.b16 %v1480
    %v1546 = vunpack.c.h.b16 %v1480
    %v1547 = vunpack.c.l.b16 %v1481
    %v1548 = vunpack.c.h.b16 %v1481
    %v1549 = vunpack.c.l.b16 %v1482
    %v1550 = vunpack.c.h.b16 %v1482
    %v1551 = vunpack.c.l.b16 %v1483
    %v1552 = vunpack.c.h.b16 %v1483
    %v1553 = vunpack.c.l.b16 %v1484
    %v1554 = vunpack.c.h.b16 %v1484
    %v1555 = vunpack.c.l.b16 %v1485
    %v1556 = vunpack.c.h.b16 %v1485
    %v1557 = vunpack.c.l.b16 %v1486
    %v1558 = vunpack.c.h.b16 %v1486
    %v1559 = vunpack.c.l.b16 %v1487
    %v1560 = vunpack.c.h.b16 %v1487
    %v1561 = vunpack.c.l.b16 %v1488
    %v1562 = vunpack.c.h.b16 %v1488
    %v1563 = vunpack.c.l.b16 %v1489
    %v1564 = vunpack.c.h.b16 %v1489
    %v1565 = vunpack.c.l.b16 %v1490
    %v1566 = vunpack.c.h.b16 %v1490
    %v1567 = vunpack.c.l.b16 %v1491
    %v1568 = vunpack.c.h.b16 %v1491
    %v1569 = vunpack.c.l.b16 %v1492
    %v1570 = vunpack.c.h.b16 %v1492
    %v1571 = vunpack.c.l.b16 %v1493
    %v1572 = vunpack.c.h.b16 %v1493
    %v1573 = vunpack.c.l.b16 %v1494
    %v1574 = vunpack.c.h.b16 %v1494
    %v1575 = vunpack.c.l.b16 %v1495
    %v1576 = vunpack.c.h.b16 %v1495
    %v1577 = vunpack.c.l.b16 %v1496
    %v1578 = vunpack.c.h.b16 %v1496
    %v1579 = vunpack.c.l.b16 %v1497
    %v1580 = vunpack.c.h.b16 %v1497
    %v1581 = vunpack.c.l.b16 %v1498
    %v1582 = vunpack.c.h.b16 %v1498
    %v1583 = vunpack.c.l.b16 %v1499
    %v1584 = vunpack.c.h.b16 %v1499
    %v1585 = vunpack.c.l.b16 %v1500
    %v1586 = vunpack.c.h.b16 %v1500
    %v1587 = vunpack.c.l.b16 %v1501
    %v1588 = vunpack.c.h.b16 %v1501
    %v1589 = vunpack.c.l.b16 %v1502
    %v1590 = vunpack.c.h.b16 %v1502
    %v1591 = vunpack.c.l.b16 %v1503
    %v1592 = vunpack.c.h.b16 %v1503
    %v1593 = vunpack.c.l.b16 %v1504
    %v1594 = vunpack.c.h.b16 %v1504
    %v1595 = vunpack.c.l.b16 %v1505
    %v1596 = vunpack.c.h.b16 %v1505
    %v1597 = vunpack.c.l.b16 %v1506
    %v1598 = vunpack.c.h.b16 %v1506
    %v1599 = vunpack.c.l.b16 %v1507
    %v1600 = vunpack.c.h.b16 %v1507
    %v1601 = vunpack.c.l.b16 %v1508
    %v1602 = vunpack.c.h.b16 %v1508
    %v1603 = vunpack.c.l.b16 %v1509
    %v1604 = vunpack.c.h.b16 %v1509
    %v1605 = vunpack.c.l.b16 %v1510
    %v1606 = vunpack.c.h.b16 %v1510
    %v1607 = vpack.c.b16 %v1547, %v1543
    %v1608 = vpack.c.b16 %v1548, %v1544
    %v1609 = vpack.c.b16 %v1549, %v1545
    %v1610 = vpack.c.b16 %v1550, %v1546
    %v1611 = vpack.c.b16 %v1555, %v1551
    %v1612 = vpack.c.b16 %v1556, %v1552
    %v1613 = vpack.c.b16 %v1557, %v1553
    %v1614 = vpack.c.b16 %v1558, %v1554
    %v1615 = vpack.c.b16 %v1563, %v1559
    %v1616 = vpack.c.b16 %v1564, %v1560
    %v1617 = vpack.c.b16 %v1565, %v1561
    %v1618 = vpack.c.b16 %v1566, %v1562
    %v1619 = vpack.c.b16 %v1571, %v1567
    %v1620 = vpack.c.b16 %v1572, %v1568
    %v1621 = vpack.c.b16 %v1573, %v1569
    %v1622 = vpack.c.b16 %v1574, %v1570
    %v1623 = vpack.c.b16 %v1579, %v1575
    %v1624 = vpack.c.b16 %v1580, %v1576
    %v1625 = vpack.c.b16 %v1581, %v1577
    %v1626 = vpack.c.b16 %v1582, %v1578
    %v1627 = vpack.c.b16 %v1587, %v1583
    %v1628 = vpack.c.b16 %v1588, %v1584
    %v1629 = vpack.c.b16 %v1589, %v1585
    %v1630 = vpack.c.b16 %v1590, %v1586
    %v1631 = vpack.c.b16 %v1595, %v1591
    %v1632 = vpack.c.b16 %v1596, %v1592
    %v1633 = vpack.c.b16 %v1597, %v1593
    %v1634 = vpack.c.b16 %v1598, %v1594
    %v1635 = vpack.c.b16 %v1603, %v1599
    %v1636 = vpack.c.b16 %v1604, %v1600
    %v1637 = vpack.c.b16 %v1605, %v1601
    %v1638 = vpack.c.b16 %v1606, %v1602
    %1671 = vmatprep.subr.bf16.mxu0 %v1608
    %1672 = vmatpush1.bf16.msra.mxu0 %v1607
    %1673 = vmatprep.subr.bf16.mxu0 %v1612
    %1674 = vmatpush1.bf16.msra.mxu0 %v1611
    %1675 = vmatprep.subr.bf16.mxu0 %v1616
    %1676 = vmatpush1.bf16.msra.mxu0 %v1615
    %1677 = vmatprep.subr.bf16.mxu0 %v1620
    %1678 = vmatpush1.bf16.msra.mxu0 %v1619
    %1679 = vmatprep.subr.bf16.mxu0 %v1624
    %1680 = vmatpush1.bf16.msra.mxu0 %v1623
    %1681 = vmatprep.subr.bf16.mxu0 %v1628
    %1682 = vmatpush1.bf16.msra.mxu0 %v1627
    %1683 = vmatprep.subr.bf16.mxu0 %v1632
    %1684 = vmatpush1.bf16.msra.mxu0 %v1631
    %1685 = vmatprep.subr.bf16.mxu0 %v1636
    %1686 = vmatpush1.bf16.msra.mxu0 %v1635
    %1687 = vmatprep.subr.bf16.mxu0 0
    %1688 = vmatpush1.bf16.msra.mxu0 0
    %1689 = vmatprep.subr.bf16.mxu0 0
    %1690 = vmatpush1.bf16.msra.mxu0 0
    %1691 = vmatprep.subr.bf16.mxu0 0
    %1692 = vmatpush1.bf16.msra.mxu0 0
    %1693 = vmatprep.subr.bf16.mxu0 0
    %1694 = vmatpush1.bf16.msra.mxu0 0
    %1695 = vmatprep.subr.bf16.mxu0 0
    %1696 = vmatpush1.bf16.msra.mxu0 0
    %1697 = vmatprep.subr.bf16.mxu0 0
    %1698 = vmatpush1.bf16.msra.mxu0 0
    %1699 = vmatprep.subr.bf16.mxu0 0
    %1700 = vmatpush1.bf16.msra.mxu0 0
    %1701 = vmatprep.subr.bf16.mxu0 0
    %1702 = vmatpush1.bf16.msra.mxu0 0
    %1703 = vmatprep.mubr.bf16.mxu0 0
    %1704 = vmatmul.mubr.bf16.gmra.mrb[0].mxu0 %v1478
    %v1705 = vpop.f32.mrb[0].mxu0
    %v1706 = vadd.f32 0.0, %v1705
    %v1707 = vpop.f32.mrb[0].mxu0
    %v1708 = vadd.f32 0.0, %v1707
    %v1709 = vpop.f32.mrb[0].mxu0
    %v1710 = vpop.f32.mrb[0].mxu0
    %1711 = vdwg.mxu0
    %1712 = vmatprep.subr.bf16.mxu0 %v1610
    %1713 = vmatpush1.bf16.msra.mxu0 %v1609
    %1714 = vmatprep.subr.bf16.mxu0 %v1614
    %1715 = vmatpush1.bf16.msra.mxu0 %v1613
    %1716 = vmatprep.subr.bf16.mxu0 %v1618
    %1717 = vmatpush1.bf16.msra.mxu0 %v1617
    %1718 = vmatprep.subr.bf16.mxu0 %v1622
    %1719 = vmatpush1.bf16.msra.mxu0 %v1621
    %1720 = vmatprep.subr.bf16.mxu0 %v1626
    %1721 = vmatpush1.bf16.msra.mxu0 %v1625
    %1722 = vmatprep.subr.bf16.mxu0 %v1630
    %1723 = vmatpush1.bf16.msra.mxu0 %v1629
    %1724 = vmatprep.subr.bf16.mxu0 %v1634
    %1725 = vmatpush1.bf16.msra.mxu0 %v1633
    %1726 = vmatprep.subr.bf16.mxu0 %v1638
    %1727 = vmatpush1.bf16.msra.mxu0 %v1637
    %1728 = vmatprep.subr.bf16.mxu0 0
    %1729 = vmatpush1.bf16.msra.mxu0 0
    %1730 = vmatprep.subr.bf16.mxu0 0
    %1731 = vmatpush1.bf16.msra.mxu0 0
    %1732 = vmatprep.subr.bf16.mxu0 0
    %1733 = vmatpush1.bf16.msra.mxu0 0
    %1734 = vmatprep.subr.bf16.mxu0 0
    %1735 = vmatpush1.bf16.msra.mxu0 0
    %1736 = vmatprep.subr.bf16.mxu0 0
    %1737 = vmatpush1.bf16.msra.mxu0 0
    %1738 = vmatprep.subr.bf16.mxu0 0
    %1739 = vmatpush1.bf16.msra.mxu0 0
    %1740 = vmatprep.subr.bf16.mxu0 0
    %1741 = vmatpush1.bf16.msra.mxu0 0
    %1742 = vmatprep.subr.bf16.mxu0 0
    %1743 = vmatpush1.bf16.msra.mxu0 0
    %1744 = vmatprep.mubr.bf16.mxu0 0
    %1745 = vmatmul.mubr.bf16.gmra.mrb[0].mxu0 %v1478
    %v1746 = vpop.f32.mrb[0].mxu0
    %v1747 = vadd.f32 0.0, %v1746
    %v1748 = vpop.f32.mrb[0].mxu0
    %v1749 = vadd.f32 0.0, %v1748
    %v1750 = vpop.f32.mrb[0].mxu0
    %v1751 = vpop.f32.mrb[0].mxu0
    %1752 = vdwg.mxu0
    %v1753 = vadd.f32 %v1474, %v1706
    %v1754 = vadd.f32 %v1475, %v1708
    %v1755 = vadd.f32 %v1476, %v1747
    %v1756 = vadd.f32 %v1477, %v1749
    %v1757 = vmul.f32 %v1753, 0.5
    %v1758 = vtanh.pop %v1757
    %v1759 = vmul.f32 %v1758, 0.5
    %v1760 = vadd.f32 %v1759, 0.5
    %v1761 = vmul.f32 %v1754, 0.5
    %v1762 = vtanh.pop %v1761
    %v1763 = vmul.f32 %v1762, 0.5
    %v1764 = vadd.f32 %v1763, 0.5
    %v1765 = vtanh.pop %v1755
    %v1766 = vmul.f32 %v1756, 0.5
    %v1767 = vtanh.pop %v1766
    %v1768 = vmul.f32 %v1767, 0.5
    %v1769 = vadd.f32 %v1768, 0.5
    %v1770 = vmul.f32 %v1764, %v1459
    %v1771 = vmul.f32 %v1760, %v1765
    %v1772 = vadd.f32 %v1770, %v1771
    %v1773 = vtanh.pop %v1772
    %v1774 = vmul.f32 %v1769, %v1773
    %s1775 = sadd.s32 %s534, 3
    %v1776 = vstv %s1775
    %vm1777 = vcmp.gt.s32.totalorder %v533, %v1776
    %v1778 = vsel %vm1777, 1, 0
    %1779 = vset.pattern.permute.xlu0 0
    %1780 = vperm.xlu0 %1779, %v1778
    %v1781 = vpop.permute.xlu0 %1780
    %vm1782 = vcmp.eq.s32.totalorder %v1781, 1
    %v1783 = vsel %vm1782, %v1774, 0.0
    %s1784 = scalar_lea.vmem [#allocation11], 24
    %1785 = vst [vmem:[%s1784] sm:$0xff] %v1783
    %s1786 = scalar_lea.vmem [#allocation2], 128
    %v1787 = vld [vmem:[%s1786] sm:$0xff]
    %v1788 = vld [vmem:[%s1786 + $0x8] sm:$0xff]
    %v1789 = vld [vmem:[%s1786 + $0x10] sm:$0xff]
    %v1790 = vld [vmem:[%s1786 + $0x18] sm:$0xff]
    %v1791 = vpack.c.bf16 %v1774, %v1774
    %v1792 = vld [vmem:[#allocation10] sm:$0xff]
    %v1793 = vld [vmem:[#allocation10 + $0x8] sm:$0xff]
    %v1794 = vld [vmem:[#allocation10 + $0x10] sm:$0xff]
    %v1795 = vld [vmem:[#allocation10 + $0x18] sm:$0xff]
    %v1796 = vld [vmem:[#allocation10 + $0x20] sm:$0xff]
    %v1797 = vld [vmem:[#allocation10 + $0x28] sm:$0xff]
    %v1798 = vld [vmem:[#allocation10 + $0x30] sm:$0xff]
    %v1799 = vld [vmem:[#allocation10 + $0x38] sm:$0xff]
    %v1800 = vld [vmem:[#allocation10 + $0x40] sm:$0xff]
    %v1801 = vld [vmem:[#allocation10 + $0x48] sm:$0xff]
    %v1802 = vld [vmem:[#allocation10 + $0x50] sm:$0xff]
    %v1803 = vld [vmem:[#allocation10 + $0x58] sm:$0xff]
    %v1804 = vld [vmem:[#allocation10 + $0x60] sm:$0xff]
    %v1805 = vld [vmem:[#allocation10 + $0x68] sm:$0xff]
    %v1806 = vld [vmem:[#allocation10 + $0x70] sm:$0xff]
    %v1807 = vld [vmem:[#allocation10 + $0x78] sm:$0xff]
    %v1808 = vld [vmem:[#allocation10 + $0x80] sm:$0xff]
    %v1809 = vld [vmem:[#allocation10 + $0x88] sm:$0xff]
    %v1810 = vld [vmem:[#allocation10 + $0x90] sm:$0xff]
    %v1811 = vld [vmem:[#allocation10 + $0x98] sm:$0xff]
    %v1812 = vld [vmem:[#allocation10 + $0xa0] sm:$0xff]
    %v1813 = vld [vmem:[#allocation10 + $0xa8] sm:$0xff]
    %v1814 = vld [vmem:[#allocation10 + $0xb0] sm:$0xff]
    %v1815 = vld [vmem:[#allocation10 + $0xb8] sm:$0xff]
    %v1816 = vld [vmem:[#allocation10 + $0xc0] sm:$0xff]
    %v1817 = vld [vmem:[#allocation10 + $0xc8] sm:$0xff]
    %v1818 = vld [vmem:[#allocation10 + $0xd0] sm:$0xff]
    %v1819 = vld [vmem:[#allocation10 + $0xd8] sm:$0xff]
    %v1820 = vld [vmem:[#allocation10 + $0xe0] sm:$0xff]
    %v1821 = vld [vmem:[#allocation10 + $0xe8] sm:$0xff]
    %v1822 = vld [vmem:[#allocation10 + $0xf0] sm:$0xff]
    %v1823 = vld [vmem:[#allocation10 + $0xf8] sm:$0xff]
    %v1856 = vunpack.c.l.b16 %v1792
    %v1857 = vunpack.c.h.b16 %v1792
    %v1858 = vunpack.c.l.b16 %v1793
    %v1859 = vunpack.c.h.b16 %v1793
    %v1860 = vunpack.c.l.b16 %v1794
    %v1861 = vunpack.c.h.b16 %v1794
    %v1862 = vunpack.c.l.b16 %v1795
    %v1863 = vunpack.c.h.b16 %v1795
    %v1864 = vunpack.c.l.b16 %v1796
    %v1865 = vunpack.c.h.b16 %v1796
    %v1866 = vunpack.c.l.b16 %v1797
    %v1867 = vunpack.c.h.b16 %v1797
    %v1868 = vunpack.c.l.b16 %v1798
    %v1869 = vunpack.c.h.b16 %v1798
    %v1870 = vunpack.c.l.b16 %v1799
    %v1871 = vunpack.c.h.b16 %v1799
    %v1872 = vunpack.c.l.b16 %v1800
    %v1873 = vunpack.c.h.b16 %v1800
    %v1874 = vunpack.c.l.b16 %v1801
    %v1875 = vunpack.c.h.b16 %v1801
    %v1876 = vunpack.c.l.b16 %v1802
    %v1877 = vunpack.c.h.b16 %v1802
    %v1878 = vunpack.c.l.b16 %v1803
    %v1879 = vunpack.c.h.b16 %v1803
    %v1880 = vunpack.c.l.b16 %v1804
    %v1881 = vunpack.c.h.b16 %v1804
    %v1882 = vunpack.c.l.b16 %v1805
    %v1883 = vunpack.c.h.b16 %v1805
    %v1884 = vunpack.c.l.b16 %v1806
    %v1885 = vunpack.c.h.b16 %v1806
    %v1886 = vunpack.c.l.b16 %v1807
    %v1887 = vunpack.c.h.b16 %v1807
    %v1888 = vunpack.c.l.b16 %v1808
    %v1889 = vunpack.c.h.b16 %v1808
    %v1890 = vunpack.c.l.b16 %v1809
    %v1891 = vunpack.c.h.b16 %v1809
    %v1892 = vunpack.c.l.b16 %v1810
    %v1893 = vunpack.c.h.b16 %v1810
    %v1894 = vunpack.c.l.b16 %v1811
    %v1895 = vunpack.c.h.b16 %v1811
    %v1896 = vunpack.c.l.b16 %v1812
    %v1897 = vunpack.c.h.b16 %v1812
    %v1898 = vunpack.c.l.b16 %v1813
    %v1899 = vunpack.c.h.b16 %v1813
    %v1900 = vunpack.c.l.b16 %v1814
    %v1901 = vunpack.c.h.b16 %v1814
    %v1902 = vunpack.c.l.b16 %v1815
    %v1903 = vunpack.c.h.b16 %v1815
    %v1904 = vunpack.c.l.b16 %v1816
    %v1905 = vunpack.c.h.b16 %v1816
    %v1906 = vunpack.c.l.b16 %v1817
    %v1907 = vunpack.c.h.b16 %v1817
    %v1908 = vunpack.c.l.b16 %v1818
    %v1909 = vunpack.c.h.b16 %v1818
    %v1910 = vunpack.c.l.b16 %v1819
    %v1911 = vunpack.c.h.b16 %v1819
    %v1912 = vunpack.c.l.b16 %v1820
    %v1913 = vunpack.c.h.b16 %v1820
    %v1914 = vunpack.c.l.b16 %v1821
    %v1915 = vunpack.c.h.b16 %v1821
    %v1916 = vunpack.c.l.b16 %v1822
    %v1917 = vunpack.c.h.b16 %v1822
    %v1918 = vunpack.c.l.b16 %v1823
    %v1919 = vunpack.c.h.b16 %v1823
    %v1920 = vpack.c.b16 %v1860, %v1856
    %v1921 = vpack.c.b16 %v1861, %v1857
    %v1922 = vpack.c.b16 %v1862, %v1858
    %v1923 = vpack.c.b16 %v1863, %v1859
    %v1924 = vpack.c.b16 %v1868, %v1864
    %v1925 = vpack.c.b16 %v1869, %v1865
    %v1926 = vpack.c.b16 %v1870, %v1866
    %v1927 = vpack.c.b16 %v1871, %v1867
    %v1928 = vpack.c.b16 %v1876, %v1872
    %v1929 = vpack.c.b16 %v1877, %v1873
    %v1930 = vpack.c.b16 %v1878, %v1874
    %v1931 = vpack.c.b16 %v1879, %v1875
    %v1932 = vpack.c.b16 %v1884, %v1880
    %v1933 = vpack.c.b16 %v1885, %v1881
    %v1934 = vpack.c.b16 %v1886, %v1882
    %v1935 = vpack.c.b16 %v1887, %v1883
    %v1936 = vpack.c.b16 %v1892, %v1888
    %v1937 = vpack.c.b16 %v1893, %v1889
    %v1938 = vpack.c.b16 %v1894, %v1890
    %v1939 = vpack.c.b16 %v1895, %v1891
    %v1940 = vpack.c.b16 %v1900, %v1896
    %v1941 = vpack.c.b16 %v1901, %v1897
    %v1942 = vpack.c.b16 %v1902, %v1898
    %v1943 = vpack.c.b16 %v1903, %v1899
    %v1944 = vpack.c.b16 %v1908, %v1904
    %v1945 = vpack.c.b16 %v1909, %v1905
    %v1946 = vpack.c.b16 %v1910, %v1906
    %v1947 = vpack.c.b16 %v1911, %v1907
    %v1948 = vpack.c.b16 %v1916, %v1912
    %v1949 = vpack.c.b16 %v1917, %v1913
    %v1950 = vpack.c.b16 %v1918, %v1914
    %v1951 = vpack.c.b16 %v1919, %v1915
    %1984 = vmatprep.subr.bf16.mxu0 %v1921
    %1985 = vmatpush1.bf16.msra.mxu0 %v1920
    %1986 = vmatprep.subr.bf16.mxu0 %v1925
    %1987 = vmatpush1.bf16.msra.mxu0 %v1924
    %1988 = vmatprep.subr.bf16.mxu0 %v1929
    %1989 = vmatpush1.bf16.msra.mxu0 %v1928
    %1990 = vmatprep.subr.bf16.mxu0 %v1933
    %1991 = vmatpush1.bf16.msra.mxu0 %v1932
    %1992 = vmatprep.subr.bf16.mxu0 %v1937
    %1993 = vmatpush1.bf16.msra.mxu0 %v1936
    %1994 = vmatprep.subr.bf16.mxu0 %v1941
    %1995 = vmatpush1.bf16.msra.mxu0 %v1940
    %1996 = vmatprep.subr.bf16.mxu0 %v1945
    %1997 = vmatpush1.bf16.msra.mxu0 %v1944
    %1998 = vmatprep.subr.bf16.mxu0 %v1949
    %1999 = vmatpush1.bf16.msra.mxu0 %v1948
    %2000 = vmatprep.subr.bf16.mxu0 0
    %2001 = vmatpush1.bf16.msra.mxu0 0
    %2002 = vmatprep.subr.bf16.mxu0 0
    %2003 = vmatpush1.bf16.msra.mxu0 0
    %2004 = vmatprep.subr.bf16.mxu0 0
    %2005 = vmatpush1.bf16.msra.mxu0 0
    %2006 = vmatprep.subr.bf16.mxu0 0
    %2007 = vmatpush1.bf16.msra.mxu0 0
    %2008 = vmatprep.subr.bf16.mxu0 0
    %2009 = vmatpush1.bf16.msra.mxu0 0
    %2010 = vmatprep.subr.bf16.mxu0 0
    %2011 = vmatpush1.bf16.msra.mxu0 0
    %2012 = vmatprep.subr.bf16.mxu0 0
    %2013 = vmatpush1.bf16.msra.mxu0 0
    %2014 = vmatprep.subr.bf16.mxu0 0
    %2015 = vmatpush1.bf16.msra.mxu0 0
    %2016 = vmatprep.mubr.bf16.mxu0 0
    %2017 = vmatmul.mubr.bf16.gmra.mrb[0].mxu0 %v1791
    %v2018 = vpop.f32.mrb[0].mxu0
    %v2019 = vadd.f32 0.0, %v2018
    %v2020 = vpop.f32.mrb[0].mxu0
    %v2021 = vadd.f32 0.0, %v2020
    %v2022 = vpop.f32.mrb[0].mxu0
    %v2023 = vpop.f32.mrb[0].mxu0
    %2024 = vdwg.mxu0
    %2025 = vmatprep.subr.bf16.mxu0 %v1923
    %2026 = vmatpush1.bf16.msra.mxu0 %v1922
    %2027 = vmatprep.subr.bf16.mxu0 %v1927
    %2028 = vmatpush1.bf16.msra.mxu0 %v1926
    %2029 = vmatprep.subr.bf16.mxu0 %v1931
    %2030 = vmatpush1.bf16.msra.mxu0 %v1930
    %2031 = vmatprep.subr.bf16.mxu0 %v1935
    %2032 = vmatpush1.bf16.msra.mxu0 %v1934
    %2033 = vmatprep.subr.bf16.mxu0 %v1939
    %2034 = vmatpush1.bf16.msra.mxu0 %v1938
    %2035 = vmatprep.subr.bf16.mxu0 %v1943
    %2036 = vmatpush1.bf16.msra.mxu0 %v1942
    %2037 = vmatprep.subr.bf16.mxu0 %v1947
    %2038 = vmatpush1.bf16.msra.mxu0 %v1946
    %2039 = vmatprep.subr.bf16.mxu0 %v1951
    %2040 = vmatpush1.bf16.msra.mxu0 %v1950
    %2041 = vmatprep.subr.bf16.mxu0 0
    %2042 = vmatpush1.bf16.msra.mxu0 0
    %2043 = vmatprep.subr.bf16.mxu0 0
    %2044 = vmatpush1.bf16.msra.mxu0 0
    %2045 = vmatprep.subr.bf16.mxu0 0
    %2046 = vmatpush1.bf16.msra.mxu0 0
    %2047 = vmatprep.subr.bf16.mxu0 0
    %2048 = vmatpush1.bf16.msra.mxu0 0
    %2049 = vmatprep.subr.bf16.mxu0 0
    %2050 = vmatpush1.bf16.msra.mxu0 0
    %2051 = vmatprep.subr.bf16.mxu0 0
    %2052 = vmatpush1.bf16.msra.mxu0 0
    %2053 = vmatprep.subr.bf16.mxu0 0
    %2054 = vmatpush1.bf16.msra.mxu0 0
    %2055 = vmatprep.subr.bf16.mxu0 0
    %2056 = vmatpush1.bf16.msra.mxu0 0
    %2057 = vmatprep.mubr.bf16.mxu0 0
    %2058 = vmatmul.mubr.bf16.gmra.mrb[0].mxu0 %v1791
    %v2059 = vpop.f32.mrb[0].mxu0
    %v2060 = vadd.f32 0.0, %v2059
    %v2061 = vpop.f32.mrb[0].mxu0
    %v2062 = vadd.f32 0.0, %v2061
    %v2063 = vpop.f32.mrb[0].mxu0
    %v2064 = vpop.f32.mrb[0].mxu0
    %2065 = vdwg.mxu0
    %v2066 = vadd.f32 %v1787, %v2019
    %v2067 = vadd.f32 %v1788, %v2021
    %v2068 = vadd.f32 %v1789, %v2060
    %v2069 = vadd.f32 %v1790, %v2062
    %v2070 = vmul.f32 %v2066, 0.5
    %v2071 = vtanh.pop %v2070
    %v2072 = vmul.f32 %v2071, 0.5
    %v2073 = vadd.f32 %v2072, 0.5
    %v2074 = vmul.f32 %v2067, 0.5
    %v2075 = vtanh.pop %v2074
    %v2076 = vmul.f32 %v2075, 0.5
    %v2077 = vadd.f32 %v2076, 0.5
    %v2078 = vtanh.pop %v2068
    %v2079 = vmul.f32 %v2069, 0.5
    %v2080 = vtanh.pop %v2079
    %v2081 = vmul.f32 %v2080, 0.5
    %v2082 = vadd.f32 %v2081, 0.5
    %v2083 = vmul.f32 %v2077, %v1772
    %v2084 = vmul.f32 %v2073, %v2078
    %v2085 = vadd.f32 %v2083, %v2084
    %v2086 = vtanh.pop %v2085
    %v2087 = vmul.f32 %v2082, %v2086
    %s2088 = sadd.s32 %s534, 4
    %v2089 = vstv %s2088
    %vm2090 = vcmp.gt.s32.totalorder %v533, %v2089
    %v2091 = vsel %vm2090, 1, 0
    %2092 = vset.pattern.permute.xlu0 0
    %2093 = vperm.xlu0 %2092, %v2091
    %v2094 = vpop.permute.xlu0 %2093
    %vm2095 = vcmp.eq.s32.totalorder %v2094, 1
    %v2096 = vsel %vm2095, %v2087, 0.0
    %s2097 = scalar_lea.vmem [#allocation11], 32
    %2098 = vst [vmem:[%s2097] sm:$0xff] %v2096
    %s2099 = scalar_lea.vmem [#allocation2], 160
    %v2100 = vld [vmem:[%s2099] sm:$0xff]
    %v2101 = vld [vmem:[%s2099 + $0x8] sm:$0xff]
    %v2102 = vld [vmem:[%s2099 + $0x10] sm:$0xff]
    %v2103 = vld [vmem:[%s2099 + $0x18] sm:$0xff]
    %v2104 = vpack.c.bf16 %v2087, %v2087
    %v2105 = vld [vmem:[#allocation10] sm:$0xff]
    %v2106 = vld [vmem:[#allocation10 + $0x8] sm:$0xff]
    %v2107 = vld [vmem:[#allocation10 + $0x10] sm:$0xff]
    %v2108 = vld [vmem:[#allocation10 + $0x18] sm:$0xff]
    %v2109 = vld [vmem:[#allocation10 + $0x20] sm:$0xff]
    %v2110 = vld [vmem:[#allocation10 + $0x28] sm:$0xff]
    %v2111 = vld [vmem:[#allocation10 + $0x30] sm:$0xff]
    %v2112 = vld [vmem:[#allocation10 + $0x38] sm:$0xff]
    %v2113 = vld [vmem:[#allocation10 + $0x40] sm:$0xff]
    %v2114 = vld [vmem:[#allocation10 + $0x48] sm:$0xff]
    %v2115 = vld [vmem:[#allocation10 + $0x50] sm:$0xff]
    %v2116 = vld [vmem:[#allocation10 + $0x58] sm:$0xff]
    %v2117 = vld [vmem:[#allocation10 + $0x60] sm:$0xff]
    %v2118 = vld [vmem:[#allocation10 + $0x68] sm:$0xff]
    %v2119 = vld [vmem:[#allocation10 + $0x70] sm:$0xff]
    %v2120 = vld [vmem:[#allocation10 + $0x78] sm:$0xff]
    %v2121 = vld [vmem:[#allocation10 + $0x80] sm:$0xff]
    %v2122 = vld [vmem:[#allocation10 + $0x88] sm:$0xff]
    %v2123 = vld [vmem:[#allocation10 + $0x90] sm:$0xff]
    %v2124 = vld [vmem:[#allocation10 + $0x98] sm:$0xff]
    %v2125 = vld [vmem:[#allocation10 + $0xa0] sm:$0xff]
    %v2126 = vld [vmem:[#allocation10 + $0xa8] sm:$0xff]
    %v2127 = vld [vmem:[#allocation10 + $0xb0] sm:$0xff]
    %v2128 = vld [vmem:[#allocation10 + $0xb8] sm:$0xff]
    %v2129 = vld [vmem:[#allocation10 + $0xc0] sm:$0xff]
    %v2130 = vld [vmem:[#allocation10 + $0xc8] sm:$0xff]
    %v2131 = vld [vmem:[#allocation10 + $0xd0] sm:$0xff]
    %v2132 = vld [vmem:[#allocation10 + $0xd8] sm:$0xff]
    %v2133 = vld [vmem:[#allocation10 + $0xe0] sm:$0xff]
    %v2134 = vld [vmem:[#allocation10 + $0xe8] sm:$0xff]
    %v2135 = vld [vmem:[#allocation10 + $0xf0] sm:$0xff]
    %v2136 = vld [vmem:[#allocation10 + $0xf8] sm:$0xff]
    %v2169 = vunpack.c.l.b16 %v2105
    %v2170 = vunpack.c.h.b16 %v2105
    %v2171 = vunpack.c.l.b16 %v2106
    %v2172 = vunpack.c.h.b16 %v2106
    %v2173 = vunpack.c.l.b16 %v2107
    %v2174 = vunpack.c.h.b16 %v2107
    %v2175 = vunpack.c.l.b16 %v2108
    %v2176 = vunpack.c.h.b16 %v2108
    %v2177 = vunpack.c.l.b16 %v2109
    %v2178 = vunpack.c.h.b16 %v2109
    %v2179 = vunpack.c.l.b16 %v2110
    %v2180 = vunpack.c.h.b16 %v2110
    %v2181 = vunpack.c.l.b16 %v2111
    %v2182 = vunpack.c.h.b16 %v2111
    %v2183 = vunpack.c.l.b16 %v2112
    %v2184 = vunpack.c.h.b16 %v2112
    %v2185 = vunpack.c.l.b16 %v2113
    %v2186 = vunpack.c.h.b16 %v2113
    %v2187 = vunpack.c.l.b16 %v2114
    %v2188 = vunpack.c.h.b16 %v2114
    %v2189 = vunpack.c.l.b16 %v2115
    %v2190 = vunpack.c.h.b16 %v2115
    %v2191 = vunpack.c.l.b16 %v2116
    %v2192 = vunpack.c.h.b16 %v2116
    %v2193 = vunpack.c.l.b16 %v2117
    %v2194 = vunpack.c.h.b16 %v2117
    %v2195 = vunpack.c.l.b16 %v2118
    %v2196 = vunpack.c.h.b16 %v2118
    %v2197 = vunpack.c.l.b16 %v2119
    %v2198 = vunpack.c.h.b16 %v2119
    %v2199 = vunpack.c.l.b16 %v2120
    %v2200 = vunpack.c.h.b16 %v2120
    %v2201 = vunpack.c.l.b16 %v2121
    %v2202 = vunpack.c.h.b16 %v2121
    %v2203 = vunpack.c.l.b16 %v2122
    %v2204 = vunpack.c.h.b16 %v2122
    %v2205 = vunpack.c.l.b16 %v2123
    %v2206 = vunpack.c.h.b16 %v2123
    %v2207 = vunpack.c.l.b16 %v2124
    %v2208 = vunpack.c.h.b16 %v2124
    %v2209 = vunpack.c.l.b16 %v2125
    %v2210 = vunpack.c.h.b16 %v2125
    %v2211 = vunpack.c.l.b16 %v2126
    %v2212 = vunpack.c.h.b16 %v2126
    %v2213 = vunpack.c.l.b16 %v2127
    %v2214 = vunpack.c.h.b16 %v2127
    %v2215 = vunpack.c.l.b16 %v2128
    %v2216 = vunpack.c.h.b16 %v2128
    %v2217 = vunpack.c.l.b16 %v2129
    %v2218 = vunpack.c.h.b16 %v2129
    %v2219 = vunpack.c.l.b16 %v2130
    %v2220 = vunpack.c.h.b16 %v2130
    %v2221 = vunpack.c.l.b16 %v2131
    %v2222 = vunpack.c.h.b16 %v2131
    %v2223 = vunpack.c.l.b16 %v2132
    %v2224 = vunpack.c.h.b16 %v2132
    %v2225 = vunpack.c.l.b16 %v2133
    %v2226 = vunpack.c.h.b16 %v2133
    %v2227 = vunpack.c.l.b16 %v2134
    %v2228 = vunpack.c.h.b16 %v2134
    %v2229 = vunpack.c.l.b16 %v2135
    %v2230 = vunpack.c.h.b16 %v2135
    %v2231 = vunpack.c.l.b16 %v2136
    %v2232 = vunpack.c.h.b16 %v2136
    %v2233 = vpack.c.b16 %v2173, %v2169
    %v2234 = vpack.c.b16 %v2174, %v2170
    %v2235 = vpack.c.b16 %v2175, %v2171
    %v2236 = vpack.c.b16 %v2176, %v2172
    %v2237 = vpack.c.b16 %v2181, %v2177
    %v2238 = vpack.c.b16 %v2182, %v2178
    %v2239 = vpack.c.b16 %v2183, %v2179
    %v2240 = vpack.c.b16 %v2184, %v2180
    %v2241 = vpack.c.b16 %v2189, %v2185
    %v2242 = vpack.c.b16 %v2190, %v2186
    %v2243 = vpack.c.b16 %v2191, %v2187
    %v2244 = vpack.c.b16 %v2192, %v2188
    %v2245 = vpack.c.b16 %v2197, %v2193
    %v2246 = vpack.c.b16 %v2198, %v2194
    %v2247 = vpack.c.b16 %v2199, %v2195
    %v2248 = vpack.c.b16 %v2200, %v2196
    %v2249 = vpack.c.b16 %v2205, %v2201
    %v2250 = vpack.c.b16 %v2206, %v2202
    %v2251 = vpack.c.b16 %v2207, %v2203
    %v2252 = vpack.c.b16 %v2208, %v2204
    %v2253 = vpack.c.b16 %v2213, %v2209
    %v2254 = vpack.c.b16 %v2214, %v2210
    %v2255 = vpack.c.b16 %v2215, %v2211
    %v2256 = vpack.c.b16 %v2216, %v2212
    %v2257 = vpack.c.b16 %v2221, %v2217
    %v2258 = vpack.c.b16 %v2222, %v2218
    %v2259 = vpack.c.b16 %v2223, %v2219
    %v2260 = vpack.c.b16 %v2224, %v2220
    %v2261 = vpack.c.b16 %v2229, %v2225
    %v2262 = vpack.c.b16 %v2230, %v2226
    %v2263 = vpack.c.b16 %v2231, %v2227
    %v2264 = vpack.c.b16 %v2232, %v2228
    %2297 = vmatprep.subr.bf16.mxu0 %v2234
    %2298 = vmatpush1.bf16.msra.mxu0 %v2233
    %2299 = vmatprep.subr.bf16.mxu0 %v2238
    %2300 = vmatpush1.bf16.msra.mxu0 %v2237
    %2301 = vmatprep.subr.bf16.mxu0 %v2242
    %2302 = vmatpush1.bf16.msra.mxu0 %v2241
    %2303 = vmatprep.subr.bf16.mxu0 %v2246
    %2304 = vmatpush1.bf16.msra.mxu0 %v2245
    %2305 = vmatprep.subr.bf16.mxu0 %v2250
    %2306 = vmatpush1.bf16.msra.mxu0 %v2249
    %2307 = vmatprep.subr.bf16.mxu0 %v2254
    %2308 = vmatpush1.bf16.msra.mxu0 %v2253
    %2309 = vmatprep.subr.bf16.mxu0 %v2258
    %2310 = vmatpush1.bf16.msra.mxu0 %v2257
    %2311 = vmatprep.subr.bf16.mxu0 %v2262
    %2312 = vmatpush1.bf16.msra.mxu0 %v2261
    %2313 = vmatprep.subr.bf16.mxu0 0
    %2314 = vmatpush1.bf16.msra.mxu0 0
    %2315 = vmatprep.subr.bf16.mxu0 0
    %2316 = vmatpush1.bf16.msra.mxu0 0
    %2317 = vmatprep.subr.bf16.mxu0 0
    %2318 = vmatpush1.bf16.msra.mxu0 0
    %2319 = vmatprep.subr.bf16.mxu0 0
    %2320 = vmatpush1.bf16.msra.mxu0 0
    %2321 = vmatprep.subr.bf16.mxu0 0
    %2322 = vmatpush1.bf16.msra.mxu0 0
    %2323 = vmatprep.subr.bf16.mxu0 0
    %2324 = vmatpush1.bf16.msra.mxu0 0
    %2325 = vmatprep.subr.bf16.mxu0 0
    %2326 = vmatpush1.bf16.msra.mxu0 0
    %2327 = vmatprep.subr.bf16.mxu0 0
    %2328 = vmatpush1.bf16.msra.mxu0 0
    %2329 = vmatprep.mubr.bf16.mxu0 0
    %2330 = vmatmul.mubr.bf16.gmra.mrb[0].mxu0 %v2104
    %v2331 = vpop.f32.mrb[0].mxu0
    %v2332 = vadd.f32 0.0, %v2331
    %v2333 = vpop.f32.mrb[0].mxu0
    %v2334 = vadd.f32 0.0, %v2333
    %v2335 = vpop.f32.mrb[0].mxu0
    %v2336 = vpop.f32.mrb[0].mxu0
    %2337 = vdwg.mxu0
    %2338 = vmatprep.subr.bf16.mxu0 %v2236
    %2339 = vmatpush1.bf16.msra.mxu0 %v2235
    %2340 = vmatprep.subr.bf16.mxu0 %v2240
    %2341 = vmatpush1.bf16.msra.mxu0 %v2239
    %2342 = vmatprep.subr.bf16.mxu0 %v2244
    %2343 = vmatpush1.bf16.msra.mxu0 %v2243
    %2344 = vmatprep.subr.bf16.mxu0 %v2248
    %2345 = vmatpush1.bf16.msra.mxu0 %v2247
    %2346 = vmatprep.subr.bf16.mxu0 %v2252
    %2347 = vmatpush1.bf16.msra.mxu0 %v2251
    %2348 = vmatprep.subr.bf16.mxu0 %v2256
    %2349 = vmatpush1.bf16.msra.mxu0 %v2255
    %2350 = vmatprep.subr.bf16.mxu0 %v2260
    %2351 = vmatpush1.bf16.msra.mxu0 %v2259
    %2352 = vmatprep.subr.bf16.mxu0 %v2264
    %2353 = vmatpush1.bf16.msra.mxu0 %v2263
    %2354 = vmatprep.subr.bf16.mxu0 0
    %2355 = vmatpush1.bf16.msra.mxu0 0
    %2356 = vmatprep.subr.bf16.mxu0 0
    %2357 = vmatpush1.bf16.msra.mxu0 0
    %2358 = vmatprep.subr.bf16.mxu0 0
    %2359 = vmatpush1.bf16.msra.mxu0 0
    %2360 = vmatprep.subr.bf16.mxu0 0
    %2361 = vmatpush1.bf16.msra.mxu0 0
    %2362 = vmatprep.subr.bf16.mxu0 0
    %2363 = vmatpush1.bf16.msra.mxu0 0
    %2364 = vmatprep.subr.bf16.mxu0 0
    %2365 = vmatpush1.bf16.msra.mxu0 0
    %2366 = vmatprep.subr.bf16.mxu0 0
    %2367 = vmatpush1.bf16.msra.mxu0 0
    %2368 = vmatprep.subr.bf16.mxu0 0
    %2369 = vmatpush1.bf16.msra.mxu0 0
    %2370 = vmatprep.mubr.bf16.mxu0 0
    %2371 = vmatmul.mubr.bf16.gmra.mrb[0].mxu0 %v2104
    %v2372 = vpop.f32.mrb[0].mxu0
    %v2373 = vadd.f32 0.0, %v2372
    %v2374 = vpop.f32.mrb[0].mxu0
    %v2375 = vadd.f32 0.0, %v2374
    %v2376 = vpop.f32.mrb[0].mxu0
    %v2377 = vpop.f32.mrb[0].mxu0
    %2378 = vdwg.mxu0
    %v2379 = vadd.f32 %v2100, %v2332
    %v2380 = vadd.f32 %v2101, %v2334
    %v2381 = vadd.f32 %v2102, %v2373
    %v2382 = vadd.f32 %v2103, %v2375
    %v2383 = vmul.f32 %v2379, 0.5
    %v2384 = vtanh.pop %v2383
    %v2385 = vmul.f32 %v2384, 0.5
    %v2386 = vadd.f32 %v2385, 0.5
    %v2387 = vmul.f32 %v2380, 0.5
    %v2388 = vtanh.pop %v2387
    %v2389 = vmul.f32 %v2388, 0.5
    %v2390 = vadd.f32 %v2389, 0.5
    %v2391 = vtanh.pop %v2381
    %v2392 = vmul.f32 %v2382, 0.5
    %v2393 = vtanh.pop %v2392
    %v2394 = vmul.f32 %v2393, 0.5
    %v2395 = vadd.f32 %v2394, 0.5
    %v2396 = vmul.f32 %v2390, %v2085
    %v2397 = vmul.f32 %v2386, %v2391
    %v2398 = vadd.f32 %v2396, %v2397
    %v2399 = vtanh.pop %v2398
    %v2400 = vmul.f32 %v2395, %v2399
    %s2401 = sadd.s32 %s534, 5
    %v2402 = vstv %s2401
    %vm2403 = vcmp.gt.s32.totalorder %v533, %v2402
    %v2404 = vsel %vm2403, 1, 0
    %2405 = vset.pattern.permute.xlu0 0
    %2406 = vperm.xlu0 %2405, %v2404
    %v2407 = vpop.permute.xlu0 %2406
    %vm2408 = vcmp.eq.s32.totalorder %v2407, 1
    %v2409 = vsel %vm2408, %v2400, 0.0
    %s2410 = scalar_lea.vmem [#allocation11], 40
    %2411 = vst [vmem:[%s2410] sm:$0xff] %v2409
    %s2412 = scalar_lea.vmem [#allocation2], 192
    %v2413 = vld [vmem:[%s2412] sm:$0xff]
    %v2414 = vld [vmem:[%s2412 + $0x8] sm:$0xff]
    %v2415 = vld [vmem:[%s2412 + $0x10] sm:$0xff]
    %v2416 = vld [vmem:[%s2412 + $0x18] sm:$0xff]
    %v2417 = vpack.c.bf16 %v2400, %v2400
    %v2418 = vld [vmem:[#allocation10] sm:$0xff]
    %v2419 = vld [vmem:[#allocation10 + $0x8] sm:$0xff]
    %v2420 = vld [vmem:[#allocation10 + $0x10] sm:$0xff]
    %v2421 = vld [vmem:[#allocation10 + $0x18] sm:$0xff]
    %v2422 = vld [vmem:[#allocation10 + $0x20] sm:$0xff]
    %v2423 = vld [vmem:[#allocation10 + $0x28] sm:$0xff]
    %v2424 = vld [vmem:[#allocation10 + $0x30] sm:$0xff]
    %v2425 = vld [vmem:[#allocation10 + $0x38] sm:$0xff]
    %v2426 = vld [vmem:[#allocation10 + $0x40] sm:$0xff]
    %v2427 = vld [vmem:[#allocation10 + $0x48] sm:$0xff]
    %v2428 = vld [vmem:[#allocation10 + $0x50] sm:$0xff]
    %v2429 = vld [vmem:[#allocation10 + $0x58] sm:$0xff]
    %v2430 = vld [vmem:[#allocation10 + $0x60] sm:$0xff]
    %v2431 = vld [vmem:[#allocation10 + $0x68] sm:$0xff]
    %v2432 = vld [vmem:[#allocation10 + $0x70] sm:$0xff]
    %v2433 = vld [vmem:[#allocation10 + $0x78] sm:$0xff]
    %v2434 = vld [vmem:[#allocation10 + $0x80] sm:$0xff]
    %v2435 = vld [vmem:[#allocation10 + $0x88] sm:$0xff]
    %v2436 = vld [vmem:[#allocation10 + $0x90] sm:$0xff]
    %v2437 = vld [vmem:[#allocation10 + $0x98] sm:$0xff]
    %v2438 = vld [vmem:[#allocation10 + $0xa0] sm:$0xff]
    %v2439 = vld [vmem:[#allocation10 + $0xa8] sm:$0xff]
    %v2440 = vld [vmem:[#allocation10 + $0xb0] sm:$0xff]
    %v2441 = vld [vmem:[#allocation10 + $0xb8] sm:$0xff]
    %v2442 = vld [vmem:[#allocation10 + $0xc0] sm:$0xff]
    %v2443 = vld [vmem:[#allocation10 + $0xc8] sm:$0xff]
    %v2444 = vld [vmem:[#allocation10 + $0xd0] sm:$0xff]
    %v2445 = vld [vmem:[#allocation10 + $0xd8] sm:$0xff]
    %v2446 = vld [vmem:[#allocation10 + $0xe0] sm:$0xff]
    %v2447 = vld [vmem:[#allocation10 + $0xe8] sm:$0xff]
    %v2448 = vld [vmem:[#allocation10 + $0xf0] sm:$0xff]
    %v2449 = vld [vmem:[#allocation10 + $0xf8] sm:$0xff]
    %v2482 = vunpack.c.l.b16 %v2418
    %v2483 = vunpack.c.h.b16 %v2418
    %v2484 = vunpack.c.l.b16 %v2419
    %v2485 = vunpack.c.h.b16 %v2419
    %v2486 = vunpack.c.l.b16 %v2420
    %v2487 = vunpack.c.h.b16 %v2420
    %v2488 = vunpack.c.l.b16 %v2421
    %v2489 = vunpack.c.h.b16 %v2421
    %v2490 = vunpack.c.l.b16 %v2422
    %v2491 = vunpack.c.h.b16 %v2422
    %v2492 = vunpack.c.l.b16 %v2423
    %v2493 = vunpack.c.h.b16 %v2423
    %v2494 = vunpack.c.l.b16 %v2424
    %v2495 = vunpack.c.h.b16 %v2424
    %v2496 = vunpack.c.l.b16 %v2425
    %v2497 = vunpack.c.h.b16 %v2425
    %v2498 = vunpack.c.l.b16 %v2426
    %v2499 = vunpack.c.h.b16 %v2426
    %v2500 = vunpack.c.l.b16 %v2427
    %v2501 = vunpack.c.h.b16 %v2427
    %v2502 = vunpack.c.l.b16 %v2428
    %v2503 = vunpack.c.h.b16 %v2428
    %v2504 = vunpack.c.l.b16 %v2429
    %v2505 = vunpack.c.h.b16 %v2429
    %v2506 = vunpack.c.l.b16 %v2430
    %v2507 = vunpack.c.h.b16 %v2430
    %v2508 = vunpack.c.l.b16 %v2431
    %v2509 = vunpack.c.h.b16 %v2431
    %v2510 = vunpack.c.l.b16 %v2432
    %v2511 = vunpack.c.h.b16 %v2432
    %v2512 = vunpack.c.l.b16 %v2433
    %v2513 = vunpack.c.h.b16 %v2433
    %v2514 = vunpack.c.l.b16 %v2434
    %v2515 = vunpack.c.h.b16 %v2434
    %v2516 = vunpack.c.l.b16 %v2435
    %v2517 = vunpack.c.h.b16 %v2435
    %v2518 = vunpack.c.l.b16 %v2436
    %v2519 = vunpack.c.h.b16 %v2436
    %v2520 = vunpack.c.l.b16 %v2437
    %v2521 = vunpack.c.h.b16 %v2437
    %v2522 = vunpack.c.l.b16 %v2438
    %v2523 = vunpack.c.h.b16 %v2438
    %v2524 = vunpack.c.l.b16 %v2439
    %v2525 = vunpack.c.h.b16 %v2439
    %v2526 = vunpack.c.l.b16 %v2440
    %v2527 = vunpack.c.h.b16 %v2440
    %v2528 = vunpack.c.l.b16 %v2441
    %v2529 = vunpack.c.h.b16 %v2441
    %v2530 = vunpack.c.l.b16 %v2442
    %v2531 = vunpack.c.h.b16 %v2442
    %v2532 = vunpack.c.l.b16 %v2443
    %v2533 = vunpack.c.h.b16 %v2443
    %v2534 = vunpack.c.l.b16 %v2444
    %v2535 = vunpack.c.h.b16 %v2444
    %v2536 = vunpack.c.l.b16 %v2445
    %v2537 = vunpack.c.h.b16 %v2445
    %v2538 = vunpack.c.l.b16 %v2446
    %v2539 = vunpack.c.h.b16 %v2446
    %v2540 = vunpack.c.l.b16 %v2447
    %v2541 = vunpack.c.h.b16 %v2447
    %v2542 = vunpack.c.l.b16 %v2448
    %v2543 = vunpack.c.h.b16 %v2448
    %v2544 = vunpack.c.l.b16 %v2449
    %v2545 = vunpack.c.h.b16 %v2449
    %v2546 = vpack.c.b16 %v2486, %v2482
    %v2547 = vpack.c.b16 %v2487, %v2483
    %v2548 = vpack.c.b16 %v2488, %v2484
    %v2549 = vpack.c.b16 %v2489, %v2485
    %v2550 = vpack.c.b16 %v2494, %v2490
    %v2551 = vpack.c.b16 %v2495, %v2491
    %v2552 = vpack.c.b16 %v2496, %v2492
    %v2553 = vpack.c.b16 %v2497, %v2493
    %v2554 = vpack.c.b16 %v2502, %v2498
    %v2555 = vpack.c.b16 %v2503, %v2499
    %v2556 = vpack.c.b16 %v2504, %v2500
    %v2557 = vpack.c.b16 %v2505, %v2501
    %v2558 = vpack.c.b16 %v2510, %v2506
    %v2559 = vpack.c.b16 %v2511, %v2507
    %v2560 = vpack.c.b16 %v2512, %v2508
    %v2561 = vpack.c.b16 %v2513, %v2509
    %v2562 = vpack.c.b16 %v2518, %v2514
    %v2563 = vpack.c.b16 %v2519, %v2515
    %v2564 = vpack.c.b16 %v2520, %v2516
    %v2565 = vpack.c.b16 %v2521, %v2517
    %v2566 = vpack.c.b16 %v2526, %v2522
    %v2567 = vpack.c.b16 %v2527, %v2523
    %v2568 = vpack.c.b16 %v2528, %v2524
    %v2569 = vpack.c.b16 %v2529, %v2525
    %v2570 = vpack.c.b16 %v2534, %v2530
    %v2571 = vpack.c.b16 %v2535, %v2531
    %v2572 = vpack.c.b16 %v2536, %v2532
    %v2573 = vpack.c.b16 %v2537, %v2533
    %v2574 = vpack.c.b16 %v2542, %v2538
    %v2575 = vpack.c.b16 %v2543, %v2539
    %v2576 = vpack.c.b16 %v2544, %v2540
    %v2577 = vpack.c.b16 %v2545, %v2541
    %2610 = vmatprep.subr.bf16.mxu0 %v2547
    %2611 = vmatpush1.bf16.msra.mxu0 %v2546
    %2612 = vmatprep.subr.bf16.mxu0 %v2551
    %2613 = vmatpush1.bf16.msra.mxu0 %v2550
    %2614 = vmatprep.subr.bf16.mxu0 %v2555
    %2615 = vmatpush1.bf16.msra.mxu0 %v2554
    %2616 = vmatprep.subr.bf16.mxu0 %v2559
    %2617 = vmatpush1.bf16.msra.mxu0 %v2558
    %2618 = vmatprep.subr.bf16.mxu0 %v2563
    %2619 = vmatpush1.bf16.msra.mxu0 %v2562
    %2620 = vmatprep.subr.bf16.mxu0 %v2567
    %2621 = vmatpush1.bf16.msra.mxu0 %v2566
    %2622 = vmatprep.subr.bf16.mxu0 %v2571
    %2623 = vmatpush1.bf16.msra.mxu0 %v2570
    %2624 = vmatprep.subr.bf16.mxu0 %v2575
    %2625 = vmatpush1.bf16.msra.mxu0 %v2574
    %2626 = vmatprep.subr.bf16.mxu0 0
    %2627 = vmatpush1.bf16.msra.mxu0 0
    %2628 = vmatprep.subr.bf16.mxu0 0
    %2629 = vmatpush1.bf16.msra.mxu0 0
    %2630 = vmatprep.subr.bf16.mxu0 0
    %2631 = vmatpush1.bf16.msra.mxu0 0
    %2632 = vmatprep.subr.bf16.mxu0 0
    %2633 = vmatpush1.bf16.msra.mxu0 0
    %2634 = vmatprep.subr.bf16.mxu0 0
    %2635 = vmatpush1.bf16.msra.mxu0 0
    %2636 = vmatprep.subr.bf16.mxu0 0
    %2637 = vmatpush1.bf16.msra.mxu0 0
    %2638 = vmatprep.subr.bf16.mxu0 0
    %2639 = vmatpush1.bf16.msra.mxu0 0
    %2640 = vmatprep.subr.bf16.mxu0 0
    %2641 = vmatpush1.bf16.msra.mxu0 0
    %2642 = vmatprep.mubr.bf16.mxu0 0
    %2643 = vmatmul.mubr.bf16.gmra.mrb[0].mxu0 %v2417
    %v2644 = vpop.f32.mrb[0].mxu0
    %v2645 = vadd.f32 0.0, %v2644
    %v2646 = vpop.f32.mrb[0].mxu0
    %v2647 = vadd.f32 0.0, %v2646
    %v2648 = vpop.f32.mrb[0].mxu0
    %v2649 = vpop.f32.mrb[0].mxu0
    %2650 = vdwg.mxu0
    %2651 = vmatprep.subr.bf16.mxu0 %v2549
    %2652 = vmatpush1.bf16.msra.mxu0 %v2548
    %2653 = vmatprep.subr.bf16.mxu0 %v2553
    %2654 = vmatpush1.bf16.msra.mxu0 %v2552
    %2655 = vmatprep.subr.bf16.mxu0 %v2557
    %2656 = vmatpush1.bf16.msra.mxu0 %v2556
    %2657 = vmatprep.subr.bf16.mxu0 %v2561
    %2658 = vmatpush1.bf16.msra.mxu0 %v2560
    %2659 = vmatprep.subr.bf16.mxu0 %v2565
    %2660 = vmatpush1.bf16.msra.mxu0 %v2564
    %2661 = vmatprep.subr.bf16.mxu0 %v2569
    %2662 = vmatpush1.bf16.msra.mxu0 %v2568
    %2663 = vmatprep.subr.bf16.mxu0 %v2573
    %2664 = vmatpush1.bf16.msra.mxu0 %v2572
    %2665 = vmatprep.subr.bf16.mxu0 %v2577
    %2666 = vmatpush1.bf16.msra.mxu0 %v2576
    %2667 = vmatprep.subr.bf16.mxu0 0
    %2668 = vmatpush1.bf16.msra.mxu0 0
    %2669 = vmatprep.subr.bf16.mxu0 0
    %2670 = vmatpush1.bf16.msra.mxu0 0
    %2671 = vmatprep.subr.bf16.mxu0 0
    %2672 = vmatpush1.bf16.msra.mxu0 0
    %2673 = vmatprep.subr.bf16.mxu0 0
    %2674 = vmatpush1.bf16.msra.mxu0 0
    %2675 = vmatprep.subr.bf16.mxu0 0
    %2676 = vmatpush1.bf16.msra.mxu0 0
    %2677 = vmatprep.subr.bf16.mxu0 0
    %2678 = vmatpush1.bf16.msra.mxu0 0
    %2679 = vmatprep.subr.bf16.mxu0 0
    %2680 = vmatpush1.bf16.msra.mxu0 0
    %2681 = vmatprep.subr.bf16.mxu0 0
    %2682 = vmatpush1.bf16.msra.mxu0 0
    %2683 = vmatprep.mubr.bf16.mxu0 0
    %2684 = vmatmul.mubr.bf16.gmra.mrb[0].mxu0 %v2417
    %v2685 = vpop.f32.mrb[0].mxu0
    %v2686 = vadd.f32 0.0, %v2685
    %v2687 = vpop.f32.mrb[0].mxu0
    %v2688 = vadd.f32 0.0, %v2687
    %v2689 = vpop.f32.mrb[0].mxu0
    %v2690 = vpop.f32.mrb[0].mxu0
    %2691 = vdwg.mxu0
    %v2692 = vadd.f32 %v2413, %v2645
    %v2693 = vadd.f32 %v2414, %v2647
    %v2694 = vadd.f32 %v2415, %v2686
    %v2695 = vadd.f32 %v2416, %v2688
    %v2696 = vmul.f32 %v2692, 0.5
    %v2697 = vtanh.pop %v2696
    %v2698 = vmul.f32 %v2697, 0.5
    %v2699 = vadd.f32 %v2698, 0.5
    %v2700 = vmul.f32 %v2693, 0.5
    %v2701 = vtanh.pop %v2700
    %v2702 = vmul.f32 %v2701, 0.5
    %v2703 = vadd.f32 %v2702, 0.5
    %v2704 = vtanh.pop %v2694
    %v2705 = vmul.f32 %v2695, 0.5
    %v2706 = vtanh.pop %v2705
    %v2707 = vmul.f32 %v2706, 0.5
    %v2708 = vadd.f32 %v2707, 0.5
    %v2709 = vmul.f32 %v2703, %v2398
    %v2710 = vmul.f32 %v2699, %v2704
    %v2711 = vadd.f32 %v2709, %v2710
    %v2712 = vtanh.pop %v2711
    %v2713 = vmul.f32 %v2708, %v2712
    %s2714 = sadd.s32 %s534, 6
    %v2715 = vstv %s2714
    %vm2716 = vcmp.gt.s32.totalorder %v533, %v2715
    %v2717 = vsel %vm2716, 1, 0
    %2718 = vset.pattern.permute.xlu0 0
    %2719 = vperm.xlu0 %2718, %v2717
    %v2720 = vpop.permute.xlu0 %2719
    %vm2721 = vcmp.eq.s32.totalorder %v2720, 1
    %v2722 = vsel %vm2721, %v2713, 0.0
    %s2723 = scalar_lea.vmem [#allocation11], 48
    %2724 = vst [vmem:[%s2723] sm:$0xff] %v2722
    %s2725 = scalar_lea.vmem [#allocation2], 224
    %v2726 = vld [vmem:[%s2725] sm:$0xff]
    %v2727 = vld [vmem:[%s2725 + $0x8] sm:$0xff]
    %v2728 = vld [vmem:[%s2725 + $0x10] sm:$0xff]
    %v2729 = vld [vmem:[%s2725 + $0x18] sm:$0xff]
    %v2730 = vpack.c.bf16 %v2713, %v2713
    %v2731 = vld [vmem:[#allocation10] sm:$0xff]
    %v2732 = vld [vmem:[#allocation10 + $0x8] sm:$0xff]
    %v2733 = vld [vmem:[#allocation10 + $0x10] sm:$0xff]
    %v2734 = vld [vmem:[#allocation10 + $0x18] sm:$0xff]
    %v2735 = vld [vmem:[#allocation10 + $0x20] sm:$0xff]
    %v2736 = vld [vmem:[#allocation10 + $0x28] sm:$0xff]
    %v2737 = vld [vmem:[#allocation10 + $0x30] sm:$0xff]
    %v2738 = vld [vmem:[#allocation10 + $0x38] sm:$0xff]
    %v2739 = vld [vmem:[#allocation10 + $0x40] sm:$0xff]
    %v2740 = vld [vmem:[#allocation10 + $0x48] sm:$0xff]
    %v2741 = vld [vmem:[#allocation10 + $0x50] sm:$0xff]
    %v2742 = vld [vmem:[#allocation10 + $0x58] sm:$0xff]
    %v2743 = vld [vmem:[#allocation10 + $0x60] sm:$0xff]
    %v2744 = vld [vmem:[#allocation10 + $0x68] sm:$0xff]
    %v2745 = vld [vmem:[#allocation10 + $0x70] sm:$0xff]
    %v2746 = vld [vmem:[#allocation10 + $0x78] sm:$0xff]
    %v2747 = vld [vmem:[#allocation10 + $0x80] sm:$0xff]
    %v2748 = vld [vmem:[#allocation10 + $0x88] sm:$0xff]
    %v2749 = vld [vmem:[#allocation10 + $0x90] sm:$0xff]
    %v2750 = vld [vmem:[#allocation10 + $0x98] sm:$0xff]
    %v2751 = vld [vmem:[#allocation10 + $0xa0] sm:$0xff]
    %v2752 = vld [vmem:[#allocation10 + $0xa8] sm:$0xff]
    %v2753 = vld [vmem:[#allocation10 + $0xb0] sm:$0xff]
    %v2754 = vld [vmem:[#allocation10 + $0xb8] sm:$0xff]
    %v2755 = vld [vmem:[#allocation10 + $0xc0] sm:$0xff]
    %v2756 = vld [vmem:[#allocation10 + $0xc8] sm:$0xff]
    %v2757 = vld [vmem:[#allocation10 + $0xd0] sm:$0xff]
    %v2758 = vld [vmem:[#allocation10 + $0xd8] sm:$0xff]
    %v2759 = vld [vmem:[#allocation10 + $0xe0] sm:$0xff]
    %v2760 = vld [vmem:[#allocation10 + $0xe8] sm:$0xff]
    %v2761 = vld [vmem:[#allocation10 + $0xf0] sm:$0xff]
    %v2762 = vld [vmem:[#allocation10 + $0xf8] sm:$0xff]
    %v2795 = vunpack.c.l.b16 %v2731
    %v2796 = vunpack.c.h.b16 %v2731
    %v2797 = vunpack.c.l.b16 %v2732
    %v2798 = vunpack.c.h.b16 %v2732
    %v2799 = vunpack.c.l.b16 %v2733
    %v2800 = vunpack.c.h.b16 %v2733
    %v2801 = vunpack.c.l.b16 %v2734
    %v2802 = vunpack.c.h.b16 %v2734
    %v2803 = vunpack.c.l.b16 %v2735
    %v2804 = vunpack.c.h.b16 %v2735
    %v2805 = vunpack.c.l.b16 %v2736
    %v2806 = vunpack.c.h.b16 %v2736
    %v2807 = vunpack.c.l.b16 %v2737
    %v2808 = vunpack.c.h.b16 %v2737
    %v2809 = vunpack.c.l.b16 %v2738
    %v2810 = vunpack.c.h.b16 %v2738
    %v2811 = vunpack.c.l.b16 %v2739
    %v2812 = vunpack.c.h.b16 %v2739
    %v2813 = vunpack.c.l.b16 %v2740
    %v2814 = vunpack.c.h.b16 %v2740
    %v2815 = vunpack.c.l.b16 %v2741
    %v2816 = vunpack.c.h.b16 %v2741
    %v2817 = vunpack.c.l.b16 %v2742
    %v2818 = vunpack.c.h.b16 %v2742
    %v2819 = vunpack.c.l.b16 %v2743
    %v2820 = vunpack.c.h.b16 %v2743
    %v2821 = vunpack.c.l.b16 %v2744
    %v2822 = vunpack.c.h.b16 %v2744
    %v2823 = vunpack.c.l.b16 %v2745
    %v2824 = vunpack.c.h.b16 %v2745
    %v2825 = vunpack.c.l.b16 %v2746
    %v2826 = vunpack.c.h.b16 %v2746
    %v2827 = vunpack.c.l.b16 %v2747
    %v2828 = vunpack.c.h.b16 %v2747
    %v2829 = vunpack.c.l.b16 %v2748
    %v2830 = vunpack.c.h.b16 %v2748
    %v2831 = vunpack.c.l.b16 %v2749
    %v2832 = vunpack.c.h.b16 %v2749
    %v2833 = vunpack.c.l.b16 %v2750
    %v2834 = vunpack.c.h.b16 %v2750
    %v2835 = vunpack.c.l.b16 %v2751
    %v2836 = vunpack.c.h.b16 %v2751
    %v2837 = vunpack.c.l.b16 %v2752
    %v2838 = vunpack.c.h.b16 %v2752
    %v2839 = vunpack.c.l.b16 %v2753
    %v2840 = vunpack.c.h.b16 %v2753
    %v2841 = vunpack.c.l.b16 %v2754
    %v2842 = vunpack.c.h.b16 %v2754
    %v2843 = vunpack.c.l.b16 %v2755
    %v2844 = vunpack.c.h.b16 %v2755
    %v2845 = vunpack.c.l.b16 %v2756
    %v2846 = vunpack.c.h.b16 %v2756
    %v2847 = vunpack.c.l.b16 %v2757
    %v2848 = vunpack.c.h.b16 %v2757
    %v2849 = vunpack.c.l.b16 %v2758
    %v2850 = vunpack.c.h.b16 %v2758
    %v2851 = vunpack.c.l.b16 %v2759
    %v2852 = vunpack.c.h.b16 %v2759
    %v2853 = vunpack.c.l.b16 %v2760
    %v2854 = vunpack.c.h.b16 %v2760
    %v2855 = vunpack.c.l.b16 %v2761
    %v2856 = vunpack.c.h.b16 %v2761
    %v2857 = vunpack.c.l.b16 %v2762
    %v2858 = vunpack.c.h.b16 %v2762
    %v2859 = vpack.c.b16 %v2799, %v2795
    %v2860 = vpack.c.b16 %v2800, %v2796
    %v2861 = vpack.c.b16 %v2801, %v2797
    %v2862 = vpack.c.b16 %v2802, %v2798
    %v2863 = vpack.c.b16 %v2807, %v2803
    %v2864 = vpack.c.b16 %v2808, %v2804
    %v2865 = vpack.c.b16 %v2809, %v2805
    %v2866 = vpack.c.b16 %v2810, %v2806
    %v2867 = vpack.c.b16 %v2815, %v2811
    %v2868 = vpack.c.b16 %v2816, %v2812
    %v2869 = vpack.c.b16 %v2817, %v2813
    %v2870 = vpack.c.b16 %v2818, %v2814
    %v2871 = vpack.c.b16 %v2823, %v2819
    %v2872 = vpack.c.b16 %v2824, %v2820
    %v2873 = vpack.c.b16 %v2825, %v2821
    %v2874 = vpack.c.b16 %v2826, %v2822
    %v2875 = vpack.c.b16 %v2831, %v2827
    %v2876 = vpack.c.b16 %v2832, %v2828
    %v2877 = vpack.c.b16 %v2833, %v2829
    %v2878 = vpack.c.b16 %v2834, %v2830
    %v2879 = vpack.c.b16 %v2839, %v2835
    %v2880 = vpack.c.b16 %v2840, %v2836
    %v2881 = vpack.c.b16 %v2841, %v2837
    %v2882 = vpack.c.b16 %v2842, %v2838
    %v2883 = vpack.c.b16 %v2847, %v2843
    %v2884 = vpack.c.b16 %v2848, %v2844
    %v2885 = vpack.c.b16 %v2849, %v2845
    %v2886 = vpack.c.b16 %v2850, %v2846
    %v2887 = vpack.c.b16 %v2855, %v2851
    %v2888 = vpack.c.b16 %v2856, %v2852
    %v2889 = vpack.c.b16 %v2857, %v2853
    %v2890 = vpack.c.b16 %v2858, %v2854
    %2923 = vmatprep.subr.bf16.mxu0 %v2860
    %2924 = vmatpush1.bf16.msra.mxu0 %v2859
    %2925 = vmatprep.subr.bf16.mxu0 %v2864
    %2926 = vmatpush1.bf16.msra.mxu0 %v2863
    %2927 = vmatprep.subr.bf16.mxu0 %v2868
    %2928 = vmatpush1.bf16.msra.mxu0 %v2867
    %2929 = vmatprep.subr.bf16.mxu0 %v2872
    %2930 = vmatpush1.bf16.msra.mxu0 %v2871
    %2931 = vmatprep.subr.bf16.mxu0 %v2876
    %2932 = vmatpush1.bf16.msra.mxu0 %v2875
    %2933 = vmatprep.subr.bf16.mxu0 %v2880
    %2934 = vmatpush1.bf16.msra.mxu0 %v2879
    %2935 = vmatprep.subr.bf16.mxu0 %v2884
    %2936 = vmatpush1.bf16.msra.mxu0 %v2883
    %2937 = vmatprep.subr.bf16.mxu0 %v2888
    %2938 = vmatpush1.bf16.msra.mxu0 %v2887
    %2939 = vmatprep.subr.bf16.mxu0 0
    %2940 = vmatpush1.bf16.msra.mxu0 0
    %2941 = vmatprep.subr.bf16.mxu0 0
    %2942 = vmatpush1.bf16.msra.mxu0 0
    %2943 = vmatprep.subr.bf16.mxu0 0
    %2944 = vmatpush1.bf16.msra.mxu0 0
    %2945 = vmatprep.subr.bf16.mxu0 0
    %2946 = vmatpush1.bf16.msra.mxu0 0
    %2947 = vmatprep.subr.bf16.mxu0 0
    %2948 = vmatpush1.bf16.msra.mxu0 0
    %2949 = vmatprep.subr.bf16.mxu0 0
    %2950 = vmatpush1.bf16.msra.mxu0 0
    %2951 = vmatprep.subr.bf16.mxu0 0
    %2952 = vmatpush1.bf16.msra.mxu0 0
    %2953 = vmatprep.subr.bf16.mxu0 0
    %2954 = vmatpush1.bf16.msra.mxu0 0
    %2955 = vmatprep.mubr.bf16.mxu0 0
    %2956 = vmatmul.mubr.bf16.gmra.mrb[0].mxu0 %v2730
    %v2957 = vpop.f32.mrb[0].mxu0
    %v2958 = vadd.f32 0.0, %v2957
    %v2959 = vpop.f32.mrb[0].mxu0
    %v2960 = vadd.f32 0.0, %v2959
    %v2961 = vpop.f32.mrb[0].mxu0
    %v2962 = vpop.f32.mrb[0].mxu0
    %2963 = vdwg.mxu0
    %2964 = vmatprep.subr.bf16.mxu0 %v2862
    %2965 = vmatpush1.bf16.msra.mxu0 %v2861
    %2966 = vmatprep.subr.bf16.mxu0 %v2866
    %2967 = vmatpush1.bf16.msra.mxu0 %v2865
    %2968 = vmatprep.subr.bf16.mxu0 %v2870
    %2969 = vmatpush1.bf16.msra.mxu0 %v2869
    %2970 = vmatprep.subr.bf16.mxu0 %v2874
    %2971 = vmatpush1.bf16.msra.mxu0 %v2873
    %2972 = vmatprep.subr.bf16.mxu0 %v2878
    %2973 = vmatpush1.bf16.msra.mxu0 %v2877
    %2974 = vmatprep.subr.bf16.mxu0 %v2882
    %2975 = vmatpush1.bf16.msra.mxu0 %v2881
    %2976 = vmatprep.subr.bf16.mxu0 %v2886
    %2977 = vmatpush1.bf16.msra.mxu0 %v2885
    %2978 = vmatprep.subr.bf16.mxu0 %v2890
    %2979 = vmatpush1.bf16.msra.mxu0 %v2889
    %2980 = vmatprep.subr.bf16.mxu0 0
    %2981 = vmatpush1.bf16.msra.mxu0 0
    %2982 = vmatprep.subr.bf16.mxu0 0
    %2983 = vmatpush1.bf16.msra.mxu0 0
    %2984 = vmatprep.subr.bf16.mxu0 0
    %2985 = vmatpush1.bf16.msra.mxu0 0
    %2986 = vmatprep.subr.bf16.mxu0 0
    %2987 = vmatpush1.bf16.msra.mxu0 0
    %2988 = vmatprep.subr.bf16.mxu0 0
    %2989 = vmatpush1.bf16.msra.mxu0 0
    %2990 = vmatprep.subr.bf16.mxu0 0
    %2991 = vmatpush1.bf16.msra.mxu0 0
    %2992 = vmatprep.subr.bf16.mxu0 0
    %2993 = vmatpush1.bf16.msra.mxu0 0
    %2994 = vmatprep.subr.bf16.mxu0 0
    %2995 = vmatpush1.bf16.msra.mxu0 0
    %2996 = vmatprep.mubr.bf16.mxu0 0
    %2997 = vmatmul.mubr.bf16.gmra.mrb[0].mxu0 %v2730
    %v2998 = vpop.f32.mrb[0].mxu0
    %v2999 = vadd.f32 0.0, %v2998
    %v3000 = vpop.f32.mrb[0].mxu0
    %v3001 = vadd.f32 0.0, %v3000
    %v3002 = vpop.f32.mrb[0].mxu0
    %v3003 = vpop.f32.mrb[0].mxu0
    %3004 = vdwg.mxu0
    %v3005 = vadd.f32 %v2726, %v2958
    %v3006 = vadd.f32 %v2727, %v2960
    %v3007 = vadd.f32 %v2728, %v2999
    %v3008 = vadd.f32 %v2729, %v3001
    %v3009 = vmul.f32 %v3005, 0.5
    %v3010 = vtanh.pop %v3009
    %v3011 = vmul.f32 %v3010, 0.5
    %v3012 = vadd.f32 %v3011, 0.5
    %v3013 = vmul.f32 %v3006, 0.5
    %v3014 = vtanh.pop %v3013
    %v3015 = vmul.f32 %v3014, 0.5
    %v3016 = vadd.f32 %v3015, 0.5
    %v3017 = vtanh.pop %v3007
    %v3018 = vmul.f32 %v3008, 0.5
    %v3019 = vtanh.pop %v3018
    %v3020 = vmul.f32 %v3019, 0.5
    %v3021 = vadd.f32 %v3020, 0.5
    %v3022 = vmul.f32 %v3016, %v2711
    %v3023 = vmul.f32 %v3012, %v3017
    %v3024 = vadd.f32 %v3022, %v3023
    %v3025 = vtanh.pop %v3024
    %v3026 = vmul.f32 %v3021, %v3025
    %s3027 = sadd.s32 %s534, 7
    %v3028 = vstv %s3027
    %vm3029 = vcmp.gt.s32.totalorder %v533, %v3028
    %v3030 = vsel %vm3029, 1, 0
    %3031 = vset.pattern.permute.xlu0 0
    %3032 = vperm.xlu0 %3031, %v3030
    %v3033 = vpop.permute.xlu0 %3032
    %vm3034 = vcmp.eq.s32.totalorder %v3033, 1
    %v3035 = vsel %vm3034, %v3026, 0.0
    %s3036 = scalar_lea.vmem [#allocation11], 56
    %3037 = vst [vmem:[%s3036] sm:$0xff] %v3035
    %3038 = vst [vmem:[#allocation3] sm:$0xff] %v3026
    %3039 = vst [vmem:[#allocation4] sm:$0xff] %v3024
    // Predicated region
    $region46: #{tpu_custom_call.1} parent=1 // pred_check
      _
    $region47: #{tpu_custom_call.1} parent=1 // pred_check_branch
      %3041 = sbr.rel (0) target = $region49
    $region48: #{tpu_custom_call.1} parent=1 // pred_region
      %s3043 = ssub.s32 1024, 1024
      %3044 = vsyncadd [#allocation7], %s3043
      %s3045 = sshll.u32 [#allocation11], 4
      %s3046 = int_to_ptr.vmem [resolvable:$true] %s3045
      %3051 = dma.vmem_to_hbm [thread:$0]  %s3046, 1024, %s7, [#allocation7], 128, 128, 8
    $region49: #{tpu_custom_call.1} parent=1 // pred_fallthru
      _
    // Predicated region
    $region50: #{tpu_custom_call.1} parent=1 // pred_check
      _
    $region51: #{tpu_custom_call.1} parent=1 // pred_check_branch
      %3053 = sbr.rel (0) target = $region53
    $region52: #{tpu_custom_call.1} parent=1 // pred_region
      %3054 = dma.done [#allocation7], 1024
    $region53: #{tpu_custom_call.1} parent=1 // pred_fallthru
      _
    %3055 = vsyncpa [#allocation6], 1
    %3056 = vsyncpa [#allocation9], 1
    %3057 = vsyncpa [#allocation7], 1

// kernel: tpu_custom_call.1
$region0: #{tpu_custom_call.1}
  #allocation0 [shape = 'u32[]', space=smem, size = 0x4, offset = 0x4, fixed_abs, tag = 'smem constant byte address 0x4 - core index']
  #allocation1 [shape = 'u32[144,128]{1,0:T(1,128)}', space=vmem, size = 0x12000, scoped, tag = 'internal scratch']
  #allocation2 [shape = 'f32[8,8,512]{2,1,0:T(8,128)}', space=vmem, size = 0x20000, scoped, tag = 'scratch operand']
  #allocation3 [shape = 'f32[8,128]{1,0:T(8,128)}', space=vmem, size = 0x1000, scoped, tag = 'scratch operand']
  #allocation4 [shape = 'f32[8,128]{1,0:T(8,128)}', space=vmem, size = 0x1000, scoped, tag = 'scratch operand']
  %s0 = inlined_call_operand.hbm [shape: bf16[8,8,128], index: 0, kind: input, shape index: {}]
  %s1 = inlined_call_operand.vmem [shape: f32[8,128], index: 1, kind: input, shape index: {}]
  %s2 = inlined_call_operand.vmem [shape: f32[8,128], index: 2, kind: input, shape index: {}]
  %s3 = inlined_call_operand.hbm [shape: bf16[128,512], index: 3, kind: input, shape index: {}]
  %s4 = inlined_call_operand.hbm [shape: bf16[128,512], index: 4, kind: input, shape index: {}]
  %s5 = inlined_call_operand.vmem [shape: f32[1,512], index: 5, kind: input, shape index: {}]
  %s6 = inlined_call_operand.vmem [shape: s32[8,1], index: 6, kind: input, shape index: {}]
  %s7 = inlined_call_operand.hbm [shape: f32[8,8,128], index: 7, kind: output, shape index: {}]
  %s8 = sld [smem:[#allocation0]]
  $region54: #{tpu_custom_call.1} parent=0
    _
  %s10 = ssub.s32 1, %s8
  %s11 = scalar_select 0, %s10, %s8
  $region1: #{tpu_custom_call.1} parent=0
    #allocation5 [shape = 'u8[16384]{0}', space=vmem, size = 0x4000, scoped, tag = 'input window, operand 0, single buffered']
    #allocation6 [shape = 's32[1]{0}', space=sflag, size = 0x4, scoped, tag = 'scoped memory for tpu_custom_call.1']
    #allocation7 [shape = 's32[1]{0}', space=sflag, size = 0x4, scoped, tag = 'scoped memory for tpu_custom_call.1']
    #allocation8 [shape = 'u8[131072]{0}', space=vmem, size = 0x20000, scoped, tag = 'input window, operand 3, single buffered']
    #allocation9 [shape = 's32[1]{0}', space=sflag, size = 0x4, scoped, tag = 'scoped memory for tpu_custom_call.1']
    #allocation10 [shape = 'u8[131072]{0}', space=vmem, size = 0x20000, scoped, tag = 'input window, operand 4, single buffered']
    #allocation11 [shape = 'u8[32768]{0}', space=vmem, size = 0x8000, scoped, tag = 'output window, operand 0, single buffered']
    %12 = vsyncpa [#allocation6], 0
    %13 = vsyncpa [#allocation9], 0
    %14 = vsyncpa [#allocation7], 0
    // Predicated region
    $region2: #{tpu_custom_call.1} parent=1 // pred_check
      _
    $region3: #{tpu_custom_call.1} parent=1 // pred_check_branch
      %16 = sbr.rel (0) target = $region5
    $region4: #{tpu_custom_call.1} parent=1 // pred_region
      %s18 = ssub.s32 512, 512
      %19 = vsyncadd [#allocation6], %s18
      %s20 = sshll.u32 [#allocation5], 4
      %s21 = int_to_ptr.vmem [resolvable:$true] %s20
      %26 = dma.hbm_to_vmem [thread:$0]  %s0, 512, %s21, [#allocation6], 64, 64, 4
    $region5: #{tpu_custom_call.1} parent=1 // pred_fallthru
      _
    // Predicated region
    $region6: #{tpu_custom_call.1} parent=1 // pred_check
      _
    $region7: #{tpu_custom_call.1} parent=1 // pred_check_branch
      %28 = sbr.rel (0) target = $region9
    $region8: #{tpu_custom_call.1} parent=1 // pred_region
      _
    $region9: #{tpu_custom_call.1} parent=1 // pred_fallthru
      _
    // Predicated region
    $region10: #{tpu_custom_call.1} parent=1 // pred_check
      _
    $region11: #{tpu_custom_call.1} parent=1 // pred_check_branch
      %30 = sbr.rel (0) target = $region13
    $region12: #{tpu_custom_call.1} parent=1 // pred_region
      _
    $region13: #{tpu_custom_call.1} parent=1 // pred_fallthru
      _
    // Predicated region
    $region14: #{tpu_custom_call.1} parent=1 // pred_check
      _
    $region15: #{tpu_custom_call.1} parent=1 // pred_check_branch
      %32 = sbr.rel (0) target = $region17
    $region16: #{tpu_custom_call.1} parent=1 // pred_region
      %s34 = ssub.s32 4096, 4096
      %35 = vsyncadd [#allocation9], %s34
      %s36 = sshll.u32 [#allocation8], 4
      %s37 = int_to_ptr.vmem [resolvable:$true] %s36
      %42 = dma.hbm_to_vmem [thread:$0]  %s3, 4096, %s37, [#allocation9], 256, 256, 16
    $region17: #{tpu_custom_call.1} parent=1 // pred_fallthru
      _
    // Predicated region
    $region18: #{tpu_custom_call.1} parent=1 // pred_check
      _
    $region19: #{tpu_custom_call.1} parent=1 // pred_check_branch
      %44 = sbr.rel (0) target = $region21
    $region20: #{tpu_custom_call.1} parent=1 // pred_region
      %s46 = ssub.s32 4096, 4096
      %47 = vsyncadd [#allocation9], %s46
      %s48 = sshll.u32 [#allocation10], 4
      %s49 = int_to_ptr.vmem [resolvable:$true] %s48
      %54 = dma.hbm_to_vmem [thread:$0]  %s4, 4096, %s49, [#allocation9], 256, 256, 16
    $region21: #{tpu_custom_call.1} parent=1 // pred_fallthru
      _
    // Predicated region
    $region22: #{tpu_custom_call.1} parent=1 // pred_check
      _
    $region23: #{tpu_custom_call.1} parent=1 // pred_check_branch
      %56 = sbr.rel (0) target = $region25
    $region24: #{tpu_custom_call.1} parent=1 // pred_region
      _
    $region25: #{tpu_custom_call.1} parent=1 // pred_fallthru
      _
    // Predicated region
    $region26: #{tpu_custom_call.1} parent=1 // pred_check
      _
    $region27: #{tpu_custom_call.1} parent=1 // pred_check_branch
      %58 = sbr.rel (0) target = $region29
    $region28: #{tpu_custom_call.1} parent=1 // pred_region
      _
    $region29: #{tpu_custom_call.1} parent=1 // pred_fallthru
      _
    // Predicated region
    $region30: #{tpu_custom_call.1} parent=1 // pred_check
      _
    $region31: #{tpu_custom_call.1} parent=1 // pred_check_branch
      %60 = sbr.rel (0) target = $region33
    $region32: #{tpu_custom_call.1} parent=1 // pred_region
      %61 = dma.done [#allocation6], 512
    $region33: #{tpu_custom_call.1} parent=1 // pred_fallthru
      _
    // Predicated region
    $region34: #{tpu_custom_call.1} parent=1 // pred_check
      _
    $region35: #{tpu_custom_call.1} parent=1 // pred_check_branch
      %63 = sbr.rel (0) target = $region37
    $region36: #{tpu_custom_call.1} parent=1 // pred_region
      %64 = dma.done [#allocation9], 4096
    $region37: #{tpu_custom_call.1} parent=1 // pred_fallthru
      _
    // Predicated region
    $region38: #{tpu_custom_call.1} parent=1 // pred_check
      _
    $region39: #{tpu_custom_call.1} parent=1 // pred_check_branch
      %66 = sbr.rel (0) target = $region41
    $region40: #{tpu_custom_call.1} parent=1 // pred_region
      %67 = dma.done [#allocation9], 4096
    $region41: #{tpu_custom_call.1} parent=1 // pred_fallthru
      _
    %p69 = scmp.eq.s32.totalorder 0, 0
    // Predicated region
    $region42: #{tpu_custom_call.1} parent=1 // pred_check
      %p70 = pneg %p69
    $region43: #{tpu_custom_call.1} parent=1 // pred_check_branch
      %72 = sbr.rel (%p70) target = $region45
    $region44: #{tpu_custom_call.1} parent=1 // pred_region
      %v73 = vld [vmem:[%s1] sm:$0xff]
      %74 = vst [vmem:[#allocation3] sm:$0xff] %v73
      %v75 = vld [vmem:[%s2] sm:$0xff]
      %76 = vst [vmem:[#allocation4] sm:$0xff] %v75
    $region45: #{tpu_custom_call.1} parent=1 // pred_fallthru
      _
    %v77 = vld [vmem:[#allocation5] sm:$0xf]
    %v78 = vld [vmem:[#allocation5 + $0x4] sm:$0xf]
    %v79 = vld [vmem:[#allocation5 + $0x8] sm:$0xf]
    %v80 = vld [vmem:[#allocation5 + $0xc] sm:$0xf]
    %v81 = vld [vmem:[#allocation5 + $0x10] sm:$0xf]
    %v82 = vld [vmem:[#allocation5 + $0x14] sm:$0xf]
    %v83 = vld [vmem:[#allocation5 + $0x18] sm:$0xf]
    %v84 = vld [vmem:[#allocation5 + $0x1c] sm:$0xf]
    %v85 = vld [vmem:[#allocation8] sm:$0xff]
    %v86 = vld [vmem:[#allocation8 + $0x8] sm:$0xff]
    %v87 = vld [vmem:[#allocation8 + $0x10] sm:$0xff]
    %v88 = vld [vmem:[#allocation8 + $0x18] sm:$0xff]
    %v89 = vld [vmem:[#allocation8 + $0x20] sm:$0xff]
    %v90 = vld [vmem:[#allocation8 + $0x28] sm:$0xff]
    %v91 = vld [vmem:[#allocation8 + $0x30] sm:$0xff]
    %v92 = vld [vmem:[#allocation8 + $0x38] sm:$0xff]
    %v93 = vld [vmem:[#allocation8 + $0x40] sm:$0xff]
    %v94 = vld [vmem:[#allocation8 + $0x48] sm:$0xff]
    %v95 = vld [vmem:[#allocation8 + $0x50] sm:$0xff]
    %v96 = vld [vmem:[#allocation8 + $0x58] sm:$0xff]
    %v97 = vld [vmem:[#allocation8 + $0x60] sm:$0xff]
    %v98 = vld [vmem:[#allocation8 + $0x68] sm:$0xff]
    %v99 = vld [vmem:[#allocation8 + $0x70] sm:$0xff]
    %v100 = vld [vmem:[#allocation8 + $0x78] sm:$0xff]
    %v101 = vld [vmem:[#allocation8 + $0x80] sm:$0xff]
    %v102 = vld [vmem:[#allocation8 + $0x88] sm:$0xff]
    %v103 = vld [vmem:[#allocation8 + $0x90] sm:$0xff]
    %v104 = vld [vmem:[#allocation8 + $0x98] sm:$0xff]
    %v105 = vld [vmem:[#allocation8 + $0xa0] sm:$0xff]
    %v106 = vld [vmem:[#allocation8 + $0xa8] sm:$0xff]
    %v107 = vld [vmem:[#allocation8 + $0xb0] sm:$0xff]
    %v108 = vld [vmem:[#allocation8 + $0xb8] sm:$0xff]
    %v109 = vld [vmem:[#allocation8 + $0xc0] sm:$0xff]
    %v110 = vld [vmem:[#allocation8 + $0xc8] sm:$0xff]
    %v111 = vld [vmem:[#allocation8 + $0xd0] sm:$0xff]
    %v112 = vld [vmem:[#allocation8 + $0xd8] sm:$0xff]
    %v113 = vld [vmem:[#allocation8 + $0xe0] sm:$0xff]
    %v114 = vld [vmem:[#allocation8 + $0xe8] sm:$0xff]
    %v115 = vld [vmem:[#allocation8 + $0xf0] sm:$0xff]
    %v116 = vld [vmem:[#allocation8 + $0xf8] sm:$0xff]
    %v125 = vunpack.c.l.b16 %v77
    %v126 = vunpack.c.l.b16 %v78
    %v127 = vunpack.c.l.b16 %v79
    %v128 = vunpack.c.l.b16 %v80
    %v129 = vunpack.c.l.b16 %v81
    %v130 = vunpack.c.l.b16 %v82
    %v131 = vunpack.c.l.b16 %v83
    %v132 = vunpack.c.l.b16 %v84
    %v133 = vpack.c.b16 %v126, %v125
    %v134 = vpack.c.b16 %v128, %v127
    %v135 = vpack.c.b16 %v130, %v129
    %v136 = vpack.c.b16 %v132, %v131
    %v173 = vunpack.c.l.b16 %v85
    %v174 = vunpack.c.h.b16 %v85
    %v175 = vunpack.c.l.b16 %v86
    %v176 = vunpack.c.h.b16 %v86
    %v177 = vunpack.c.l.b16 %v87
    %v178 = vunpack.c.h.b16 %v87
    %v179 = vunpack.c.l.b16 %v88
    %v180 = vunpack.c.h.b16 %v88
    %v181 = vunpack.c.l.b16 %v89
    %v182 = vunpack.c.h.b16 %v89
    %v183 = vunpack.c.l.b16 %v90
    %v184 = vunpack.c.h.b16 %v90
    %v185 = vunpack.c.l.b16 %v91
    %v186 = vunpack.c.h.b16 %v91
    %v187 = vunpack.c.l.b16 %v92
    %v188 = vunpack.c.h.b16 %v92
    %v189 = vunpack.c.l.b16 %v93
    %v190 = vunpack.c.h.b16 %v93
    %v191 = vunpack.c.l.b16 %v94
    %v192 = vunpack.c.h.b16 %v94
    %v193 = vunpack.c.l.b16 %v95
    %v194 = vunpack.c.h.b16 %v95
    %v195 = vunpack.c.l.b16 %v96
    %v196 = vunpack.c.h.b16 %v96
    %v197 = vunpack.c.l.b16 %v97
    %v198 = vunpack.c.h.b16 %v97
    %v199 = vunpack.c.l.b16 %v98
    %v200 = vunpack.c.h.b16 %v98
    %v201 = vunpack.c.l.b16 %v99
    %v202 = vunpack.c.h.b16 %v99
    %v203 = vunpack.c.l.b16 %v100
    %v204 = vunpack.c.h.b16 %v100
    %v205 = vunpack.c.l.b16 %v101
    %v206 = vunpack.c.h.b16 %v101
    %v207 = vunpack.c.l.b16 %v102
    %v208 = vunpack.c.h.b16 %v102
    %v209 = vunpack.c.l.b16 %v103
    %v210 = vunpack.c.h.b16 %v103
    %v211 = vunpack.c.l.b16 %v104
    %v212 = vunpack.c.h.b16 %v104
    %v213 = vunpack.c.l.b16 %v105
    %v214 = vunpack.c.h.b16 %v105
    %v215 = vunpack.c.l.b16 %v106
    %v216 = vunpack.c.h.b16 %v106
    %v217 = vunpack.c.l.b16 %v107
    %v218 = vunpack.c.h.b16 %v107
    %v219 = vunpack.c.l.b16 %v108
    %v220 = vunpack.c.h.b16 %v108
    %v221 = vunpack.c.l.b16 %v109
    %v222 = vunpack.c.h.b16 %v109
    %v223 = vunpack.c.l.b16 %v110
    %v224 = vunpack.c.h.b16 %v110
    %v225 = vunpack.c.l.b16 %v111
    %v226 = vunpack.c.h.b16 %v111
    %v227 = vunpack.c.l.b16 %v112
    %v228 = vunpack.c.h.b16 %v112
    %v229 = vunpack.c.l.b16 %v113
    %v230 = vunpack.c.h.b16 %v113
    %v231 = vunpack.c.l.b16 %v114
    %v232 = vunpack.c.h.b16 %v114
    %v233 = vunpack.c.l.b16 %v115
    %v234 = vunpack.c.h.b16 %v115
    %v235 = vunpack.c.l.b16 %v116
    %v236 = vunpack.c.h.b16 %v116
    %v237 = vpack.c.b16 %v177, %v173
    %v238 = vpack.c.b16 %v178, %v174
    %v239 = vpack.c.b16 %v179, %v175
    %v240 = vpack.c.b16 %v180, %v176
    %v241 = vpack.c.b16 %v185, %v181
    %v242 = vpack.c.b16 %v186, %v182
    %v243 = vpack.c.b16 %v187, %v183
    %v244 = vpack.c.b16 %v188, %v184
    %v245 = vpack.c.b16 %v193, %v189
    %v246 = vpack.c.b16 %v194, %v190
    %v247 = vpack.c.b16 %v195, %v191
    %v248 = vpack.c.b16 %v196, %v192
    %v249 = vpack.c.b16 %v201, %v197
    %v250 = vpack.c.b16 %v202, %v198
    %v251 = vpack.c.b16 %v203, %v199
    %v252 = vpack.c.b16 %v204, %v200
    %v253 = vpack.c.b16 %v209, %v205
    %v254 = vpack.c.b16 %v210, %v206
    %v255 = vpack.c.b16 %v211, %v207
    %v256 = vpack.c.b16 %v212, %v208
    %v257 = vpack.c.b16 %v217, %v213
    %v258 = vpack.c.b16 %v218, %v214
    %v259 = vpack.c.b16 %v219, %v215
    %v260 = vpack.c.b16 %v220, %v216
    %v261 = vpack.c.b16 %v225, %v221
    %v262 = vpack.c.b16 %v226, %v222
    %v263 = vpack.c.b16 %v227, %v223
    %v264 = vpack.c.b16 %v228, %v224
    %v265 = vpack.c.b16 %v233, %v229
    %v266 = vpack.c.b16 %v234, %v230
    %v267 = vpack.c.b16 %v235, %v231
    %v268 = vpack.c.b16 %v236, %v232
    %301 = vmatprep.subr.bf16.mxu0 %v238
    %302 = vmatpush1.bf16.msra.mxu0 %v237
    %303 = vmatprep.subr.bf16.mxu0 %v242
    %304 = vmatpush1.bf16.msra.mxu0 %v241
    %305 = vmatprep.subr.bf16.mxu0 %v246
    %306 = vmatpush1.bf16.msra.mxu0 %v245
    %307 = vmatprep.subr.bf16.mxu0 %v250
    %308 = vmatpush1.bf16.msra.mxu0 %v249
    %309 = vmatprep.subr.bf16.mxu0 %v254
    %310 = vmatpush1.bf16.msra.mxu0 %v253
    %311 = vmatprep.subr.bf16.mxu0 %v258
    %312 = vmatpush1.bf16.msra.mxu0 %v257
    %313 = vmatprep.subr.bf16.mxu0 %v262
    %314 = vmatpush1.bf16.msra.mxu0 %v261
    %315 = vmatprep.subr.bf16.mxu0 %v266
    %316 = vmatpush1.bf16.msra.mxu0 %v265
    %317 = vmatprep.subr.bf16.mxu0 0
    %318 = vmatpush1.bf16.msra.mxu0 0
    %319 = vmatprep.subr.bf16.mxu0 0
    %320 = vmatpush1.bf16.msra.mxu0 0
    %321 = vmatprep.subr.bf16.mxu0 0
    %322 = vmatpush1.bf16.msra.mxu0 0
    %323 = vmatprep.subr.bf16.mxu0 0
    %324 = vmatpush1.bf16.msra.mxu0 0
    %325 = vmatprep.subr.bf16.mxu0 0
    %326 = vmatpush1.bf16.msra.mxu0 0
    %327 = vmatprep.subr.bf16.mxu0 0
    %328 = vmatpush1.bf16.msra.mxu0 0
    %329 = vmatprep.subr.bf16.mxu0 0
    %330 = vmatpush1.bf16.msra.mxu0 0
    %331 = vmatprep.subr.bf16.mxu0 0
    %332 = vmatpush1.bf16.msra.mxu0 0
    %333 = vmatprep.mubr.bf16.mxu0 0
    %334 = vmatmul.mubr.bf16.gmra.mrb[0].mxu0 %v133
    %v335 = vpop.f32.mrb[0].mxu0
    %v336 = vadd.f32 0.0, %v335
    %v337 = vpop.f32.mrb[0].mxu0
    %v338 = vadd.f32 0.0, %v337
    %v339 = vpop.f32.mrb[0].mxu0
    %v340 = vadd.f32 0.0, %v339
    %v341 = vpop.f32.mrb[0].mxu0
    %v342 = vadd.f32 0.0, %v341
    %343 = vmatprep.mubr.bf16.mxu0 0
    %344 = vmatmul.mubr.bf16.gmra.mrb[0].mxu0 %v134
    %v345 = vpop.f32.mrb[0].mxu0
    %v346 = vadd.f32 0.0, %v345
    %v347 = vpop.f32.mrb[0].mxu0
    %v348 = vadd.f32 0.0, %v347
    %v349 = vpop.f32.mrb[0].mxu0
    %v350 = vadd.f32 0.0, %v349
    %v351 = vpop.f32.mrb[0].mxu0
    %v352 = vadd.f32 0.0, %v351
    %353 = vmatprep.mubr.bf16.mxu0 0
    %354 = vmatmul.mubr.bf16.gmra.mrb[0].mxu0 %v135
    %v355 = vpop.f32.mrb[0].mxu0
    %v356 = vadd.f32 0.0, %v355
    %v357 = vpop.f32.mrb[0].mxu0
    %v358 = vadd.f32 0.0, %v357
    %v359 = vpop.f32.mrb[0].mxu0
    %v360 = vadd.f32 0.0, %v359
    %v361 = vpop.f32.mrb[0].mxu0
    %v362 = vadd.f32 0.0, %v361
    %363 = vmatprep.mubr.bf16.mxu0 0
    %364 = vmatmul.mubr.bf16.gmra.mrb[0].mxu0 %v136
    %v365 = vpop.f32.mrb[0].mxu0
    %v366 = vadd.f32 0.0, %v365
    %v367 = vpop.f32.mrb[0].mxu0
    %v368 = vadd.f32 0.0, %v367
    %v369 = vpop.f32.mrb[0].mxu0
    %v370 = vadd.f32 0.0, %v369
    %v371 = vpop.f32.mrb[0].mxu0
    %v372 = vadd.f32 0.0, %v371
    %373 = vdwg.mxu0
    %374 = vmatprep.subr.bf16.mxu0 %v240
    %375 = vmatpush1.bf16.msra.mxu0 %v239
    %376 = vmatprep.subr.bf16.mxu0 %v244
    %377 = vmatpush1.bf16.msra.mxu0 %v243
    %378 = vmatprep.subr.bf16.mxu0 %v248
    %379 = vmatpush1.bf16.msra.mxu0 %v247
    %380 = vmatprep.subr.bf16.mxu0 %v252
    %381 = vmatpush1.bf16.msra.mxu0 %v251
    %382 = vmatprep.subr.bf16.mxu0 %v256
    %383 = vmatpush1.bf16.msra.mxu0 %v255
    %384 = vmatprep.subr.bf16.mxu0 %v260
    %385 = vmatpush1.bf16.msra.mxu0 %v259
    %386 = vmatprep.subr.bf16.mxu0 %v264
    %387 = vmatpush1.bf16.msra.mxu0 %v263
    %388 = vmatprep.subr.bf16.mxu0 %v268
    %389 = vmatpush1.bf16.msra.mxu0 %v267
    %390 = vmatprep.subr.bf16.mxu0 0
    %391 = vmatpush1.bf16.msra.mxu0 0
    %392 = vmatprep.subr.bf16.mxu0 0
    %393 = vmatpush1.bf16.msra.mxu0 0
    %394 = vmatprep.subr.bf16.mxu0 0
    %395 = vmatpush1.bf16.msra.mxu0 0
    %396 = vmatprep.subr.bf16.mxu0 0
    %397 = vmatpush1.bf16.msra.mxu0 0
    %398 = vmatprep.subr.bf16.mxu0 0
    %399 = vmatpush1.bf16.msra.mxu0 0
    %400 = vmatprep.subr.bf16.mxu0 0
    %401 = vmatpush1.bf16.msra.mxu0 0
    %402 = vmatprep.subr.bf16.mxu0 0
    %403 = vmatpush1.bf16.msra.mxu0 0
    %404 = vmatprep.subr.bf16.mxu0 0
    %405 = vmatpush1.bf16.msra.mxu0 0
    %406 = vmatprep.mubr.bf16.mxu0 0
    %407 = vmatmul.mubr.bf16.gmra.mrb[0].mxu0 %v133
    %v408 = vpop.f32.mrb[0].mxu0
    %v409 = vadd.f32 0.0, %v408
    %v410 = vpop.f32.mrb[0].mxu0
    %v411 = vadd.f32 0.0, %v410
    %v412 = vpop.f32.mrb[0].mxu0
    %v413 = vadd.f32 0.0, %v412
    %v414 = vpop.f32.mrb[0].mxu0
    %v415 = vadd.f32 0.0, %v414
    %416 = vmatprep.mubr.bf16.mxu0 0
    %417 = vmatmul.mubr.bf16.gmra.mrb[0].mxu0 %v134
    %v418 = vpop.f32.mrb[0].mxu0
    %v419 = vadd.f32 0.0, %v418
    %v420 = vpop.f32.mrb[0].mxu0
    %v421 = vadd.f32 0.0, %v420
    %v422 = vpop.f32.mrb[0].mxu0
    %v423 = vadd.f32 0.0, %v422
    %v424 = vpop.f32.mrb[0].mxu0
    %v425 = vadd.f32 0.0, %v424
    %426 = vmatprep.mubr.bf16.mxu0 0
    %427 = vmatmul.mubr.bf16.gmra.mrb[0].mxu0 %v135
    %v428 = vpop.f32.mrb[0].mxu0
    %v429 = vadd.f32 0.0, %v428
    %v430 = vpop.f32.mrb[0].mxu0
    %v431 = vadd.f32 0.0, %v430
    %v432 = vpop.f32.mrb[0].mxu0
    %v433 = vadd.f32 0.0, %v432
    %v434 = vpop.f32.mrb[0].mxu0
    %v435 = vadd.f32 0.0, %v434
    %436 = vmatprep.mubr.bf16.mxu0 0
    %437 = vmatmul.mubr.bf16.gmra.mrb[0].mxu0 %v136
    %v438 = vpop.f32.mrb[0].mxu0
    %v439 = vadd.f32 0.0, %v438
    %v440 = vpop.f32.mrb[0].mxu0
    %v441 = vadd.f32 0.0, %v440
    %v442 = vpop.f32.mrb[0].mxu0
    %v443 = vadd.f32 0.0, %v442
    %v444 = vpop.f32.mrb[0].mxu0
    %v445 = vadd.f32 0.0, %v444
    %446 = vdwg.mxu0
    %v447 = vld [vmem:[%s5] sm:$0xf]
    %v449 = vlaneseq
    %v450 = vshrl.u32 %v449, 7
    %v451 = vsub.s32 0, %v450
    %v452 = vrot.slane %v447, %v451
    %v453 = vlaneseq
    %v454 = vshrl.u32 %v453, 7
    %v455 = vsub.s32 1, %v454
    %v456 = vrot.slane %v447, %v455
    %v457 = vlaneseq
    %v458 = vshrl.u32 %v457, 7
    %v459 = vsub.s32 2, %v458
    %v460 = vrot.slane %v447, %v459
    %v461 = vlaneseq
    %v462 = vshrl.u32 %v461, 7
    %v463 = vsub.s32 3, %v462
    %v464 = vrot.slane %v447, %v463
    %v469 = vadd.f32 %v336, %v452
    %v470 = vadd.f32 %v338, %v456
    %v471 = vadd.f32 %v409, %v460
    %v472 = vadd.f32 %v411, %v464
    %v473 = vadd.f32 %v340, %v452
    %v474 = vadd.f32 %v342, %v456
    %v475 = vadd.f32 %v413, %v460
    %v476 = vadd.f32 %v415, %v464
    %v477 = vadd.f32 %v346, %v452
    %v478 = vadd.f32 %v348, %v456
    %v479 = vadd.f32 %v419, %v460
    %v480 = vadd.f32 %v421, %v464
    %v481 = vadd.f32 %v350, %v452
    %v482 = vadd.f32 %v352, %v456
    %v483 = vadd.f32 %v423, %v460
    %v484 = vadd.f32 %v425, %v464
    %v485 = vadd.f32 %v356, %v452
    %v486 = vadd.f32 %v358, %v456
    %v487 = vadd.f32 %v429, %v460
    %v488 = vadd.f32 %v431, %v464
    %v489 = vadd.f32 %v360, %v452
    %v490 = vadd.f32 %v362, %v456
    %v491 = vadd.f32 %v433, %v460
    %v492 = vadd.f32 %v435, %v464
    %v493 = vadd.f32 %v366, %v452
    %v494 = vadd.f32 %v368, %v456
    %v495 = vadd.f32 %v439, %v460
    %v496 = vadd.f32 %v441, %v464
    %v497 = vadd.f32 %v370, %v452
    %v498 = vadd.f32 %v372, %v456
    %v499 = vadd.f32 %v443, %v460
    %v500 = vadd.f32 %v445, %v464
    %501 = vst [vmem:[#allocation2] sm:$0xff] %v469
    %502 = vst [vmem:[#allocation2 + $0x8] sm:$0xff] %v470
    %503 = vst [vmem:[#allocation2 + $0x10] sm:$0xff] %v471
    %504 = vst [vmem:[#allocation2 + $0x18] sm:$0xff] %v472
    %505 = vst [vmem:[#allocation2 + $0x20] sm:$0xff] %v473
    %506 = vst [vmem:[#allocation2 + $0x28] sm:$0xff] %v474
    %507 = vst [vmem:[#allocation2 + $0x30] sm:$0xff] %v475
    %508 = vst [vmem:[#allocation2 + $0x38] sm:$0xff] %v476
    %509 = vst [vmem:[#allocation2 + $0x40] sm:$0xff] %v477
    %510 = vst [vmem:[#allocation2 + $0x48] sm:$0xff] %v478
    %511 = vst [vmem:[#allocation2 + $0x50] sm:$0xff] %v479
    %512 = vst [vmem:[#allocation2 + $0x58] sm:$0xff] %v480
    %513 = vst [vmem:[#allocation2 + $0x60] sm:$0xff] %v481
    %514 = vst [vmem:[#allocation2 + $0x68] sm:$0xff] %v482
    %515 = vst [vmem:[#allocation2 + $0x70] sm:$0xff] %v483
    %516 = vst [vmem:[#allocation2 + $0x78] sm:$0xff] %v484
    %517 = vst [vmem:[#allocation2 + $0x80] sm:$0xff] %v485
    %518 = vst [vmem:[#allocation2 + $0x88] sm:$0xff] %v486
    %519 = vst [vmem:[#allocation2 + $0x90] sm:$0xff] %v487
    %520 = vst [vmem:[#allocation2 + $0x98] sm:$0xff] %v488
    %521 = vst [vmem:[#allocation2 + $0xa0] sm:$0xff] %v489
    %522 = vst [vmem:[#allocation2 + $0xa8] sm:$0xff] %v490
    %523 = vst [vmem:[#allocation2 + $0xb0] sm:$0xff] %v491
    %524 = vst [vmem:[#allocation2 + $0xb8] sm:$0xff] %v492
    %525 = vst [vmem:[#allocation2 + $0xc0] sm:$0xff] %v493
    %526 = vst [vmem:[#allocation2 + $0xc8] sm:$0xff] %v494
    %527 = vst [vmem:[#allocation2 + $0xd0] sm:$0xff] %v495
    %528 = vst [vmem:[#allocation2 + $0xd8] sm:$0xff] %v496
    %529 = vst [vmem:[#allocation2 + $0xe0] sm:$0xff] %v497
    %530 = vst [vmem:[#allocation2 + $0xe8] sm:$0xff] %v498
    %531 = vst [vmem:[#allocation2 + $0xf0] sm:$0xff] %v499
    %532 = vst [vmem:[#allocation2 + $0xf8] sm:$0xff] %v500
    %v533 = vld [vmem:[%s6] sm:$0xff]
    %s534 = smul.u32 0, 8
    %v535 = vld [vmem:[#allocation3] sm:$0xff]
    %v536 = vld [vmem:[#allocation4] sm:$0xff]
    %v537 = vld [vmem:[#allocation2] sm:$0xff]
    %v538 = vld [vmem:[#allocation2 + $0x8] sm:$0xff]
    %v539 = vld [vmem:[#allocation2 + $0x10] sm:$0xff]
    %v540 = vld [vmem:[#allocation2 + $0x18] sm:$0xff]
    %v541 = vpack.c.bf16 %v535, %v535
    %v542 = vld [vmem:[#allocation10] sm:$0xff]
    %v543 = vld [vmem:[#allocation10 + $0x8] sm:$0xff]
    %v544 = vld [vmem:[#allocation10 + $0x10] sm:$0xff]
    %v545 = vld [vmem:[#allocation10 + $0x18] sm:$0xff]
    %v546 = vld [vmem:[#allocation10 + $0x20] sm:$0xff]
    %v547 = vld [vmem:[#allocation10 + $0x28] sm:$0xff]
    %v548 = vld [vmem:[#allocation10 + $0x30] sm:$0xff]
    %v549 = vld [vmem:[#allocation10 + $0x38] sm:$0xff]
    %v550 = vld [vmem:[#allocation10 + $0x40] sm:$0xff]
    %v551 = vld [vmem:[#allocation10 + $0x48] sm:$0xff]
    %v552 = vld [vmem:[#allocation10 + $0x50] sm:$0xff]
    %v553 = vld [vmem:[#allocation10 + $0x58] sm:$0xff]
    %v554 = vld [vmem:[#allocation10 + $0x60] sm:$0xff]
    %v555 = vld [vmem:[#allocation10 + $0x68] sm:$0xff]
    %v556 = vld [vmem:[#allocation10 + $0x70] sm:$0xff]
    %v557 = vld [vmem:[#allocation10 + $0x78] sm:$0xff]
    %v558 = vld [vmem:[#allocation10 + $0x80] sm:$0xff]
    %v559 = vld [vmem:[#allocation10 + $0x88] sm:$0xff]
    %v560 = vld [vmem:[#allocation10 + $0x90] sm:$0xff]
    %v561 = vld [vmem:[#allocation10 + $0x98] sm:$0xff]
    %v562 = vld [vmem:[#allocation10 + $0xa0] sm:$0xff]
    %v563 = vld [vmem:[#allocation10 + $0xa8] sm:$0xff]
    %v564 = vld [vmem:[#allocation10 + $0xb0] sm:$0xff]
    %v565 = vld [vmem:[#allocation10 + $0xb8] sm:$0xff]
    %v566 = vld [vmem:[#allocation10 + $0xc0] sm:$0xff]
    %v567 = vld [vmem:[#allocation10 + $0xc8] sm:$0xff]
    %v568 = vld [vmem:[#allocation10 + $0xd0] sm:$0xff]
    %v569 = vld [vmem:[#allocation10 + $0xd8] sm:$0xff]
    %v570 = vld [vmem:[#allocation10 + $0xe0] sm:$0xff]
    %v571 = vld [vmem:[#allocation10 + $0xe8] sm:$0xff]
    %v572 = vld [vmem:[#allocation10 + $0xf0] sm:$0xff]
    %v573 = vld [vmem:[#allocation10 + $0xf8] sm:$0xff]
    %v606 = vunpack.c.l.b16 %v542
    %v607 = vunpack.c.h.b16 %v542
    %v608 = vunpack.c.l.b16 %v543
    %v609 = vunpack.c.h.b16 %v543
    %v610 = vunpack.c.l.b16 %v544
    %v611 = vunpack.c.h.b16 %v544
    %v612 = vunpack.c.l.b16 %v545
    %v613 = vunpack.c.h.b16 %v545
    %v614 = vunpack.c.l.b16 %v546
    %v615 = vunpack.c.h.b16 %v546
    %v616 = vunpack.c.l.b16 %v547
    %v617 = vunpack.c.h.b16 %v547
    %v618 = vunpack.c.l.b16 %v548
    %v619 = vunpack.c.h.b16 %v548
    %v620 = vunpack.c.l.b16 %v549
    %v621 = vunpack.c.h.b16 %v549
    %v622 = vunpack.c.l.b16 %v550
    %v623 = vunpack.c.h.b16 %v550
    %v624 = vunpack.c.l.b16 %v551
    %v625 = vunpack.c.h.b16 %v551
    %v626 = vunpack.c.l.b16 %v552
    %v627 = vunpack.c.h.b16 %v552
    %v628 = vunpack.c.l.b16 %v553
    %v629 = vunpack.c.h.b16 %v553
    %v630 = vunpack.c.l.b16 %v554
    %v631 = vunpack.c.h.b16 %v554
    %v632 = vunpack.c.l.b16 %v555
    %v633 = vunpack.c.h.b16 %v555
    %v634 = vunpack.c.l.b16 %v556
    %v635 = vunpack.c.h.b16 %v556
    %v636 = vunpack.c.l.b16 %v557
    %v637 = vunpack.c.h.b16 %v557
    %v638 = vunpack.c.l.b16 %v558
    %v639 = vunpack.c.h.b16 %v558
    %v640 = vunpack.c.l.b16 %v559
    %v641 = vunpack.c.h.b16 %v559
    %v642 = vunpack.c.l.b16 %v560
    %v643 = vunpack.c.h.b16 %v560
    %v644 = vunpack.c.l.b16 %v561
    %v645 = vunpack.c.h.b16 %v561
    %v646 = vunpack.c.l.b16 %v562
    %v647 = vunpack.c.h.b16 %v562
    %v648 = vunpack.c.l.b16 %v563
    %v649 = vunpack.c.h.b16 %v563
    %v650 = vunpack.c.l.b16 %v564
    %v651 = vunpack.c.h.b16 %v564
    %v652 = vunpack.c.l.b16 %v565
    %v653 = vunpack.c.h.b16 %v565
    %v654 = vunpack.c.l.b16 %v566
    %v655 = vunpack.c.h.b16 %v566
    %v656 = vunpack.c.l.b16 %v567
    %v657 = vunpack.c.h.b16 %v567
    %v658 = vunpack.c.l.b16 %v568
    %v659 = vunpack.c.h.b16 %v568
    %v660 = vunpack.c.l.b16 %v569
    %v661 = vunpack.c.h.b16 %v569
    %v662 = vunpack.c.l.b16 %v570
    %v663 = vunpack.c.h.b16 %v570
    %v664 = vunpack.c.l.b16 %v571
    %v665 = vunpack.c.h.b16 %v571
    %v666 = vunpack.c.l.b16 %v572
    %v667 = vunpack.c.h.b16 %v572
    %v668 = vunpack.c.l.b16 %v573
    %v669 = vunpack.c.h.b16 %v573
    %v670 = vpack.c.b16 %v610, %v606
    %v671 = vpack.c.b16 %v611, %v607
    %v672 = vpack.c.b16 %v612, %v608
    %v673 = vpack.c.b16 %v613, %v609
    %v674 = vpack.c.b16 %v618, %v614
    %v675 = vpack.c.b16 %v619, %v615
    %v676 = vpack.c.b16 %v620, %v616
    %v677 = vpack.c.b16 %v621, %v617
    %v678 = vpack.c.b16 %v626, %v622
    %v679 = vpack.c.b16 %v627, %v623
    %v680 = vpack.c.b16 %v628, %v624
    %v681 = vpack.c.b16 %v629, %v625
    %v682 = vpack.c.b16 %v634, %v630
    %v683 = vpack.c.b16 %v635, %v631
    %v684 = vpack.c.b16 %v636, %v632
    %v685 = vpack.c.b16 %v637, %v633
    %v686 = vpack.c.b16 %v642, %v638
    %v687 = vpack.c.b16 %v643, %v639
    %v688 = vpack.c.b16 %v644, %v640
    %v689 = vpack.c.b16 %v645, %v641
    %v690 = vpack.c.b16 %v650, %v646
    %v691 = vpack.c.b16 %v651, %v647
    %v692 = vpack.c.b16 %v652, %v648
    %v693 = vpack.c.b16 %v653, %v649
    %v694 = vpack.c.b16 %v658, %v654
    %v695 = vpack.c.b16 %v659, %v655
    %v696 = vpack.c.b16 %v660, %v656
    %v697 = vpack.c.b16 %v661, %v657
    %v698 = vpack.c.b16 %v666, %v662
    %v699 = vpack.c.b16 %v667, %v663
    %v700 = vpack.c.b16 %v668, %v664
    %v701 = vpack.c.b16 %v669, %v665
    %734 = vmatprep.subr.bf16.mxu0 %v671
    %735 = vmatpush1.bf16.msra.mxu0 %v670
    %736 = vmatprep.subr.bf16.mxu0 %v675
    %737 = vmatpush1.bf16.msra.mxu0 %v674
    %738 = vmatprep.subr.bf16.mxu0 %v679
    %739 = vmatpush1.bf16.msra.mxu0 %v678
    %740 = vmatprep.subr.bf16.mxu0 %v683
    %741 = vmatpush1.bf16.msra.mxu0 %v682
    %742 = vmatprep.subr.bf16.mxu0 %v687
    %743 = vmatpush1.bf16.msra.mxu0 %v686
    %744 = vmatprep.subr.bf16.mxu0 %v691
    %745 = vmatpush1.bf16.msra.mxu0 %v690
    %746 = vmatprep.subr.bf16.mxu0 %v695
    %747 = vmatpush1.bf16.msra.mxu0 %v694
    %748 = vmatprep.subr.bf16.mxu0 %v699
    %749 = vmatpush1.bf16.msra.mxu0 %v698
    %750 = vmatprep.subr.bf16.mxu0 0
    %751 = vmatpush1.bf16.msra.mxu0 0
    %752 = vmatprep.subr.bf16.mxu0 0
    %753 = vmatpush1.bf16.msra.mxu0 0
    %754 = vmatprep.subr.bf16.mxu0 0
    %755 = vmatpush1.bf16.msra.mxu0 0
    %756 = vmatprep.subr.bf16.mxu0 0
    %757 = vmatpush1.bf16.msra.mxu0 0
    %758 = vmatprep.subr.bf16.mxu0 0
    %759 = vmatpush1.bf16.msra.mxu0 0
    %760 = vmatprep.subr.bf16.mxu0 0
    %761 = vmatpush1.bf16.msra.mxu0 0
    %762 = vmatprep.subr.bf16.mxu0 0
    %763 = vmatpush1.bf16.msra.mxu0 0
    %764 = vmatprep.subr.bf16.mxu0 0
    %765 = vmatpush1.bf16.msra.mxu0 0
    %766 = vmatprep.mubr.bf16.mxu0 0
    %767 = vmatmul.mubr.bf16.gmra.mrb[0].mxu0 %v541
    %v768 = vpop.f32.mrb[0].mxu0
    %v769 = vadd.f32 0.0, %v768
    %v770 = vpop.f32.mrb[0].mxu0
    %v771 = vadd.f32 0.0, %v770
    %v772 = vpop.f32.mrb[0].mxu0
    %v773 = vpop.f32.mrb[0].mxu0
    %774 = vdwg.mxu0
    %775 = vmatprep.subr.bf16.mxu0 %v673
    %776 = vmatpush1.bf16.msra.mxu0 %v672
    %777 = vmatprep.subr.bf16.mxu0 %v677
    %778 = vmatpush1.bf16.msra.mxu0 %v676
    %779 = vmatprep.subr.bf16.mxu0 %v681
    %780 = vmatpush1.bf16.msra.mxu0 %v680
    %781 = vmatprep.subr.bf16.mxu0 %v685
    %782 = vmatpush1.bf16.msra.mxu0 %v684
    %783 = vmatprep.subr.bf16.mxu0 %v689
    %784 = vmatpush1.bf16.msra.mxu0 %v688
    %785 = vmatprep.subr.bf16.mxu0 %v693
    %786 = vmatpush1.bf16.msra.mxu0 %v692
    %787 = vmatprep.subr.bf16.mxu0 %v697
    %788 = vmatpush1.bf16.msra.mxu0 %v696
    %789 = vmatprep.subr.bf16.mxu0 %v701
    %790 = vmatpush1.bf16.msra.mxu0 %v700
    %791 = vmatprep.subr.bf16.mxu0 0
    %792 = vmatpush1.bf16.msra.mxu0 0
    %793 = vmatprep.subr.bf16.mxu0 0
    %794 = vmatpush1.bf16.msra.mxu0 0
    %795 = vmatprep.subr.bf16.mxu0 0
    %796 = vmatpush1.bf16.msra.mxu0 0
    %797 = vmatprep.subr.bf16.mxu0 0
    %798 = vmatpush1.bf16.msra.mxu0 0
    %799 = vmatprep.subr.bf16.mxu0 0
    %800 = vmatpush1.bf16.msra.mxu0 0
    %801 = vmatprep.subr.bf16.mxu0 0
    %802 = vmatpush1.bf16.msra.mxu0 0
    %803 = vmatprep.subr.bf16.mxu0 0
    %804 = vmatpush1.bf16.msra.mxu0 0
    %805 = vmatprep.subr.bf16.mxu0 0
    %806 = vmatpush1.bf16.msra.mxu0 0
    %807 = vmatprep.mubr.bf16.mxu0 0
    %808 = vmatmul.mubr.bf16.gmra.mrb[0].mxu0 %v541
    %v809 = vpop.f32.mrb[0].mxu0
    %v810 = vadd.f32 0.0, %v809
    %v811 = vpop.f32.mrb[0].mxu0
    %v812 = vadd.f32 0.0, %v811
    %v813 = vpop.f32.mrb[0].mxu0
    %v814 = vpop.f32.mrb[0].mxu0
    %815 = vdwg.mxu0
    %v816 = vadd.f32 %v537, %v769
    %v817 = vadd.f32 %v538, %v771
    %v818 = vadd.f32 %v539, %v810
    %v819 = vadd.f32 %v540, %v812
    %v820 = vmul.f32 %v816, 0.5
    %v821 = vtanh.pop %v820
    %v822 = vmul.f32 %v821, 0.5
    %v823 = vadd.f32 %v822, 0.5
    %v824 = vmul.f32 %v817, 0.5
    %v825 = vtanh.pop %v824
    %v826 = vmul.f32 %v825, 0.5
    %v827 = vadd.f32 %v826, 0.5
    %v828 = vtanh.pop %v818
    %v829 = vmul.f32 %v819, 0.5
    %v830 = vtanh.pop %v829
    %v831 = vmul.f32 %v830, 0.5
    %v832 = vadd.f32 %v831, 0.5
    %v833 = vmul.f32 %v827, %v536
    %v834 = vmul.f32 %v823, %v828
    %v835 = vadd.f32 %v833, %v834
    %v836 = vtanh.pop %v835
    %v837 = vmul.f32 %v832, %v836
    %v838 = vstv %s534
    %vm839 = vcmp.gt.s32.totalorder %v533, %v838
    %v840 = vsel %vm839, 1, 0
    %841 = vset.pattern.permute.xlu0 0
    %842 = vperm.xlu0 %841, %v840
    %v843 = vpop.permute.xlu0 %842
    %vm844 = vcmp.eq.s32.totalorder %v843, 1
    %v845 = vsel %vm844, %v837, 0.0
    %846 = vst [vmem:[#allocation11] sm:$0xff] %v845
    %s847 = scalar_lea.vmem [#allocation2], 32
    %v848 = vld [vmem:[%s847] sm:$0xff]
    %v849 = vld [vmem:[%s847 + $0x8] sm:$0xff]
    %v850 = vld [vmem:[%s847 + $0x10] sm:$0xff]
    %v851 = vld [vmem:[%s847 + $0x18] sm:$0xff]
    %v852 = vpack.c.bf16 %v837, %v837
    %v853 = vld [vmem:[#allocation10] sm:$0xff]
    %v854 = vld [vmem:[#allocation10 + $0x8] sm:$0xff]
    %v855 = vld [vmem:[#allocation10 + $0x10] sm:$0xff]
    %v856 = vld [vmem:[#allocation10 + $0x18] sm:$0xff]
    %v857 = vld [vmem:[#allocation10 + $0x20] sm:$0xff]
    %v858 = vld [vmem:[#allocation10 + $0x28] sm:$0xff]
    %v859 = vld [vmem:[#allocation10 + $0x30] sm:$0xff]
    %v860 = vld [vmem:[#allocation10 + $0x38] sm:$0xff]
    %v861 = vld [vmem:[#allocation10 + $0x40] sm:$0xff]
    %v862 = vld [vmem:[#allocation10 + $0x48] sm:$0xff]
    %v863 = vld [vmem:[#allocation10 + $0x50] sm:$0xff]
    %v864 = vld [vmem:[#allocation10 + $0x58] sm:$0xff]
    %v865 = vld [vmem:[#allocation10 + $0x60] sm:$0xff]
    %v866 = vld [vmem:[#allocation10 + $0x68] sm:$0xff]
    %v867 = vld [vmem:[#allocation10 + $0x70] sm:$0xff]
    %v868 = vld [vmem:[#allocation10 + $0x78] sm:$0xff]
    %v869 = vld [vmem:[#allocation10 + $0x80] sm:$0xff]
    %v870 = vld [vmem:[#allocation10 + $0x88] sm:$0xff]
    %v871 = vld [vmem:[#allocation10 + $0x90] sm:$0xff]
    %v872 = vld [vmem:[#allocation10 + $0x98] sm:$0xff]
    %v873 = vld [vmem:[#allocation10 + $0xa0] sm:$0xff]
    %v874 = vld [vmem:[#allocation10 + $0xa8] sm:$0xff]
    %v875 = vld [vmem:[#allocation10 + $0xb0] sm:$0xff]
    %v876 = vld [vmem:[#allocation10 + $0xb8] sm:$0xff]
    %v877 = vld [vmem:[#allocation10 + $0xc0] sm:$0xff]
    %v878 = vld [vmem:[#allocation10 + $0xc8] sm:$0xff]
    %v879 = vld [vmem:[#allocation10 + $0xd0] sm:$0xff]
    %v880 = vld [vmem:[#allocation10 + $0xd8] sm:$0xff]
    %v881 = vld [vmem:[#allocation10 + $0xe0] sm:$0xff]
    %v882 = vld [vmem:[#allocation10 + $0xe8] sm:$0xff]
    %v883 = vld [vmem:[#allocation10 + $0xf0] sm:$0xff]
    %v884 = vld [vmem:[#allocation10 + $0xf8] sm:$0xff]
    %v917 = vunpack.c.l.b16 %v853
    %v918 = vunpack.c.h.b16 %v853
    %v919 = vunpack.c.l.b16 %v854
    %v920 = vunpack.c.h.b16 %v854
    %v921 = vunpack.c.l.b16 %v855
    %v922 = vunpack.c.h.b16 %v855
    %v923 = vunpack.c.l.b16 %v856
    %v924 = vunpack.c.h.b16 %v856
    %v925 = vunpack.c.l.b16 %v857
    %v926 = vunpack.c.h.b16 %v857
    %v927 = vunpack.c.l.b16 %v858
    %v928 = vunpack.c.h.b16 %v858
    %v929 = vunpack.c.l.b16 %v859
    %v930 = vunpack.c.h.b16 %v859
    %v931 = vunpack.c.l.b16 %v860
    %v932 = vunpack.c.h.b16 %v860
    %v933 = vunpack.c.l.b16 %v861
    %v934 = vunpack.c.h.b16 %v861
    %v935 = vunpack.c.l.b16 %v862
    %v936 = vunpack.c.h.b16 %v862
    %v937 = vunpack.c.l.b16 %v863
    %v938 = vunpack.c.h.b16 %v863
    %v939 = vunpack.c.l.b16 %v864
    %v940 = vunpack.c.h.b16 %v864
    %v941 = vunpack.c.l.b16 %v865
    %v942 = vunpack.c.h.b16 %v865
    %v943 = vunpack.c.l.b16 %v866
    %v944 = vunpack.c.h.b16 %v866
    %v945 = vunpack.c.l.b16 %v867
    %v946 = vunpack.c.h.b16 %v867
    %v947 = vunpack.c.l.b16 %v868
    %v948 = vunpack.c.h.b16 %v868
    %v949 = vunpack.c.l.b16 %v869
    %v950 = vunpack.c.h.b16 %v869
    %v951 = vunpack.c.l.b16 %v870
    %v952 = vunpack.c.h.b16 %v870
    %v953 = vunpack.c.l.b16 %v871
    %v954 = vunpack.c.h.b16 %v871
    %v955 = vunpack.c.l.b16 %v872
    %v956 = vunpack.c.h.b16 %v872
    %v957 = vunpack.c.l.b16 %v873
    %v958 = vunpack.c.h.b16 %v873
    %v959 = vunpack.c.l.b16 %v874
    %v960 = vunpack.c.h.b16 %v874
    %v961 = vunpack.c.l.b16 %v875
    %v962 = vunpack.c.h.b16 %v875
    %v963 = vunpack.c.l.b16 %v876
    %v964 = vunpack.c.h.b16 %v876
    %v965 = vunpack.c.l.b16 %v877
    %v966 = vunpack.c.h.b16 %v877
    %v967 = vunpack.c.l.b16 %v878
    %v968 = vunpack.c.h.b16 %v878
    %v969 = vunpack.c.l.b16 %v879
    %v970 = vunpack.c.h.b16 %v879
    %v971 = vunpack.c.l.b16 %v880
    %v972 = vunpack.c.h.b16 %v880
    %v973 = vunpack.c.l.b16 %v881
    %v974 = vunpack.c.h.b16 %v881
    %v975 = vunpack.c.l.b16 %v882
    %v976 = vunpack.c.h.b16 %v882
    %v977 = vunpack.c.l.b16 %v883
    %v978 = vunpack.c.h.b16 %v883
    %v979 = vunpack.c.l.b16 %v884
    %v980 = vunpack.c.h.b16 %v884
    %v981 = vpack.c.b16 %v921, %v917
    %v982 = vpack.c.b16 %v922, %v918
    %v983 = vpack.c.b16 %v923, %v919
    %v984 = vpack.c.b16 %v924, %v920
    %v985 = vpack.c.b16 %v929, %v925
    %v986 = vpack.c.b16 %v930, %v926
    %v987 = vpack.c.b16 %v931, %v927
    %v988 = vpack.c.b16 %v932, %v928
    %v989 = vpack.c.b16 %v937, %v933
    %v990 = vpack.c.b16 %v938, %v934
    %v991 = vpack.c.b16 %v939, %v935
    %v992 = vpack.c.b16 %v940, %v936
    %v993 = vpack.c.b16 %v945, %v941
    %v994 = vpack.c.b16 %v946, %v942
    %v995 = vpack.c.b16 %v947, %v943
    %v996 = vpack.c.b16 %v948, %v944
    %v997 = vpack.c.b16 %v953, %v949
    %v998 = vpack.c.b16 %v954, %v950
    %v999 = vpack.c.b16 %v955, %v951
    %v1000 = vpack.c.b16 %v956, %v952
    %v1001 = vpack.c.b16 %v961, %v957
    %v1002 = vpack.c.b16 %v962, %v958
    %v1003 = vpack.c.b16 %v963, %v959
    %v1004 = vpack.c.b16 %v964, %v960
    %v1005 = vpack.c.b16 %v969, %v965
    %v1006 = vpack.c.b16 %v970, %v966
    %v1007 = vpack.c.b16 %v971, %v967
    %v1008 = vpack.c.b16 %v972, %v968
    %v1009 = vpack.c.b16 %v977, %v973
    %v1010 = vpack.c.b16 %v978, %v974
    %v1011 = vpack.c.b16 %v979, %v975
    %v1012 = vpack.c.b16 %v980, %v976
    %1045 = vmatprep.subr.bf16.mxu0 %v982
    %1046 = vmatpush1.bf16.msra.mxu0 %v981
    %1047 = vmatprep.subr.bf16.mxu0 %v986
    %1048 = vmatpush1.bf16.msra.mxu0 %v985
    %1049 = vmatprep.subr.bf16.mxu0 %v990
    %1050 = vmatpush1.bf16.msra.mxu0 %v989
    %1051 = vmatprep.subr.bf16.mxu0 %v994
    %1052 = vmatpush1.bf16.msra.mxu0 %v993
    %1053 = vmatprep.subr.bf16.mxu0 %v998
    %1054 = vmatpush1.bf16.msra.mxu0 %v997
    %1055 = vmatprep.subr.bf16.mxu0 %v1002
    %1056 = vmatpush1.bf16.msra.mxu0 %v1001
    %1057 = vmatprep.subr.bf16.mxu0 %v1006
    %1058 = vmatpush1.bf16.msra.mxu0 %v1005
    %1059 = vmatprep.subr.bf16.mxu0 %v1010
    %1060 = vmatpush1.bf16.msra.mxu0 %v1009
    %1061 = vmatprep.subr.bf16.mxu0 0
    %1062 = vmatpush1.bf16.msra.mxu0 0
    %1063 = vmatprep.subr.bf16.mxu0 0
    %1064 = vmatpush1.bf16.msra.mxu0 0
    %1065 = vmatprep.subr.bf16.mxu0 0
    %1066 = vmatpush1.bf16.msra.mxu0 0
    %1067 = vmatprep.subr.bf16.mxu0 0
    %1068 = vmatpush1.bf16.msra.mxu0 0
    %1069 = vmatprep.subr.bf16.mxu0 0
    %1070 = vmatpush1.bf16.msra.mxu0 0
    %1071 = vmatprep.subr.bf16.mxu0 0
    %1072 = vmatpush1.bf16.msra.mxu0 0
    %1073 = vmatprep.subr.bf16.mxu0 0
    %1074 = vmatpush1.bf16.msra.mxu0 0
    %1075 = vmatprep.subr.bf16.mxu0 0
    %1076 = vmatpush1.bf16.msra.mxu0 0
    %1077 = vmatprep.mubr.bf16.mxu0 0
    %1078 = vmatmul.mubr.bf16.gmra.mrb[0].mxu0 %v852
    %v1079 = vpop.f32.mrb[0].mxu0
    %v1080 = vadd.f32 0.0, %v1079
    %v1081 = vpop.f32.mrb[0].mxu0
    %v1082 = vadd.f32 0.0, %v1081
    %v1083 = vpop.f32.mrb[0].mxu0
    %v1084 = vpop.f32.mrb[0].mxu0
    %1085 = vdwg.mxu0
    %1086 = vmatprep.subr.bf16.mxu0 %v984
    %1087 = vmatpush1.bf16.msra.mxu0 %v983
    %1088 = vmatprep.subr.bf16.mxu0 %v988
    %1089 = vmatpush1.bf16.msra.mxu0 %v987
    %1090 = vmatprep.subr.bf16.mxu0 %v992
    %1091 = vmatpush1.bf16.msra.mxu0 %v991
    %1092 = vmatprep.subr.bf16.mxu0 %v996
    %1093 = vmatpush1.bf16.msra.mxu0 %v995
    %1094 = vmatprep.subr.bf16.mxu0 %v1000
    %1095 = vmatpush1.bf16.msra.mxu0 %v999
    %1096 = vmatprep.subr.bf16.mxu0 %v1004
    %1097 = vmatpush1.bf16.msra.mxu0 %v1003
    %1098 = vmatprep.subr.bf16.mxu0 %v1008
    %1099 = vmatpush1.bf16.msra.mxu0 %v1007
    %1100 = vmatprep.subr.bf16.mxu0 %v1012
    %1101 = vmatpush1.bf16.msra.mxu0 %v1011
    %1102 = vmatprep.subr.bf16.mxu0 0
    %1103 = vmatpush1.bf16.msra.mxu0 0
    %1104 = vmatprep.subr.bf16.mxu0 0
    %1105 = vmatpush1.bf16.msra.mxu0 0
    %1106 = vmatprep.subr.bf16.mxu0 0
    %1107 = vmatpush1.bf16.msra.mxu0 0
    %1108 = vmatprep.subr.bf16.mxu0 0
    %1109 = vmatpush1.bf16.msra.mxu0 0
    %1110 = vmatprep.subr.bf16.mxu0 0
    %1111 = vmatpush1.bf16.msra.mxu0 0
    %1112 = vmatprep.subr.bf16.mxu0 0
    %1113 = vmatpush1.bf16.msra.mxu0 0
    %1114 = vmatprep.subr.bf16.mxu0 0
    %1115 = vmatpush1.bf16.msra.mxu0 0
    %1116 = vmatprep.subr.bf16.mxu0 0
    %1117 = vmatpush1.bf16.msra.mxu0 0
    %1118 = vmatprep.mubr.bf16.mxu0 0
    %1119 = vmatmul.mubr.bf16.gmra.mrb[0].mxu0 %v852
    %v1120 = vpop.f32.mrb[0].mxu0
    %v1121 = vadd.f32 0.0, %v1120
    %v1122 = vpop.f32.mrb[0].mxu0
    %v1123 = vadd.f32 0.0, %v1122
    %v1124 = vpop.f32.mrb[0].mxu0
    %v1125 = vpop.f32.mrb[0].mxu0
    %1126 = vdwg.mxu0
    %v1127 = vadd.f32 %v848, %v1080
    %v1128 = vadd.f32 %v849, %v1082
    %v1129 = vadd.f32 %v850, %v1121
    %v1130 = vadd.f32 %v851, %v1123
    %v1131 = vmul.f32 %v1127, 0.5
    %v1132 = vtanh.pop %v1131
    %v1133 = vmul.f32 %v1132, 0.5
    %v1134 = vadd.f32 %v1133, 0.5
    %v1135 = vmul.f32 %v1128, 0.5
    %v1136 = vtanh.pop %v1135
    %v1137 = vmul.f32 %v1136, 0.5
    %v1138 = vadd.f32 %v1137, 0.5
    %v1139 = vtanh.pop %v1129
    %v1140 = vmul.f32 %v1130, 0.5
    %v1141 = vtanh.pop %v1140
    %v1142 = vmul.f32 %v1141, 0.5
    %v1143 = vadd.f32 %v1142, 0.5
    %v1144 = vmul.f32 %v1138, %v835
    %v1145 = vmul.f32 %v1134, %v1139
    %v1146 = vadd.f32 %v1144, %v1145
    %v1147 = vtanh.pop %v1146
    %v1148 = vmul.f32 %v1143, %v1147
    %s1149 = sadd.s32 %s534, 1
    %v1150 = vstv %s1149
    %vm1151 = vcmp.gt.s32.totalorder %v533, %v1150
    %v1152 = vsel %vm1151, 1, 0
    %1153 = vset.pattern.permute.xlu0 0
    %1154 = vperm.xlu0 %1153, %v1152
    %v1155 = vpop.permute.xlu0 %1154
    %vm1156 = vcmp.eq.s32.totalorder %v1155, 1
    %v1157 = vsel %vm1156, %v1148, 0.0
    %s1158 = scalar_lea.vmem [#allocation11], 8
    %1159 = vst [vmem:[%s1158] sm:$0xff] %v1157
    %s1160 = scalar_lea.vmem [#allocation2], 64
    %v1161 = vld [vmem:[%s1160] sm:$0xff]
    %v1162 = vld [vmem:[%s1160 + $0x8] sm:$0xff]
    %v1163 = vld [vmem:[%s1160 + $0x10] sm:$0xff]
    %v1164 = vld [vmem:[%s1160 + $0x18] sm:$0xff]
    %v1165 = vpack.c.bf16 %v1148, %v1148
    %v1166 = vld [vmem:[#allocation10] sm:$0xff]
    %v1167 = vld [vmem:[#allocation10 + $0x8] sm:$0xff]
    %v1168 = vld [vmem:[#allocation10 + $0x10] sm:$0xff]
    %v1169 = vld [vmem:[#allocation10 + $0x18] sm:$0xff]
    %v1170 = vld [vmem:[#allocation10 + $0x20] sm:$0xff]
    %v1171 = vld [vmem:[#allocation10 + $0x28] sm:$0xff]
    %v1172 = vld [vmem:[#allocation10 + $0x30] sm:$0xff]
    %v1173 = vld [vmem:[#allocation10 + $0x38] sm:$0xff]
    %v1174 = vld [vmem:[#allocation10 + $0x40] sm:$0xff]
    %v1175 = vld [vmem:[#allocation10 + $0x48] sm:$0xff]
    %v1176 = vld [vmem:[#allocation10 + $0x50] sm:$0xff]
    %v1177 = vld [vmem:[#allocation10 + $0x58] sm:$0xff]
    %v1178 = vld [vmem:[#allocation10 + $0x60] sm:$0xff]
    %v1179 = vld [vmem:[#allocation10 + $0x68] sm:$0xff]
    %v1180 = vld [vmem:[#allocation10 + $0x70] sm:$0xff]
    %v1181 = vld [vmem:[#allocation10 + $0x78] sm:$0xff]
    %v1182 = vld [vmem:[#allocation10 + $0x80] sm:$0xff]
    %v1183 = vld [vmem:[#allocation10 + $0x88] sm:$0xff]
    %v1184 = vld [vmem:[#allocation10 + $0x90] sm:$0xff]
    %v1185 = vld [vmem:[#allocation10 + $0x98] sm:$0xff]
    %v1186 = vld [vmem:[#allocation10 + $0xa0] sm:$0xff]
    %v1187 = vld [vmem:[#allocation10 + $0xa8] sm:$0xff]
    %v1188 = vld [vmem:[#allocation10 + $0xb0] sm:$0xff]
    %v1189 = vld [vmem:[#allocation10 + $0xb8] sm:$0xff]
    %v1190 = vld [vmem:[#allocation10 + $0xc0] sm:$0xff]
    %v1191 = vld [vmem:[#allocation10 + $0xc8] sm:$0xff]
    %v1192 = vld [vmem:[#allocation10 + $0xd0] sm:$0xff]
    %v1193 = vld [vmem:[#allocation10 + $0xd8] sm:$0xff]
    %v1194 = vld [vmem:[#allocation10 + $0xe0] sm:$0xff]
    %v1195 = vld [vmem:[#allocation10 + $0xe8] sm:$0xff]
    %v1196 = vld [vmem:[#allocation10 + $0xf0] sm:$0xff]
    %v1197 = vld [vmem:[#allocation10 + $0xf8] sm:$0xff]
    %v1230 = vunpack.c.l.b16 %v1166
    %v1231 = vunpack.c.h.b16 %v1166
    %v1232 = vunpack.c.l.b16 %v1167
    %v1233 = vunpack.c.h.b16 %v1167
    %v1234 = vunpack.c.l.b16 %v1168
    %v1235 = vunpack.c.h.b16 %v1168
    %v1236 = vunpack.c.l.b16 %v1169
    %v1237 = vunpack.c.h.b16 %v1169
    %v1238 = vunpack.c.l.b16 %v1170
    %v1239 = vunpack.c.h.b16 %v1170
    %v1240 = vunpack.c.l.b16 %v1171
    %v1241 = vunpack.c.h.b16 %v1171
    %v1242 = vunpack.c.l.b16 %v1172
    %v1243 = vunpack.c.h.b16 %v1172
    %v1244 = vunpack.c.l.b16 %v1173
    %v1245 = vunpack.c.h.b16 %v1173
    %v1246 = vunpack.c.l.b16 %v1174
    %v1247 = vunpack.c.h.b16 %v1174
    %v1248 = vunpack.c.l.b16 %v1175
    %v1249 = vunpack.c.h.b16 %v1175
    %v1250 = vunpack.c.l.b16 %v1176
    %v1251 = vunpack.c.h.b16 %v1176
    %v1252 = vunpack.c.l.b16 %v1177
    %v1253 = vunpack.c.h.b16 %v1177
    %v1254 = vunpack.c.l.b16 %v1178
    %v1255 = vunpack.c.h.b16 %v1178
    %v1256 = vunpack.c.l.b16 %v1179
    %v1257 = vunpack.c.h.b16 %v1179
    %v1258 = vunpack.c.l.b16 %v1180
    %v1259 = vunpack.c.h.b16 %v1180
    %v1260 = vunpack.c.l.b16 %v1181
    %v1261 = vunpack.c.h.b16 %v1181
    %v1262 = vunpack.c.l.b16 %v1182
    %v1263 = vunpack.c.h.b16 %v1182
    %v1264 = vunpack.c.l.b16 %v1183
    %v1265 = vunpack.c.h.b16 %v1183
    %v1266 = vunpack.c.l.b16 %v1184
    %v1267 = vunpack.c.h.b16 %v1184
    %v1268 = vunpack.c.l.b16 %v1185
    %v1269 = vunpack.c.h.b16 %v1185
    %v1270 = vunpack.c.l.b16 %v1186
    %v1271 = vunpack.c.h.b16 %v1186
    %v1272 = vunpack.c.l.b16 %v1187
    %v1273 = vunpack.c.h.b16 %v1187
    %v1274 = vunpack.c.l.b16 %v1188
    %v1275 = vunpack.c.h.b16 %v1188
    %v1276 = vunpack.c.l.b16 %v1189
    %v1277 = vunpack.c.h.b16 %v1189
    %v1278 = vunpack.c.l.b16 %v1190
    %v1279 = vunpack.c.h.b16 %v1190
    %v1280 = vunpack.c.l.b16 %v1191
    %v1281 = vunpack.c.h.b16 %v1191
    %v1282 = vunpack.c.l.b16 %v1192
    %v1283 = vunpack.c.h.b16 %v1192
    %v1284 = vunpack.c.l.b16 %v1193
    %v1285 = vunpack.c.h.b16 %v1193
    %v1286 = vunpack.c.l.b16 %v1194
    %v1287 = vunpack.c.h.b16 %v1194
    %v1288 = vunpack.c.l.b16 %v1195
    %v1289 = vunpack.c.h.b16 %v1195
    %v1290 = vunpack.c.l.b16 %v1196
    %v1291 = vunpack.c.h.b16 %v1196
    %v1292 = vunpack.c.l.b16 %v1197
    %v1293 = vunpack.c.h.b16 %v1197
    %v1294 = vpack.c.b16 %v1234, %v1230
    %v1295 = vpack.c.b16 %v1235, %v1231
    %v1296 = vpack.c.b16 %v1236, %v1232
    %v1297 = vpack.c.b16 %v1237, %v1233
    %v1298 = vpack.c.b16 %v1242, %v1238
    %v1299 = vpack.c.b16 %v1243, %v1239
    %v1300 = vpack.c.b16 %v1244, %v1240
    %v1301 = vpack.c.b16 %v1245, %v1241
    %v1302 = vpack.c.b16 %v1250, %v1246
    %v1303 = vpack.c.b16 %v1251, %v1247
    %v1304 = vpack.c.b16 %v1252, %v1248
    %v1305 = vpack.c.b16 %v1253, %v1249
    %v1306 = vpack.c.b16 %v1258, %v1254
    %v1307 = vpack.c.b16 %v1259, %v1255
    %v1308 = vpack.c.b16 %v1260, %v1256
    %v1309 = vpack.c.b16 %v1261, %v1257
    %v1310 = vpack.c.b16 %v1266, %v1262
    %v1311 = vpack.c.b16 %v1267, %v1263
    %v1312 = vpack.c.b16 %v1268, %v1264
    %v1313 = vpack.c.b16 %v1269, %v1265
    %v1314 = vpack.c.b16 %v1274, %v1270
    %v1315 = vpack.c.b16 %v1275, %v1271
    %v1316 = vpack.c.b16 %v1276, %v1272
    %v1317 = vpack.c.b16 %v1277, %v1273
    %v1318 = vpack.c.b16 %v1282, %v1278
    %v1319 = vpack.c.b16 %v1283, %v1279
    %v1320 = vpack.c.b16 %v1284, %v1280
    %v1321 = vpack.c.b16 %v1285, %v1281
    %v1322 = vpack.c.b16 %v1290, %v1286
    %v1323 = vpack.c.b16 %v1291, %v1287
    %v1324 = vpack.c.b16 %v1292, %v1288
    %v1325 = vpack.c.b16 %v1293, %v1289
    %1358 = vmatprep.subr.bf16.mxu0 %v1295
    %1359 = vmatpush1.bf16.msra.mxu0 %v1294
    %1360 = vmatprep.subr.bf16.mxu0 %v1299
    %1361 = vmatpush1.bf16.msra.mxu0 %v1298
    %1362 = vmatprep.subr.bf16.mxu0 %v1303
    %1363 = vmatpush1.bf16.msra.mxu0 %v1302
    %1364 = vmatprep.subr.bf16.mxu0 %v1307
    %1365 = vmatpush1.bf16.msra.mxu0 %v1306
    %1366 = vmatprep.subr.bf16.mxu0 %v1311
    %1367 = vmatpush1.bf16.msra.mxu0 %v1310
    %1368 = vmatprep.subr.bf16.mxu0 %v1315
    %1369 = vmatpush1.bf16.msra.mxu0 %v1314
    %1370 = vmatprep.subr.bf16.mxu0 %v1319
    %1371 = vmatpush1.bf16.msra.mxu0 %v1318
    %1372 = vmatprep.subr.bf16.mxu0 %v1323
    %1373 = vmatpush1.bf16.msra.mxu0 %v1322
    %1374 = vmatprep.subr.bf16.mxu0 0
    %1375 = vmatpush1.bf16.msra.mxu0 0
    %1376 = vmatprep.subr.bf16.mxu0 0
    %1377 = vmatpush1.bf16.msra.mxu0 0
    %1378 = vmatprep.subr.bf16.mxu0 0
    %1379 = vmatpush1.bf16.msra.mxu0 0
    %1380 = vmatprep.subr.bf16.mxu0 0
    %1381 = vmatpush1.bf16.msra.mxu0 0
    %1382 = vmatprep.subr.bf16.mxu0 0
    %1383 = vmatpush1.bf16.msra.mxu0 0
    %1384 = vmatprep.subr.bf16.mxu0 0
    %1385 = vmatpush1.bf16.msra.mxu0 0
    %1386 = vmatprep.subr.bf16.mxu0 0
    %1387 = vmatpush1.bf16.msra.mxu0 0
    %1388 = vmatprep.subr.bf16.mxu0 0
    %1389 = vmatpush1.bf16.msra.mxu0 0
    %1390 = vmatprep.mubr.bf16.mxu0 0
    %1391 = vmatmul.mubr.bf16.gmra.mrb[0].mxu0 %v1165
    %v1392 = vpop.f32.mrb[0].mxu0
    %v1393 = vadd.f32 0.0, %v1392
    %v1394 = vpop.f32.mrb[0].mxu0
    %v1395 = vadd.f32 0.0, %v1394
    %v1396 = vpop.f32.mrb[0].mxu0
    %v1397 = vpop.f32.mrb[0].mxu0
    %1398 = vdwg.mxu0
    %1399 = vmatprep.subr.bf16.mxu0 %v1297
    %1400 = vmatpush1.bf16.msra.mxu0 %v1296
    %1401 = vmatprep.subr.bf16.mxu0 %v1301
    %1402 = vmatpush1.bf16.msra.mxu0 %v1300
    %1403 = vmatprep.subr.bf16.mxu0 %v1305
    %1404 = vmatpush1.bf16.msra.mxu0 %v1304
    %1405 = vmatprep.subr.bf16.mxu0 %v1309
    %1406 = vmatpush1.bf16.msra.mxu0 %v1308
    %1407 = vmatprep.subr.bf16.mxu0 %v1313
    %1408 = vmatpush1.bf16.msra.mxu0 %v1312
    %1409 = vmatprep.subr.bf16.mxu0 %v1317
    %1410 = vmatpush1.bf16.msra.mxu0 %v1316
    %1411 = vmatprep.subr.bf16.mxu0 %v1321
    %1412 = vmatpush1.bf16.msra.mxu0 %v1320
    %1413 = vmatprep.subr.bf16.mxu0 %v1325
    %1414 = vmatpush1.bf16.msra.mxu0 %v1324
    %1415 = vmatprep.subr.bf16.mxu0 0
    %1416 = vmatpush1.bf16.msra.mxu0 0
    %1417 = vmatprep.subr.bf16.mxu0 0
    %1418 = vmatpush1.bf16.msra.mxu0 0
    %1419 = vmatprep.subr.bf16.mxu0 0
    %1420 = vmatpush1.bf16.msra.mxu0 0
    %1421 = vmatprep.subr.bf16.mxu0 0
    %1422 = vmatpush1.bf16.msra.mxu0 0
    %1423 = vmatprep.subr.bf16.mxu0 0
    %1424 = vmatpush1.bf16.msra.mxu0 0
    %1425 = vmatprep.subr.bf16.mxu0 0
    %1426 = vmatpush1.bf16.msra.mxu0 0
    %1427 = vmatprep.subr.bf16.mxu0 0
    %1428 = vmatpush1.bf16.msra.mxu0 0
    %1429 = vmatprep.subr.bf16.mxu0 0
    %1430 = vmatpush1.bf16.msra.mxu0 0
    %1431 = vmatprep.mubr.bf16.mxu0 0
    %1432 = vmatmul.mubr.bf16.gmra.mrb[0].mxu0 %v1165
    %v1433 = vpop.f32.mrb[0].mxu0
    %v1434 = vadd.f32 0.0, %v1433
    %v1435 = vpop.f32.mrb[0].mxu0
    %v1436 = vadd.f32 0.0, %v1435
    %v1437 = vpop.f32.mrb[0].mxu0
    %v1438 = vpop.f32.mrb[0].mxu0
    %1439 = vdwg.mxu0
    %v1440 = vadd.f32 %v1161, %v1393
    %v1441 = vadd.f32 %v1162, %v1395
    %v1442 = vadd.f32 %v1163, %v1434
    %v1443 = vadd.f32 %v1164, %v1436
    %v1444 = vmul.f32 %v1440, 0.5
    %v1445 = vtanh.pop %v1444
    %v1446 = vmul.f32 %v1445, 0.5
    %v1447 = vadd.f32 %v1446, 0.5
    %v1448 = vmul.f32 %v1441, 0.5
    %v1449 = vtanh.pop %v1448
    %v1450 = vmul.f32 %v1449, 0.5
    %v1451 = vadd.f32 %v1450, 0.5
    %v1452 = vtanh.pop %v1442
    %v1453 = vmul.f32 %v1443, 0.5
    %v1454 = vtanh.pop %v1453
    %v1455 = vmul.f32 %v1454, 0.5
    %v1456 = vadd.f32 %v1455, 0.5
    %v1457 = vmul.f32 %v1451, %v1146
    %v1458 = vmul.f32 %v1447, %v1452
    %v1459 = vadd.f32 %v1457, %v1458
    %v1460 = vtanh.pop %v1459
    %v1461 = vmul.f32 %v1456, %v1460
    %s1462 = sadd.s32 %s534, 2
    %v1463 = vstv %s1462
    %vm1464 = vcmp.gt.s32.totalorder %v533, %v1463
    %v1465 = vsel %vm1464, 1, 0
    %1466 = vset.pattern.permute.xlu0 0
    %1467 = vperm.xlu0 %1466, %v1465
    %v1468 = vpop.permute.xlu0 %1467
    %vm1469 = vcmp.eq.s32.totalorder %v1468, 1
    %v1470 = vsel %vm1469, %v1461, 0.0
    %s1471 = scalar_lea.vmem [#allocation11], 16
    %1472 = vst [vmem:[%s1471] sm:$0xff] %v1470
    %s1473 = scalar_lea.vmem [#allocation2], 96
    %v1474 = vld [vmem:[%s1473] sm:$0xff]
    %v1475 = vld [vmem:[%s1473 + $0x8] sm:$0xff]
    %v1476 = vld [vmem:[%s1473 + $0x10] sm:$0xff]
    %v1477 = vld [vmem:[%s1473 + $0x18] sm:$0xff]
    %v1478 = vpack.c.bf16 %v1461, %v1461
    %v1479 = vld [vmem:[#allocation10] sm:$0xff]
    %v1480 = vld [vmem:[#allocation10 + $0x8] sm:$0xff]
    %v1481 = vld [vmem:[#allocation10 + $0x10] sm:$0xff]
    %v1482 = vld [vmem:[#allocation10 + $0x18] sm:$0xff]
    %v1483 = vld [vmem:[#allocation10 + $0x20] sm:$0xff]
    %v1484 = vld [vmem:[#allocation10 + $0x28] sm:$0xff]
    %v1485 = vld [vmem:[#allocation10 + $0x30] sm:$0xff]
    %v1486 = vld [vmem:[#allocation10 + $0x38] sm:$0xff]
    %v1487 = vld [vmem:[#allocation10 + $0x40] sm:$0xff]
    %v1488 = vld [vmem:[#allocation10 + $0x48] sm:$0xff]
    %v1489 = vld [vmem:[#allocation10 + $0x50] sm:$0xff]
    %v1490 = vld [vmem:[#allocation10 + $0x58] sm:$0xff]
    %v1491 = vld [vmem:[#allocation10 + $0x60] sm:$0xff]
    %v1492 = vld [vmem:[#allocation10 + $0x68] sm:$0xff]
    %v1493 = vld [vmem:[#allocation10 + $0x70] sm:$0xff]
    %v1494 = vld [vmem:[#allocation10 + $0x78] sm:$0xff]
    %v1495 = vld [vmem:[#allocation10 + $0x80] sm:$0xff]
    %v1496 = vld [vmem:[#allocation10 + $0x88] sm:$0xff]
    %v1497 = vld [vmem:[#allocation10 + $0x90] sm:$0xff]
    %v1498 = vld [vmem:[#allocation10 + $0x98] sm:$0xff]
    %v1499 = vld [vmem:[#allocation10 + $0xa0] sm:$0xff]
    %v1500 = vld [vmem:[#allocation10 + $0xa8] sm:$0xff]
    %v1501 = vld [vmem:[#allocation10 + $0xb0] sm:$0xff]
    %v1502 = vld [vmem:[#allocation10 + $0xb8] sm:$0xff]
    %v1503 = vld [vmem:[#allocation10 + $0xc0] sm:$0xff]
    %v1504 = vld [vmem:[#allocation10 + $0xc8] sm:$0xff]
    %v1505 = vld [vmem:[#allocation10 + $0xd0] sm:$0xff]
    %v1506 = vld [vmem:[#allocation10 + $0xd8] sm:$0xff]
    %v1507 = vld [vmem:[#allocation10 + $0xe0] sm:$0xff]
    %v1508 = vld [vmem:[#allocation10 + $0xe8] sm:$0xff]
    %v1509 = vld [vmem:[#allocation10 + $0xf0] sm:$0xff]
    %v1510 = vld [vmem:[#allocation10 + $0xf8] sm:$0xff]
    %v1543 = vunpack.c.l.b16 %v1479
    %v1544 = vunpack.c.h.b16 %v1479
    %v1545 = vunpack.c.l.b16 %v1480
    %v1546 = vunpack.c.h.b16 %v1480
    %v1547 = vunpack.c.l.b16 %v1481
    %v1548 = vunpack.c.h.b16 %v1481
    %v1549 = vunpack.c.l.b16 %v1482
    %v1550 = vunpack.c.h.b16 %v1482
    %v1551 = vunpack.c.l.b16 %v1483
    %v1552 = vunpack.c.h.b16 %v1483
    %v1553 = vunpack.c.l.b16 %v1484
    %v1554 = vunpack.c.h.b16 %v1484
    %v1555 = vunpack.c.l.b16 %v1485
    %v1556 = vunpack.c.h.b16 %v1485
    %v1557 = vunpack.c.l.b16 %v1486
    %v1558 = vunpack.c.h.b16 %v1486
    %v1559 = vunpack.c.l.b16 %v1487
    %v1560 = vunpack.c.h.b16 %v1487
    %v1561 = vunpack.c.l.b16 %v1488
    %v1562 = vunpack.c.h.b16 %v1488
    %v1563 = vunpack.c.l.b16 %v1489
    %v1564 = vunpack.c.h.b16 %v1489
    %v1565 = vunpack.c.l.b16 %v1490
    %v1566 = vunpack.c.h.b16 %v1490
    %v1567 = vunpack.c.l.b16 %v1491
    %v1568 = vunpack.c.h.b16 %v1491
    %v1569 = vunpack.c.l.b16 %v1492
    %v1570 = vunpack.c.h.b16 %v1492
    %v1571 = vunpack.c.l.b16 %v1493
    %v1572 = vunpack.c.h.b16 %v1493
    %v1573 = vunpack.c.l.b16 %v1494
    %v1574 = vunpack.c.h.b16 %v1494
    %v1575 = vunpack.c.l.b16 %v1495
    %v1576 = vunpack.c.h.b16 %v1495
    %v1577 = vunpack.c.l.b16 %v1496
    %v1578 = vunpack.c.h.b16 %v1496
    %v1579 = vunpack.c.l.b16 %v1497
    %v1580 = vunpack.c.h.b16 %v1497
    %v1581 = vunpack.c.l.b16 %v1498
    %v1582 = vunpack.c.h.b16 %v1498
    %v1583 = vunpack.c.l.b16 %v1499
    %v1584 = vunpack.c.h.b16 %v1499
    %v1585 = vunpack.c.l.b16 %v1500
    %v1586 = vunpack.c.h.b16 %v1500
    %v1587 = vunpack.c.l.b16 %v1501
    %v1588 = vunpack.c.h.b16 %v1501
    %v1589 = vunpack.c.l.b16 %v1502
    %v1590 = vunpack.c.h.b16 %v1502
    %v1591 = vunpack.c.l.b16 %v1503
    %v1592 = vunpack.c.h.b16 %v1503
    %v1593 = vunpack.c.l.b16 %v1504
    %v1594 = vunpack.c.h.b16 %v1504
    %v1595 = vunpack.c.l.b16 %v1505
    %v1596 = vunpack.c.h.b16 %v1505
    %v1597 = vunpack.c.l.b16 %v1506
    %v1598 = vunpack.c.h.b16 %v1506
    %v1599 = vunpack.c.l.b16 %v1507
    %v1600 = vunpack.c.h.b16 %v1507
    %v1601 = vunpack.c.l.b16 %v1508
    %v1602 = vunpack.c.h.b16 %v1508
    %v1603 = vunpack.c.l.b16 %v1509
    %v1604 = vunpack.c.h.b16 %v1509
    %v1605 = vunpack.c.l.b16 %v1510
    %v1606 = vunpack.c.h.b16 %v1510
    %v1607 = vpack.c.b16 %v1547, %v1543
    %v1608 = vpack.c.b16 %v1548, %v1544
    %v1609 = vpack.c.b16 %v1549, %v1545
    %v1610 = vpack.c.b16 %v1550, %v1546
    %v1611 = vpack.c.b16 %v1555, %v1551
    %v1612 = vpack.c.b16 %v1556, %v1552
    %v1613 = vpack.c.b16 %v1557, %v1553
    %v1614 = vpack.c.b16 %v1558, %v1554
    %v1615 = vpack.c.b16 %v1563, %v1559
    %v1616 = vpack.c.b16 %v1564, %v1560
    %v1617 = vpack.c.b16 %v1565, %v1561
    %v1618 = vpack.c.b16 %v1566, %v1562
    %v1619 = vpack.c.b16 %v1571, %v1567
    %v1620 = vpack.c.b16 %v1572, %v1568
    %v1621 = vpack.c.b16 %v1573, %v1569
    %v1622 = vpack.c.b16 %v1574, %v1570
    %v1623 = vpack.c.b16 %v1579, %v1575
    %v1624 = vpack.c.b16 %v1580, %v1576
    %v1625 = vpack.c.b16 %v1581, %v1577
    %v1626 = vpack.c.b16 %v1582, %v1578
    %v1627 = vpack.c.b16 %v1587, %v1583
    %v1628 = vpack.c.b16 %v1588, %v1584
    %v1629 = vpack.c.b16 %v1589, %v1585
    %v1630 = vpack.c.b16 %v1590, %v1586
    %v1631 = vpack.c.b16 %v1595, %v1591
    %v1632 = vpack.c.b16 %v1596, %v1592
    %v1633 = vpack.c.b16 %v1597, %v1593
    %v1634 = vpack.c.b16 %v1598, %v1594
    %v1635 = vpack.c.b16 %v1603, %v1599
    %v1636 = vpack.c.b16 %v1604, %v1600
    %v1637 = vpack.c.b16 %v1605, %v1601
    %v1638 = vpack.c.b16 %v1606, %v1602
    %1671 = vmatprep.subr.bf16.mxu0 %v1608
    %1672 = vmatpush1.bf16.msra.mxu0 %v1607
    %1673 = vmatprep.subr.bf16.mxu0 %v1612
    %1674 = vmatpush1.bf16.msra.mxu0 %v1611
    %1675 = vmatprep.subr.bf16.mxu0 %v1616
    %1676 = vmatpush1.bf16.msra.mxu0 %v1615
    %1677 = vmatprep.subr.bf16.mxu0 %v1620
    %1678 = vmatpush1.bf16.msra.mxu0 %v1619
    %1679 = vmatprep.subr.bf16.mxu0 %v1624
    %1680 = vmatpush1.bf16.msra.mxu0 %v1623
    %1681 = vmatprep.subr.bf16.mxu0 %v1628
    %1682 = vmatpush1.bf16.msra.mxu0 %v1627
    %1683 = vmatprep.subr.bf16.mxu0 %v1632
    %1684 = vmatpush1.bf16.msra.mxu0 %v1631
    %1685 = vmatprep.subr.bf16.mxu0 %v1636
    %1686 = vmatpush1.bf16.msra.mxu0 %v1635
    %1687 = vmatprep.subr.bf16.mxu0 0
    %1688 = vmatpush1.bf16.msra.mxu0 0
    %1689 = vmatprep.subr.bf16.mxu0 0
    %1690 = vmatpush1.bf16.msra.mxu0 0
    %1691 = vmatprep.subr.bf16.mxu0 0
    %1692 = vmatpush1.bf16.msra.mxu0 0
    %1693 = vmatprep.subr.bf16.mxu0 0
    %1694 = vmatpush1.bf16.msra.mxu0 0
    %1695 = vmatprep.subr.bf16.mxu0 0
    %1696 = vmatpush1.bf16.msra.mxu0 0
    %1697 = vmatprep.subr.bf16.mxu0 0
    %1698 = vmatpush1.bf16.msra.mxu0 0
    %1699 = vmatprep.subr.bf16.mxu0 0
    %1700 = vmatpush1.bf16.msra.mxu0 0
    %1701 = vmatprep.subr.bf16.mxu0 0
    %1702 = vmatpush1.bf16.msra.mxu0 0
    %1703 = vmatprep.mubr.bf16.mxu0 0
    %1704 = vmatmul.mubr.bf16.gmra.mrb[0].mxu0 %v1478
    %v1705 = vpop.f32.mrb[0].mxu0
    %v1706 = vadd.f32 0.0, %v1705
    %v1707 = vpop.f32.mrb[0].mxu0
    %v1708 = vadd.f32 0.0, %v1707
    %v1709 = vpop.f32.mrb[0].mxu0
    %v1710 = vpop.f32.mrb[0].mxu0
    %1711 = vdwg.mxu0
    %1712 = vmatprep.subr.bf16.mxu0 %v1610
    %1713 = vmatpush1.bf16.msra.mxu0 %v1609
    %1714 = vmatprep.subr.bf16.mxu0 %v1614
    %1715 = vmatpush1.bf16.msra.mxu0 %v1613
    %1716 = vmatprep.subr.bf16.mxu0 %v1618
    %1717 = vmatpush1.bf16.msra.mxu0 %v1617
    %1718 = vmatprep.subr.bf16.mxu0 %v1622
    %1719 = vmatpush1.bf16.msra.mxu0 %v1621
    %1720 = vmatprep.subr.bf16.mxu0 %v1626
    %1721 = vmatpush1.bf16.msra.mxu0 %v1625
    %1722 = vmatprep.subr.bf16.mxu0 %v1630
    %1723 = vmatpush1.bf16.msra.mxu0 %v1629
    %1724 = vmatprep.subr.bf16.mxu0 %v1634
    %1725 = vmatpush1.bf16.msra.mxu0 %v1633
    %1726 = vmatprep.subr.bf16.mxu0 %v1638
    %1727 = vmatpush1.bf16.msra.mxu0 %v1637
    %1728 = vmatprep.subr.bf16.mxu0 0
    %1729 = vmatpush1.bf16.msra.mxu0 0
    %1730 = vmatprep.subr.bf16.mxu0 0
    %1731 = vmatpush1.bf16.msra.mxu0 0
    %1732 = vmatprep.subr.bf16.mxu0 0
    %1733 = vmatpush1.bf16.msra.mxu0 0
    %1734 = vmatprep.subr.bf16.mxu0 0
    %1735 = vmatpush1.bf16.msra.mxu0 0
    %1736 = vmatprep.subr.bf16.mxu0 0
    %1737 = vmatpush1.bf16.msra.mxu0 0
    %1738 = vmatprep.subr.bf16.mxu0 0
    %1739 = vmatpush1.bf16.msra.mxu0 0
    %1740 = vmatprep.subr.bf16.mxu0 0
    %1741 = vmatpush1.bf16.msra.mxu0 0
    %1742 = vmatprep.subr.bf16.mxu0 0
    %1743 = vmatpush1.bf16.msra.mxu0 0
    %1744 = vmatprep.mubr.bf16.mxu0 0
    %1745 = vmatmul.mubr.bf16.gmra.mrb[0].mxu0 %v1478
    %v1746 = vpop.f32.mrb[0].mxu0
    %v1747 = vadd.f32 0.0, %v1746
    %v1748 = vpop.f32.mrb[0].mxu0
    %v1749 = vadd.f32 0.0, %v1748
    %v1750 = vpop.f32.mrb[0].mxu0
    %v1751 = vpop.f32.mrb[0].mxu0
    %1752 = vdwg.mxu0
    %v1753 = vadd.f32 %v1474, %v1706
    %v1754 = vadd.f32 %v1475, %v1708
    %v1755 = vadd.f32 %v1476, %v1747
    %v1756 = vadd.f32 %v1477, %v1749
    %v1757 = vmul.f32 %v1753, 0.5
    %v1758 = vtanh.pop %v1757
    %v1759 = vmul.f32 %v1758, 0.5
    %v1760 = vadd.f32 %v1759, 0.5
    %v1761 = vmul.f32 %v1754, 0.5
    %v1762 = vtanh.pop %v1761
    %v1763 = vmul.f32 %v1762, 0.5
    %v1764 = vadd.f32 %v1763, 0.5
    %v1765 = vtanh.pop %v1755
    %v1766 = vmul.f32 %v1756, 0.5
    %v1767 = vtanh.pop %v1766
    %v1768 = vmul.f32 %v1767, 0.5
    %v1769 = vadd.f32 %v1768, 0.5
    %v1770 = vmul.f32 %v1764, %v1459
    %v1771 = vmul.f32 %v1760, %v1765
    %v1772 = vadd.f32 %v1770, %v1771
    %v1773 = vtanh.pop %v1772
    %v1774 = vmul.f32 %v1769, %v1773
    %s1775 = sadd.s32 %s534, 3
    %v1776 = vstv %s1775
    %vm1777 = vcmp.gt.s32.totalorder %v533, %v1776
    %v1778 = vsel %vm1777, 1, 0
    %1779 = vset.pattern.permute.xlu0 0
    %1780 = vperm.xlu0 %1779, %v1778
    %v1781 = vpop.permute.xlu0 %1780
    %vm1782 = vcmp.eq.s32.totalorder %v1781, 1
    %v1783 = vsel %vm1782, %v1774, 0.0
    %s1784 = scalar_lea.vmem [#allocation11], 24
    %1785 = vst [vmem:[%s1784] sm:$0xff] %v1783
    %s1786 = scalar_lea.vmem [#allocation2], 128
    %v1787 = vld [vmem:[%s1786] sm:$0xff]
    %v1788 = vld [vmem:[%s1786 + $0x8] sm:$0xff]
    %v1789 = vld [vmem:[%s1786 + $0x10] sm:$0xff]
    %v1790 = vld [vmem:[%s1786 + $0x18] sm:$0xff]
    %v1791 = vpack.c.bf16 %v1774, %v1774
    %v1792 = vld [vmem:[#allocation10] sm:$0xff]
    %v1793 = vld [vmem:[#allocation10 + $0x8] sm:$0xff]
    %v1794 = vld [vmem:[#allocation10 + $0x10] sm:$0xff]
    %v1795 = vld [vmem:[#allocation10 + $0x18] sm:$0xff]
    %v1796 = vld [vmem:[#allocation10 + $0x20] sm:$0xff]
    %v1797 = vld [vmem:[#allocation10 + $0x28] sm:$0xff]
    %v1798 = vld [vmem:[#allocation10 + $0x30] sm:$0xff]
    %v1799 = vld [vmem:[#allocation10 + $0x38] sm:$0xff]
    %v1800 = vld [vmem:[#allocation10 + $0x40] sm:$0xff]
    %v1801 = vld [vmem:[#allocation10 + $0x48] sm:$0xff]
    %v1802 = vld [vmem:[#allocation10 + $0x50] sm:$0xff]
    %v1803 = vld [vmem:[#allocation10 + $0x58] sm:$0xff]
    %v1804 = vld [vmem:[#allocation10 + $0x60] sm:$0xff]
    %v1805 = vld [vmem:[#allocation10 + $0x68] sm:$0xff]
    %v1806 = vld [vmem:[#allocation10 + $0x70] sm:$0xff]
    %v1807 = vld [vmem:[#allocation10 + $0x78] sm:$0xff]
    %v1808 = vld [vmem:[#allocation10 + $0x80] sm:$0xff]
    %v1809 = vld [vmem:[#allocation10 + $0x88] sm:$0xff]
    %v1810 = vld [vmem:[#allocation10 + $0x90] sm:$0xff]
    %v1811 = vld [vmem:[#allocation10 + $0x98] sm:$0xff]
    %v1812 = vld [vmem:[#allocation10 + $0xa0] sm:$0xff]
    %v1813 = vld [vmem:[#allocation10 + $0xa8] sm:$0xff]
    %v1814 = vld [vmem:[#allocation10 + $0xb0] sm:$0xff]
    %v1815 = vld [vmem:[#allocation10 + $0xb8] sm:$0xff]
    %v1816 = vld [vmem:[#allocation10 + $0xc0] sm:$0xff]
    %v1817 = vld [vmem:[#allocation10 + $0xc8] sm:$0xff]
    %v1818 = vld [vmem:[#allocation10 + $0xd0] sm:$0xff]
    %v1819 = vld [vmem:[#allocation10 + $0xd8] sm:$0xff]
    %v1820 = vld [vmem:[#allocation10 + $0xe0] sm:$0xff]
    %v1821 = vld [vmem:[#allocation10 + $0xe8] sm:$0xff]
    %v1822 = vld [vmem:[#allocation10 + $0xf0] sm:$0xff]
    %v1823 = vld [vmem:[#allocation10 + $0xf8] sm:$0xff]
    %v1856 = vunpack.c.l.b16 %v1792
    %v1857 = vunpack.c.h.b16 %v1792
    %v1858 = vunpack.c.l.b16 %v1793
    %v1859 = vunpack.c.h.b16 %v1793
    %v1860 = vunpack.c.l.b16 %v1794
    %v1861 = vunpack.c.h.b16 %v1794
    %v1862 = vunpack.c.l.b16 %v1795
    %v1863 = vunpack.c.h.b16 %v1795
    %v1864 = vunpack.c.l.b16 %v1796
    %v1865 = vunpack.c.h.b16 %v1796
    %v1866 = vunpack.c.l.b16 %v1797
    %v1867 = vunpack.c.h.b16 %v1797
    %v1868 = vunpack.c.l.b16 %v1798
    %v1869 = vunpack.c.h.b16 %v1798
    %v1870 = vunpack.c.l.b16 %v1799
    %v1871 = vunpack.c.h.b16 %v1799
    %v1872 = vunpack.c.l.b16 %v1800
    %v1873 = vunpack.c.h.b16 %v1800
    %v1874 = vunpack.c.l.b16 %v1801
    %v1875 = vunpack.c.h.b16 %v1801
    %v1876 = vunpack.c.l.b16 %v1802
    %v1877 = vunpack.c.h.b16 %v1802
    %v1878 = vunpack.c.l.b16 %v1803
    %v1879 = vunpack.c.h.b16 %v1803
    %v1880 = vunpack.c.l.b16 %v1804
    %v1881 = vunpack.c.h.b16 %v1804
    %v1882 = vunpack.c.l.b16 %v1805
    %v1883 = vunpack.c.h.b16 %v1805
    %v1884 = vunpack.c.l.b16 %v1806
    %v1885 = vunpack.c.h.b16 %v1806
    %v1886 = vunpack.c.l.b16 %v1807
    %v1887 = vunpack.c.h.b16 %v1807
    %v1888 = vunpack.c.l.b16 %v1808
    %v1889 = vunpack.c.h.b16 %v1808
    %v1890 = vunpack.c.l.b16 %v1809
    %v1891 = vunpack.c.h.b16 %v1809
    %v1892 = vunpack.c.l.b16 %v1810
    %v1893 = vunpack.c.h.b16 %v1810
    %v1894 = vunpack.c.l.b16 %v1811
    %v1895 = vunpack.c.h.b16 %v1811
    %v1896 = vunpack.c.l.b16 %v1812
    %v1897 = vunpack.c.h.b16 %v1812
    %v1898 = vunpack.c.l.b16 %v1813
    %v1899 = vunpack.c.h.b16 %v1813
    %v1900 = vunpack.c.l.b16 %v1814
    %v1901 = vunpack.c.h.b16 %v1814
    %v1902 = vunpack.c.l.b16 %v1815
    %v1903 = vunpack.c.h.b16 %v1815
    %v1904 = vunpack.c.l.b16 %v1816
    %v1905 = vunpack.c.h.b16 %v1816
    %v1906 = vunpack.c.l.b16 %v1817
    %v1907 = vunpack.c.h.b16 %v1817
    %v1908 = vunpack.c.l.b16 %v1818
    %v1909 = vunpack.c.h.b16 %v1818
    %v1910 = vunpack.c.l.b16 %v1819
    %v1911 = vunpack.c.h.b16 %v1819
    %v1912 = vunpack.c.l.b16 %v1820
    %v1913 = vunpack.c.h.b16 %v1820
    %v1914 = vunpack.c.l.b16 %v1821
    %v1915 = vunpack.c.h.b16 %v1821
    %v1916 = vunpack.c.l.b16 %v1822
    %v1917 = vunpack.c.h.b16 %v1822
    %v1918 = vunpack.c.l.b16 %v1823
    %v1919 = vunpack.c.h.b16 %v1823
    %v1920 = vpack.c.b16 %v1860, %v1856
    %v1921 = vpack.c.b16 %v1861, %v1857
    %v1922 = vpack.c.b16 %v1862, %v1858
    %v1923 = vpack.c.b16 %v1863, %v1859
    %v1924 = vpack.c.b16 %v1868, %v1864
    %v1925 = vpack.c.b16 %v1869, %v1865
    %v1926 = vpack.c.b16 %v1870, %v1866
    %v1927 = vpack.c.b16 %v1871, %v1867
    %v1928 = vpack.c.b16 %v1876, %v1872
    %v1929 = vpack.c.b16 %v1877, %v1873
    %v1930 = vpack.c.b16 %v1878, %v1874
    %v1931 = vpack.c.b16 %v1879, %v1875
    %v1932 = vpack.c.b16 %v1884, %v1880
    %v1933 = vpack.c.b16 %v1885, %v1881
    %v1934 = vpack.c.b16 %v1886, %v1882
    %v1935 = vpack.c.b16 %v1887, %v1883
    %v1936 = vpack.c.b16 %v1892, %v1888
    %v1937 = vpack.c.b16 %v1893, %v1889
    %v1938 = vpack.c.b16 %v1894, %v1890
    %v1939 = vpack.c.b16 %v1895, %v1891
    %v1940 = vpack.c.b16 %v1900, %v1896
    %v1941 = vpack.c.b16 %v1901, %v1897
    %v1942 = vpack.c.b16 %v1902, %v1898
    %v1943 = vpack.c.b16 %v1903, %v1899
    %v1944 = vpack.c.b16 %v1908, %v1904
    %v1945 = vpack.c.b16 %v1909, %v1905
    %v1946 = vpack.c.b16 %v1910, %v1906
    %v1947 = vpack.c.b16 %v1911, %v1907
    %v1948 = vpack.c.b16 %v1916, %v1912
    %v1949 = vpack.c.b16 %v1917, %v1913
    %v1950 = vpack.c.b16 %v1918, %v1914
    %v1951 = vpack.c.b16 %v1919, %v1915
    %1984 = vmatprep.subr.bf16.mxu0 %v1921
    %1985 = vmatpush1.bf16.msra.mxu0 %v1920
    %1986 = vmatprep.subr.bf16.mxu0 %v1925
    %1987 = vmatpush1.bf16.msra.mxu0 %v1924
    %1988 = vmatprep.subr.bf16.mxu0 %v1929
    %1989 = vmatpush1.bf16.msra.mxu0 %v1928
    %1990 = vmatprep.subr.bf16.mxu0 %v1933
    %1991 = vmatpush1.bf16.msra.mxu0 %v1932
    %1992 = vmatprep.subr.bf16.mxu0 %v1937
    %1993 = vmatpush1.bf16.msra.mxu0 %v1936
    %1994 = vmatprep.subr.bf16.mxu0 %v1941
    %1995 = vmatpush1.bf16.msra.mxu0 %v1940
    %1996 = vmatprep.subr.bf16.mxu0 %v1945
    %1997 = vmatpush1.bf16.msra.mxu0 %v1944
    %1998 = vmatprep.subr.bf16.mxu0 %v1949
    %1999 = vmatpush1.bf16.msra.mxu0 %v1948
    %2000 = vmatprep.subr.bf16.mxu0 0
    %2001 = vmatpush1.bf16.msra.mxu0 0
    %2002 = vmatprep.subr.bf16.mxu0 0
    %2003 = vmatpush1.bf16.msra.mxu0 0
    %2004 = vmatprep.subr.bf16.mxu0 0
    %2005 = vmatpush1.bf16.msra.mxu0 0
    %2006 = vmatprep.subr.bf16.mxu0 0
    %2007 = vmatpush1.bf16.msra.mxu0 0
    %2008 = vmatprep.subr.bf16.mxu0 0
    %2009 = vmatpush1.bf16.msra.mxu0 0
    %2010 = vmatprep.subr.bf16.mxu0 0
    %2011 = vmatpush1.bf16.msra.mxu0 0
    %2012 = vmatprep.subr.bf16.mxu0 0
    %2013 = vmatpush1.bf16.msra.mxu0 0
    %2014 = vmatprep.subr.bf16.mxu0 0
    %2015 = vmatpush1.bf16.msra.mxu0 0
    %2016 = vmatprep.mubr.bf16.mxu0 0
    %2017 = vmatmul.mubr.bf16.gmra.mrb[0].mxu0 %v1791
    %v2018 = vpop.f32.mrb[0].mxu0
    %v2019 = vadd.f32 0.0, %v2018
    %v2020 = vpop.f32.mrb[0].mxu0
    %v2021 = vadd.f32 0.0, %v2020
    %v2022 = vpop.f32.mrb[0].mxu0
    %v2023 = vpop.f32.mrb[0].mxu0
    %2024 = vdwg.mxu0
    %2025 = vmatprep.subr.bf16.mxu0 %v1923
    %2026 = vmatpush1.bf16.msra.mxu0 %v1922
    %2027 = vmatprep.subr.bf16.mxu0 %v1927
    %2028 = vmatpush1.bf16.msra.mxu0 %v1926
    %2029 = vmatprep.subr.bf16.mxu0 %v1931
    %2030 = vmatpush1.bf16.msra.mxu0 %v1930
    %2031 = vmatprep.subr.bf16.mxu0 %v1935
    %2032 = vmatpush1.bf16.msra.mxu0 %v1934
    %2033 = vmatprep.subr.bf16.mxu0 %v1939
    %2034 = vmatpush1.bf16.msra.mxu0 %v1938
    %2035 = vmatprep.subr.bf16.mxu0 %v1943
    %2036 = vmatpush1.bf16.msra.mxu0 %v1942
    %2037 = vmatprep.subr.bf16.mxu0 %v1947
    %2038 = vmatpush1.bf16.msra.mxu0 %v1946
    %2039 = vmatprep.subr.bf16.mxu0 %v1951
    %2040 = vmatpush1.bf16.msra.mxu0 %v1950
    %2041 = vmatprep.subr.bf16.mxu0 0
    %2042 = vmatpush1.bf16.msra.mxu0 0
    %2043 = vmatprep.subr.bf16.mxu0 0
    %2044 = vmatpush1.bf16.msra.mxu0 0
    %2045 = vmatprep.subr.bf16.mxu0 0
    %2046 = vmatpush1.bf16.msra.mxu0 0
    %2047 = vmatprep.subr.bf16.mxu0 0
    %2048 = vmatpush1.bf16.msra.mxu0 0
    %2049 = vmatprep.subr.bf16.mxu0 0
    %2050 = vmatpush1.bf16.msra.mxu0 0
    %2051 = vmatprep.subr.bf16.mxu0 0
    %2052 = vmatpush1.bf16.msra.mxu0 0
    %2053 = vmatprep.subr.bf16.mxu0 0
    %2054 = vmatpush1.bf16.msra.mxu0 0
    %2055 = vmatprep.subr.bf16.mxu0 0
    %2056 = vmatpush1.bf16.msra.mxu0 0
    %2057 = vmatprep.mubr.bf16.mxu0 0
    %2058 = vmatmul.mubr.bf16.gmra.mrb[0].mxu0 %v1791
    %v2059 = vpop.f32.mrb[0].mxu0
    %v2060 = vadd.f32 0.0, %v2059
    %v2061 = vpop.f32.mrb[0].mxu0
    %v2062 = vadd.f32 0.0, %v2061
    %v2063 = vpop.f32.mrb[0].mxu0
    %v2064 = vpop.f32.mrb[0].mxu0
    %2065 = vdwg.mxu0
    %v2066 = vadd.f32 %v1787, %v2019
    %v2067 = vadd.f32 %v1788, %v2021
    %v2068 = vadd.f32 %v1789, %v2060
    %v2069 = vadd.f32 %v1790, %v2062
    %v2070 = vmul.f32 %v2066, 0.5
    %v2071 = vtanh.pop %v2070
    %v2072 = vmul.f32 %v2071, 0.5
    %v2073 = vadd.f32 %v2072, 0.5
    %v2074 = vmul.f32 %v2067, 0.5
    %v2075 = vtanh.pop %v2074
    %v2076 = vmul.f32 %v2075, 0.5
    %v2077 = vadd.f32 %v2076, 0.5
    %v2078 = vtanh.pop %v2068
    %v2079 = vmul.f32 %v2069, 0.5
    %v2080 = vtanh.pop %v2079
    %v2081 = vmul.f32 %v2080, 0.5
    %v2082 = vadd.f32 %v2081, 0.5
    %v2083 = vmul.f32 %v2077, %v1772
    %v2084 = vmul.f32 %v2073, %v2078
    %v2085 = vadd.f32 %v2083, %v2084
    %v2086 = vtanh.pop %v2085
    %v2087 = vmul.f32 %v2082, %v2086
    %s2088 = sadd.s32 %s534, 4
    %v2089 = vstv %s2088
    %vm2090 = vcmp.gt.s32.totalorder %v533, %v2089
    %v2091 = vsel %vm2090, 1, 0
    %2092 = vset.pattern.permute.xlu0 0
    %2093 = vperm.xlu0 %2092, %v2091
    %v2094 = vpop.permute.xlu0 %2093
    %vm2095 = vcmp.eq.s32.totalorder %v2094, 1
    %v2096 = vsel %vm2095, %v2087, 0.0
    %s2097 = scalar_lea.vmem [#allocation11], 32
    %2098 = vst [vmem:[%s2097] sm:$0xff] %v2096
    %s2099 = scalar_lea.vmem [#allocation2], 160
    %v2100 = vld [vmem:[%s2099] sm:$0xff]
    %v2101 = vld [vmem:[%s2099 + $0x8] sm:$0xff]
    %v2102 = vld [vmem:[%s2099 + $0x10] sm:$0xff]
    %v2103 = vld [vmem:[%s2099 + $0x18] sm:$0xff]
    %v2104 = vpack.c.bf16 %v2087, %v2087
    %v2105 = vld [vmem:[#allocation10] sm:$0xff]
    %v2106 = vld [vmem:[#allocation10 + $0x8] sm:$0xff]
    %v2107 = vld [vmem:[#allocation10 + $0x10] sm:$0xff]
    %v2108 = vld [vmem:[#allocation10 + $0x18] sm:$0xff]
    %v2109 = vld [vmem:[#allocation10 + $0x20] sm:$0xff]
    %v2110 = vld [vmem:[#allocation10 + $0x28] sm:$0xff]
    %v2111 = vld [vmem:[#allocation10 + $0x30] sm:$0xff]
    %v2112 = vld [vmem:[#allocation10 + $0x38] sm:$0xff]
    %v2113 = vld [vmem:[#allocation10 + $0x40] sm:$0xff]
    %v2114 = vld [vmem:[#allocation10 + $0x48] sm:$0xff]
    %v2115 = vld [vmem:[#allocation10 + $0x50] sm:$0xff]
    %v2116 = vld [vmem:[#allocation10 + $0x58] sm:$0xff]
    %v2117 = vld [vmem:[#allocation10 + $0x60] sm:$0xff]
    %v2118 = vld [vmem:[#allocation10 + $0x68] sm:$0xff]
    %v2119 = vld [vmem:[#allocation10 + $0x70] sm:$0xff]
    %v2120 = vld [vmem:[#allocation10 + $0x78] sm:$0xff]
    %v2121 = vld [vmem:[#allocation10 + $0x80] sm:$0xff]
    %v2122 = vld [vmem:[#allocation10 + $0x88] sm:$0xff]
    %v2123 = vld [vmem:[#allocation10 + $0x90] sm:$0xff]
    %v2124 = vld [vmem:[#allocation10 + $0x98] sm:$0xff]
    %v2125 = vld [vmem:[#allocation10 + $0xa0] sm:$0xff]
    %v2126 = vld [vmem:[#allocation10 + $0xa8] sm:$0xff]
    %v2127 = vld [vmem:[#allocation10 + $0xb0] sm:$0xff]
    %v2128 = vld [vmem:[#allocation10 + $0xb8] sm:$0xff]
    %v2129 = vld [vmem:[#allocation10 + $0xc0] sm:$0xff]
    %v2130 = vld [vmem:[#allocation10 + $0xc8] sm:$0xff]
    %v2131 = vld [vmem:[#allocation10 + $0xd0] sm:$0xff]
    %v2132 = vld [vmem:[#allocation10 + $0xd8] sm:$0xff]
    %v2133 = vld [vmem:[#allocation10 + $0xe0] sm:$0xff]
    %v2134 = vld [vmem:[#allocation10 + $0xe8] sm:$0xff]
    %v2135 = vld [vmem:[#allocation10 + $0xf0] sm:$0xff]
    %v2136 = vld [vmem:[#allocation10 + $0xf8] sm:$0xff]
    %v2169 = vunpack.c.l.b16 %v2105
    %v2170 = vunpack.c.h.b16 %v2105
    %v2171 = vunpack.c.l.b16 %v2106
    %v2172 = vunpack.c.h.b16 %v2106
    %v2173 = vunpack.c.l.b16 %v2107
    %v2174 = vunpack.c.h.b16 %v2107
    %v2175 = vunpack.c.l.b16 %v2108
    %v2176 = vunpack.c.h.b16 %v2108
    %v2177 = vunpack.c.l.b16 %v2109
    %v2178 = vunpack.c.h.b16 %v2109
    %v2179 = vunpack.c.l.b16 %v2110
    %v2180 = vunpack.c.h.b16 %v2110
    %v2181 = vunpack.c.l.b16 %v2111
    %v2182 = vunpack.c.h.b16 %v2111
    %v2183 = vunpack.c.l.b16 %v2112
    %v2184 = vunpack.c.h.b16 %v2112
    %v2185 = vunpack.c.l.b16 %v2113
    %v2186 = vunpack.c.h.b16 %v2113
    %v2187 = vunpack.c.l.b16 %v2114
    %v2188 = vunpack.c.h.b16 %v2114
    %v2189 = vunpack.c.l.b16 %v2115
    %v2190 = vunpack.c.h.b16 %v2115
    %v2191 = vunpack.c.l.b16 %v2116
    %v2192 = vunpack.c.h.b16 %v2116
    %v2193 = vunpack.c.l.b16 %v2117
    %v2194 = vunpack.c.h.b16 %v2117
    %v2195 = vunpack.c.l.b16 %v2118
    %v2196 = vunpack.c.h.b16 %v2118
    %v2197 = vunpack.c.l.b16 %v2119
    %v2198 = vunpack.c.h.b16 %v2119
    %v2199 = vunpack.c.l.b16 %v2120
    %v2200 = vunpack.c.h.b16 %v2120
    %v2201 = vunpack.c.l.b16 %v2121
    %v2202 = vunpack.c.h.b16 %v2121
    %v2203 = vunpack.c.l.b16 %v2122
    %v2204 = vunpack.c.h.b16 %v2122
    %v2205 = vunpack.c.l.b16 %v2123
    %v2206 = vunpack.c.h.b16 %v2123
    %v2207 = vunpack.c.l.b16 %v2124
    %v2208 = vunpack.c.h.b16 %v2124
    %v2209 = vunpack.c.l.b16 %v2125
    %v2210 = vunpack.c.h.b16 %v2125
    %v2211 = vunpack.c.l.b16 %v2126
    %v2212 = vunpack.c.h.b16 %v2126
    %v2213 = vunpack.c.l.b16 %v2127
    %v2214 = vunpack.c.h.b16 %v2127
    %v2215 = vunpack.c.l.b16 %v2128
    %v2216 = vunpack.c.h.b16 %v2128
    %v2217 = vunpack.c.l.b16 %v2129
    %v2218 = vunpack.c.h.b16 %v2129
    %v2219 = vunpack.c.l.b16 %v2130
    %v2220 = vunpack.c.h.b16 %v2130
    %v2221 = vunpack.c.l.b16 %v2131
    %v2222 = vunpack.c.h.b16 %v2131
    %v2223 = vunpack.c.l.b16 %v2132
    %v2224 = vunpack.c.h.b16 %v2132
    %v2225 = vunpack.c.l.b16 %v2133
    %v2226 = vunpack.c.h.b16 %v2133
    %v2227 = vunpack.c.l.b16 %v2134
    %v2228 = vunpack.c.h.b16 %v2134
    %v2229 = vunpack.c.l.b16 %v2135
    %v2230 = vunpack.c.h.b16 %v2135
    %v2231 = vunpack.c.l.b16 %v2136
    %v2232 = vunpack.c.h.b16 %v2136
    %v2233 = vpack.c.b16 %v2173, %v2169
    %v2234 = vpack.c.b16 %v2174, %v2170
    %v2235 = vpack.c.b16 %v2175, %v2171
    %v2236 = vpack.c.b16 %v2176, %v2172
    %v2237 = vpack.c.b16 %v2181, %v2177
    %v2238 = vpack.c.b16 %v2182, %v2178
    %v2239 = vpack.c.b16 %v2183, %v2179
    %v2240 = vpack.c.b16 %v2184, %v2180
    %v2241 = vpack.c.b16 %v2189, %v2185
    %v2242 = vpack.c.b16 %v2190, %v2186
    %v2243 = vpack.c.b16 %v2191, %v2187
    %v2244 = vpack.c.b16 %v2192, %v2188
    %v2245 = vpack.c.b16 %v2197, %v2193
    %v2246 = vpack.c.b16 %v2198, %v2194
    %v2247 = vpack.c.b16 %v2199, %v2195
    %v2248 = vpack.c.b16 %v2200, %v2196
    %v2249 = vpack.c.b16 %v2205, %v2201
    %v2250 = vpack.c.b16 %v2206, %v2202
    %v2251 = vpack.c.b16 %v2207, %v2203
    %v2252 = vpack.c.b16 %v2208, %v2204
    %v2253 = vpack.c.b16 %v2213, %v2209
    %v2254 = vpack.c.b16 %v2214, %v2210
    %v2255 = vpack.c.b16 %v2215, %v2211
    %v2256 = vpack.c.b16 %v2216, %v2212
    %v2257 = vpack.c.b16 %v2221, %v2217
    %v2258 = vpack.c.b16 %v2222, %v2218
    %v2259 = vpack.c.b16 %v2223, %v2219
    %v2260 = vpack.c.b16 %v2224, %v2220
    %v2261 = vpack.c.b16 %v2229, %v2225
    %v2262 = vpack.c.b16 %v2230, %v2226
    %v2263 = vpack.c.b16 %v2231, %v2227
    %v2264 = vpack.c.b16 %v2232, %v2228
    %2297 = vmatprep.subr.bf16.mxu0 %v2234
    %2298 = vmatpush1.bf16.msra.mxu0 %v2233
    %2299 = vmatprep.subr.bf16.mxu0 %v2238
    %2300 = vmatpush1.bf16.msra.mxu0 %v2237
    %2301 = vmatprep.subr.bf16.mxu0 %v2242
    %2302 = vmatpush1.bf16.msra.mxu0 %v2241
    %2303 = vmatprep.subr.bf16.mxu0 %v2246
    %2304 = vmatpush1.bf16.msra.mxu0 %v2245
    %2305 = vmatprep.subr.bf16.mxu0 %v2250
    %2306 = vmatpush1.bf16.msra.mxu0 %v2249
    %2307 = vmatprep.subr.bf16.mxu0 %v2254
    %2308 = vmatpush1.bf16.msra.mxu0 %v2253
    %2309 = vmatprep.subr.bf16.mxu0 %v2258
    %2310 = vmatpush1.bf16.msra.mxu0 %v2257
    %2311 = vmatprep.subr.bf16.mxu0 %v2262
    %2312 = vmatpush1.bf16.msra.mxu0 %v2261
    %2313 = vmatprep.subr.bf16.mxu0 0
    %2314 = vmatpush1.bf16.msra.mxu0 0
    %2315 = vmatprep.subr.bf16.mxu0 0
    %2316 = vmatpush1.bf16.msra.mxu0 0
    %2317 = vmatprep.subr.bf16.mxu0 0
    %2318 = vmatpush1.bf16.msra.mxu0 0
    %2319 = vmatprep.subr.bf16.mxu0 0
    %2320 = vmatpush1.bf16.msra.mxu0 0
    %2321 = vmatprep.subr.bf16.mxu0 0
    %2322 = vmatpush1.bf16.msra.mxu0 0
    %2323 = vmatprep.subr.bf16.mxu0 0
    %2324 = vmatpush1.bf16.msra.mxu0 0
    %2325 = vmatprep.subr.bf16.mxu0 0
    %2326 = vmatpush1.bf16.msra.mxu0 0
    %2327 = vmatprep.subr.bf16.mxu0 0
    %2328 = vmatpush1.bf16.msra.mxu0 0
    %2329 = vmatprep.mubr.bf16.mxu0 0
    %2330 = vmatmul.mubr.bf16.gmra.mrb[0].mxu0 %v2104
    %v2331 = vpop.f32.mrb[0].mxu0
    %v2332 = vadd.f32 0.0, %v2331
    %v2333 = vpop.f32.mrb[0].mxu0
    %v2334 = vadd.f32 0.0, %v2333
    %v2335 = vpop.f32.mrb[0].mxu0
    %v2336 = vpop.f32.mrb[0].mxu0
    %2337 = vdwg.mxu0
    %2338 = vmatprep.subr.bf16.mxu0 %v2236
    %2339 = vmatpush1.bf16.msra.mxu0 %v2235
    %2340 = vmatprep.subr.bf16.mxu0 %v2240
    %2341 = vmatpush1.bf16.msra.mxu0 %v2239
    %2342 = vmatprep.subr.bf16.mxu0 %v2244
    %2343 = vmatpush1.bf16.msra.mxu0 %v2243
    %2344 = vmatprep.subr.bf16.mxu0 %v2248
    %2345 = vmatpush1.bf16.msra.mxu0 %v2247
    %2346 = vmatprep.subr.bf16.mxu0 %v2252
    %2347 = vmatpush1.bf16.msra.mxu0 %v2251
    %2348 = vmatprep.subr.bf16.mxu0 %v2256
    %2349 = vmatpush1.bf16.msra.mxu0 %v2255
    %2350 = vmatprep.subr.bf16.mxu0 %v2260
    %2351 = vmatpush1.bf16.msra.mxu0 %v2259
    %2352 = vmatprep.subr.bf16.mxu0 %v2264
    %2353 = vmatpush1.bf16.msra.mxu0 %v2263
    %2354 = vmatprep.subr.bf16.mxu0 0
    %2355 = vmatpush1.bf16.msra.mxu0 0
    %2356 = vmatprep.subr.bf16.mxu0 0
    %2357 = vmatpush1.bf16.msra.mxu0 0
    %2358 = vmatprep.subr.bf16.mxu0 0
    %2359 = vmatpush1.bf16.msra.mxu0 0
    %2360 = vmatprep.subr.bf16.mxu0 0
    %2361 = vmatpush1.bf16.msra.mxu0 0
    %2362 = vmatprep.subr.bf16.mxu0 0
    %2363 = vmatpush1.bf16.msra.mxu0 0
    %2364 = vmatprep.subr.bf16.mxu0 0
    %2365 = vmatpush1.bf16.msra.mxu0 0
    %2366 = vmatprep.subr.bf16.mxu0 0
    %2367 = vmatpush1.bf16.msra.mxu0 0
    %2368 = vmatprep.subr.bf16.mxu0 0
    %2369 = vmatpush1.bf16.msra.mxu0 0
    %2370 = vmatprep.mubr.bf16.mxu0 0
    %2371 = vmatmul.mubr.bf16.gmra.mrb[0].mxu0 %v2104
    %v2372 = vpop.f32.mrb[0].mxu0
    %v2373 = vadd.f32 0.0, %v2372
    %v2374 = vpop.f32.mrb[0].mxu0
    %v2375 = vadd.f32 0.0, %v2374
    %v2376 = vpop.f32.mrb[0].mxu0
    %v2377 = vpop.f32.mrb[0].mxu0
    %2378 = vdwg.mxu0
    %v2379 = vadd.f32 %v2100, %v2332
    %v2380 = vadd.f32 %v2101, %v2334
    %v2381 = vadd.f32 %v2102, %v2373
    %v2382 = vadd.f32 %v2103, %v2375
    %v2383 = vmul.f32 %v2379, 0.5
    %v2384 = vtanh.pop %v2383
    %v2385 = vmul.f32 %v2384, 0.5
    %v2386 = vadd.f32 %v2385, 0.5
    %v2387 = vmul.f32 %v2380, 0.5
    %v2388 = vtanh.pop %v2387
    %v2389 = vmul.f32 %v2388, 0.5
    %v2390 = vadd.f32 %v2389, 0.5
    %v2391 = vtanh.pop %v2381
    %v2392 = vmul.f32 %v2382, 0.5
    %v2393 = vtanh.pop %v2392
    %v2394 = vmul.f32 %v2393, 0.5
    %v2395 = vadd.f32 %v2394, 0.5
    %v2396 = vmul.f32 %v2390, %v2085
    %v2397 = vmul.f32 %v2386, %v2391
    %v2398 = vadd.f32 %v2396, %v2397
    %v2399 = vtanh.pop %v2398
    %v2400 = vmul.f32 %v2395, %v2399
    %s2401 = sadd.s32 %s534, 5
    %v2402 = vstv %s2401
    %vm2403 = vcmp.gt.s32.totalorder %v533, %v2402
    %v2404 = vsel %vm2403, 1, 0
    %2405 = vset.pattern.permute.xlu0 0
    %2406 = vperm.xlu0 %2405, %v2404
    %v2407 = vpop.permute.xlu0 %2406
    %vm2408 = vcmp.eq.s32.totalorder %v2407, 1
    %v2409 = vsel %vm2408, %v2400, 0.0
    %s2410 = scalar_lea.vmem [#allocation11], 40
    %2411 = vst [vmem:[%s2410] sm:$0xff] %v2409
    %s2412 = scalar_lea.vmem [#allocation2], 192
    %v2413 = vld [vmem:[%s2412] sm:$0xff]
    %v2414 = vld [vmem:[%s2412 + $0x8] sm:$0xff]
    %v2415 = vld [vmem:[%s2412 + $0x10] sm:$0xff]
    %v2416 = vld [vmem:[%s2412 + $0x18] sm:$0xff]
    %v2417 = vpack.c.bf16 %v2400, %v2400
    %v2418 = vld [vmem:[#allocation10] sm:$0xff]
    %v2419 = vld [vmem:[#allocation10 + $0x8] sm:$0xff]
    %v2420 = vld [vmem:[#allocation10 + $0x10] sm:$0xff]
    %v2421 = vld [vmem:[#allocation10 + $0x18] sm:$0xff]
    %v2422 = vld [vmem:[#allocation10 + $0x20] sm:$0xff]
    %v2423 = vld [vmem:[#allocation10 + $0x28] sm:$0xff]
    %v2424 = vld [vmem:[#allocation10 + $0x30] sm:$0xff]
    %v2425 = vld [vmem:[#allocation10 + $0x38] sm:$0xff]
    %v2426 = vld [vmem:[#allocation10 + $0x40] sm:$0xff]
    %v2427 = vld [vmem:[#allocation10 + $0x48] sm:$0xff]
    %v2428 = vld [vmem:[#allocation10 + $0x50] sm:$0xff]
    %v2429 = vld [vmem:[#allocation10 + $0x58] sm:$0xff]
    %v2430 = vld [vmem:[#allocation10 + $0x60] sm:$0xff]
    %v2431 = vld [vmem:[#allocation10 + $0x68] sm:$0xff]
    %v2432 = vld [vmem:[#allocation10 + $0x70] sm:$0xff]
    %v2433 = vld [vmem:[#allocation10 + $0x78] sm:$0xff]
    %v2434 = vld [vmem:[#allocation10 + $0x80] sm:$0xff]
    %v2435 = vld [vmem:[#allocation10 + $0x88] sm:$0xff]
    %v2436 = vld [vmem:[#allocation10 + $0x90] sm:$0xff]
    %v2437 = vld [vmem:[#allocation10 + $0x98] sm:$0xff]
    %v2438 = vld [vmem:[#allocation10 + $0xa0] sm:$0xff]
    %v2439 = vld [vmem:[#allocation10 + $0xa8] sm:$0xff]
    %v2440 = vld [vmem:[#allocation10 + $0xb0] sm:$0xff]
    %v2441 = vld [vmem:[#allocation10 + $0xb8] sm:$0xff]
    %v2442 = vld [vmem:[#allocation10 + $0xc0] sm:$0xff]
    %v2443 = vld [vmem:[#allocation10 + $0xc8] sm:$0xff]
    %v2444 = vld [vmem:[#allocation10 + $0xd0] sm:$0xff]
    %v2445 = vld [vmem:[#allocation10 + $0xd8] sm:$0xff]
    %v2446 = vld [vmem:[#allocation10 + $0xe0] sm:$0xff]
    %v2447 = vld [vmem:[#allocation10 + $0xe8] sm:$0xff]
    %v2448 = vld [vmem:[#allocation10 + $0xf0] sm:$0xff]
    %v2449 = vld [vmem:[#allocation10 + $0xf8] sm:$0xff]
    %v2482 = vunpack.c.l.b16 %v2418
    %v2483 = vunpack.c.h.b16 %v2418
    %v2484 = vunpack.c.l.b16 %v2419
    %v2485 = vunpack.c.h.b16 %v2419
    %v2486 = vunpack.c.l.b16 %v2420
    %v2487 = vunpack.c.h.b16 %v2420
    %v2488 = vunpack.c.l.b16 %v2421
    %v2489 = vunpack.c.h.b16 %v2421
    %v2490 = vunpack.c.l.b16 %v2422
    %v2491 = vunpack.c.h.b16 %v2422
    %v2492 = vunpack.c.l.b16 %v2423
    %v2493 = vunpack.c.h.b16 %v2423
    %v2494 = vunpack.c.l.b16 %v2424
    %v2495 = vunpack.c.h.b16 %v2424
    %v2496 = vunpack.c.l.b16 %v2425
    %v2497 = vunpack.c.h.b16 %v2425
    %v2498 = vunpack.c.l.b16 %v2426
    %v2499 = vunpack.c.h.b16 %v2426
    %v2500 = vunpack.c.l.b16 %v2427
    %v2501 = vunpack.c.h.b16 %v2427
    %v2502 = vunpack.c.l.b16 %v2428
    %v2503 = vunpack.c.h.b16 %v2428
    %v2504 = vunpack.c.l.b16 %v2429
    %v2505 = vunpack.c.h.b16 %v2429
    %v2506 = vunpack.c.l.b16 %v2430
    %v2507 = vunpack.c.h.b16 %v2430
    %v2508 = vunpack.c.l.b16 %v2431
    %v2509 = vunpack.c.h.b16 %v2431
    %v2510 = vunpack.c.l.b16 %v2432
    %v2511 = vunpack.c.h.b16 %v2432
    %v2512 = vunpack.c.l.b16 %v2433
    %v2513 = vunpack.c.h.b16 %v2433
    %v2514 = vunpack.c.l.b16 %v2434
    %v2515 = vunpack.c.h.b16 %v2434
    %v2516 = vunpack.c.l.b16 %v2435
    %v2517 = vunpack.c.h.b16 %v2435
    %v2518 = vunpack.c.l.b16 %v2436
    %v2519 = vunpack.c.h.b16 %v2436
    %v2520 = vunpack.c.l.b16 %v2437
    %v2521 = vunpack.c.h.b16 %v2437
    %v2522 = vunpack.c.l.b16 %v2438
    %v2523 = vunpack.c.h.b16 %v2438
    %v2524 = vunpack.c.l.b16 %v2439
    %v2525 = vunpack.c.h.b16 %v2439
    %v2526 = vunpack.c.l.b16 %v2440
    %v2527 = vunpack.c.h.b16 %v2440
    %v2528 = vunpack.c.l.b16 %v2441
    %v2529 = vunpack.c.h.b16 %v2441
    %v2530 = vunpack.c.l.b16 %v2442
    %v2531 = vunpack.c.h.b16 %v2442
    %v2532 = vunpack.c.l.b16 %v2443
    %v2533 = vunpack.c.h.b16 %v2443
    %v2534 = vunpack.c.l.b16 %v2444
    %v2535 = vunpack.c.h.b16 %v2444
    %v2536 = vunpack.c.l.b16 %v2445
    %v2537 = vunpack.c.h.b16 %v2445
    %v2538 = vunpack.c.l.b16 %v2446
    %v2539 = vunpack.c.h.b16 %v2446
    %v2540 = vunpack.c.l.b16 %v2447
    %v2541 = vunpack.c.h.b16 %v2447
    %v2542 = vunpack.c.l.b16 %v2448
    %v2543 = vunpack.c.h.b16 %v2448
    %v2544 = vunpack.c.l.b16 %v2449
    %v2545 = vunpack.c.h.b16 %v2449
    %v2546 = vpack.c.b16 %v2486, %v2482
    %v2547 = vpack.c.b16 %v2487, %v2483
    %v2548 = vpack.c.b16 %v2488, %v2484
    %v2549 = vpack.c.b16 %v2489, %v2485
    %v2550 = vpack.c.b16 %v2494, %v2490
    %v2551 = vpack.c.b16 %v2495, %v2491
    %v2552 = vpack.c.b16 %v2496, %v2492
    %v2553 = vpack.c.b16 %v2497, %v2493
    %v2554 = vpack.c.b16 %v2502, %v2498
    %v2555 = vpack.c.b16 %v2503, %v2499
    %v2556 = vpack.c.b16 %v2504, %v2500
    %v2557 = vpack.c.b16 %v2505, %v2501
    %v2558 = vpack.c.b16 %v2510, %v2506
    %v2559 = vpack.c.b16 %v2511, %v2507
    %v2560 = vpack.c.b16 %v2512, %v2508
    %v2561 = vpack.c.b16 %v2513, %v2509
    %v2562 = vpack.c.b16 %v2518, %v2514
    %v2563 = vpack.c.b16 %v2519, %v2515
    %v2564 = vpack.c.b16 %v2520, %v2516
    %v2565 = vpack.c.b16 %v2521, %v2517
    %v2566 = vpack.c.b16 %v2526, %v2522
    %v2567 = vpack.c.b16 %v2527, %v2523
    %v2568 = vpack.c.b16 %v2528, %v2524
    %v2569 = vpack.c.b16 %v2529, %v2525
    %v2570 = vpack.c.b16 %v2534, %v2530
    %v2571 = vpack.c.b16 %v2535, %v2531
    %v2572 = vpack.c.b16 %v2536, %v2532
    %v2573 = vpack.c.b16 %v2537, %v2533
    %v2574 = vpack.c.b16 %v2542, %v2538
    %v2575 = vpack.c.b16 %v2543, %v2539
    %v2576 = vpack.c.b16 %v2544, %v2540
    %v2577 = vpack.c.b16 %v2545, %v2541
    %2610 = vmatprep.subr.bf16.mxu0 %v2547
    %2611 = vmatpush1.bf16.msra.mxu0 %v2546
    %2612 = vmatprep.subr.bf16.mxu0 %v2551
    %2613 = vmatpush1.bf16.msra.mxu0 %v2550
    %2614 = vmatprep.subr.bf16.mxu0 %v2555
    %2615 = vmatpush1.bf16.msra.mxu0 %v2554
    %2616 = vmatprep.subr.bf16.mxu0 %v2559
    %2617 = vmatpush1.bf16.msra.mxu0 %v2558
    %2618 = vmatprep.subr.bf16.mxu0 %v2563
    %2619 = vmatpush1.bf16.msra.mxu0 %v2562
    %2620 = vmatprep.subr.bf16.mxu0 %v2567
    %2621 = vmatpush1.bf16.msra.mxu0 %v2566
    %2622 = vmatprep.subr.bf16.mxu0 %v2571
    %2623 = vmatpush1.bf16.msra.mxu0 %v2570
    %2624 = vmatprep.subr.bf16.mxu0 %v2575
    %2625 = vmatpush1.bf16.msra.mxu0 %v2574
    %2626 = vmatprep.subr.bf16.mxu0 0
    %2627 = vmatpush1.bf16.msra.mxu0 0
    %2628 = vmatprep.subr.bf16.mxu0 0
    %2629 = vmatpush1.bf16.msra.mxu0 0
    %2630 = vmatprep.subr.bf16.mxu0 0
    %2631 = vmatpush1.bf16.msra.mxu0 0
    %2632 = vmatprep.subr.bf16.mxu0 0
    %2633 = vmatpush1.bf16.msra.mxu0 0
    %2634 = vmatprep.subr.bf16.mxu0 0
    %2635 = vmatpush1.bf16.msra.mxu0 0
    %2636 = vmatprep.subr.bf16.mxu0 0
    %2637 = vmatpush1.bf16.msra.mxu0 0
    %2638 = vmatprep.subr.bf16.mxu0 0
    %2639 = vmatpush1.bf16.msra.mxu0 0
    %2640 = vmatprep.subr.bf16.mxu0 0
    %2641 = vmatpush1.bf16.msra.mxu0 0
    %2642 = vmatprep.mubr.bf16.mxu0 0
    %2643 = vmatmul.mubr.bf16.gmra.mrb[0].mxu0 %v2417
    %v2644 = vpop.f32.mrb[0].mxu0
    %v2645 = vadd.f32 0.0, %v2644
    %v2646 = vpop.f32.mrb[0].mxu0
    %v2647 = vadd.f32 0.0, %v2646
    %v2648 = vpop.f32.mrb[0].mxu0
    %v2649 = vpop.f32.mrb[0].mxu0
    %2650 = vdwg.mxu0
    %2651 = vmatprep.subr.bf16.mxu0 %v2549
    %2652 = vmatpush1.bf16.msra.mxu0 %v2548
    %2653 = vmatprep.subr.bf16.mxu0 %v2553
    %2654 = vmatpush1.bf16.msra.mxu0 %v2552
    %2655 = vmatprep.subr.bf16.mxu0 %v2557
    %2656 = vmatpush1.bf16.msra.mxu0 %v2556
    %2657 = vmatprep.subr.bf16.mxu0 %v2561
    %2658 = vmatpush1.bf16.msra.mxu0 %v2560
    %2659 = vmatprep.subr.bf16.mxu0 %v2565
    %2660 = vmatpush1.bf16.msra.mxu0 %v2564
    %2661 = vmatprep.subr.bf16.mxu0 %v2569
    %2662 = vmatpush1.bf16.msra.mxu0 %v2568
    %2663 = vmatprep.subr.bf16.mxu0 %v2573
    %2664 = vmatpush1.bf16.msra.mxu0 %v2572
    %2665 = vmatprep.subr.bf16.mxu0 %v2577
    %2666 = vmatpush1.bf16.msra.mxu0 %v2576
    %2667 = vmatprep.subr.bf16.mxu0 0
    %2668 = vmatpush1.bf16.msra.mxu0 0
    %2669 = vmatprep.subr.bf16.mxu0 0
    %2670 = vmatpush1.bf16.msra.mxu0 0
    %2671 = vmatprep.subr.bf16.mxu0 0
    %2672 = vmatpush1.bf16.msra.mxu0 0
    %2673 = vmatprep.subr.bf16.mxu0 0
    %2674 = vmatpush1.bf16.msra.mxu0 0
    %2675 = vmatprep.subr.bf16.mxu0 0
    %2676 = vmatpush1.bf16.msra.mxu0 0
    %2677 = vmatprep.subr.bf16.mxu0 0
    %2678 = vmatpush1.bf16.msra.mxu0 0
    %2679 = vmatprep.subr.bf16.mxu0 0
    %2680 = vmatpush1.bf16.msra.mxu0 0
    %2681 = vmatprep.subr.bf16.mxu0 0
    %2682 = vmatpush1.bf16.msra.mxu0 0
    %2683 = vmatprep.mubr.bf16.mxu0 0
    %2684 = vmatmul.mubr.bf16.gmra.mrb[0].mxu0 %v2417
    %v2685 = vpop.f32.mrb[0].mxu0
    %v2686 = vadd.f32 0.0, %v2685
    %v2687 = vpop.f32.mrb[0].mxu0
    %v2688 = vadd.f32 0.0, %v2687
    %v2689 = vpop.f32.mrb[0].mxu0
    %v2690 = vpop.f32.mrb[0].mxu0
    %2691 = vdwg.mxu0
    %v2692 = vadd.f32 %v2413, %v2645
    %v2693 = vadd.f32 %v2414, %v2647
    %v2694 = vadd.f32 %v2415, %v2686
    %v2695 = vadd.f32 %v2416, %v2688
    %v2696 = vmul.f32 %v2692, 0.5
    %v2697 = vtanh.pop %v2696
    %v2698 = vmul.f32 %v2697, 0.5
    %v2699 = vadd.f32 %v2698, 0.5
    %v2700 = vmul.f32 %v2693, 0.5
    %v2701 = vtanh.pop %v2700
    %v2702 = vmul.f32 %v2701, 0.5
    %v2703 = vadd.f32 %v2702, 0.5
    %v2704 = vtanh.pop %v2694
    %v2705 = vmul.f32 %v2695, 0.5
    %v2706 = vtanh.pop %v2705
    %v2707 = vmul.f32 %v2706, 0.5
    %v2708 = vadd.f32 %v2707, 0.5
    %v2709 = vmul.f32 %v2703, %v2398
    %v2710 = vmul.f32 %v2699, %v2704
    %v2711 = vadd.f32 %v2709, %v2710
    %v2712 = vtanh.pop %v2711
    %v2713 = vmul.f32 %v2708, %v2712
    %s2714 = sadd.s32 %s534, 6
    %v2715 = vstv %s2714
    %vm2716 = vcmp.gt.s32.totalorder %v533, %v2715
    %v2717 = vsel %vm2716, 1, 0
    %2718 = vset.pattern.permute.xlu0 0
    %2719 = vperm.xlu0 %2718, %v2717
    %v2720 = vpop.permute.xlu0 %2719
    %vm2721 = vcmp.eq.s32.totalorder %v2720, 1
    %v2722 = vsel %vm2721, %v2713, 0.0
    %s2723 = scalar_lea.vmem [#allocation11], 48
    %2724 = vst [vmem:[%s2723] sm:$0xff] %v2722
    %s2725 = scalar_lea.vmem [#allocation2], 224
    %v2726 = vld [vmem:[%s2725] sm:$0xff]
    %v2727 = vld [vmem:[%s2725 + $0x8] sm:$0xff]
    %v2728 = vld [vmem:[%s2725 + $0x10] sm:$0xff]
    %v2729 = vld [vmem:[%s2725 + $0x18] sm:$0xff]
    %v2730 = vpack.c.bf16 %v2713, %v2713
    %v2731 = vld [vmem:[#allocation10] sm:$0xff]
    %v2732 = vld [vmem:[#allocation10 + $0x8] sm:$0xff]
    %v2733 = vld [vmem:[#allocation10 + $0x10] sm:$0xff]
    %v2734 = vld [vmem:[#allocation10 + $0x18] sm:$0xff]
    %v2735 = vld [vmem:[#allocation10 + $0x20] sm:$0xff]
    %v2736 = vld [vmem:[#allocation10 + $0x28] sm:$0xff]
    %v2737 = vld [vmem:[#allocation10 + $0x30] sm:$0xff]
    %v2738 = vld [vmem:[#allocation10 + $0x38] sm:$0xff]
    %v2739 = vld [vmem:[#allocation10 + $0x40] sm:$0xff]
    %v2740 = vld [vmem:[#allocation10 + $0x48] sm:$0xff]
    %v2741 = vld [vmem:[#allocation10 + $0x50] sm:$0xff]
    %v2742 = vld [vmem:[#allocation10 + $0x58] sm:$0xff]
    %v2743 = vld [vmem:[#allocation10 + $0x60] sm:$0xff]
    %v2744 = vld [vmem:[#allocation10 + $0x68] sm:$0xff]
    %v2745 = vld [vmem:[#allocation10 + $0x70] sm:$0xff]
    %v2746 = vld [vmem:[#allocation10 + $0x78] sm:$0xff]
    %v2747 = vld [vmem:[#allocation10 + $0x80] sm:$0xff]
    %v2748 = vld [vmem:[#allocation10 + $0x88] sm:$0xff]
    %v2749 = vld [vmem:[#allocation10 + $0x90] sm:$0xff]
    %v2750 = vld [vmem:[#allocation10 + $0x98] sm:$0xff]
    %v2751 = vld [vmem:[#allocation10 + $0xa0] sm:$0xff]
    %v2752 = vld [vmem:[#allocation10 + $0xa8] sm:$0xff]
    %v2753 = vld [vmem:[#allocation10 + $0xb0] sm:$0xff]
    %v2754 = vld [vmem:[#allocation10 + $0xb8] sm:$0xff]
    %v2755 = vld [vmem:[#allocation10 + $0xc0] sm:$0xff]
    %v2756 = vld [vmem:[#allocation10 + $0xc8] sm:$0xff]
    %v2757 = vld [vmem:[#allocation10 + $0xd0] sm:$0xff]
    %v2758 = vld [vmem:[#allocation10 + $0xd8] sm:$0xff]
    %v2759 = vld [vmem:[#allocation10 + $0xe0] sm:$0xff]
    %v2760 = vld [vmem:[#allocation10 + $0xe8] sm:$0xff]
    %v2761 = vld [vmem:[#allocation10 + $0xf0] sm:$0xff]
    %v2762 = vld [vmem:[#allocation10 + $0xf8] sm:$0xff]
    %v2795 = vunpack.c.l.b16 %v2731
    %v2796 = vunpack.c.h.b16 %v2731
    %v2797 = vunpack.c.l.b16 %v2732
    %v2798 = vunpack.c.h.b16 %v2732
    %v2799 = vunpack.c.l.b16 %v2733
    %v2800 = vunpack.c.h.b16 %v2733
    %v2801 = vunpack.c.l.b16 %v2734
    %v2802 = vunpack.c.h.b16 %v2734
    %v2803 = vunpack.c.l.b16 %v2735
    %v2804 = vunpack.c.h.b16 %v2735
    %v2805 = vunpack.c.l.b16 %v2736
    %v2806 = vunpack.c.h.b16 %v2736
    %v2807 = vunpack.c.l.b16 %v2737
    %v2808 = vunpack.c.h.b16 %v2737
    %v2809 = vunpack.c.l.b16 %v2738
    %v2810 = vunpack.c.h.b16 %v2738
    %v2811 = vunpack.c.l.b16 %v2739
    %v2812 = vunpack.c.h.b16 %v2739
    %v2813 = vunpack.c.l.b16 %v2740
    %v2814 = vunpack.c.h.b16 %v2740
    %v2815 = vunpack.c.l.b16 %v2741
    %v2816 = vunpack.c.h.b16 %v2741
    %v2817 = vunpack.c.l.b16 %v2742
    %v2818 = vunpack.c.h.b16 %v2742
    %v2819 = vunpack.c.l.b16 %v2743
    %v2820 = vunpack.c.h.b16 %v2743
    %v2821 = vunpack.c.l.b16 %v2744
    %v2822 = vunpack.c.h.b16 %v2744
    %v2823 = vunpack.c.l.b16 %v2745
    %v2824 = vunpack.c.h.b16 %v2745
    %v2825 = vunpack.c.l.b16 %v2746
    %v2826 = vunpack.c.h.b16 %v2746
    %v2827 = vunpack.c.l.b16 %v2747
    %v2828 = vunpack.c.h.b16 %v2747
    %v2829 = vunpack.c.l.b16 %v2748
    %v2830 = vunpack.c.h.b16 %v2748
    %v2831 = vunpack.c.l.b16 %v2749
    %v2832 = vunpack.c.h.b16 %v2749
    %v2833 = vunpack.c.l.b16 %v2750
    %v2834 = vunpack.c.h.b16 %v2750
    %v2835 = vunpack.c.l.b16 %v2751
    %v2836 = vunpack.c.h.b16 %v2751
    %v2837 = vunpack.c.l.b16 %v2752
    %v2838 = vunpack.c.h.b16 %v2752
    %v2839 = vunpack.c.l.b16 %v2753
    %v2840 = vunpack.c.h.b16 %v2753
    %v2841 = vunpack.c.l.b16 %v2754
    %v2842 = vunpack.c.h.b16 %v2754
    %v2843 = vunpack.c.l.b16 %v2755
    %v2844 = vunpack.c.h.b16 %v2755
    %v2845 = vunpack.c.l.b16 %v2756
    %v2846 = vunpack.c.h.b16 %v2756
    %v2847 = vunpack.c.l.b16 %v2757
    %v2848 = vunpack.c.h.b16 %v2757
    %v2849 = vunpack.c.l.b16 %v2758
    %v2850 = vunpack.c.h.b16 %v2758
    %v2851 = vunpack.c.l.b16 %v2759
    %v2852 = vunpack.c.h.b16 %v2759
    %v2853 = vunpack.c.l.b16 %v2760
    %v2854 = vunpack.c.h.b16 %v2760
    %v2855 = vunpack.c.l.b16 %v2761
    %v2856 = vunpack.c.h.b16 %v2761
    %v2857 = vunpack.c.l.b16 %v2762
    %v2858 = vunpack.c.h.b16 %v2762
    %v2859 = vpack.c.b16 %v2799, %v2795
    %v2860 = vpack.c.b16 %v2800, %v2796
    %v2861 = vpack.c.b16 %v2801, %v2797
    %v2862 = vpack.c.b16 %v2802, %v2798
    %v2863 = vpack.c.b16 %v2807, %v2803
    %v2864 = vpack.c.b16 %v2808, %v2804
    %v2865 = vpack.c.b16 %v2809, %v2805
    %v2866 = vpack.c.b16 %v2810, %v2806
    %v2867 = vpack.c.b16 %v2815, %v2811
    %v2868 = vpack.c.b16 %v2816, %v2812
    %v2869 = vpack.c.b16 %v2817, %v2813
    %v2870 = vpack.c.b16 %v2818, %v2814
    %v2871 = vpack.c.b16 %v2823, %v2819
    %v2872 = vpack.c.b16 %v2824, %v2820
    %v2873 = vpack.c.b16 %v2825, %v2821
    %v2874 = vpack.c.b16 %v2826, %v2822
    %v2875 = vpack.c.b16 %v2831, %v2827
    %v2876 = vpack.c.b16 %v2832, %v2828
    %v2877 = vpack.c.b16 %v2833, %v2829
    %v2878 = vpack.c.b16 %v2834, %v2830
    %v2879 = vpack.c.b16 %v2839, %v2835
    %v2880 = vpack.c.b16 %v2840, %v2836
    %v2881 = vpack.c.b16 %v2841, %v2837
    %v2882 = vpack.c.b16 %v2842, %v2838
    %v2883 = vpack.c.b16 %v2847, %v2843
    %v2884 = vpack.c.b16 %v2848, %v2844
    %v2885 = vpack.c.b16 %v2849, %v2845
    %v2886 = vpack.c.b16 %v2850, %v2846
    %v2887 = vpack.c.b16 %v2855, %v2851
    %v2888 = vpack.c.b16 %v2856, %v2852
    %v2889 = vpack.c.b16 %v2857, %v2853
    %v2890 = vpack.c.b16 %v2858, %v2854
    %2923 = vmatprep.subr.bf16.mxu0 %v2860
    %2924 = vmatpush1.bf16.msra.mxu0 %v2859
    %2925 = vmatprep.subr.bf16.mxu0 %v2864
    %2926 = vmatpush1.bf16.msra.mxu0 %v2863
    %2927 = vmatprep.subr.bf16.mxu0 %v2868
    %2928 = vmatpush1.bf16.msra.mxu0 %v2867
    %2929 = vmatprep.subr.bf16.mxu0 %v2872
    %2930 = vmatpush1.bf16.msra.mxu0 %v2871
    %2931 = vmatprep.subr.bf16.mxu0 %v2876
    %2932 = vmatpush1.bf16.msra.mxu0 %v2875
    %2933 = vmatprep.subr.bf16.mxu0 %v2880
    %2934 = vmatpush1.bf16.msra.mxu0 %v2879
    %2935 = vmatprep.subr.bf16.mxu0 %v2884
    %2936 = vmatpush1.bf16.msra.mxu0 %v2883
    %2937 = vmatprep.subr.bf16.mxu0 %v2888
    %2938 = vmatpush1.bf16.msra.mxu0 %v2887
    %2939 = vmatprep.subr.bf16.mxu0 0
    %2940 = vmatpush1.bf16.msra.mxu0 0
    %2941 = vmatprep.subr.bf16.mxu0 0
    %2942 = vmatpush1.bf16.msra.mxu0 0
    %2943 = vmatprep.subr.bf16.mxu0 0
    %2944 = vmatpush1.bf16.msra.mxu0 0
    %2945 = vmatprep.subr.bf16.mxu0 0
    %2946 = vmatpush1.bf16.msra.mxu0 0
    %2947 = vmatprep.subr.bf16.mxu0 0
    %2948 = vmatpush1.bf16.msra.mxu0 0
    %2949 = vmatprep.subr.bf16.mxu0 0
    %2950 = vmatpush1.bf16.msra.mxu0 0
    %2951 = vmatprep.subr.bf16.mxu0 0
    %2952 = vmatpush1.bf16.msra.mxu0 0
    %2953 = vmatprep.subr.bf16.mxu0 0
    %2954 = vmatpush1.bf16.msra.mxu0 0
    %2955 = vmatprep.mubr.bf16.mxu0 0
    %2956 = vmatmul.mubr.bf16.gmra.mrb[0].mxu0 %v2730
    %v2957 = vpop.f32.mrb[0].mxu0
    %v2958 = vadd.f32 0.0, %v2957
    %v2959 = vpop.f32.mrb[0].mxu0
    %v2960 = vadd.f32 0.0, %v2959
    %v2961 = vpop.f32.mrb[0].mxu0
    %v2962 = vpop.f32.mrb[0].mxu0
    %2963 = vdwg.mxu0
    %2964 = vmatprep.subr.bf16.mxu0 %v2862
    %2965 = vmatpush1.bf16.msra.mxu0 %v2861
    %2966 = vmatprep.subr.bf16.mxu0 %v2866
    %2967 = vmatpush1.bf16.msra.mxu0 %v2865
    %2968 = vmatprep.subr.bf16.mxu0 %v2870
    %2969 = vmatpush1.bf16.msra.mxu0 %v2869
    %2970 = vmatprep.subr.bf16.mxu0 %v2874
    %2971 = vmatpush1.bf16.msra.mxu0 %v2873
    %2972 = vmatprep.subr.bf16.mxu0 %v2878
    %2973 = vmatpush1.bf16.msra.mxu0 %v2877
    %2974 = vmatprep.subr.bf16.mxu0 %v2882
    %2975 = vmatpush1.bf16.msra.mxu0 %v2881
    %2976 = vmatprep.subr.bf16.mxu0 %v2886
    %2977 = vmatpush1.bf16.msra.mxu0 %v2885
    %2978 = vmatprep.subr.bf16.mxu0 %v2890
    %2979 = vmatpush1.bf16.msra.mxu0 %v2889
    %2980 = vmatprep.subr.bf16.mxu0 0
    %2981 = vmatpush1.bf16.msra.mxu0 0
    %2982 = vmatprep.subr.bf16.mxu0 0
    %2983 = vmatpush1.bf16.msra.mxu0 0
    %2984 = vmatprep.subr.bf16.mxu0 0
    %2985 = vmatpush1.bf16.msra.mxu0 0
    %2986 = vmatprep.subr.bf16.mxu0 0
    %2987 = vmatpush1.bf16.msra.mxu0 0
    %2988 = vmatprep.subr.bf16.mxu0 0
    %2989 = vmatpush1.bf16.msra.mxu0 0
    %2990 = vmatprep.subr.bf16.mxu0 0
    %2991 = vmatpush1.bf16.msra.mxu0 0
    %2992 = vmatprep.subr.bf16.mxu0 0
    %2993 = vmatpush1.bf16.msra.mxu0 0
    %2994 = vmatprep.subr.bf16.mxu0 0
    %2995 = vmatpush1.bf16.msra.mxu0 0
    %2996 = vmatprep.mubr.bf16.mxu0 0
    %2997 = vmatmul.mubr.bf16.gmra.mrb[0].mxu0 %v2730
    %v2998 = vpop.f32.mrb[0].mxu0
    %v2999 = vadd.f32 0.0, %v2998
    %v3000 = vpop.f32.mrb[0].mxu0
    %v3001 = vadd.f32 0.0, %v3000
    %v3002 = vpop.f32.mrb[0].mxu0
    %v3003 = vpop.f32.mrb[0].mxu0
    %3004 = vdwg.mxu0
    %v3005 = vadd.f32 %v2726, %v2958
    %v3006 = vadd.f32 %v2727, %v2960
    %v3007 = vadd.f32 %v2728, %v2999
    %v3008 = vadd.f32 %v2729, %v3001
    %v3009 = vmul.f32 %v3005, 0.5
    %v3010 = vtanh.pop %v3009
    %v3011 = vmul.f32 %v3010, 0.5
    %v3012 = vadd.f32 %v3011, 0.5
    %v3013 = vmul.f32 %v3006, 0.5
    %v3014 = vtanh.pop %v3013
    %v3015 = vmul.f32 %v3014, 0.5
    %v3016 = vadd.f32 %v3015, 0.5
    %v3017 = vtanh.pop %v3007
    %v3018 = vmul.f32 %v3008, 0.5
    %v3019 = vtanh.pop %v3018
    %v3020 = vmul.f32 %v3019, 0.5
    %v3021 = vadd.f32 %v3020, 0.5
    %v3022 = vmul.f32 %v3016, %v2711
    %v3023 = vmul.f32 %v3012, %v3017
    %v3024 = vadd.f32 %v3022, %v3023
    %v3025 = vtanh.pop %v3024
    %v3026 = vmul.f32 %v3021, %v3025
    %s3027 = sadd.s32 %s534, 7
    %v3028 = vstv %s3027
    %vm3029 = vcmp.gt.s32.totalorder %v533, %v3028
    %v3030 = vsel %vm3029, 1, 0
    %3031 = vset.pattern.permute.xlu0 0
    %3032 = vperm.xlu0 %3031, %v3030
    %v3033 = vpop.permute.xlu0 %3032
    %vm3034 = vcmp.eq.s32.totalorder %v3033, 1
    %v3035 = vsel %vm3034, %v3026, 0.0
    %s3036 = scalar_lea.vmem [#allocation11], 56
    %3037 = vst [vmem:[%s3036] sm:$0xff] %v3035
    %3038 = vst [vmem:[#allocation3] sm:$0xff] %v3026
    %3039 = vst [vmem:[#allocation4] sm:$0xff] %v3024
    // Predicated region
    $region46: #{tpu_custom_call.1} parent=1 // pred_check
      _
    $region47: #{tpu_custom_call.1} parent=1 // pred_check_branch
      %3041 = sbr.rel (0) target = $region49
    $region48: #{tpu_custom_call.1} parent=1 // pred_region
      %s3043 = ssub.s32 1024, 1024
      %3044 = vsyncadd [#allocation7], %s3043
      %s3045 = sshll.u32 [#allocation11], 4
      %s3046 = int_to_ptr.vmem [resolvable:$true] %s3045
      %3051 = dma.vmem_to_hbm [thread:$0]  %s3046, 1024, %s7, [#allocation7], 128, 128, 8
    $region49: #{tpu_custom_call.1} parent=1 // pred_fallthru
      _
    // Predicated region
    $region50: #{tpu_custom_call.1} parent=1 // pred_check
      _
    $region51: #{tpu_custom_call.1} parent=1 // pred_check_branch
      %3053 = sbr.rel (0) target = $region53
    $region52: #{tpu_custom_call.1} parent=1 // pred_region
      %3054 = dma.done [#allocation7], 1024
    $region53: #{tpu_custom_call.1} parent=1 // pred_fallthru
      _
    %3055 = vsyncpa [#allocation6], 1
    %3056 = vsyncpa [#allocation9], 1
    %3057 = vsyncpa [#allocation7], 1

</llo_original>
